<compile_context>
chip_gen: v6e
topology: v6e:2x2x1
jax: 0.10.0
libtpu: 0.0.40
codegen_flags: <defaults>
</compile_context>

<pallas_src>
import functools

import jax
import jax.numpy as jnp
from jax import lax
from jax.experimental import pallas as pl
from jax.experimental.pallas import tpu as pltpu


_VMEM_LIMIT = 32 * 1024 * 1024  # safe on v5e/v6e/v7x; fits the worst-case f32 tile


def _tensorcores_per_device():
    """2 for multi-TensorCore parts (v4/v5p megacore, v7x), else 1."""
    try:
        kind = jax.devices()[0].device_kind.lower()
    except Exception:
        return 1
    if "lite" in kind or "v5e" in kind or "v6e" in kind or "v6" in kind:
        return 1
    if "v2" in kind or "v3" in kind:
        return 1
    if "v4" in kind or "v5p" in kind or "v7" in kind or "7x" in kind or "v5" in kind:
        return 2
    return 1


def _pick_tile(N, tn, two_tc):
    """128-aligned row tile.  Only force >=2 grid steps on multi-TC chips."""
    tn = min(tn, 128 * pl.cdiv(N, 128))
    if two_tc and N > 128:
        tn = min(tn, 128 * pl.cdiv(pl.cdiv(N, 2), 128))
    return max(tn, 128)


def _full_spec(arr):
    shape = arr.shape
    # Constant index map: the block never changes, so Pallas fetches it once.
    return pl.BlockSpec(shape, lambda i, _s=shape: (0,) * len(_s))


# ----------------------------------------------------------------------------
# Kernel 1: per-instance attention tower   h -> (h1, A^T)
# ----------------------------------------------------------------------------
def _attn_tower_kernel(x_ref, w0_ref, b0_ref, wab_ref, bab_ref, wct_ref, bc_ref,
                       h1_ref, at_ref):
    x = x_ref[...]

    # fc: Linear(E, H1) + ReLU  (Dropout(p=0.0) is identity); f32 accumulation.
    h1 = jax.nn.relu(
        jnp.dot(x, w0_ref[...], preferred_element_type=jnp.float32)
        + b0_ref[...])
    h1_ref[...] = h1.astype(h1_ref.dtype)

    # Gated attention: ONE fused matmul for the tanh and sigmoid branches
    # (weights concatenated host-side), then split along the lane axis.
    ab = jnp.dot(h1.astype(wab_ref.dtype), wab_ref[...],
                 preferred_element_type=jnp.float32) + bab_ref[...]
    half = ab.shape[-1] // 2
    att = jnp.tanh(ab[:, :half]) * jax.nn.sigmoid(ab[:, half:])

    # attention_c emitted already transposed: (8, H2) . (tn, H2)^T -> (8, tn).
    # n_classes is sublane-padded to 8 rows; tn (multiple of 128) stays on the
    # lane axis, so every store is an unmasked, lane-dense vst and the HBM
    # writeback is (8, N) instead of (N, 128).
    at = lax.dot_general(wct_ref[...], att.astype(wct_ref.dtype),
                         (((1,), (1,)), ((), ())),
                         preferred_element_type=jnp.float32)
    at_ref[...] = (at + bc_ref[...]).astype(at_ref.dtype)


# ----------------------------------------------------------------------------
# Kernel 2: bag aggregation   M = A_final @ h1   (revisited-output accumulator)
# ----------------------------------------------------------------------------
def _bag_agg_kernel(a_ref, h1_ref, m_ref):
    @pl.when(pl.program_id(1) == 0)
    def _():
        m_ref[...] = jnp.zeros_like(m_ref)

    # (C, tn) @ (tn, H1_blk) accumulated across the (last, 'arbitrary') row axis.
    m_ref[...] += jnp.dot(a_ref[...], h1_ref[...],
                          preferred_element_type=jnp.float32)


# ----------------------------------------------------------------------------
# Wrappers
# ----------------------------------------------------------------------------
def _attention_tower(h_padded, params, *, tn, compute_dtype):
    """fc + Attn_Net_Gated over padded rows.

    Returns (A^T (8, Np) f32, h1 (Np, H1) in compute_dtype)."""
    w0, b0, wa, ba, wb, bb, wc, bc = params
    Np, E = h_padded.shape
    H1 = w0.shape[1]
    H2 = wa.shape[1]
    C = wc.shape[1]
    assert C <= 8, "attention head assumes n_classes <= 8 (sublane padding)"

    # Host-side weight prep: fuse tanh/sigmoid branch weights; transpose and
    # sublane-pad the attention head to 8 rows for lane-dense (8, tn) stores.
    wab = jnp.concatenate([wa, wb], axis=1)                        # (H1, 2*H2)
    bab = (jnp.concatenate([ba, bb], axis=0)
           .reshape(1, 2 * H2).astype(jnp.float32))
    wct = jnp.zeros((8, H2), wc.dtype).at[:C].set(wc.T)            # (8, H2)
    bc8 = jnp.zeros((8, 1), jnp.float32).at[:C, 0].set(bc)

    x = h_padded.astype(compute_dtype)
    w0c = w0.astype(compute_dtype)
    wabc = wab.astype(compute_dtype)
    wctc = wct.astype(compute_dtype)
    b0r = b0.reshape(1, H1).astype(jnp.float32)

    weights = (w0c, b0r, wabc, bab, wctc, bc8)
    in_specs = [pl.BlockSpec((tn, E), lambda i: (i, 0))]
    in_specs += [_full_spec(w) for w in weights]
    out_specs = [pl.BlockSpec((tn, H1), lambda i: (i, 0)),
                 pl.BlockSpec((8, tn), lambda i: (0, i))]

    h1_p, at_p = pl.pallas_call(
        _attn_tower_kernel,
        out_shape=(jax.ShapeDtypeStruct((Np, H1), compute_dtype),  # bf16 by default
                   jax.ShapeDtypeStruct((8, Np), jnp.float32)),
        grid_spec=pltpu.PrefetchScalarGridSpec(
            num_scalar_prefetch=0,
            grid=(Np // tn,),
            in_specs=in_specs,
            out_specs=out_specs),
        compiler_params=pltpu.CompilerParams(
            dimension_semantics=("parallel",),
            vmem_limit_bytes=_VMEM_LIMIT),
    )(x, *weights)
    return at_p, h1_p


def _bag_aggregate(a_final_p, h1_p, *, tn, num_col_blocks):
    """M = a_final_p @ h1_p, accumulated over row tiles.

    H1 columns optionally split across a 'parallel' grid axis so both
    TensorCores stream h1 on 2-TC chips."""
    C, Np = a_final_p.shape
    H1 = h1_p.shape[1]
    h1b = H1 // num_col_blocks

    in_specs = [pl.BlockSpec((C, tn), lambda j, i: (0, i)),
                pl.BlockSpec((tn, h1b), lambda j, i: (i, j))]
    out_specs = pl.BlockSpec((C, h1b), lambda j, i: (0, j))

    return pl.pallas_call(
        _bag_agg_kernel,
        out_shape=jax.ShapeDtypeStruct((C, H1), jnp.float32),
        grid_spec=pltpu.PrefetchScalarGridSpec(
            num_scalar_prefetch=0,
            grid=(num_col_blocks, Np // tn),   # reduction axis last
            in_specs=in_specs,
            out_specs=out_specs),
        compiler_params=pltpu.CompilerParams(
            dimension_semantics=("parallel", "arbitrary"),
            vmem_limit_bytes=_VMEM_LIMIT),
    )(a_final_p.astype(h1_p.dtype), h1_p)


def clam_mb_n_forward(h, patch_neighbors, params, *, tn=None,
                      compute_dtype=jnp.bfloat16):
    """CLAM_MB_N.forward (eval; no instance_eval / attention_only);
    results_dict carries 'features' as with return_features=True."""
    (w0, b0, wa, ba, wb, bb, wc, bc, wcls, bcls) = params
    N = h.shape[0]
    H1 = w0.shape[1]
    C = wc.shape[1]

    two_tc = _tensorcores_per_device() >= 2
    if tn is None:
        tn = 1024 if compute_dtype == jnp.bfloat16 else 512
    tn = _pick_tile(N, tn, two_tc)
    Np = tn * pl.cdiv(N, tn)
    h_p = jnp.pad(h, ((0, Np - N), (0, 0))) if Np != N else h

    # ---- Kernel 1: per-instance tower -> A already in (C, N) layout ----
    at_p, h1_p = _attention_tower(h_p, (w0, b0, wa, ba, wb, bb, wc, bc),
                                  tn=tn, compute_dtype=compute_dtype)
    A_raw = at_p[:C, :N]                                        # (C, N)

    # ---- bag-level glue: softmax over instances + neighbour smoothing ----
    # TODO(synk): the patch_neighbors gather is data-dependent; left to XLA
    # rather than a Pallas DMA-gather.
    A_s = jax.nn.softmax(A_raw, axis=1)
    idx = jnp.where(patch_neighbors < 0, N, patch_neighbors)    # (N, 4)
    A_pad = jnp.concatenate([A_s, jnp.zeros((C, 1), A_s.dtype)], axis=1)
    A_nb = jnp.take(A_pad, idx, axis=1)                         # (C, N, 4)
    diff = A_s[:, :, None] - A_nb
    values = jnp.exp(A_nb - jax.nn.relu(diff))
    valid = (idx != N)                                          # (N, 4)
    values = values * valid[None].astype(A_s.dtype)
    sum_values = jnp.sum(values, axis=2)                        # (C, N)
    counts = jnp.maximum(jnp.sum(valid, axis=1), 1).astype(A_s.dtype)
    T = jax.nn.softmax(sum_values / counts[None, :], axis=1)
    A_final = A_s + T                                           # (C, N)

    # ---- Kernel 2: M = A_final @ h1 ----
    # Padded instance rows of h1_p hold finite garbage (relu(b0)); they are
    # multiplied by the zero-padded attention columns, contributing exactly 0.
    A_final_p = (jnp.pad(A_final, ((0, 0), (0, Np - N)))
                 if Np != N else A_final)
    ncol = 2 if (two_tc and H1 % 256 == 0) else 1
    M = _bag_aggregate(A_final_p, h1_p, tn=tn, num_col_blocks=ncol)

    # Per-class bag classifiers: tiny (C,H1)*(H1,) per class -> XLA.
    logits = (jnp.sum(M * wcls.T.astype(jnp.float32), axis=1)
              + bcls.astype(jnp.float32)).reshape(1, C)
    Y_prob = jax.nn.softmax(logits, axis=1)
    Y_hat = jnp.argmax(logits, axis=1).reshape(1, 1)
    results_dict = {"features": M}
    return logits, Y_prob, Y_hat, A_raw, results_dict


# ----------------------------------------------------------------------------
# Parameters (PyTorch-style U(+-1/sqrt(fan_in)) init; weights stored (in, out))
# ----------------------------------------------------------------------------
def init_params(key, E, H1, H2, C):
    def linear(k, fan_in, fan_out):
        kw, kb = jax.random.split(k)
        bound = 1.0 / (fan_in ** 0.5)
        w = jax.random.uniform(kw, (fan_in, fan_out), jnp.float32, -bound, bound)
        b = jax.random.uniform(kb, (fan_out,), jnp.float32, -bound, bound)
        return w, b

    keys = jax.random.split(key, 5)
    w0, b0 = linear(keys[0], E, H1)        # fc
    wa, ba = linear(keys[1], H1, H2)       # attention_a
    wb, bb = linear(keys[2], H1, H2)       # attention_b
    wc, bc = linear(keys[3], H2, C)        # attention_c
    wcls, bcls = linear(keys[4], H1, C)    # column c == classifiers[c]
    return (w0, b0, wa, ba, wb, bb, wc, bc, wcls, bcls)


# ----------------------------------------------------------------------------
# Pure-JAX reference of the same forward (highest matmul precision)
# ----------------------------------------------------------------------------
def reference_forward(h, patch_neighbors, params):
    (w0, b0, wa, ba, wb, bb, wc, bc, wcls, bcls) = params
    dot = functools.partial(jnp.dot, precision=jax.lax.Precision.HIGHEST)

    h1 = jax.nn.relu(dot(h, w0) + b0)
    a = jnp.tanh(dot(h1, wa) + ba)
    g = jax.nn.sigmoid(dot(h1, wb) + bb)
    A = dot(a * g, wc) + bc                                   # (N, C)
    A_raw = A.T
    A_s = jax.nn.softmax(A_raw, axis=1)
    N = h.shape[0]
    C = wc.shape[1]
    idx = jnp.where(patch_neighbors < 0, N, patch_neighbors)
    A_pad = jnp.concatenate([A_s, jnp.zeros((C, 1), A_s.dtype)], axis=1)
    A_nb = jnp.take(A_pad, idx, axis=1)
    values = jnp.exp(A_nb - jax.nn.relu(A_s[:, :, None] - A_nb))
    valid = (idx != N)
    values = values * valid[None].astype(A_s.dtype)
    T = jnp.sum(values, axis=2) / jnp.maximum(
        jnp.sum(valid, axis=1), 1).astype(A_s.dtype)[None, :]
    T = jax.nn.softmax(T, axis=1)
    A_final = A_s + T
    M = dot(A_final, h1)                                      # (C, H1)
    logits = (jnp.sum(M * wcls.T, axis=1) + bcls).reshape(1, -1)
    Y_prob = jax.nn.softmax(logits, axis=1)
    Y_hat = jnp.argmax(logits, axis=1).reshape(1, 1)
    return logits, Y_prob, Y_hat, A_raw, M


# ----------------------------------------------------------------------------
if __name__ == "__main__":
    # CLAM_MB_N 'small' sizes [embed_dim, 512, 256], n_classes=2; modest bag.
    N, E, H1, H2, C = 400, 1024, 512, 256, 2

    key = jax.random.PRNGKey(0)
    kx, kn, kp = jax.random.split(key, 3)
    h = jax.random.normal(kx, (N, E), jnp.float32)
    patch_neighbors = jax.random.randint(kn, (N, 4), -1, N, dtype=jnp.int32)
    params = init_params(kp, E, H1, H2, C)

    # ---- f32 run: exact check against the pure-JAX reference. ----
    logits, Y_prob, Y_hat, A_raw, res = jax.block_until_ready(
        clam_mb_n_forward(h, patch_neighbors, params,
                          compute_dtype=jnp.float32))
    ref_logits, ref_prob, ref_hat, ref_Araw, ref_M = reference_forward(
        h, patch_neighbors, params)

    assert logits.shape == (1, C) and Y_prob.shape == (1, C)
    assert Y_hat.shape == (1, 1) and A_raw.shape == (C, N)
    assert jnp.allclose(A_raw, ref_Araw, atol=1e-3, rtol=1e-3), "A_raw mismatch"
    assert jnp.allclose(res["features"], ref_M, atol=1e-3, rtol=1e-3), "M mismatch"
    assert jnp.allclose(logits, ref_logits, atol=1e-3, rtol=1e-3), "logits mismatch"
    assert jnp.allclose(Y_prob, ref_prob, atol=1e-3, rtol=1e-3), "Y_prob mismatch"

    # ---- default bf16-operand run (MXU fast path): loose-tolerance check. ----
    logits_bf, prob_bf, hat_bf, Araw_bf, res_bf = jax.block_until_ready(
        clam_mb_n_forward(h, patch_neighbors, params))
    assert logits_bf.shape == (1, C) and Araw_bf.shape == (C, N)
    assert bool(jnp.all(jnp.isfinite(logits_bf)))
    assert jnp.allclose(logits_bf, ref_logits, atol=5e-2, rtol=5e-2), \
        "bf16 logits out of tolerance"
    assert jnp.allclose(prob_bf, ref_prob, atol=2e-2), \
        "bf16 Y_prob out of tolerance"

    print("KERNEL_OK")
</pallas_src>

<mosaic_0001>
module attributes {stable_mosaic.version = 11 : i64} {
  func.func @_attn_tower_kernel(%arg0: i32, %arg1: memref<512x1024xf32, #tpu.memory_space<vmem>>, %arg2: memref<1024x512xf32, #tpu.memory_space<vmem>>, %arg3: memref<1x512xf32, #tpu.memory_space<vmem>>, %arg4: memref<512x512xf32, #tpu.memory_space<vmem>>, %arg5: memref<1x512xf32, #tpu.memory_space<vmem>>, %arg6: memref<8x256xf32, #tpu.memory_space<vmem>>, %arg7: memref<8x1xf32, #tpu.memory_space<vmem>>, %arg8: memref<512x512xf32, #tpu.memory_space<vmem>>, %arg9: memref<8x512xf32, #tpu.memory_space<vmem>>) attributes {dimension_semantics = [#tpu.dimension_semantics<parallel>], iteration_bounds = array<i64: 1>, scalar_prefetch = 0 : i64, scratch_operands = 0 : i64, tpu.core_type = #tpu.core_type<tc>, window_params = [{transform_indices = @transform_0, window_bounds = array<i64: 512, 1024>}, {pipeline_mode = #tpu.pipeline_mode<synchronous>, transform_indices = @transform_1, window_bounds = array<i64: 1024, 512>}, {pipeline_mode = #tpu.pipeline_mode<synchronous>, transform_indices = @transform_2, window_bounds = array<i64: 1, 512>}, {pipeline_mode = #tpu.pipeline_mode<synchronous>, transform_indices = @transform_3, window_bounds = array<i64: 512, 512>}, {pipeline_mode = #tpu.pipeline_mode<synchronous>, transform_indices = @transform_4, window_bounds = array<i64: 1, 512>}, {pipeline_mode = #tpu.pipeline_mode<synchronous>, transform_indices = @transform_5, window_bounds = array<i64: 8, 256>}, {pipeline_mode = #tpu.pipeline_mode<synchronous>, transform_indices = @transform_6, window_bounds = array<i64: 8, 1>}, {transform_indices = @transform_7, window_bounds = array<i64: 512, 512>}, {transform_indices = @transform_8, window_bounds = array<i64: 8, 512>}]} {
    %c0 = arith.constant 0 : index
    %c0_0 = arith.constant 0 : index
    %0 = vector.load %arg1[%c0, %c0_0] : memref<512x1024xf32, #tpu.memory_space<vmem>>, vector<512x1024xf32>
    %c0_1 = arith.constant 0 : index
    %c0_2 = arith.constant 0 : index
    %1 = vector.load %arg2[%c0_1, %c0_2] : memref<1024x512xf32, #tpu.memory_space<vmem>>, vector<1024x512xf32>
    %cst = arith.constant dense<0.000000e+00> : vector<512x512xf32>
    %2 = tpu.matmul %0, %1, %cst {dimension_numbers = #tpu.dot_dimension_numbers<[1], [0], [0], [1], [0, 0, 1, 1], [], []>} : vector<512x1024xf32>, vector<1024x512xf32>, vector<512x512xf32> -> vector<512x512xf32>
    %c0_3 = arith.constant 0 : index
    %c0_4 = arith.constant 0 : index
    %3 = vector.load %arg3[%c0_3, %c0_4] : memref<1x512xf32, #tpu.memory_space<vmem>>, vector<1x512xf32>
    %4 = vector.broadcast %3 : vector<1x512xf32> to vector<512x512xf32>
    %5 = arith.addf %2, %4 : vector<512x512xf32>
    %cst_5 = arith.constant 0.000000e+00 : f32
    %6 = vector.broadcast %cst_5 : f32 to vector<512x512xf32>
    %7 = arith.maximumf %5, %6 : vector<512x512xf32>
    %c0_6 = arith.constant 0 : index
    %c0_7 = arith.constant 0 : index
    %8 = vector.load %arg8[%c0_6, %c0_7] : memref<512x512xf32, #tpu.memory_space<vmem>>, vector<512x512xf32>
    tpu.vector_store %arg8[%c0_6, %c0_7], %7 {strides = array<i32>} : memref<512x512xf32, #tpu.memory_space<vmem>>, vector<512x512xf32>,
    %c0_8 = arith.constant 0 : index
    %c0_9 = arith.constant 0 : index
    %9 = vector.load %arg4[%c0_8, %c0_9] : memref<512x512xf32, #tpu.memory_space<vmem>>, vector<512x512xf32>
    %cst_10 = arith.constant dense<0.000000e+00> : vector<512x512xf32>
    %10 = tpu.matmul %7, %9, %cst_10 {dimension_numbers = #tpu.dot_dimension_numbers<[1], [0], [0], [1], [0, 0, 1, 1], [], []>} : vector<512x512xf32>, vector<512x512xf32>, vector<512x512xf32> -> vector<512x512xf32>
    %c0_11 = arith.constant 0 : index
    %c0_12 = arith.constant 0 : index
    %11 = vector.load %arg5[%c0_11, %c0_12] : memref<1x512xf32, #tpu.memory_space<vmem>>, vector<1x512xf32>
    %12 = vector.broadcast %11 : vector<1x512xf32> to vector<512x512xf32>
    %13 = arith.addf %10, %12 : vector<512x512xf32>
    %14 = vector.extract_strided_slice %13 {offsets = [0, 0], sizes = [512, 256], strides = [1, 1]} : vector<512x512xf32> to vector<512x256xf32>
    %15 = math.tanh %14 : vector<512x256xf32>
    %16 = vector.extract_strided_slice %13 {offsets = [0, 256], sizes = [512, 256], strides = [1, 1]} : vector<512x512xf32> to vector<512x256xf32>
    %17 = arith.negf %16 : vector<512x256xf32>
    %18 = math.exp %17 : vector<512x256xf32>
    %cst_13 = arith.constant 1.000000e+00 : f32
    %19 = vector.broadcast %cst_13 : f32 to vector<512x256xf32>
    %20 = arith.addf %19, %18 : vector<512x256xf32>
    %21 = arith.divf %19, %20 : vector<512x256xf32>
    %22 = arith.mulf %15, %21 : vector<512x256xf32>
    %c0_14 = arith.constant 0 : index
    %c0_15 = arith.constant 0 : index
    %23 = vector.load %arg6[%c0_14, %c0_15] : memref<8x256xf32, #tpu.memory_space<vmem>>, vector<8x256xf32>
    %cst_16 = arith.constant dense<0.000000e+00> : vector<8x512xf32>
    %24 = tpu.matmul %23, %22, %cst_16 {dimension_numbers = #tpu.dot_dimension_numbers<[1], [1], [0], [0], [0, 0, 1, 0], [], []>} : vector<8x256xf32>, vector<512x256xf32>, vector<8x512xf32> -> vector<8x512xf32>
    %c0_17 = arith.constant 0 : index
    %c0_18 = arith.constant 0 : index
    %25 = vector.load %arg7[%c0_17, %c0_18] : memref<8x1xf32, #tpu.memory_space<vmem>>, vector<8x1xf32>
    %26 = vector.broadcast %25 : vector<8x1xf32> to vector<8x512xf32>
    %27 = arith.addf %24, %26 : vector<8x512xf32>
    %c0_19 = arith.constant 0 : index
    %c0_20 = arith.constant 0 : index
    %28 = vector.load %arg9[%c0_19, %c0_20] : memref<8x512xf32, #tpu.memory_space<vmem>>, vector<8x512xf32>
    tpu.vector_store %arg9[%c0_19, %c0_20], %27 {strides = array<i32>} : memref<8x512xf32, #tpu.memory_space<vmem>>, vector<8x512xf32>,
    return
  }
  func.func @transform_0(%arg0: i32) -> (i32, i32) {
    %c0_i32 = arith.constant 0 : i32
    %c0_i32_0 = arith.constant 0 : i32
    return %arg0, %c0_i32 : i32, i32
  }
  func.func @transform_1(%arg0: i32) -> (i32, i32) {
    %c0_i32 = arith.constant 0 : i32
    %c0_i32_0 = arith.constant 0 : i32
    %c0_i32_1 = arith.constant 0 : i32
    return %c0_i32, %c0_i32_0 : i32, i32
  }
  func.func @transform_2(%arg0: i32) -> (i32, i32) {
    %c0_i32 = arith.constant 0 : i32
    %c0_i32_0 = arith.constant 0 : i32
    %c0_i32_1 = arith.constant 0 : i32
    return %c0_i32, %c0_i32_0 : i32, i32
  }
  func.func @transform_3(%arg0: i32) -> (i32, i32) {
    %c0_i32 = arith.constant 0 : i32
    %c0_i32_0 = arith.constant 0 : i32
    %c0_i32_1 = arith.constant 0 : i32
    return %c0_i32, %c0_i32_0 : i32, i32
  }
  func.func @transform_4(%arg0: i32) -> (i32, i32) {
    %c0_i32 = arith.constant 0 : i32
    %c0_i32_0 = arith.constant 0 : i32
    %c0_i32_1 = arith.constant 0 : i32
    return %c0_i32, %c0_i32_0 : i32, i32
  }
  func.func @transform_5(%arg0: i32) -> (i32, i32) {
    %c0_i32 = arith.constant 0 : i32
    %c0_i32_0 = arith.constant 0 : i32
    %c0_i32_1 = arith.constant 0 : i32
    return %c0_i32, %c0_i32_0 : i32, i32
  }
  func.func @transform_6(%arg0: i32) -> (i32, i32) {
    %c0_i32 = arith.constant 0 : i32
    %c0_i32_0 = arith.constant 0 : i32
    %c0_i32_1 = arith.constant 0 : i32
    return %c0_i32, %c0_i32_0 : i32, i32
  }
  func.func @transform_7(%arg0: i32) -> (i32, i32) {
    %c0_i32 = arith.constant 0 : i32
    %c0_i32_0 = arith.constant 0 : i32
    return %arg0, %c0_i32 : i32, i32
  }
  func.func @transform_8(%arg0: i32) -> (i32, i32) {
    %c0_i32 = arith.constant 0 : i32
    %c0_i32_0 = arith.constant 0 : i32
    return %c0_i32, %arg0 : i32, i32
  }
}

</mosaic_0001>

<llo_original>
// kernel: tpu_custom_call.1
$region0: #{tpu_custom_call.1}
  #allocation0 [shape = 'u32[]', space=smem, size = 0x4, offset = 0x4, fixed_abs, tag = 'smem constant byte address 0x4 - core index']
  #allocation1 [shape = 'u32[144,128]{1,0:T(1,128)}', space=vmem, size = 0x12000, scoped, tag = 'internal scratch']
  %s0 = inlined_call_operand.hbm [shape: f32[512,1024], index: 0, kind: input, shape index: {}]
  %s1 = inlined_call_operand.hbm [shape: f32[1024,512], index: 1, kind: input, shape index: {}]
  %s2 = inlined_call_operand.hbm [shape: f32[1,512], index: 2, kind: input, shape index: {}]
  %s3 = inlined_call_operand.hbm [shape: f32[512,512], index: 3, kind: input, shape index: {}]
  %s4 = inlined_call_operand.hbm [shape: f32[1,512], index: 4, kind: input, shape index: {}]
  %s5 = inlined_call_operand.hbm [shape: f32[8,256], index: 5, kind: input, shape index: {}]
  %s6 = inlined_call_operand.vmem [shape: f32[8,1], index: 6, kind: input, shape index: {}]
  %s7 = inlined_call_operand.hbm [shape: f32[512,512], index: 7, kind: output, shape index: {0}]
  %s8 = inlined_call_operand.hbm [shape: f32[8,512], index: 8, kind: output, shape index: {1}]
  %9 = xla_tuple %s7, %s8
  %s10 = sld [smem:[#allocation0]]
  $region70: #{tpu_custom_call.1} parent=0
    _
  %s12 = ssub.s32 1, %s10
  %s13 = scalar_select 0, %s12, %s10
  $region1: #{tpu_custom_call.1} parent=0
    #allocation2 [shape = 'u8[2097152]{0}', space=vmem, size = 0x200000, scoped, tag = 'input window, operand 0, single buffered']
    #allocation3 [shape = 's32[1]{0}', space=sflag, size = 0x4, scoped, tag = 'scoped memory for tpu_custom_call.1']
    #allocation4 [shape = 's32[1]{0}', space=sflag, size = 0x4, scoped, tag = 'scoped memory for tpu_custom_call.1']
    #allocation5 [shape = 'u8[2097152]{0}', space=vmem, size = 0x200000, scoped, tag = 'input window, operand 1, single buffered']
    #allocation6 [shape = 's32[1]{0}', space=sflag, size = 0x4, scoped, tag = 'scoped memory for tpu_custom_call.1']
    #allocation7 [shape = 'u8[2048]{0}', space=vmem, size = 0x800, scoped, tag = 'input window, operand 2, single buffered']
    #allocation8 [shape = 'u8[1048576]{0}', space=vmem, size = 0x100000, scoped, tag = 'input window, operand 3, single buffered']
    #allocation9 [shape = 's32[1]{0}', space=sflag, size = 0x4, scoped, tag = 'scoped memory for tpu_custom_call.1']
    #allocation10 [shape = 'u8[2048]{0}', space=vmem, size = 0x800, scoped, tag = 'input window, operand 4, single buffered']
    #allocation11 [shape = 'u8[8192]{0}', space=vmem, size = 0x2000, scoped, tag = 'input window, operand 5, single buffered']
    #allocation12 [shape = 's32[1]{0}', space=sflag, size = 0x4, scoped, tag = 'scoped memory for tpu_custom_call.1']
    #allocation13 [shape = 'u8[1048576]{0}', space=vmem, size = 0x100000, scoped, tag = 'output window, operand 0, single buffered']
    #allocation14 [shape = 'u8[16384]{0}', space=vmem, size = 0x4000, scoped, tag = 'output window, operand 1, single buffered']
    #allocation15 [shape = 's32[1]{0}', space=sflag, size = 0x4, scoped, tag = 'scoped memory for tpu_custom_call.1']
    %14 = vsyncpa [#allocation3], 0
    %15 = vsyncpa [#allocation6], 0
    %16 = vsyncpa [#allocation9], 0
    %17 = vsyncpa [#allocation12], 0
    %18 = vsyncpa [#allocation4], 0
    %19 = vsyncpa [#allocation15], 0
    // Predicated region
    $region2: #{tpu_custom_call.1} parent=1 // pred_check
      _
    $region3: #{tpu_custom_call.1} parent=1 // pred_check_branch
      %21 = sbr.rel (0) target = $region5
    $region4: #{tpu_custom_call.1} parent=1 // pred_region
      %s23 = ssub.s32 65536, 65536
      %24 = vsyncadd [#allocation3], %s23
      %s25 = sshll.u32 [#allocation2], 4
      %s26 = int_to_ptr.vmem [resolvable:$true] %s25
      %31 = dma.hbm_to_vmem [thread:$0]  %s0, 65536, %s26, [#allocation3], 1024, 1024, 64
    $region5: #{tpu_custom_call.1} parent=1 // pred_fallthru
      _
    // Predicated region
    $region6: #{tpu_custom_call.1} parent=1 // pred_check
      _
    $region7: #{tpu_custom_call.1} parent=1 // pred_check_branch
      %33 = sbr.rel (0) target = $region9
    $region8: #{tpu_custom_call.1} parent=1 // pred_region
      %s35 = ssub.s32 65536, 65536
      %36 = vsyncadd [#allocation6], %s35
      %s37 = sshll.u32 [#allocation5], 4
      %s38 = int_to_ptr.vmem [resolvable:$true] %s37
      %43 = dma.hbm_to_vmem [thread:$0]  %s1, 65536, %s38, [#allocation6], 512, 512, 32
    $region9: #{tpu_custom_call.1} parent=1 // pred_fallthru
      _
    // Predicated region
    $region10: #{tpu_custom_call.1} parent=1 // pred_check
      _
    $region11: #{tpu_custom_call.1} parent=1 // pred_check_branch
      %45 = sbr.rel (0) target = $region13
    $region12: #{tpu_custom_call.1} parent=1 // pred_region
      %s47 = ssub.s32 64, 64
      %48 = vsyncadd [#allocation6], %s47
      %s50 = sshll.u32 [#allocation7], 4
      %s51 = int_to_ptr.vmem [resolvable:$true] %s50
      %53 = dma.hbm_to_vmem [thread:$0]  %s2, 64, %s51, [#allocation6]
    $region13: #{tpu_custom_call.1} parent=1 // pred_fallthru
      _
    // Predicated region
    $region14: #{tpu_custom_call.1} parent=1 // pred_check
      _
    $region15: #{tpu_custom_call.1} parent=1 // pred_check_branch
      %55 = sbr.rel (0) target = $region17
    $region16: #{tpu_custom_call.1} parent=1 // pred_region
      %s57 = ssub.s32 32768, 32768
      %58 = vsyncadd [#allocation9], %s57
      %s59 = sshll.u32 [#allocation8], 4
      %s60 = int_to_ptr.vmem [resolvable:$true] %s59
      %65 = dma.hbm_to_vmem [thread:$0]  %s3, 32768, %s60, [#allocation9], 512, 512, 32
    $region17: #{tpu_custom_call.1} parent=1 // pred_fallthru
      _
    // Predicated region
    $region18: #{tpu_custom_call.1} parent=1 // pred_check
      _
    $region19: #{tpu_custom_call.1} parent=1 // pred_check_branch
      %67 = sbr.rel (0) target = $region21
    $region20: #{tpu_custom_call.1} parent=1 // pred_region
      %s69 = ssub.s32 64, 64
      %70 = vsyncadd [#allocation9], %s69
      %s72 = sshll.u32 [#allocation10], 4
      %s73 = int_to_ptr.vmem [resolvable:$true] %s72
      %75 = dma.hbm_to_vmem [thread:$0]  %s4, 64, %s73, [#allocation9]
    $region21: #{tpu_custom_call.1} parent=1 // pred_fallthru
      _
    // Predicated region
    $region22: #{tpu_custom_call.1} parent=1 // pred_check
      _
    $region23: #{tpu_custom_call.1} parent=1 // pred_check_branch
      %77 = sbr.rel (0) target = $region25
    $region24: #{tpu_custom_call.1} parent=1 // pred_region
      %s79 = ssub.s32 256, 256
      %80 = vsyncadd [#allocation12], %s79
      %s82 = sshll.u32 [#allocation11], 4
      %s83 = int_to_ptr.vmem [resolvable:$true] %s82
      %85 = dma.hbm_to_vmem [thread:$0]  %s5, 256, %s83, [#allocation12]
    $region25: #{tpu_custom_call.1} parent=1 // pred_fallthru
      _
    // Predicated region
    $region26: #{tpu_custom_call.1} parent=1 // pred_check
      _
    $region27: #{tpu_custom_call.1} parent=1 // pred_check_branch
      %87 = sbr.rel (0) target = $region29
    $region28: #{tpu_custom_call.1} parent=1 // pred_region
      _
    $region29: #{tpu_custom_call.1} parent=1 // pred_fallthru
      _
    // Predicated region
    $region30: #{tpu_custom_call.1} parent=1 // pred_check
      _
    $region31: #{tpu_custom_call.1} parent=1 // pred_check_branch
      %89 = sbr.rel (0) target = $region33
    $region32: #{tpu_custom_call.1} parent=1 // pred_region
      %90 = dma.done [#allocation3], 65536
    $region33: #{tpu_custom_call.1} parent=1 // pred_fallthru
      _
    // Predicated region
    $region34: #{tpu_custom_call.1} parent=1 // pred_check
      _
    $region35: #{tpu_custom_call.1} parent=1 // pred_check_branch
      %92 = sbr.rel (0) target = $region37
    $region36: #{tpu_custom_call.1} parent=1 // pred_region
      %93 = dma.done [#allocation6], 65536
    $region37: #{tpu_custom_call.1} parent=1 // pred_fallthru
      _
    // Predicated region
    $region38: #{tpu_custom_call.1} parent=1 // pred_check
      _
    $region39: #{tpu_custom_call.1} parent=1 // pred_check_branch
      %95 = sbr.rel (0) target = $region41
    $region40: #{tpu_custom_call.1} parent=1 // pred_region
      %96 = dma.done [#allocation6], 64
    $region41: #{tpu_custom_call.1} parent=1 // pred_fallthru
      _
    // Predicated region
    $region42: #{tpu_custom_call.1} parent=1 // pred_check
      _
    $region43: #{tpu_custom_call.1} parent=1 // pred_check_branch
      %98 = sbr.rel (0) target = $region45
    $region44: #{tpu_custom_call.1} parent=1 // pred_region
      %99 = dma.done [#allocation9], 32768
    $region45: #{tpu_custom_call.1} parent=1 // pred_fallthru
      _
    // Predicated region
    $region46: #{tpu_custom_call.1} parent=1 // pred_check
      _
    $region47: #{tpu_custom_call.1} parent=1 // pred_check_branch
      %101 = sbr.rel (0) target = $region49
    $region48: #{tpu_custom_call.1} parent=1 // pred_region
      %102 = dma.done [#allocation9], 64
    $region49: #{tpu_custom_call.1} parent=1 // pred_fallthru
      _
    // Predicated region
    $region50: #{tpu_custom_call.1} parent=1 // pred_check
      _
    $region51: #{tpu_custom_call.1} parent=1 // pred_check_branch
      %104 = sbr.rel (0) target = $region53
    $region52: #{tpu_custom_call.1} parent=1 // pred_region
      %105 = dma.done [#allocation12], 256
    $region53: #{tpu_custom_call.1} parent=1 // pred_fallthru
      _
    %v106 = vld [vmem:[#allocation2] sm:$0xff]
    %v107 = vld [vmem:[#allocation2 + $0x8] sm:$0xff]
    %v108 = vld [vmem:[#allocation2 + $0x10] sm:$0xff]
    %v109 = vld [vmem:[#allocation2 + $0x18] sm:$0xff]
    %v110 = vld [vmem:[#allocation2 + $0x20] sm:$0xff]
    %v111 = vld [vmem:[#allocation2 + $0x28] sm:$0xff]
    %v112 = vld [vmem:[#allocation2 + $0x30] sm:$0xff]
    %v113 = vld [vmem:[#allocation2 + $0x38] sm:$0xff]
    %v114 = vld [vmem:[#allocation2 + $0x40] sm:$0xff]
    %v115 = vld [vmem:[#allocation2 + $0x48] sm:$0xff]
    %v116 = vld [vmem:[#allocation2 + $0x50] sm:$0xff]
    %v117 = vld [vmem:[#allocation2 + $0x58] sm:$0xff]
    %v118 = vld [vmem:[#allocation2 + $0x60] sm:$0xff]
    %v119 = vld [vmem:[#allocation2 + $0x68] sm:$0xff]
    %v120 = vld [vmem:[#allocation2 + $0x70] sm:$0xff]
    %v121 = vld [vmem:[#allocation2 + $0x78] sm:$0xff]
    %v122 = vld [vmem:[#allocation2 + $0x80] sm:$0xff]
    %v123 = vld [vmem:[#allocation2 + $0x88] sm:$0xff]
    %v124 = vld [vmem:[#allocation2 + $0x90] sm:$0xff]
    %v125 = vld [vmem:[#allocation2 + $0x98] sm:$0xff]
    %v126 = vld [vmem:[#allocation2 + $0xa0] sm:$0xff]
    %v127 = vld [vmem:[#allocation2 + $0xa8] sm:$0xff]
    %v128 = vld [vmem:[#allocation2 + $0xb0] sm:$0xff]
    %v129 = vld [vmem:[#allocation2 + $0xb8] sm:$0xff]
    %v130 = vld [vmem:[#allocation2 + $0xc0] sm:$0xff]
    %v131 = vld [vmem:[#allocation2 + $0xc8] sm:$0xff]
    %v132 = vld [vmem:[#allocation2 + $0xd0] sm:$0xff]
    %v133 = vld [vmem:[#allocation2 + $0xd8] sm:$0xff]
    %v134 = vld [vmem:[#allocation2 + $0xe0] sm:$0xff]
    %v135 = vld [vmem:[#allocation2 + $0xe8] sm:$0xff]
    %v136 = vld [vmem:[#allocation2 + $0xf0] sm:$0xff]
    %v137 = vld [vmem:[#allocation2 + $0xf8] sm:$0xff]
    %v138 = vld [vmem:[#allocation2 + $0x100] sm:$0xff]
    %v139 = vld [vmem:[#allocation2 + $0x108] sm:$0xff]
    %v140 = vld [vmem:[#allocation2 + $0x110] sm:$0xff]
    %v141 = vld [vmem:[#allocation2 + $0x118] sm:$0xff]
    %v142 = vld [vmem:[#allocation2 + $0x120] sm:$0xff]
    %v143 = vld [vmem:[#allocation2 + $0x128] sm:$0xff]
    %v144 = vld [vmem:[#allocation2 + $0x130] sm:$0xff]
    %v145 = vld [vmem:[#allocation2 + $0x138] sm:$0xff]
    %v146 = vld [vmem:[#allocation2 + $0x140] sm:$0xff]
    %v147 = vld [vmem:[#allocation2 + $0x148] sm:$0xff]
    %v148 = vld [vmem:[#allocation2 + $0x150] sm:$0xff]
    %v149 = vld [vmem:[#allocation2 + $0x158] sm:$0xff]
    %v150 = vld [vmem:[#allocation2 + $0x160] sm:$0xff]
    %v151 = vld [vmem:[#allocation2 + $0x168] sm:$0xff]
    %v152 = vld [vmem:[#allocation2 + $0x170] sm:$0xff]
    %v153 = vld [vmem:[#allocation2 + $0x178] sm:$0xff]
    %v154 = vld [vmem:[#allocation2 + $0x180] sm:$0xff]
    %v155 = vld [vmem:[#allocation2 + $0x188] sm:$0xff]
    %v156 = vld [vmem:[#allocation2 + $0x190] sm:$0xff]
    %v157 = vld [vmem:[#allocation2 + $0x198] sm:$0xff]
    %v158 = vld [vmem:[#allocation2 + $0x1a0] sm:$0xff]
    %v159 = vld [vmem:[#allocation2 + $0x1a8] sm:$0xff]
    %v160 = vld [vmem:[#allocation2 + $0x1b0] sm:$0xff]
    %v161 = vld [vmem:[#allocation2 + $0x1b8] sm:$0xff]
    %v162 = vld [vmem:[#allocation2 + $0x1c0] sm:$0xff]
    %v163 = vld [vmem:[#allocation2 + $0x1c8] sm:$0xff]
    %v164 = vld [vmem:[#allocation2 + $0x1d0] sm:$0xff]
    %v165 = vld [vmem:[#allocation2 + $0x1d8] sm:$0xff]
    %v166 = vld [vmem:[#allocation2 + $0x1e0] sm:$0xff]
    %v167 = vld [vmem:[#allocation2 + $0x1e8] sm:$0xff]
    %v168 = vld [vmem:[#allocation2 + $0x1f0] sm:$0xff]
    %v169 = vld [vmem:[#allocation2 + $0x1f8] sm:$0xff]
    %v170 = vld [vmem:[#allocation2 + $0x200] sm:$0xff]
    %v171 = vld [vmem:[#allocation2 + $0x208] sm:$0xff]
    %v172 = vld [vmem:[#allocation2 + $0x210] sm:$0xff]
    %v173 = vld [vmem:[#allocation2 + $0x218] sm:$0xff]
    %v174 = vld [vmem:[#allocation2 + $0x220] sm:$0xff]
    %v175 = vld [vmem:[#allocation2 + $0x228] sm:$0xff]
    %v176 = vld [vmem:[#allocation2 + $0x230] sm:$0xff]
    %v177 = vld [vmem:[#allocation2 + $0x238] sm:$0xff]
    %v178 = vld [vmem:[#allocation2 + $0x240] sm:$0xff]
    %v179 = vld [vmem:[#allocation2 + $0x248] sm:$0xff]
    %v180 = vld [vmem:[#allocation2 + $0x250] sm:$0xff]
    %v181 = vld [vmem:[#allocation2 + $0x258] sm:$0xff]
    %v182 = vld [vmem:[#allocation2 + $0x260] sm:$0xff]
    %v183 = vld [vmem:[#allocation2 + $0x268] sm:$0xff]
    %v184 = vld [vmem:[#allocation2 + $0x270] sm:$0xff]
    %v185 = vld [vmem:[#allocation2 + $0x278] sm:$0xff]
    %v186 = vld [vmem:[#allocation2 + $0x280] sm:$0xff]
    %v187 = vld [vmem:[#allocation2 + $0x288] sm:$0xff]
    %v188 = vld [vmem:[#allocation2 + $0x290] sm:$0xff]
    %v189 = vld [vmem:[#allocation2 + $0x298] sm:$0xff]
    %v190 = vld [vmem:[#allocation2 + $0x2a0] sm:$0xff]
    %v191 = vld [vmem:[#allocation2 + $0x2a8] sm:$0xff]
    %v192 = vld [vmem:[#allocation2 + $0x2b0] sm:$0xff]
    %v193 = vld [vmem:[#allocation2 + $0x2b8] sm:$0xff]
    %v194 = vld [vmem:[#allocation2 + $0x2c0] sm:$0xff]
    %v195 = vld [vmem:[#allocation2 + $0x2c8] sm:$0xff]
    %v196 = vld [vmem:[#allocation2 + $0x2d0] sm:$0xff]
    %v197 = vld [vmem:[#allocation2 + $0x2d8] sm:$0xff]
    %v198 = vld [vmem:[#allocation2 + $0x2e0] sm:$0xff]
    %v199 = vld [vmem:[#allocation2 + $0x2e8] sm:$0xff]
    %v200 = vld [vmem:[#allocation2 + $0x2f0] sm:$0xff]
    %v201 = vld [vmem:[#allocation2 + $0x2f8] sm:$0xff]
    %v202 = vld [vmem:[#allocation2 + $0x300] sm:$0xff]
    %v203 = vld [vmem:[#allocation2 + $0x308] sm:$0xff]
    %v204 = vld [vmem:[#allocation2 + $0x310] sm:$0xff]
    %v205 = vld [vmem:[#allocation2 + $0x318] sm:$0xff]
    %v206 = vld [vmem:[#allocation2 + $0x320] sm:$0xff]
    %v207 = vld [vmem:[#allocation2 + $0x328] sm:$0xff]
    %v208 = vld [vmem:[#allocation2 + $0x330] sm:$0xff]
    %v209 = vld [vmem:[#allocation2 + $0x338] sm:$0xff]
    %v210 = vld [vmem:[#allocation2 + $0x340] sm:$0xff]
    %v211 = vld [vmem:[#allocation2 + $0x348] sm:$0xff]
    %v212 = vld [vmem:[#allocation2 + $0x350] sm:$0xff]
    %v213 = vld [vmem:[#allocation2 + $0x358] sm:$0xff]
    %v214 = vld [vmem:[#allocation2 + $0x360] sm:$0xff]
    %v215 = vld [vmem:[#allocation2 + $0x368] sm:$0xff]
    %v216 = vld [vmem:[#allocation2 + $0x370] sm:$0xff]
    %v217 = vld [vmem:[#allocation2 + $0x378] sm:$0xff]
    %v218 = vld [vmem:[#allocation2 + $0x380] sm:$0xff]
    %v219 = vld [vmem:[#allocation2 + $0x388] sm:$0xff]
    %v220 = vld [vmem:[#allocation2 + $0x390] sm:$0xff]
    %v221 = vld [vmem:[#allocation2 + $0x398] sm:$0xff]
    %v222 = vld [vmem:[#allocation2 + $0x3a0] sm:$0xff]
    %v223 = vld [vmem:[#allocation2 + $0x3a8] sm:$0xff]
    %v224 = vld [vmem:[#allocation2 + $0x3b0] sm:$0xff]
    %v225 = vld [vmem:[#allocation2 + $0x3b8] sm:$0xff]
    %v226 = vld [vmem:[#allocation2 + $0x3c0] sm:$0xff]
    %v227 = vld [vmem:[#allocation2 + $0x3c8] sm:$0xff]
    %v228 = vld [vmem:[#allocation2 + $0x3d0] sm:$0xff]
    %v229 = vld [vmem:[#allocation2 + $0x3d8] sm:$0xff]
    %v230 = vld [vmem:[#allocation2 + $0x3e0] sm:$0xff]
    %v231 = vld [vmem:[#allocation2 + $0x3e8] sm:$0xff]
    %v232 = vld [vmem:[#allocation2 + $0x3f0] sm:$0xff]
    %v233 = vld [vmem:[#allocation2 + $0x3f8] sm:$0xff]
    %v234 = vld [vmem:[#allocation2 + $0x400] sm:$0xff]
    %v235 = vld [vmem:[#allocation2 + $0x408] sm:$0xff]
    %v236 = vld [vmem:[#allocation2 + $0x410] sm:$0xff]
    %v237 = vld [vmem:[#allocation2 + $0x418] sm:$0xff]
    %v238 = vld [vmem:[#allocation2 + $0x420] sm:$0xff]
    %v239 = vld [vmem:[#allocation2 + $0x428] sm:$0xff]
    %v240 = vld [vmem:[#allocation2 + $0x430] sm:$0xff]
    %v241 = vld [vmem:[#allocation2 + $0x438] sm:$0xff]
    %v242 = vld [vmem:[#allocation2 + $0x440] sm:$0xff]
    %v243 = vld [vmem:[#allocation2 + $0x448] sm:$0xff]
    %v244 = vld [vmem:[#allocation2 + $0x450] sm:$0xff]
    %v245 = vld [vmem:[#allocation2 + $0x458] sm:$0xff]
    %v246 = vld [vmem:[#allocation2 + $0x460] sm:$0xff]
    %v247 = vld [vmem:[#allocation2 + $0x468] sm:$0xff]
    %v248 = vld [vmem:[#allocation2 + $0x470] sm:$0xff]
    %v249 = vld [vmem:[#allocation2 + $0x478] sm:$0xff]
    %v250 = vld [vmem:[#allocation2 + $0x480] sm:$0xff]
    %v251 = vld [vmem:[#allocation2 + $0x488] sm:$0xff]
    %v252 = vld [vmem:[#allocation2 + $0x490] sm:$0xff]
    %v253 = vld [vmem:[#allocation2 + $0x498] sm:$0xff]
    %v254 = vld [vmem:[#allocation2 + $0x4a0] sm:$0xff]
    %v255 = vld [vmem:[#allocation2 + $0x4a8] sm:$0xff]
    %v256 = vld [vmem:[#allocation2 + $0x4b0] sm:$0xff]
    %v257 = vld [vmem:[#allocation2 + $0x4b8] sm:$0xff]
    %v258 = vld [vmem:[#allocation2 + $0x4c0] sm:$0xff]
    %v259 = vld [vmem:[#allocation2 + $0x4c8] sm:$0xff]
    %v260 = vld [vmem:[#allocation2 + $0x4d0] sm:$0xff]
    %v261 = vld [vmem:[#allocation2 + $0x4d8] sm:$0xff]
    %v262 = vld [vmem:[#allocation2 + $0x4e0] sm:$0xff]
    %v263 = vld [vmem:[#allocation2 + $0x4e8] sm:$0xff]
    %v264 = vld [vmem:[#allocation2 + $0x4f0] sm:$0xff]
    %v265 = vld [vmem:[#allocation2 + $0x4f8] sm:$0xff]
    %v266 = vld [vmem:[#allocation2 + $0x500] sm:$0xff]
    %v267 = vld [vmem:[#allocation2 + $0x508] sm:$0xff]
    %v268 = vld [vmem:[#allocation2 + $0x510] sm:$0xff]
    %v269 = vld [vmem:[#allocation2 + $0x518] sm:$0xff]
    %v270 = vld [vmem:[#allocation2 + $0x520] sm:$0xff]
    %v271 = vld [vmem:[#allocation2 + $0x528] sm:$0xff]
    %v272 = vld [vmem:[#allocation2 + $0x530] sm:$0xff]
    %v273 = vld [vmem:[#allocation2 + $0x538] sm:$0xff]
    %v274 = vld [vmem:[#allocation2 + $0x540] sm:$0xff]
    %v275 = vld [vmem:[#allocation2 + $0x548] sm:$0xff]
    %v276 = vld [vmem:[#allocation2 + $0x550] sm:$0xff]
    %v277 = vld [vmem:[#allocation2 + $0x558] sm:$0xff]
    %v278 = vld [vmem:[#allocation2 + $0x560] sm:$0xff]
    %v279 = vld [vmem:[#allocation2 + $0x568] sm:$0xff]
    %v280 = vld [vmem:[#allocation2 + $0x570] sm:$0xff]
    %v281 = vld [vmem:[#allocation2 + $0x578] sm:$0xff]
    %v282 = vld [vmem:[#allocation2 + $0x580] sm:$0xff]
    %v283 = vld [vmem:[#allocation2 + $0x588] sm:$0xff]
    %v284 = vld [vmem:[#allocation2 + $0x590] sm:$0xff]
    %v285 = vld [vmem:[#allocation2 + $0x598] sm:$0xff]
    %v286 = vld [vmem:[#allocation2 + $0x5a0] sm:$0xff]
    %v287 = vld [vmem:[#allocation2 + $0x5a8] sm:$0xff]
    %v288 = vld [vmem:[#allocation2 + $0x5b0] sm:$0xff]
    %v289 = vld [vmem:[#allocation2 + $0x5b8] sm:$0xff]
    %v290 = vld [vmem:[#allocation2 + $0x5c0] sm:$0xff]
    %v291 = vld [vmem:[#allocation2 + $0x5c8] sm:$0xff]
    %v292 = vld [vmem:[#allocation2 + $0x5d0] sm:$0xff]
    %v293 = vld [vmem:[#allocation2 + $0x5d8] sm:$0xff]
    %v294 = vld [vmem:[#allocation2 + $0x5e0] sm:$0xff]
    %v295 = vld [vmem:[#allocation2 + $0x5e8] sm:$0xff]
    %v296 = vld [vmem:[#allocation2 + $0x5f0] sm:$0xff]
    %v297 = vld [vmem:[#allocation2 + $0x5f8] sm:$0xff]
    %v298 = vld [vmem:[#allocation2 + $0x600] sm:$0xff]
    %v299 = vld [vmem:[#allocation2 + $0x608] sm:$0xff]
    %v300 = vld [vmem:[#allocation2 + $0x610] sm:$0xff]
    %v301 = vld [vmem:[#allocation2 + $0x618] sm:$0xff]
    %v302 = vld [vmem:[#allocation2 + $0x620] sm:$0xff]
    %v303 = vld [vmem:[#allocation2 + $0x628] sm:$0xff]
    %v304 = vld [vmem:[#allocation2 + $0x630] sm:$0xff]
    %v305 = vld [vmem:[#allocation2 + $0x638] sm:$0xff]
    %v306 = vld [vmem:[#allocation2 + $0x640] sm:$0xff]
    %v307 = vld [vmem:[#allocation2 + $0x648] sm:$0xff]
    %v308 = vld [vmem:[#allocation2 + $0x650] sm:$0xff]
    %v309 = vld [vmem:[#allocation2 + $0x658] sm:$0xff]
    %v310 = vld [vmem:[#allocation2 + $0x660] sm:$0xff]
    %v311 = vld [vmem:[#allocation2 + $0x668] sm:$0xff]
    %v312 = vld [vmem:[#allocation2 + $0x670] sm:$0xff]
    %v313 = vld [vmem:[#allocation2 + $0x678] sm:$0xff]
    %v314 = vld [vmem:[#allocation2 + $0x680] sm:$0xff]
    %v315 = vld [vmem:[#allocation2 + $0x688] sm:$0xff]
    %v316 = vld [vmem:[#allocation2 + $0x690] sm:$0xff]
    %v317 = vld [vmem:[#allocation2 + $0x698] sm:$0xff]
    %v318 = vld [vmem:[#allocation2 + $0x6a0] sm:$0xff]
    %v319 = vld [vmem:[#allocation2 + $0x6a8] sm:$0xff]
    %v320 = vld [vmem:[#allocation2 + $0x6b0] sm:$0xff]
    %v321 = vld [vmem:[#allocation2 + $0x6b8] sm:$0xff]
    %v322 = vld [vmem:[#allocation2 + $0x6c0] sm:$0xff]
    %v323 = vld [vmem:[#allocation2 + $0x6c8] sm:$0xff]
    %v324 = vld [vmem:[#allocation2 + $0x6d0] sm:$0xff]
    %v325 = vld [vmem:[#allocation2 + $0x6d8] sm:$0xff]
    %v326 = vld [vmem:[#allocation2 + $0x6e0] sm:$0xff]
    %v327 = vld [vmem:[#allocation2 + $0x6e8] sm:$0xff]
    %v328 = vld [vmem:[#allocation2 + $0x6f0] sm:$0xff]
    %v329 = vld [vmem:[#allocation2 + $0x6f8] sm:$0xff]
    %v330 = vld [vmem:[#allocation2 + $0x700] sm:$0xff]
    %v331 = vld [vmem:[#allocation2 + $0x708] sm:$0xff]
    %v332 = vld [vmem:[#allocation2 + $0x710] sm:$0xff]
    %v333 = vld [vmem:[#allocation2 + $0x718] sm:$0xff]
    %v334 = vld [vmem:[#allocation2 + $0x720] sm:$0xff]
    %v335 = vld [vmem:[#allocation2 + $0x728] sm:$0xff]
    %v336 = vld [vmem:[#allocation2 + $0x730] sm:$0xff]
    %v337 = vld [vmem:[#allocation2 + $0x738] sm:$0xff]
    %v338 = vld [vmem:[#allocation2 + $0x740] sm:$0xff]
    %v339 = vld [vmem:[#allocation2 + $0x748] sm:$0xff]
    %v340 = vld [vmem:[#allocation2 + $0x750] sm:$0xff]
    %v341 = vld [vmem:[#allocation2 + $0x758] sm:$0xff]
    %v342 = vld [vmem:[#allocation2 + $0x760] sm:$0xff]
    %v343 = vld [vmem:[#allocation2 + $0x768] sm:$0xff]
    %v344 = vld [vmem:[#allocation2 + $0x770] sm:$0xff]
    %v345 = vld [vmem:[#allocation2 + $0x778] sm:$0xff]
    %v346 = vld [vmem:[#allocation2 + $0x780] sm:$0xff]
    %v347 = vld [vmem:[#allocation2 + $0x788] sm:$0xff]
    %v348 = vld [vmem:[#allocation2 + $0x790] sm:$0xff]
    %v349 = vld [vmem:[#allocation2 + $0x798] sm:$0xff]
    %v350 = vld [vmem:[#allocation2 + $0x7a0] sm:$0xff]
    %v351 = vld [vmem:[#allocation2 + $0x7a8] sm:$0xff]
    %v352 = vld [vmem:[#allocation2 + $0x7b0] sm:$0xff]
    %v353 = vld [vmem:[#allocation2 + $0x7b8] sm:$0xff]
    %v354 = vld [vmem:[#allocation2 + $0x7c0] sm:$0xff]
    %v355 = vld [vmem:[#allocation2 + $0x7c8] sm:$0xff]
    %v356 = vld [vmem:[#allocation2 + $0x7d0] sm:$0xff]
    %v357 = vld [vmem:[#allocation2 + $0x7d8] sm:$0xff]
    %v358 = vld [vmem:[#allocation2 + $0x7e0] sm:$0xff]
    %v359 = vld [vmem:[#allocation2 + $0x7e8] sm:$0xff]
    %v360 = vld [vmem:[#allocation2 + $0x7f0] sm:$0xff]
    %v361 = vld [vmem:[#allocation2 + $0x7f8] sm:$0xff]
    %v362 = vld [vmem:[#allocation2 + $0x800] sm:$0xff]
    %v363 = vld [vmem:[#allocation2 + $0x808] sm:$0xff]
    %v364 = vld [vmem:[#allocation2 + $0x810] sm:$0xff]
    %v365 = vld [vmem:[#allocation2 + $0x818] sm:$0xff]
    %v366 = vld [vmem:[#allocation2 + $0x820] sm:$0xff]
    %v367 = vld [vmem:[#allocation2 + $0x828] sm:$0xff]
    %v368 = vld [vmem:[#allocation2 + $0x830] sm:$0xff]
    %v369 = vld [vmem:[#allocation2 + $0x838] sm:$0xff]
    %v370 = vld [vmem:[#allocation2 + $0x840] sm:$0xff]
    %v371 = vld [vmem:[#allocation2 + $0x848] sm:$0xff]
    %v372 = vld [vmem:[#allocation2 + $0x850] sm:$0xff]
    %v373 = vld [vmem:[#allocation2 + $0x858] sm:$0xff]
    %v374 = vld [vmem:[#allocation2 + $0x860] sm:$0xff]
    %v375 = vld [vmem:[#allocation2 + $0x868] sm:$0xff]
    %v376 = vld [vmem:[#allocation2 + $0x870] sm:$0xff]
    %v377 = vld [vmem:[#allocation2 + $0x878] sm:$0xff]
    %v378 = vld [vmem:[#allocation2 + $0x880] sm:$0xff]
    %v379 = vld [vmem:[#allocation2 + $0x888] sm:$0xff]
    %v380 = vld [vmem:[#allocation2 + $0x890] sm:$0xff]
    %v381 = vld [vmem:[#allocation2 + $0x898] sm:$0xff]
    %v382 = vld [vmem:[#allocation2 + $0x8a0] sm:$0xff]
    %v383 = vld [vmem:[#allocation2 + $0x8a8] sm:$0xff]
    %v384 = vld [vmem:[#allocation2 + $0x8b0] sm:$0xff]
    %v385 = vld [vmem:[#allocation2 + $0x8b8] sm:$0xff]
    %v386 = vld [vmem:[#allocation2 + $0x8c0] sm:$0xff]
    %v387 = vld [vmem:[#allocation2 + $0x8c8] sm:$0xff]
    %v388 = vld [vmem:[#allocation2 + $0x8d0] sm:$0xff]
    %v389 = vld [vmem:[#allocation2 + $0x8d8] sm:$0xff]
    %v390 = vld [vmem:[#allocation2 + $0x8e0] sm:$0xff]
    %v391 = vld [vmem:[#allocation2 + $0x8e8] sm:$0xff]
    %v392 = vld [vmem:[#allocation2 + $0x8f0] sm:$0xff]
    %v393 = vld [vmem:[#allocation2 + $0x8f8] sm:$0xff]
    %v394 = vld [vmem:[#allocation2 + $0x900] sm:$0xff]
    %v395 = vld [vmem:[#allocation2 + $0x908] sm:$0xff]
    %v396 = vld [vmem:[#allocation2 + $0x910] sm:$0xff]
    %v397 = vld [vmem:[#allocation2 + $0x918] sm:$0xff]
    %v398 = vld [vmem:[#allocation2 + $0x920] sm:$0xff]
    %v399 = vld [vmem:[#allocation2 + $0x928] sm:$0xff]
    %v400 = vld [vmem:[#allocation2 + $0x930] sm:$0xff]
    %v401 = vld [vmem:[#allocation2 + $0x938] sm:$0xff]
    %v402 = vld [vmem:[#allocation2 + $0x940] sm:$0xff]
    %v403 = vld [vmem:[#allocation2 + $0x948] sm:$0xff]
    %v404 = vld [vmem:[#allocation2 + $0x950] sm:$0xff]
    %v405 = vld [vmem:[#allocation2 + $0x958] sm:$0xff]
    %v406 = vld [vmem:[#allocation2 + $0x960] sm:$0xff]
    %v407 = vld [vmem:[#allocation2 + $0x968] sm:$0xff]
    %v408 = vld [vmem:[#allocation2 + $0x970] sm:$0xff]
    %v409 = vld [vmem:[#allocation2 + $0x978] sm:$0xff]
    %v410 = vld [vmem:[#allocation2 + $0x980] sm:$0xff]
    %v411 = vld [vmem:[#allocation2 + $0x988] sm:$0xff]
    %v412 = vld [vmem:[#allocation2 + $0x990] sm:$0xff]
    %v413 = vld [vmem:[#allocation2 + $0x998] sm:$0xff]
    %v414 = vld [vmem:[#allocation2 + $0x9a0] sm:$0xff]
    %v415 = vld [vmem:[#allocation2 + $0x9a8] sm:$0xff]
    %v416 = vld [vmem:[#allocation2 + $0x9b0] sm:$0xff]
    %v417 = vld [vmem:[#allocation2 + $0x9b8] sm:$0xff]
    %v418 = vld [vmem:[#allocation2 + $0x9c0] sm:$0xff]
    %v419 = vld [vmem:[#allocation2 + $0x9c8] sm:$0xff]
    %v420 = vld [vmem:[#allocation2 + $0x9d0] sm:$0xff]
    %v421 = vld [vmem:[#allocation2 + $0x9d8] sm:$0xff]
    %v422 = vld [vmem:[#allocation2 + $0x9e0] sm:$0xff]
    %v423 = vld [vmem:[#allocation2 + $0x9e8] sm:$0xff]
    %v424 = vld [vmem:[#allocation2 + $0x9f0] sm:$0xff]
    %v425 = vld [vmem:[#allocation2 + $0x9f8] sm:$0xff]
    %v426 = vld [vmem:[#allocation2 + $0xa00] sm:$0xff]
    %v427 = vld [vmem:[#allocation2 + $0xa08] sm:$0xff]
    %v428 = vld [vmem:[#allocation2 + $0xa10] sm:$0xff]
    %v429 = vld [vmem:[#allocation2 + $0xa18] sm:$0xff]
    %v430 = vld [vmem:[#allocation2 + $0xa20] sm:$0xff]
    %v431 = vld [vmem:[#allocation2 + $0xa28] sm:$0xff]
    %v432 = vld [vmem:[#allocation2 + $0xa30] sm:$0xff]
    %v433 = vld [vmem:[#allocation2 + $0xa38] sm:$0xff]
    %v434 = vld [vmem:[#allocation2 + $0xa40] sm:$0xff]
    %v435 = vld [vmem:[#allocation2 + $0xa48] sm:$0xff]
    %v436 = vld [vmem:[#allocation2 + $0xa50] sm:$0xff]
    %v437 = vld [vmem:[#allocation2 + $0xa58] sm:$0xff]
    %v438 = vld [vmem:[#allocation2 + $0xa60] sm:$0xff]
    %v439 = vld [vmem:[#allocation2 + $0xa68] sm:$0xff]
    %v440 = vld [vmem:[#allocation2 + $0xa70] sm:$0xff]
    %v441 = vld [vmem:[#allocation2 + $0xa78] sm:$0xff]
    %v442 = vld [vmem:[#allocation2 + $0xa80] sm:$0xff]
    %v443 = vld [vmem:[#allocation2 + $0xa88] sm:$0xff]
    %v444 = vld [vmem:[#allocation2 + $0xa90] sm:$0xff]
    %v445 = vld [vmem:[#allocation2 + $0xa98] sm:$0xff]
    %v446 = vld [vmem:[#allocation2 + $0xaa0] sm:$0xff]
    %v447 = vld [vmem:[#allocation2 + $0xaa8] sm:$0xff]
    %v448 = vld [vmem:[#allocation2 + $0xab0] sm:$0xff]
    %v449 = vld [vmem:[#allocation2 + $0xab8] sm:$0xff]
    %v450 = vld [vmem:[#allocation2 + $0xac0] sm:$0xff]
    %v451 = vld [vmem:[#allocation2 + $0xac8] sm:$0xff]
    %v452 = vld [vmem:[#allocation2 + $0xad0] sm:$0xff]
    %v453 = vld [vmem:[#allocation2 + $0xad8] sm:$0xff]
    %v454 = vld [vmem:[#allocation2 + $0xae0] sm:$0xff]
    %v455 = vld [vmem:[#allocation2 + $0xae8] sm:$0xff]
    %v456 = vld [vmem:[#allocation2 + $0xaf0] sm:$0xff]
    %v457 = vld [vmem:[#allocation2 + $0xaf8] sm:$0xff]
    %v458 = vld [vmem:[#allocation2 + $0xb00] sm:$0xff]
    %v459 = vld [vmem:[#allocation2 + $0xb08] sm:$0xff]
    %v460 = vld [vmem:[#allocation2 + $0xb10] sm:$0xff]
    %v461 = vld [vmem:[#allocation2 + $0xb18] sm:$0xff]
    %v462 = vld [vmem:[#allocation2 + $0xb20] sm:$0xff]
    %v463 = vld [vmem:[#allocation2 + $0xb28] sm:$0xff]
    %v464 = vld [vmem:[#allocation2 + $0xb30] sm:$0xff]
    %v465 = vld [vmem:[#allocation2 + $0xb38] sm:$0xff]
    %v466 = vld [vmem:[#allocation2 + $0xb40] sm:$0xff]
    %v467 = vld [vmem:[#allocation2 + $0xb48] sm:$0xff]
    %v468 = vld [vmem:[#allocation2 + $0xb50] sm:$0xff]
    %v469 = vld [vmem:[#allocation2 + $0xb58] sm:$0xff]
    %v470 = vld [vmem:[#allocation2 + $0xb60] sm:$0xff]
    %v471 = vld [vmem:[#allocation2 + $0xb68] sm:$0xff]
    %v472 = vld [vmem:[#allocation2 + $0xb70] sm:$0xff]
    %v473 = vld [vmem:[#allocation2 + $0xb78] sm:$0xff]
    %v474 = vld [vmem:[#allocation2 + $0xb80] sm:$0xff]
    %v475 = vld [vmem:[#allocation2 + $0xb88] sm:$0xff]
    %v476 = vld [vmem:[#allocation2 + $0xb90] sm:$0xff]
    %v477 = vld [vmem:[#allocation2 + $0xb98] sm:$0xff]
    %v478 = vld [vmem:[#allocation2 + $0xba0] sm:$0xff]
    %v479 = vld [vmem:[#allocation2 + $0xba8] sm:$0xff]
    %v480 = vld [vmem:[#allocation2 + $0xbb0] sm:$0xff]
    %v481 = vld [vmem:[#allocation2 + $0xbb8] sm:$0xff]
    %v482 = vld [vmem:[#allocation2 + $0xbc0] sm:$0xff]
    %v483 = vld [vmem:[#allocation2 + $0xbc8] sm:$0xff]
    %v484 = vld [vmem:[#allocation2 + $0xbd0] sm:$0xff]
    %v485 = vld [vmem:[#allocation2 + $0xbd8] sm:$0xff]
    %v486 = vld [vmem:[#allocation2 + $0xbe0] sm:$0xff]
    %v487 = vld [vmem:[#allocation2 + $0xbe8] sm:$0xff]
    %v488 = vld [vmem:[#allocation2 + $0xbf0] sm:$0xff]
    %v489 = vld [vmem:[#allocation2 + $0xbf8] sm:$0xff]
    %v490 = vld [vmem:[#allocation2 + $0xc00] sm:$0xff]
    %v491 = vld [vmem:[#allocation2 + $0xc08] sm:$0xff]
    %v492 = vld [vmem:[#allocation2 + $0xc10] sm:$0xff]
    %v493 = vld [vmem:[#allocation2 + $0xc18] sm:$0xff]
    %v494 = vld [vmem:[#allocation2 + $0xc20] sm:$0xff]
    %v495 = vld [vmem:[#allocation2 + $0xc28] sm:$0xff]
    %v496 = vld [vmem:[#allocation2 + $0xc30] sm:$0xff]
    %v497 = vld [vmem:[#allocation2 + $0xc38] sm:$0xff]
    %v498 = vld [vmem:[#allocation2 + $0xc40] sm:$0xff]
    %v499 = vld [vmem:[#allocation2 + $0xc48] sm:$0xff]
    %v500 = vld [vmem:[#allocation2 + $0xc50] sm:$0xff]
    %v501 = vld [vmem:[#allocation2 + $0xc58] sm:$0xff]
    %v502 = vld [vmem:[#allocation2 + $0xc60] sm:$0xff]
    %v503 = vld [vmem:[#allocation2 + $0xc68] sm:$0xff]
    %v504 = vld [vmem:[#allocation2 + $0xc70] sm:$0xff]
    %v505 = vld [vmem:[#allocation2 + $0xc78] sm:$0xff]
    %v506 = vld [vmem:[#allocation2 + $0xc80] sm:$0xff]
    %v507 = vld [vmem:[#allocation2 + $0xc88] sm:$0xff]
    %v508 = vld [vmem:[#allocation2 + $0xc90] sm:$0xff]
    %v509 = vld [vmem:[#allocation2 + $0xc98] sm:$0xff]
    %v510 = vld [vmem:[#allocation2 + $0xca0] sm:$0xff]
    %v511 = vld [vmem:[#allocation2 + $0xca8] sm:$0xff]
    %v512 = vld [vmem:[#allocation2 + $0xcb0] sm:$0xff]
    %v513 = vld [vmem:[#allocation2 + $0xcb8] sm:$0xff]
    %v514 = vld [vmem:[#allocation2 + $0xcc0] sm:$0xff]
    %v515 = vld [vmem:[#allocation2 + $0xcc8] sm:$0xff]
    %v516 = vld [vmem:[#allocation2 + $0xcd0] sm:$0xff]
    %v517 = vld [vmem:[#allocation2 + $0xcd8] sm:$0xff]
    %v518 = vld [vmem:[#allocation2 + $0xce0] sm:$0xff]
    %v519 = vld [vmem:[#allocation2 + $0xce8] sm:$0xff]
    %v520 = vld [vmem:[#allocation2 + $0xcf0] sm:$0xff]
    %v521 = vld [vmem:[#allocation2 + $0xcf8] sm:$0xff]
    %v522 = vld [vmem:[#allocation2 + $0xd00] sm:$0xff]
    %v523 = vld [vmem:[#allocation2 + $0xd08] sm:$0xff]
    %v524 = vld [vmem:[#allocation2 + $0xd10] sm:$0xff]
    %v525 = vld [vmem:[#allocation2 + $0xd18] sm:$0xff]
    %v526 = vld [vmem:[#allocation2 + $0xd20] sm:$0xff]
    %v527 = vld [vmem:[#allocation2 + $0xd28] sm:$0xff]
    %v528 = vld [vmem:[#allocation2 + $0xd30] sm:$0xff]
    %v529 = vld [vmem:[#allocation2 + $0xd38] sm:$0xff]
    %v530 = vld [vmem:[#allocation2 + $0xd40] sm:$0xff]
    %v531 = vld [vmem:[#allocation2 + $0xd48] sm:$0xff]
    %v532 = vld [vmem:[#allocation2 + $0xd50] sm:$0xff]
    %v533 = vld [vmem:[#allocation2 + $0xd58] sm:$0xff]
    %v534 = vld [vmem:[#allocation2 + $0xd60] sm:$0xff]
    %v535 = vld [vmem:[#allocation2 + $0xd68] sm:$0xff]
    %v536 = vld [vmem:[#allocation2 + $0xd70] sm:$0xff]
    %v537 = vld [vmem:[#allocation2 + $0xd78] sm:$0xff]
    %v538 = vld [vmem:[#allocation2 + $0xd80] sm:$0xff]
    %v539 = vld [vmem:[#allocation2 + $0xd88] sm:$0xff]
    %v540 = vld [vmem:[#allocation2 + $0xd90] sm:$0xff]
    %v541 = vld [vmem:[#allocation2 + $0xd98] sm:$0xff]
    %v542 = vld [vmem:[#allocation2 + $0xda0] sm:$0xff]
    %v543 = vld [vmem:[#allocation2 + $0xda8] sm:$0xff]
    %v544 = vld [vmem:[#allocation2 + $0xdb0] sm:$0xff]
    %v545 = vld [vmem:[#allocation2 + $0xdb8] sm:$0xff]
    %v546 = vld [vmem:[#allocation2 + $0xdc0] sm:$0xff]
    %v547 = vld [vmem:[#allocation2 + $0xdc8] sm:$0xff]
    %v548 = vld [vmem:[#allocation2 + $0xdd0] sm:$0xff]
    %v549 = vld [vmem:[#allocation2 + $0xdd8] sm:$0xff]
    %v550 = vld [vmem:[#allocation2 + $0xde0] sm:$0xff]
    %v551 = vld [vmem:[#allocation2 + $0xde8] sm:$0xff]
    %v552 = vld [vmem:[#allocation2 + $0xdf0] sm:$0xff]
    %v553 = vld [vmem:[#allocation2 + $0xdf8] sm:$0xff]
    %v554 = vld [vmem:[#allocation2 + $0xe00] sm:$0xff]
    %v555 = vld [vmem:[#allocation2 + $0xe08] sm:$0xff]
    %v556 = vld [vmem:[#allocation2 + $0xe10] sm:$0xff]
    %v557 = vld [vmem:[#allocation2 + $0xe18] sm:$0xff]
    %v558 = vld [vmem:[#allocation2 + $0xe20] sm:$0xff]
    %v559 = vld [vmem:[#allocation2 + $0xe28] sm:$0xff]
    %v560 = vld [vmem:[#allocation2 + $0xe30] sm:$0xff]
    %v561 = vld [vmem:[#allocation2 + $0xe38] sm:$0xff]
    %v562 = vld [vmem:[#allocation2 + $0xe40] sm:$0xff]
    %v563 = vld [vmem:[#allocation2 + $0xe48] sm:$0xff]
    %v564 = vld [vmem:[#allocation2 + $0xe50] sm:$0xff]
    %v565 = vld [vmem:[#allocation2 + $0xe58] sm:$0xff]
    %v566 = vld [vmem:[#allocation2 + $0xe60] sm:$0xff]
    %v567 = vld [vmem:[#allocation2 + $0xe68] sm:$0xff]
    %v568 = vld [vmem:[#allocation2 + $0xe70] sm:$0xff]
    %v569 = vld [vmem:[#allocation2 + $0xe78] sm:$0xff]
    %v570 = vld [vmem:[#allocation2 + $0xe80] sm:$0xff]
    %v571 = vld [vmem:[#allocation2 + $0xe88] sm:$0xff]
    %v572 = vld [vmem:[#allocation2 + $0xe90] sm:$0xff]
    %v573 = vld [vmem:[#allocation2 + $0xe98] sm:$0xff]
    %v574 = vld [vmem:[#allocation2 + $0xea0] sm:$0xff]
    %v575 = vld [vmem:[#allocation2 + $0xea8] sm:$0xff]
    %v576 = vld [vmem:[#allocation2 + $0xeb0] sm:$0xff]
    %v577 = vld [vmem:[#allocation2 + $0xeb8] sm:$0xff]
    %v578 = vld [vmem:[#allocation2 + $0xec0] sm:$0xff]
    %v579 = vld [vmem:[#allocation2 + $0xec8] sm:$0xff]
    %v580 = vld [vmem:[#allocation2 + $0xed0] sm:$0xff]
    %v581 = vld [vmem:[#allocation2 + $0xed8] sm:$0xff]
    %v582 = vld [vmem:[#allocation2 + $0xee0] sm:$0xff]
    %v583 = vld [vmem:[#allocation2 + $0xee8] sm:$0xff]
    %v584 = vld [vmem:[#allocation2 + $0xef0] sm:$0xff]
    %v585 = vld [vmem:[#allocation2 + $0xef8] sm:$0xff]
    %v586 = vld [vmem:[#allocation2 + $0xf00] sm:$0xff]
    %v587 = vld [vmem:[#allocation2 + $0xf08] sm:$0xff]
    %v588 = vld [vmem:[#allocation2 + $0xf10] sm:$0xff]
    %v589 = vld [vmem:[#allocation2 + $0xf18] sm:$0xff]
    %v590 = vld [vmem:[#allocation2 + $0xf20] sm:$0xff]
    %v591 = vld [vmem:[#allocation2 + $0xf28] sm:$0xff]
    %v592 = vld [vmem:[#allocation2 + $0xf30] sm:$0xff]
    %v593 = vld [vmem:[#allocation2 + $0xf38] sm:$0xff]
    %v594 = vld [vmem:[#allocation2 + $0xf40] sm:$0xff]
    %v595 = vld [vmem:[#allocation2 + $0xf48] sm:$0xff]
    %v596 = vld [vmem:[#allocation2 + $0xf50] sm:$0xff]
    %v597 = vld [vmem:[#allocation2 + $0xf58] sm:$0xff]
    %v598 = vld [vmem:[#allocation2 + $0xf60] sm:$0xff]
    %v599 = vld [vmem:[#allocation2 + $0xf68] sm:$0xff]
    %v600 = vld [vmem:[#allocation2 + $0xf70] sm:$0xff]
    %v601 = vld [vmem:[#allocation2 + $0xf78] sm:$0xff]
    %v602 = vld [vmem:[#allocation2 + $0xf80] sm:$0xff]
    %v603 = vld [vmem:[#allocation2 + $0xf88] sm:$0xff]
    %v604 = vld [vmem:[#allocation2 + $0xf90] sm:$0xff]
    %v605 = vld [vmem:[#allocation2 + $0xf98] sm:$0xff]
    %v606 = vld [vmem:[#allocation2 + $0xfa0] sm:$0xff]
    %v607 = vld [vmem:[#allocation2 + $0xfa8] sm:$0xff]
    %v608 = vld [vmem:[#allocation2 + $0xfb0] sm:$0xff]
    %v609 = vld [vmem:[#allocation2 + $0xfb8] sm:$0xff]
    %v610 = vld [vmem:[#allocation2 + $0xfc0] sm:$0xff]
    %v611 = vld [vmem:[#allocation2 + $0xfc8] sm:$0xff]
    %v612 = vld [vmem:[#allocation2 + $0xfd0] sm:$0xff]
    %v613 = vld [vmem:[#allocation2 + $0xfd8] sm:$0xff]
    %v614 = vld [vmem:[#allocation2 + $0xfe0] sm:$0xff]
    %v615 = vld [vmem:[#allocation2 + $0xfe8] sm:$0xff]
    %v616 = vld [vmem:[#allocation2 + $0xff0] sm:$0xff]
    %v617 = vld [vmem:[#allocation2 + $0xff8] sm:$0xff]
    %v618 = vld [vmem:[#allocation5] sm:$0xff]
    %v619 = vld [vmem:[#allocation5 + $0x8] sm:$0xff]
    %v620 = vld [vmem:[#allocation5 + $0x10] sm:$0xff]
    %v621 = vld [vmem:[#allocation5 + $0x18] sm:$0xff]
    %v622 = vld [vmem:[#allocation5 + $0x20] sm:$0xff]
    %v623 = vld [vmem:[#allocation5 + $0x28] sm:$0xff]
    %v624 = vld [vmem:[#allocation5 + $0x30] sm:$0xff]
    %v625 = vld [vmem:[#allocation5 + $0x38] sm:$0xff]
    %v626 = vld [vmem:[#allocation5 + $0x40] sm:$0xff]
    %v627 = vld [vmem:[#allocation5 + $0x48] sm:$0xff]
    %v628 = vld [vmem:[#allocation5 + $0x50] sm:$0xff]
    %v629 = vld [vmem:[#allocation5 + $0x58] sm:$0xff]
    %v630 = vld [vmem:[#allocation5 + $0x60] sm:$0xff]
    %v631 = vld [vmem:[#allocation5 + $0x68] sm:$0xff]
    %v632 = vld [vmem:[#allocation5 + $0x70] sm:$0xff]
    %v633 = vld [vmem:[#allocation5 + $0x78] sm:$0xff]
    %v634 = vld [vmem:[#allocation5 + $0x80] sm:$0xff]
    %v635 = vld [vmem:[#allocation5 + $0x88] sm:$0xff]
    %v636 = vld [vmem:[#allocation5 + $0x90] sm:$0xff]
    %v637 = vld [vmem:[#allocation5 + $0x98] sm:$0xff]
    %v638 = vld [vmem:[#allocation5 + $0xa0] sm:$0xff]
    %v639 = vld [vmem:[#allocation5 + $0xa8] sm:$0xff]
    %v640 = vld [vmem:[#allocation5 + $0xb0] sm:$0xff]
    %v641 = vld [vmem:[#allocation5 + $0xb8] sm:$0xff]
    %v642 = vld [vmem:[#allocation5 + $0xc0] sm:$0xff]
    %v643 = vld [vmem:[#allocation5 + $0xc8] sm:$0xff]
    %v644 = vld [vmem:[#allocation5 + $0xd0] sm:$0xff]
    %v645 = vld [vmem:[#allocation5 + $0xd8] sm:$0xff]
    %v646 = vld [vmem:[#allocation5 + $0xe0] sm:$0xff]
    %v647 = vld [vmem:[#allocation5 + $0xe8] sm:$0xff]
    %v648 = vld [vmem:[#allocation5 + $0xf0] sm:$0xff]
    %v649 = vld [vmem:[#allocation5 + $0xf8] sm:$0xff]
    %v650 = vld [vmem:[#allocation5 + $0x100] sm:$0xff]
    %v651 = vld [vmem:[#allocation5 + $0x108] sm:$0xff]
    %v652 = vld [vmem:[#allocation5 + $0x110] sm:$0xff]
    %v653 = vld [vmem:[#allocation5 + $0x118] sm:$0xff]
    %v654 = vld [vmem:[#allocation5 + $0x120] sm:$0xff]
    %v655 = vld [vmem:[#allocation5 + $0x128] sm:$0xff]
    %v656 = vld [vmem:[#allocation5 + $0x130] sm:$0xff]
    %v657 = vld [vmem:[#allocation5 + $0x138] sm:$0xff]
    %v658 = vld [vmem:[#allocation5 + $0x140] sm:$0xff]
    %v659 = vld [vmem:[#allocation5 + $0x148] sm:$0xff]
    %v660 = vld [vmem:[#allocation5 + $0x150] sm:$0xff]
    %v661 = vld [vmem:[#allocation5 + $0x158] sm:$0xff]
    %v662 = vld [vmem:[#allocation5 + $0x160] sm:$0xff]
    %v663 = vld [vmem:[#allocation5 + $0x168] sm:$0xff]
    %v664 = vld [vmem:[#allocation5 + $0x170] sm:$0xff]
    %v665 = vld [vmem:[#allocation5 + $0x178] sm:$0xff]
    %v666 = vld [vmem:[#allocation5 + $0x180] sm:$0xff]
    %v667 = vld [vmem:[#allocation5 + $0x188] sm:$0xff]
    %v668 = vld [vmem:[#allocation5 + $0x190] sm:$0xff]
    %v669 = vld [vmem:[#allocation5 + $0x198] sm:$0xff]
    %v670 = vld [vmem:[#allocation5 + $0x1a0] sm:$0xff]
    %v671 = vld [vmem:[#allocation5 + $0x1a8] sm:$0xff]
    %v672 = vld [vmem:[#allocation5 + $0x1b0] sm:$0xff]
    %v673 = vld [vmem:[#allocation5 + $0x1b8] sm:$0xff]
    %v674 = vld [vmem:[#allocation5 + $0x1c0] sm:$0xff]
    %v675 = vld [vmem:[#allocation5 + $0x1c8] sm:$0xff]
    %v676 = vld [vmem:[#allocation5 + $0x1d0] sm:$0xff]
    %v677 = vld [vmem:[#allocation5 + $0x1d8] sm:$0xff]
    %v678 = vld [vmem:[#allocation5 + $0x1e0] sm:$0xff]
    %v679 = vld [vmem:[#allocation5 + $0x1e8] sm:$0xff]
    %v680 = vld [vmem:[#allocation5 + $0x1f0] sm:$0xff]
    %v681 = vld [vmem:[#allocation5 + $0x1f8] sm:$0xff]
    %v682 = vld [vmem:[#allocation5 + $0x200] sm:$0xff]
    %v683 = vld [vmem:[#allocation5 + $0x208] sm:$0xff]
    %v684 = vld [vmem:[#allocation5 + $0x210] sm:$0xff]
    %v685 = vld [vmem:[#allocation5 + $0x218] sm:$0xff]
    %v686 = vld [vmem:[#allocation5 + $0x220] sm:$0xff]
    %v687 = vld [vmem:[#allocation5 + $0x228] sm:$0xff]
    %v688 = vld [vmem:[#allocation5 + $0x230] sm:$0xff]
    %v689 = vld [vmem:[#allocation5 + $0x238] sm:$0xff]
    %v690 = vld [vmem:[#allocation5 + $0x240] sm:$0xff]
    %v691 = vld [vmem:[#allocation5 + $0x248] sm:$0xff]
    %v692 = vld [vmem:[#allocation5 + $0x250] sm:$0xff]
    %v693 = vld [vmem:[#allocation5 + $0x258] sm:$0xff]
    %v694 = vld [vmem:[#allocation5 + $0x260] sm:$0xff]
    %v695 = vld [vmem:[#allocation5 + $0x268] sm:$0xff]
    %v696 = vld [vmem:[#allocation5 + $0x270] sm:$0xff]
    %v697 = vld [vmem:[#allocation5 + $0x278] sm:$0xff]
    %v698 = vld [vmem:[#allocation5 + $0x280] sm:$0xff]
    %v699 = vld [vmem:[#allocation5 + $0x288] sm:$0xff]
    %v700 = vld [vmem:[#allocation5 + $0x290] sm:$0xff]
    %v701 = vld [vmem:[#allocation5 + $0x298] sm:$0xff]
    %v702 = vld [vmem:[#allocation5 + $0x2a0] sm:$0xff]
    %v703 = vld [vmem:[#allocation5 + $0x2a8] sm:$0xff]
    %v704 = vld [vmem:[#allocation5 + $0x2b0] sm:$0xff]
    %v705 = vld [vmem:[#allocation5 + $0x2b8] sm:$0xff]
    %v706 = vld [vmem:[#allocation5 + $0x2c0] sm:$0xff]
    %v707 = vld [vmem:[#allocation5 + $0x2c8] sm:$0xff]
    %v708 = vld [vmem:[#allocation5 + $0x2d0] sm:$0xff]
    %v709 = vld [vmem:[#allocation5 + $0x2d8] sm:$0xff]
    %v710 = vld [vmem:[#allocation5 + $0x2e0] sm:$0xff]
    %v711 = vld [vmem:[#allocation5 + $0x2e8] sm:$0xff]
    %v712 = vld [vmem:[#allocation5 + $0x2f0] sm:$0xff]
    %v713 = vld [vmem:[#allocation5 + $0x2f8] sm:$0xff]
    %v714 = vld [vmem:[#allocation5 + $0x300] sm:$0xff]
    %v715 = vld [vmem:[#allocation5 + $0x308] sm:$0xff]
    %v716 = vld [vmem:[#allocation5 + $0x310] sm:$0xff]
    %v717 = vld [vmem:[#allocation5 + $0x318] sm:$0xff]
    %v718 = vld [vmem:[#allocation5 + $0x320] sm:$0xff]
    %v719 = vld [vmem:[#allocation5 + $0x328] sm:$0xff]
    %v720 = vld [vmem:[#allocation5 + $0x330] sm:$0xff]
    %v721 = vld [vmem:[#allocation5 + $0x338] sm:$0xff]
    %v722 = vld [vmem:[#allocation5 + $0x340] sm:$0xff]
    %v723 = vld [vmem:[#allocation5 + $0x348] sm:$0xff]
    %v724 = vld [vmem:[#allocation5 + $0x350] sm:$0xff]
    %v725 = vld [vmem:[#allocation5 + $0x358] sm:$0xff]
    %v726 = vld [vmem:[#allocation5 + $0x360] sm:$0xff]
    %v727 = vld [vmem:[#allocation5 + $0x368] sm:$0xff]
    %v728 = vld [vmem:[#allocation5 + $0x370] sm:$0xff]
    %v729 = vld [vmem:[#allocation5 + $0x378] sm:$0xff]
    %v730 = vld [vmem:[#allocation5 + $0x380] sm:$0xff]
    %v731 = vld [vmem:[#allocation5 + $0x388] sm:$0xff]
    %v732 = vld [vmem:[#allocation5 + $0x390] sm:$0xff]
    %v733 = vld [vmem:[#allocation5 + $0x398] sm:$0xff]
    %v734 = vld [vmem:[#allocation5 + $0x3a0] sm:$0xff]
    %v735 = vld [vmem:[#allocation5 + $0x3a8] sm:$0xff]
    %v736 = vld [vmem:[#allocation5 + $0x3b0] sm:$0xff]
    %v737 = vld [vmem:[#allocation5 + $0x3b8] sm:$0xff]
    %v738 = vld [vmem:[#allocation5 + $0x3c0] sm:$0xff]
    %v739 = vld [vmem:[#allocation5 + $0x3c8] sm:$0xff]
    %v740 = vld [vmem:[#allocation5 + $0x3d0] sm:$0xff]
    %v741 = vld [vmem:[#allocation5 + $0x3d8] sm:$0xff]
    %v742 = vld [vmem:[#allocation5 + $0x3e0] sm:$0xff]
    %v743 = vld [vmem:[#allocation5 + $0x3e8] sm:$0xff]
    %v744 = vld [vmem:[#allocation5 + $0x3f0] sm:$0xff]
    %v745 = vld [vmem:[#allocation5 + $0x3f8] sm:$0xff]
    %v746 = vld [vmem:[#allocation5 + $0x400] sm:$0xff]
    %v747 = vld [vmem:[#allocation5 + $0x408] sm:$0xff]
    %v748 = vld [vmem:[#allocation5 + $0x410] sm:$0xff]
    %v749 = vld [vmem:[#allocation5 + $0x418] sm:$0xff]
    %v750 = vld [vmem:[#allocation5 + $0x420] sm:$0xff]
    %v751 = vld [vmem:[#allocation5 + $0x428] sm:$0xff]
    %v752 = vld [vmem:[#allocation5 + $0x430] sm:$0xff]
    %v753 = vld [vmem:[#allocation5 + $0x438] sm:$0xff]
    %v754 = vld [vmem:[#allocation5 + $0x440] sm:$0xff]
    %v755 = vld [vmem:[#allocation5 + $0x448] sm:$0xff]
    %v756 = vld [vmem:[#allocation5 + $0x450] sm:$0xff]
    %v757 = vld [vmem:[#allocation5 + $0x458] sm:$0xff]
    %v758 = vld [vmem:[#allocation5 + $0x460] sm:$0xff]
    %v759 = vld [vmem:[#allocation5 + $0x468] sm:$0xff]
    %v760 = vld [vmem:[#allocation5 + $0x470] sm:$0xff]
    %v761 = vld [vmem:[#allocation5 + $0x478] sm:$0xff]
    %v762 = vld [vmem:[#allocation5 + $0x480] sm:$0xff]
    %v763 = vld [vmem:[#allocation5 + $0x488] sm:$0xff]
    %v764 = vld [vmem:[#allocation5 + $0x490] sm:$0xff]
    %v765 = vld [vmem:[#allocation5 + $0x498] sm:$0xff]
    %v766 = vld [vmem:[#allocation5 + $0x4a0] sm:$0xff]
    %v767 = vld [vmem:[#allocation5 + $0x4a8] sm:$0xff]
    %v768 = vld [vmem:[#allocation5 + $0x4b0] sm:$0xff]
    %v769 = vld [vmem:[#allocation5 + $0x4b8] sm:$0xff]
    %v770 = vld [vmem:[#allocation5 + $0x4c0] sm:$0xff]
    %v771 = vld [vmem:[#allocation5 + $0x4c8] sm:$0xff]
    %v772 = vld [vmem:[#allocation5 + $0x4d0] sm:$0xff]
    %v773 = vld [vmem:[#allocation5 + $0x4d8] sm:$0xff]
    %v774 = vld [vmem:[#allocation5 + $0x4e0] sm:$0xff]
    %v775 = vld [vmem:[#allocation5 + $0x4e8] sm:$0xff]
    %v776 = vld [vmem:[#allocation5 + $0x4f0] sm:$0xff]
    %v777 = vld [vmem:[#allocation5 + $0x4f8] sm:$0xff]
    %v778 = vld [vmem:[#allocation5 + $0x500] sm:$0xff]
    %v779 = vld [vmem:[#allocation5 + $0x508] sm:$0xff]
    %v780 = vld [vmem:[#allocation5 + $0x510] sm:$0xff]
    %v781 = vld [vmem:[#allocation5 + $0x518] sm:$0xff]
    %v782 = vld [vmem:[#allocation5 + $0x520] sm:$0xff]
    %v783 = vld [vmem:[#allocation5 + $0x528] sm:$0xff]
    %v784 = vld [vmem:[#allocation5 + $0x530] sm:$0xff]
    %v785 = vld [vmem:[#allocation5 + $0x538] sm:$0xff]
    %v786 = vld [vmem:[#allocation5 + $0x540] sm:$0xff]
    %v787 = vld [vmem:[#allocation5 + $0x548] sm:$0xff]
    %v788 = vld [vmem:[#allocation5 + $0x550] sm:$0xff]
    %v789 = vld [vmem:[#allocation5 + $0x558] sm:$0xff]
    %v790 = vld [vmem:[#allocation5 + $0x560] sm:$0xff]
    %v791 = vld [vmem:[#allocation5 + $0x568] sm:$0xff]
    %v792 = vld [vmem:[#allocation5 + $0x570] sm:$0xff]
    %v793 = vld [vmem:[#allocation5 + $0x578] sm:$0xff]
    %v794 = vld [vmem:[#allocation5 + $0x580] sm:$0xff]
    %v795 = vld [vmem:[#allocation5 + $0x588] sm:$0xff]
    %v796 = vld [vmem:[#allocation5 + $0x590] sm:$0xff]
    %v797 = vld [vmem:[#allocation5 + $0x598] sm:$0xff]
    %v798 = vld [vmem:[#allocation5 + $0x5a0] sm:$0xff]
    %v799 = vld [vmem:[#allocation5 + $0x5a8] sm:$0xff]
    %v800 = vld [vmem:[#allocation5 + $0x5b0] sm:$0xff]
    %v801 = vld [vmem:[#allocation5 + $0x5b8] sm:$0xff]
    %v802 = vld [vmem:[#allocation5 + $0x5c0] sm:$0xff]
    %v803 = vld [vmem:[#allocation5 + $0x5c8] sm:$0xff]
    %v804 = vld [vmem:[#allocation5 + $0x5d0] sm:$0xff]
    %v805 = vld [vmem:[#allocation5 + $0x5d8] sm:$0xff]
    %v806 = vld [vmem:[#allocation5 + $0x5e0] sm:$0xff]
    %v807 = vld [vmem:[#allocation5 + $0x5e8] sm:$0xff]
    %v808 = vld [vmem:[#allocation5 + $0x5f0] sm:$0xff]
    %v809 = vld [vmem:[#allocation5 + $0x5f8] sm:$0xff]
    %v810 = vld [vmem:[#allocation5 + $0x600] sm:$0xff]
    %v811 = vld [vmem:[#allocation5 + $0x608] sm:$0xff]
    %v812 = vld [vmem:[#allocation5 + $0x610] sm:$0xff]
    %v813 = vld [vmem:[#allocation5 + $0x618] sm:$0xff]
    %v814 = vld [vmem:[#allocation5 + $0x620] sm:$0xff]
    %v815 = vld [vmem:[#allocation5 + $0x628] sm:$0xff]
    %v816 = vld [vmem:[#allocation5 + $0x630] sm:$0xff]
    %v817 = vld [vmem:[#allocation5 + $0x638] sm:$0xff]
    %v818 = vld [vmem:[#allocation5 + $0x640] sm:$0xff]
    %v819 = vld [vmem:[#allocation5 + $0x648] sm:$0xff]
    %v820 = vld [vmem:[#allocation5 + $0x650] sm:$0xff]
    %v821 = vld [vmem:[#allocation5 + $0x658] sm:$0xff]
    %v822 = vld [vmem:[#allocation5 + $0x660] sm:$0xff]
    %v823 = vld [vmem:[#allocation5 + $0x668] sm:$0xff]
    %v824 = vld [vmem:[#allocation5 + $0x670] sm:$0xff]
    %v825 = vld [vmem:[#allocation5 + $0x678] sm:$0xff]
    %v826 = vld [vmem:[#allocation5 + $0x680] sm:$0xff]
    %v827 = vld [vmem:[#allocation5 + $0x688] sm:$0xff]
    %v828 = vld [vmem:[#allocation5 + $0x690] sm:$0xff]
    %v829 = vld [vmem:[#allocation5 + $0x698] sm:$0xff]
    %v830 = vld [vmem:[#allocation5 + $0x6a0] sm:$0xff]
    %v831 = vld [vmem:[#allocation5 + $0x6a8] sm:$0xff]
    %v832 = vld [vmem:[#allocation5 + $0x6b0] sm:$0xff]
    %v833 = vld [vmem:[#allocation5 + $0x6b8] sm:$0xff]
    %v834 = vld [vmem:[#allocation5 + $0x6c0] sm:$0xff]
    %v835 = vld [vmem:[#allocation5 + $0x6c8] sm:$0xff]
    %v836 = vld [vmem:[#allocation5 + $0x6d0] sm:$0xff]
    %v837 = vld [vmem:[#allocation5 + $0x6d8] sm:$0xff]
    %v838 = vld [vmem:[#allocation5 + $0x6e0] sm:$0xff]
    %v839 = vld [vmem:[#allocation5 + $0x6e8] sm:$0xff]
    %v840 = vld [vmem:[#allocation5 + $0x6f0] sm:$0xff]
    %v841 = vld [vmem:[#allocation5 + $0x6f8] sm:$0xff]
    %v842 = vld [vmem:[#allocation5 + $0x700] sm:$0xff]
    %v843 = vld [vmem:[#allocation5 + $0x708] sm:$0xff]
    %v844 = vld [vmem:[#allocation5 + $0x710] sm:$0xff]
    %v845 = vld [vmem:[#allocation5 + $0x718] sm:$0xff]
    %v846 = vld [vmem:[#allocation5 + $0x720] sm:$0xff]
    %v847 = vld [vmem:[#allocation5 + $0x728] sm:$0xff]
    %v848 = vld [vmem:[#allocation5 + $0x730] sm:$0xff]
    %v849 = vld [vmem:[#allocation5 + $0x738] sm:$0xff]
    %v850 = vld [vmem:[#allocation5 + $0x740] sm:$0xff]
    %v851 = vld [vmem:[#allocation5 + $0x748] sm:$0xff]
    %v852 = vld [vmem:[#allocation5 + $0x750] sm:$0xff]
    %v853 = vld [vmem:[#allocation5 + $0x758] sm:$0xff]
    %v854 = vld [vmem:[#allocation5 + $0x760] sm:$0xff]
    %v855 = vld [vmem:[#allocation5 + $0x768] sm:$0xff]
    %v856 = vld [vmem:[#allocation5 + $0x770] sm:$0xff]
    %v857 = vld [vmem:[#allocation5 + $0x778] sm:$0xff]
    %v858 = vld [vmem:[#allocation5 + $0x780] sm:$0xff]
    %v859 = vld [vmem:[#allocation5 + $0x788] sm:$0xff]
    %v860 = vld [vmem:[#allocation5 + $0x790] sm:$0xff]
    %v861 = vld [vmem:[#allocation5 + $0x798] sm:$0xff]
    %v862 = vld [vmem:[#allocation5 + $0x7a0] sm:$0xff]
    %v863 = vld [vmem:[#allocation5 + $0x7a8] sm:$0xff]
    %v864 = vld [vmem:[#allocation5 + $0x7b0] sm:$0xff]
    %v865 = vld [vmem:[#allocation5 + $0x7b8] sm:$0xff]
    %v866 = vld [vmem:[#allocation5 + $0x7c0] sm:$0xff]
    %v867 = vld [vmem:[#allocation5 + $0x7c8] sm:$0xff]
    %v868 = vld [vmem:[#allocation5 + $0x7d0] sm:$0xff]
    %v869 = vld [vmem:[#allocation5 + $0x7d8] sm:$0xff]
    %v870 = vld [vmem:[#allocation5 + $0x7e0] sm:$0xff]
    %v871 = vld [vmem:[#allocation5 + $0x7e8] sm:$0xff]
    %v872 = vld [vmem:[#allocation5 + $0x7f0] sm:$0xff]
    %v873 = vld [vmem:[#allocation5 + $0x7f8] sm:$0xff]
    %v874 = vld [vmem:[#allocation5 + $0x800] sm:$0xff]
    %v875 = vld [vmem:[#allocation5 + $0x808] sm:$0xff]
    %v876 = vld [vmem:[#allocation5 + $0x810] sm:$0xff]
    %v877 = vld [vmem:[#allocation5 + $0x818] sm:$0xff]
    %v878 = vld [vmem:[#allocation5 + $0x820] sm:$0xff]
    %v879 = vld [vmem:[#allocation5 + $0x828] sm:$0xff]
    %v880 = vld [vmem:[#allocation5 + $0x830] sm:$0xff]
    %v881 = vld [vmem:[#allocation5 + $0x838] sm:$0xff]
    %v882 = vld [vmem:[#allocation5 + $0x840] sm:$0xff]
    %v883 = vld [vmem:[#allocation5 + $0x848] sm:$0xff]
    %v884 = vld [vmem:[#allocation5 + $0x850] sm:$0xff]
    %v885 = vld [vmem:[#allocation5 + $0x858] sm:$0xff]
    %v886 = vld [vmem:[#allocation5 + $0x860] sm:$0xff]
    %v887 = vld [vmem:[#allocation5 + $0x868] sm:$0xff]
    %v888 = vld [vmem:[#allocation5 + $0x870] sm:$0xff]
    %v889 = vld [vmem:[#allocation5 + $0x878] sm:$0xff]
    %v890 = vld [vmem:[#allocation5 + $0x880] sm:$0xff]
    %v891 = vld [vmem:[#allocation5 + $0x888] sm:$0xff]
    %v892 = vld [vmem:[#allocation5 + $0x890] sm:$0xff]
    %v893 = vld [vmem:[#allocation5 + $0x898] sm:$0xff]
    %v894 = vld [vmem:[#allocation5 + $0x8a0] sm:$0xff]
    %v895 = vld [vmem:[#allocation5 + $0x8a8] sm:$0xff]
    %v896 = vld [vmem:[#allocation5 + $0x8b0] sm:$0xff]
    %v897 = vld [vmem:[#allocation5 + $0x8b8] sm:$0xff]
    %v898 = vld [vmem:[#allocation5 + $0x8c0] sm:$0xff]
    %v899 = vld [vmem:[#allocation5 + $0x8c8] sm:$0xff]
    %v900 = vld [vmem:[#allocation5 + $0x8d0] sm:$0xff]
    %v901 = vld [vmem:[#allocation5 + $0x8d8] sm:$0xff]
    %v902 = vld [vmem:[#allocation5 + $0x8e0] sm:$0xff]
    %v903 = vld [vmem:[#allocation5 + $0x8e8] sm:$0xff]
    %v904 = vld [vmem:[#allocation5 + $0x8f0] sm:$0xff]
    %v905 = vld [vmem:[#allocation5 + $0x8f8] sm:$0xff]
    %v906 = vld [vmem:[#allocation5 + $0x900] sm:$0xff]
    %v907 = vld [vmem:[#allocation5 + $0x908] sm:$0xff]
    %v908 = vld [vmem:[#allocation5 + $0x910] sm:$0xff]
    %v909 = vld [vmem:[#allocation5 + $0x918] sm:$0xff]
    %v910 = vld [vmem:[#allocation5 + $0x920] sm:$0xff]
    %v911 = vld [vmem:[#allocation5 + $0x928] sm:$0xff]
    %v912 = vld [vmem:[#allocation5 + $0x930] sm:$0xff]
    %v913 = vld [vmem:[#allocation5 + $0x938] sm:$0xff]
    %v914 = vld [vmem:[#allocation5 + $0x940] sm:$0xff]
    %v915 = vld [vmem:[#allocation5 + $0x948] sm:$0xff]
    %v916 = vld [vmem:[#allocation5 + $0x950] sm:$0xff]
    %v917 = vld [vmem:[#allocation5 + $0x958] sm:$0xff]
    %v918 = vld [vmem:[#allocation5 + $0x960] sm:$0xff]
    %v919 = vld [vmem:[#allocation5 + $0x968] sm:$0xff]
    %v920 = vld [vmem:[#allocation5 + $0x970] sm:$0xff]
    %v921 = vld [vmem:[#allocation5 + $0x978] sm:$0xff]
    %v922 = vld [vmem:[#allocation5 + $0x980] sm:$0xff]
    %v923 = vld [vmem:[#allocation5 + $0x988] sm:$0xff]
    %v924 = vld [vmem:[#allocation5 + $0x990] sm:$0xff]
    %v925 = vld [vmem:[#allocation5 + $0x998] sm:$0xff]
    %v926 = vld [vmem:[#allocation5 + $0x9a0] sm:$0xff]
    %v927 = vld [vmem:[#allocation5 + $0x9a8] sm:$0xff]
    %v928 = vld [vmem:[#allocation5 + $0x9b0] sm:$0xff]
    %v929 = vld [vmem:[#allocation5 + $0x9b8] sm:$0xff]
    %v930 = vld [vmem:[#allocation5 + $0x9c0] sm:$0xff]
    %v931 = vld [vmem:[#allocation5 + $0x9c8] sm:$0xff]
    %v932 = vld [vmem:[#allocation5 + $0x9d0] sm:$0xff]
    %v933 = vld [vmem:[#allocation5 + $0x9d8] sm:$0xff]
    %v934 = vld [vmem:[#allocation5 + $0x9e0] sm:$0xff]
    %v935 = vld [vmem:[#allocation5 + $0x9e8] sm:$0xff]
    %v936 = vld [vmem:[#allocation5 + $0x9f0] sm:$0xff]
    %v937 = vld [vmem:[#allocation5 + $0x9f8] sm:$0xff]
    %v938 = vld [vmem:[#allocation5 + $0xa00] sm:$0xff]
    %v939 = vld [vmem:[#allocation5 + $0xa08] sm:$0xff]
    %v940 = vld [vmem:[#allocation5 + $0xa10] sm:$0xff]
    %v941 = vld [vmem:[#allocation5 + $0xa18] sm:$0xff]
    %v942 = vld [vmem:[#allocation5 + $0xa20] sm:$0xff]
    %v943 = vld [vmem:[#allocation5 + $0xa28] sm:$0xff]
    %v944 = vld [vmem:[#allocation5 + $0xa30] sm:$0xff]
    %v945 = vld [vmem:[#allocation5 + $0xa38] sm:$0xff]
    %v946 = vld [vmem:[#allocation5 + $0xa40] sm:$0xff]
    %v947 = vld [vmem:[#allocation5 + $0xa48] sm:$0xff]
    %v948 = vld [vmem:[#allocation5 + $0xa50] sm:$0xff]
    %v949 = vld [vmem:[#allocation5 + $0xa58] sm:$0xff]
    %v950 = vld [vmem:[#allocation5 + $0xa60] sm:$0xff]
    %v951 = vld [vmem:[#allocation5 + $0xa68] sm:$0xff]
    %v952 = vld [vmem:[#allocation5 + $0xa70] sm:$0xff]
    %v953 = vld [vmem:[#allocation5 + $0xa78] sm:$0xff]
    %v954 = vld [vmem:[#allocation5 + $0xa80] sm:$0xff]
    %v955 = vld [vmem:[#allocation5 + $0xa88] sm:$0xff]
    %v956 = vld [vmem:[#allocation5 + $0xa90] sm:$0xff]
    %v957 = vld [vmem:[#allocation5 + $0xa98] sm:$0xff]
    %v958 = vld [vmem:[#allocation5 + $0xaa0] sm:$0xff]
    %v959 = vld [vmem:[#allocation5 + $0xaa8] sm:$0xff]
    %v960 = vld [vmem:[#allocation5 + $0xab0] sm:$0xff]
    %v961 = vld [vmem:[#allocation5 + $0xab8] sm:$0xff]
    %v962 = vld [vmem:[#allocation5 + $0xac0] sm:$0xff]
    %v963 = vld [vmem:[#allocation5 + $0xac8] sm:$0xff]
    %v964 = vld [vmem:[#allocation5 + $0xad0] sm:$0xff]
    %v965 = vld [vmem:[#allocation5 + $0xad8] sm:$0xff]
    %v966 = vld [vmem:[#allocation5 + $0xae0] sm:$0xff]
    %v967 = vld [vmem:[#allocation5 + $0xae8] sm:$0xff]
    %v968 = vld [vmem:[#allocation5 + $0xaf0] sm:$0xff]
    %v969 = vld [vmem:[#allocation5 + $0xaf8] sm:$0xff]
    %v970 = vld [vmem:[#allocation5 + $0xb00] sm:$0xff]
    %v971 = vld [vmem:[#allocation5 + $0xb08] sm:$0xff]
    %v972 = vld [vmem:[#allocation5 + $0xb10] sm:$0xff]
    %v973 = vld [vmem:[#allocation5 + $0xb18] sm:$0xff]
    %v974 = vld [vmem:[#allocation5 + $0xb20] sm:$0xff]
    %v975 = vld [vmem:[#allocation5 + $0xb28] sm:$0xff]
    %v976 = vld [vmem:[#allocation5 + $0xb30] sm:$0xff]
    %v977 = vld [vmem:[#allocation5 + $0xb38] sm:$0xff]
    %v978 = vld [vmem:[#allocation5 + $0xb40] sm:$0xff]
    %v979 = vld [vmem:[#allocation5 + $0xb48] sm:$0xff]
    %v980 = vld [vmem:[#allocation5 + $0xb50] sm:$0xff]
    %v981 = vld [vmem:[#allocation5 + $0xb58] sm:$0xff]
    %v982 = vld [vmem:[#allocation5 + $0xb60] sm:$0xff]
    %v983 = vld [vmem:[#allocation5 + $0xb68] sm:$0xff]
    %v984 = vld [vmem:[#allocation5 + $0xb70] sm:$0xff]
    %v985 = vld [vmem:[#allocation5 + $0xb78] sm:$0xff]
    %v986 = vld [vmem:[#allocation5 + $0xb80] sm:$0xff]
    %v987 = vld [vmem:[#allocation5 + $0xb88] sm:$0xff]
    %v988 = vld [vmem:[#allocation5 + $0xb90] sm:$0xff]
    %v989 = vld [vmem:[#allocation5 + $0xb98] sm:$0xff]
    %v990 = vld [vmem:[#allocation5 + $0xba0] sm:$0xff]
    %v991 = vld [vmem:[#allocation5 + $0xba8] sm:$0xff]
    %v992 = vld [vmem:[#allocation5 + $0xbb0] sm:$0xff]
    %v993 = vld [vmem:[#allocation5 + $0xbb8] sm:$0xff]
    %v994 = vld [vmem:[#allocation5 + $0xbc0] sm:$0xff]
    %v995 = vld [vmem:[#allocation5 + $0xbc8] sm:$0xff]
    %v996 = vld [vmem:[#allocation5 + $0xbd0] sm:$0xff]
    %v997 = vld [vmem:[#allocation5 + $0xbd8] sm:$0xff]
    %v998 = vld [vmem:[#allocation5 + $0xbe0] sm:$0xff]
    %v999 = vld [vmem:[#allocation5 + $0xbe8] sm:$0xff]
    %v1000 = vld [vmem:[#allocation5 + $0xbf0] sm:$0xff]
    %v1001 = vld [vmem:[#allocation5 + $0xbf8] sm:$0xff]
    %v1002 = vld [vmem:[#allocation5 + $0xc00] sm:$0xff]
    %v1003 = vld [vmem:[#allocation5 + $0xc08] sm:$0xff]
    %v1004 = vld [vmem:[#allocation5 + $0xc10] sm:$0xff]
    %v1005 = vld [vmem:[#allocation5 + $0xc18] sm:$0xff]
    %v1006 = vld [vmem:[#allocation5 + $0xc20] sm:$0xff]
    %v1007 = vld [vmem:[#allocation5 + $0xc28] sm:$0xff]
    %v1008 = vld [vmem:[#allocation5 + $0xc30] sm:$0xff]
    %v1009 = vld [vmem:[#allocation5 + $0xc38] sm:$0xff]
    %v1010 = vld [vmem:[#allocation5 + $0xc40] sm:$0xff]
    %v1011 = vld [vmem:[#allocation5 + $0xc48] sm:$0xff]
    %v1012 = vld [vmem:[#allocation5 + $0xc50] sm:$0xff]
    %v1013 = vld [vmem:[#allocation5 + $0xc58] sm:$0xff]
    %v1014 = vld [vmem:[#allocation5 + $0xc60] sm:$0xff]
    %v1015 = vld [vmem:[#allocation5 + $0xc68] sm:$0xff]
    %v1016 = vld [vmem:[#allocation5 + $0xc70] sm:$0xff]
    %v1017 = vld [vmem:[#allocation5 + $0xc78] sm:$0xff]
    %v1018 = vld [vmem:[#allocation5 + $0xc80] sm:$0xff]
    %v1019 = vld [vmem:[#allocation5 + $0xc88] sm:$0xff]
    %v1020 = vld [vmem:[#allocation5 + $0xc90] sm:$0xff]
    %v1021 = vld [vmem:[#allocation5 + $0xc98] sm:$0xff]
    %v1022 = vld [vmem:[#allocation5 + $0xca0] sm:$0xff]
    %v1023 = vld [vmem:[#allocation5 + $0xca8] sm:$0xff]
    %v1024 = vld [vmem:[#allocation5 + $0xcb0] sm:$0xff]
    %v1025 = vld [vmem:[#allocation5 + $0xcb8] sm:$0xff]
    %v1026 = vld [vmem:[#allocation5 + $0xcc0] sm:$0xff]
    %v1027 = vld [vmem:[#allocation5 + $0xcc8] sm:$0xff]
    %v1028 = vld [vmem:[#allocation5 + $0xcd0] sm:$0xff]
    %v1029 = vld [vmem:[#allocation5 + $0xcd8] sm:$0xff]
    %v1030 = vld [vmem:[#allocation5 + $0xce0] sm:$0xff]
    %v1031 = vld [vmem:[#allocation5 + $0xce8] sm:$0xff]
    %v1032 = vld [vmem:[#allocation5 + $0xcf0] sm:$0xff]
    %v1033 = vld [vmem:[#allocation5 + $0xcf8] sm:$0xff]
    %v1034 = vld [vmem:[#allocation5 + $0xd00] sm:$0xff]
    %v1035 = vld [vmem:[#allocation5 + $0xd08] sm:$0xff]
    %v1036 = vld [vmem:[#allocation5 + $0xd10] sm:$0xff]
    %v1037 = vld [vmem:[#allocation5 + $0xd18] sm:$0xff]
    %v1038 = vld [vmem:[#allocation5 + $0xd20] sm:$0xff]
    %v1039 = vld [vmem:[#allocation5 + $0xd28] sm:$0xff]
    %v1040 = vld [vmem:[#allocation5 + $0xd30] sm:$0xff]
    %v1041 = vld [vmem:[#allocation5 + $0xd38] sm:$0xff]
    %v1042 = vld [vmem:[#allocation5 + $0xd40] sm:$0xff]
    %v1043 = vld [vmem:[#allocation5 + $0xd48] sm:$0xff]
    %v1044 = vld [vmem:[#allocation5 + $0xd50] sm:$0xff]
    %v1045 = vld [vmem:[#allocation5 + $0xd58] sm:$0xff]
    %v1046 = vld [vmem:[#allocation5 + $0xd60] sm:$0xff]
    %v1047 = vld [vmem:[#allocation5 + $0xd68] sm:$0xff]
    %v1048 = vld [vmem:[#allocation5 + $0xd70] sm:$0xff]
    %v1049 = vld [vmem:[#allocation5 + $0xd78] sm:$0xff]
    %v1050 = vld [vmem:[#allocation5 + $0xd80] sm:$0xff]
    %v1051 = vld [vmem:[#allocation5 + $0xd88] sm:$0xff]
    %v1052 = vld [vmem:[#allocation5 + $0xd90] sm:$0xff]
    %v1053 = vld [vmem:[#allocation5 + $0xd98] sm:$0xff]
    %v1054 = vld [vmem:[#allocation5 + $0xda0] sm:$0xff]
    %v1055 = vld [vmem:[#allocation5 + $0xda8] sm:$0xff]
    %v1056 = vld [vmem:[#allocation5 + $0xdb0] sm:$0xff]
    %v1057 = vld [vmem:[#allocation5 + $0xdb8] sm:$0xff]
    %v1058 = vld [vmem:[#allocation5 + $0xdc0] sm:$0xff]
    %v1059 = vld [vmem:[#allocation5 + $0xdc8] sm:$0xff]
    %v1060 = vld [vmem:[#allocation5 + $0xdd0] sm:$0xff]
    %v1061 = vld [vmem:[#allocation5 + $0xdd8] sm:$0xff]
    %v1062 = vld [vmem:[#allocation5 + $0xde0] sm:$0xff]
    %v1063 = vld [vmem:[#allocation5 + $0xde8] sm:$0xff]
    %v1064 = vld [vmem:[#allocation5 + $0xdf0] sm:$0xff]
    %v1065 = vld [vmem:[#allocation5 + $0xdf8] sm:$0xff]
    %v1066 = vld [vmem:[#allocation5 + $0xe00] sm:$0xff]
    %v1067 = vld [vmem:[#allocation5 + $0xe08] sm:$0xff]
    %v1068 = vld [vmem:[#allocation5 + $0xe10] sm:$0xff]
    %v1069 = vld [vmem:[#allocation5 + $0xe18] sm:$0xff]
    %v1070 = vld [vmem:[#allocation5 + $0xe20] sm:$0xff]
    %v1071 = vld [vmem:[#allocation5 + $0xe28] sm:$0xff]
    %v1072 = vld [vmem:[#allocation5 + $0xe30] sm:$0xff]
    %v1073 = vld [vmem:[#allocation5 + $0xe38] sm:$0xff]
    %v1074 = vld [vmem:[#allocation5 + $0xe40] sm:$0xff]
    %v1075 = vld [vmem:[#allocation5 + $0xe48] sm:$0xff]
    %v1076 = vld [vmem:[#allocation5 + $0xe50] sm:$0xff]
    %v1077 = vld [vmem:[#allocation5 + $0xe58] sm:$0xff]
    %v1078 = vld [vmem:[#allocation5 + $0xe60] sm:$0xff]
    %v1079 = vld [vmem:[#allocation5 + $0xe68] sm:$0xff]
    %v1080 = vld [vmem:[#allocation5 + $0xe70] sm:$0xff]
    %v1081 = vld [vmem:[#allocation5 + $0xe78] sm:$0xff]
    %v1082 = vld [vmem:[#allocation5 + $0xe80] sm:$0xff]
    %v1083 = vld [vmem:[#allocation5 + $0xe88] sm:$0xff]
    %v1084 = vld [vmem:[#allocation5 + $0xe90] sm:$0xff]
    %v1085 = vld [vmem:[#allocation5 + $0xe98] sm:$0xff]
    %v1086 = vld [vmem:[#allocation5 + $0xea0] sm:$0xff]
    %v1087 = vld [vmem:[#allocation5 + $0xea8] sm:$0xff]
    %v1088 = vld [vmem:[#allocation5 + $0xeb0] sm:$0xff]
    %v1089 = vld [vmem:[#allocation5 + $0xeb8] sm:$0xff]
    %v1090 = vld [vmem:[#allocation5 + $0xec0] sm:$0xff]
    %v1091 = vld [vmem:[#allocation5 + $0xec8] sm:$0xff]
    %v1092 = vld [vmem:[#allocation5 + $0xed0] sm:$0xff]
    %v1093 = vld [vmem:[#allocation5 + $0xed8] sm:$0xff]
    %v1094 = vld [vmem:[#allocation5 + $0xee0] sm:$0xff]
    %v1095 = vld [vmem:[#allocation5 + $0xee8] sm:$0xff]
    %v1096 = vld [vmem:[#allocation5 + $0xef0] sm:$0xff]
    %v1097 = vld [vmem:[#allocation5 + $0xef8] sm:$0xff]
    %v1098 = vld [vmem:[#allocation5 + $0xf00] sm:$0xff]
    %v1099 = vld [vmem:[#allocation5 + $0xf08] sm:$0xff]
    %v1100 = vld [vmem:[#allocation5 + $0xf10] sm:$0xff]
    %v1101 = vld [vmem:[#allocation5 + $0xf18] sm:$0xff]
    %v1102 = vld [vmem:[#allocation5 + $0xf20] sm:$0xff]
    %v1103 = vld [vmem:[#allocation5 + $0xf28] sm:$0xff]
    %v1104 = vld [vmem:[#allocation5 + $0xf30] sm:$0xff]
    %v1105 = vld [vmem:[#allocation5 + $0xf38] sm:$0xff]
    %v1106 = vld [vmem:[#allocation5 + $0xf40] sm:$0xff]
    %v1107 = vld [vmem:[#allocation5 + $0xf48] sm:$0xff]
    %v1108 = vld [vmem:[#allocation5 + $0xf50] sm:$0xff]
    %v1109 = vld [vmem:[#allocation5 + $0xf58] sm:$0xff]
    %v1110 = vld [vmem:[#allocation5 + $0xf60] sm:$0xff]
    %v1111 = vld [vmem:[#allocation5 + $0xf68] sm:$0xff]
    %v1112 = vld [vmem:[#allocation5 + $0xf70] sm:$0xff]
    %v1113 = vld [vmem:[#allocation5 + $0xf78] sm:$0xff]
    %v1114 = vld [vmem:[#allocation5 + $0xf80] sm:$0xff]
    %v1115 = vld [vmem:[#allocation5 + $0xf88] sm:$0xff]
    %v1116 = vld [vmem:[#allocation5 + $0xf90] sm:$0xff]
    %v1117 = vld [vmem:[#allocation5 + $0xf98] sm:$0xff]
    %v1118 = vld [vmem:[#allocation5 + $0xfa0] sm:$0xff]
    %v1119 = vld [vmem:[#allocation5 + $0xfa8] sm:$0xff]
    %v1120 = vld [vmem:[#allocation5 + $0xfb0] sm:$0xff]
    %v1121 = vld [vmem:[#allocation5 + $0xfb8] sm:$0xff]
    %v1122 = vld [vmem:[#allocation5 + $0xfc0] sm:$0xff]
    %v1123 = vld [vmem:[#allocation5 + $0xfc8] sm:$0xff]
    %v1124 = vld [vmem:[#allocation5 + $0xfd0] sm:$0xff]
    %v1125 = vld [vmem:[#allocation5 + $0xfd8] sm:$0xff]
    %v1126 = vld [vmem:[#allocation5 + $0xfe0] sm:$0xff]
    %v1127 = vld [vmem:[#allocation5 + $0xfe8] sm:$0xff]
    %v1128 = vld [vmem:[#allocation5 + $0xff0] sm:$0xff]
    %v1129 = vld [vmem:[#allocation5 + $0xff8] sm:$0xff]
    %v1130 = vld [vmem:[#allocation7] sm:$0xf]
    %v1132 = vlaneseq
    %v1133 = vshrl.u32 %v1132, 7
    %v1134 = vsub.s32 0, %v1133
    %v1135 = vrot.slane %v1130, %v1134
    %v1136 = vlaneseq
    %v1137 = vshrl.u32 %v1136, 7
    %v1138 = vsub.s32 1, %v1137
    %v1139 = vrot.slane %v1130, %v1138
    %v1140 = vlaneseq
    %v1141 = vshrl.u32 %v1140, 7
    %v1142 = vsub.s32 2, %v1141
    %v1143 = vrot.slane %v1130, %v1142
    %v1144 = vlaneseq
    %v1145 = vshrl.u32 %v1144, 7
    %v1146 = vsub.s32 3, %v1145
    %v1147 = vrot.slane %v1130, %v1146
    %1152 = vmatprep.subr.mxu0 %v679
    %1153 = vmatpush1.msra.mxu0 %v678
    %1154 = vmatprep.subr.mxu0 %v675
    %1155 = vmatpush1.msra.mxu0 %v674
    %1156 = vmatprep.subr.mxu0 %v671
    %1157 = vmatpush1.msra.mxu0 %v670
    %1158 = vmatprep.subr.mxu0 %v667
    %1159 = vmatpush1.msra.mxu0 %v666
    %1160 = vmatprep.subr.mxu0 %v663
    %1161 = vmatpush1.msra.mxu0 %v662
    %1162 = vmatprep.subr.mxu0 %v659
    %1163 = vmatpush1.msra.mxu0 %v658
    %1164 = vmatprep.subr.mxu0 %v655
    %1165 = vmatpush1.msra.mxu0 %v654
    %1166 = vmatprep.subr.mxu0 %v651
    %1167 = vmatpush1.msra.mxu0 %v650
    %1168 = vmatprep.subr.mxu0 %v647
    %1169 = vmatpush1.msra.mxu0 %v646
    %1170 = vmatprep.subr.mxu0 %v643
    %1171 = vmatpush1.msra.mxu0 %v642
    %1172 = vmatprep.subr.mxu0 %v639
    %1173 = vmatpush1.msra.mxu0 %v638
    %1174 = vmatprep.subr.mxu0 %v635
    %1175 = vmatpush1.msra.mxu0 %v634
    %1176 = vmatprep.subr.mxu0 %v631
    %1177 = vmatpush1.msra.mxu0 %v630
    %1178 = vmatprep.subr.mxu0 %v627
    %1179 = vmatpush1.msra.mxu0 %v626
    %1180 = vmatprep.subr.mxu0 %v623
    %1181 = vmatpush1.msra.mxu0 %v622
    %1182 = vmatprep.subr.mxu0 %v619
    %1183 = vmatpush1.msra.mxu0 %v618
    %1184 = vmatprep.subr.mxu0 %v743
    %1185 = vmatpush2.msra.mxu0 %v742
    %1186 = vmatprep.subr.mxu0 %v739
    %1187 = vmatpush2.msra.mxu0 %v738
    %1188 = vmatprep.subr.mxu0 %v735
    %1189 = vmatpush2.msra.mxu0 %v734
    %1190 = vmatprep.subr.mxu0 %v731
    %1191 = vmatpush2.msra.mxu0 %v730
    %1192 = vmatprep.subr.mxu0 %v727
    %1193 = vmatpush2.msra.mxu0 %v726
    %1194 = vmatprep.subr.mxu0 %v723
    %1195 = vmatpush2.msra.mxu0 %v722
    %1196 = vmatprep.subr.mxu0 %v719
    %1197 = vmatpush2.msra.mxu0 %v718
    %1198 = vmatprep.subr.mxu0 %v715
    %1199 = vmatpush2.msra.mxu0 %v714
    %1200 = vmatprep.subr.mxu0 %v711
    %1201 = vmatpush2.msra.mxu0 %v710
    %1202 = vmatprep.subr.mxu0 %v707
    %1203 = vmatpush2.msra.mxu0 %v706
    %1204 = vmatprep.subr.mxu0 %v703
    %1205 = vmatpush2.msra.mxu0 %v702
    %1206 = vmatprep.subr.mxu0 %v699
    %1207 = vmatpush2.msra.mxu0 %v698
    %1208 = vmatprep.subr.mxu0 %v695
    %1209 = vmatpush2.msra.mxu0 %v694
    %1210 = vmatprep.subr.mxu0 %v691
    %1211 = vmatpush2.msra.mxu0 %v690
    %1212 = vmatprep.subr.mxu0 %v687
    %1213 = vmatpush2.msra.mxu0 %v686
    %1214 = vmatprep.subr.mxu0 %v683
    %1215 = vmatpush2.msra.mxu0 %v682
    %1216 = vmatprep.mubr.f32.mxu0 %v107
    %1217 = vmatmul.mubr.f32.gmra.mxu0 %v106
    %v1218 = vpop.f32.mrf.mxu0
    %v1219 = vadd.f32 %v1135, %v1218
    %v1220 = vpop.f32.mrf.mxu0
    %v1221 = vadd.f32 %v1139, %v1220
    %1222 = vmatprep.mubr.f32.mxu0 %v115
    %1223 = vmatmul.mubr.f32.gmra.mxu0 %v114
    %v1224 = vpop.f32.mrf.mxu0
    %v1225 = vadd.f32 %v1135, %v1224
    %v1226 = vpop.f32.mrf.mxu0
    %v1227 = vadd.f32 %v1139, %v1226
    %1228 = vmatprep.mubr.f32.mxu0 %v123
    %1229 = vmatmul.mubr.f32.gmra.mxu0 %v122
    %v1230 = vpop.f32.mrf.mxu0
    %v1231 = vadd.f32 %v1135, %v1230
    %v1232 = vpop.f32.mrf.mxu0
    %v1233 = vadd.f32 %v1139, %v1232
    %1234 = vmatprep.mubr.f32.mxu0 %v131
    %1235 = vmatmul.mubr.f32.gmra.mxu0 %v130
    %v1236 = vpop.f32.mrf.mxu0
    %v1237 = vadd.f32 %v1135, %v1236
    %v1238 = vpop.f32.mrf.mxu0
    %v1239 = vadd.f32 %v1139, %v1238
    %1240 = vmatprep.mubr.f32.mxu0 %v139
    %1241 = vmatmul.mubr.f32.gmra.mxu0 %v138
    %v1242 = vpop.f32.mrf.mxu0
    %v1243 = vadd.f32 %v1135, %v1242
    %v1244 = vpop.f32.mrf.mxu0
    %v1245 = vadd.f32 %v1139, %v1244
    %1246 = vmatprep.mubr.f32.mxu0 %v147
    %1247 = vmatmul.mubr.f32.gmra.mxu0 %v146
    %v1248 = vpop.f32.mrf.mxu0
    %v1249 = vadd.f32 %v1135, %v1248
    %v1250 = vpop.f32.mrf.mxu0
    %v1251 = vadd.f32 %v1139, %v1250
    %1252 = vmatprep.mubr.f32.mxu0 %v155
    %1253 = vmatmul.mubr.f32.gmra.mxu0 %v154
    %v1254 = vpop.f32.mrf.mxu0
    %v1255 = vadd.f32 %v1135, %v1254
    %v1256 = vpop.f32.mrf.mxu0
    %v1257 = vadd.f32 %v1139, %v1256
    %1258 = vmatprep.mubr.f32.mxu0 %v163
    %1259 = vmatmul.mubr.f32.gmra.mxu0 %v162
    %v1260 = vpop.f32.mrf.mxu0
    %v1261 = vadd.f32 %v1135, %v1260
    %v1262 = vpop.f32.mrf.mxu0
    %v1263 = vadd.f32 %v1139, %v1262
    %1264 = vmatprep.mubr.f32.mxu0 %v171
    %1265 = vmatmul.mubr.f32.gmra.mxu0 %v170
    %v1266 = vpop.f32.mrf.mxu0
    %v1267 = vadd.f32 %v1135, %v1266
    %v1268 = vpop.f32.mrf.mxu0
    %v1269 = vadd.f32 %v1139, %v1268
    %1270 = vmatprep.mubr.f32.mxu0 %v179
    %1271 = vmatmul.mubr.f32.gmra.mxu0 %v178
    %v1272 = vpop.f32.mrf.mxu0
    %v1273 = vadd.f32 %v1135, %v1272
    %v1274 = vpop.f32.mrf.mxu0
    %v1275 = vadd.f32 %v1139, %v1274
    %1276 = vmatprep.mubr.f32.mxu0 %v187
    %1277 = vmatmul.mubr.f32.gmra.mxu0 %v186
    %v1278 = vpop.f32.mrf.mxu0
    %v1279 = vadd.f32 %v1135, %v1278
    %v1280 = vpop.f32.mrf.mxu0
    %v1281 = vadd.f32 %v1139, %v1280
    %1282 = vmatprep.mubr.f32.mxu0 %v195
    %1283 = vmatmul.mubr.f32.gmra.mxu0 %v194
    %v1284 = vpop.f32.mrf.mxu0
    %v1285 = vadd.f32 %v1135, %v1284
    %v1286 = vpop.f32.mrf.mxu0
    %v1287 = vadd.f32 %v1139, %v1286
    %1288 = vmatprep.mubr.f32.mxu0 %v203
    %1289 = vmatmul.mubr.f32.gmra.mxu0 %v202
    %v1290 = vpop.f32.mrf.mxu0
    %v1291 = vadd.f32 %v1135, %v1290
    %v1292 = vpop.f32.mrf.mxu0
    %v1293 = vadd.f32 %v1139, %v1292
    %1294 = vmatprep.mubr.f32.mxu0 %v211
    %1295 = vmatmul.mubr.f32.gmra.mxu0 %v210
    %v1296 = vpop.f32.mrf.mxu0
    %v1297 = vadd.f32 %v1135, %v1296
    %v1298 = vpop.f32.mrf.mxu0
    %v1299 = vadd.f32 %v1139, %v1298
    %1300 = vmatprep.mubr.f32.mxu0 %v219
    %1301 = vmatmul.mubr.f32.gmra.mxu0 %v218
    %v1302 = vpop.f32.mrf.mxu0
    %v1303 = vadd.f32 %v1135, %v1302
    %v1304 = vpop.f32.mrf.mxu0
    %v1305 = vadd.f32 %v1139, %v1304
    %1306 = vmatprep.mubr.f32.mxu0 %v227
    %1307 = vmatmul.mubr.f32.gmra.mxu0 %v226
    %v1308 = vpop.f32.mrf.mxu0
    %v1309 = vadd.f32 %v1135, %v1308
    %v1310 = vpop.f32.mrf.mxu0
    %v1311 = vadd.f32 %v1139, %v1310
    %1312 = vmatprep.mubr.f32.mxu0 %v235
    %1313 = vmatmul.mubr.f32.gmra.mxu0 %v234
    %v1314 = vpop.f32.mrf.mxu0
    %v1315 = vadd.f32 %v1135, %v1314
    %v1316 = vpop.f32.mrf.mxu0
    %v1317 = vadd.f32 %v1139, %v1316
    %1318 = vmatprep.mubr.f32.mxu0 %v243
    %1319 = vmatmul.mubr.f32.gmra.mxu0 %v242
    %v1320 = vpop.f32.mrf.mxu0
    %v1321 = vadd.f32 %v1135, %v1320
    %v1322 = vpop.f32.mrf.mxu0
    %v1323 = vadd.f32 %v1139, %v1322
    %1324 = vmatprep.mubr.f32.mxu0 %v251
    %1325 = vmatmul.mubr.f32.gmra.mxu0 %v250
    %v1326 = vpop.f32.mrf.mxu0
    %v1327 = vadd.f32 %v1135, %v1326
    %v1328 = vpop.f32.mrf.mxu0
    %v1329 = vadd.f32 %v1139, %v1328
    %1330 = vmatprep.mubr.f32.mxu0 %v259
    %1331 = vmatmul.mubr.f32.gmra.mxu0 %v258
    %v1332 = vpop.f32.mrf.mxu0
    %v1333 = vadd.f32 %v1135, %v1332
    %v1334 = vpop.f32.mrf.mxu0
    %v1335 = vadd.f32 %v1139, %v1334
    %1336 = vmatprep.mubr.f32.mxu0 %v267
    %1337 = vmatmul.mubr.f32.gmra.mxu0 %v266
    %v1338 = vpop.f32.mrf.mxu0
    %v1339 = vadd.f32 %v1135, %v1338
    %v1340 = vpop.f32.mrf.mxu0
    %v1341 = vadd.f32 %v1139, %v1340
    %1342 = vmatprep.mubr.f32.mxu0 %v275
    %1343 = vmatmul.mubr.f32.gmra.mxu0 %v274
    %v1344 = vpop.f32.mrf.mxu0
    %v1345 = vadd.f32 %v1135, %v1344
    %v1346 = vpop.f32.mrf.mxu0
    %v1347 = vadd.f32 %v1139, %v1346
    %1348 = vmatprep.mubr.f32.mxu0 %v283
    %1349 = vmatmul.mubr.f32.gmra.mxu0 %v282
    %v1350 = vpop.f32.mrf.mxu0
    %v1351 = vadd.f32 %v1135, %v1350
    %v1352 = vpop.f32.mrf.mxu0
    %v1353 = vadd.f32 %v1139, %v1352
    %1354 = vmatprep.mubr.f32.mxu0 %v291
    %1355 = vmatmul.mubr.f32.gmra.mxu0 %v290
    %v1356 = vpop.f32.mrf.mxu0
    %v1357 = vadd.f32 %v1135, %v1356
    %v1358 = vpop.f32.mrf.mxu0
    %v1359 = vadd.f32 %v1139, %v1358
    %1360 = vmatprep.mubr.f32.mxu0 %v299
    %1361 = vmatmul.mubr.f32.gmra.mxu0 %v298
    %v1362 = vpop.f32.mrf.mxu0
    %v1363 = vadd.f32 %v1135, %v1362
    %v1364 = vpop.f32.mrf.mxu0
    %v1365 = vadd.f32 %v1139, %v1364
    %1366 = vmatprep.mubr.f32.mxu0 %v307
    %1367 = vmatmul.mubr.f32.gmra.mxu0 %v306
    %v1368 = vpop.f32.mrf.mxu0
    %v1369 = vadd.f32 %v1135, %v1368
    %v1370 = vpop.f32.mrf.mxu0
    %v1371 = vadd.f32 %v1139, %v1370
    %1372 = vmatprep.mubr.f32.mxu0 %v315
    %1373 = vmatmul.mubr.f32.gmra.mxu0 %v314
    %v1374 = vpop.f32.mrf.mxu0
    %v1375 = vadd.f32 %v1135, %v1374
    %v1376 = vpop.f32.mrf.mxu0
    %v1377 = vadd.f32 %v1139, %v1376
    %1378 = vmatprep.mubr.f32.mxu0 %v323
    %1379 = vmatmul.mubr.f32.gmra.mxu0 %v322
    %v1380 = vpop.f32.mrf.mxu0
    %v1381 = vadd.f32 %v1135, %v1380
    %v1382 = vpop.f32.mrf.mxu0
    %v1383 = vadd.f32 %v1139, %v1382
    %1384 = vmatprep.mubr.f32.mxu0 %v331
    %1385 = vmatmul.mubr.f32.gmra.mxu0 %v330
    %v1386 = vpop.f32.mrf.mxu0
    %v1387 = vadd.f32 %v1135, %v1386
    %v1388 = vpop.f32.mrf.mxu0
    %v1389 = vadd.f32 %v1139, %v1388
    %1390 = vmatprep.mubr.f32.mxu0 %v339
    %1391 = vmatmul.mubr.f32.gmra.mxu0 %v338
    %v1392 = vpop.f32.mrf.mxu0
    %v1393 = vadd.f32 %v1135, %v1392
    %v1394 = vpop.f32.mrf.mxu0
    %v1395 = vadd.f32 %v1139, %v1394
    %1396 = vmatprep.mubr.f32.mxu0 %v347
    %1397 = vmatmul.mubr.f32.gmra.mxu0 %v346
    %v1398 = vpop.f32.mrf.mxu0
    %v1399 = vadd.f32 %v1135, %v1398
    %v1400 = vpop.f32.mrf.mxu0
    %v1401 = vadd.f32 %v1139, %v1400
    %1402 = vmatprep.mubr.f32.mxu0 %v355
    %1403 = vmatmul.mubr.f32.gmra.mxu0 %v354
    %v1404 = vpop.f32.mrf.mxu0
    %v1405 = vadd.f32 %v1135, %v1404
    %v1406 = vpop.f32.mrf.mxu0
    %v1407 = vadd.f32 %v1139, %v1406
    %1408 = vmatprep.mubr.f32.mxu0 %v363
    %1409 = vmatmul.mubr.f32.gmra.mxu0 %v362
    %v1410 = vpop.f32.mrf.mxu0
    %v1411 = vadd.f32 %v1135, %v1410
    %v1412 = vpop.f32.mrf.mxu0
    %v1413 = vadd.f32 %v1139, %v1412
    %1414 = vmatprep.mubr.f32.mxu0 %v371
    %1415 = vmatmul.mubr.f32.gmra.mxu0 %v370
    %v1416 = vpop.f32.mrf.mxu0
    %v1417 = vadd.f32 %v1135, %v1416
    %v1418 = vpop.f32.mrf.mxu0
    %v1419 = vadd.f32 %v1139, %v1418
    %1420 = vmatprep.mubr.f32.mxu0 %v379
    %1421 = vmatmul.mubr.f32.gmra.mxu0 %v378
    %v1422 = vpop.f32.mrf.mxu0
    %v1423 = vadd.f32 %v1135, %v1422
    %v1424 = vpop.f32.mrf.mxu0
    %v1425 = vadd.f32 %v1139, %v1424
    %1426 = vmatprep.mubr.f32.mxu0 %v387
    %1427 = vmatmul.mubr.f32.gmra.mxu0 %v386
    %v1428 = vpop.f32.mrf.mxu0
    %v1429 = vadd.f32 %v1135, %v1428
    %v1430 = vpop.f32.mrf.mxu0
    %v1431 = vadd.f32 %v1139, %v1430
    %1432 = vmatprep.mubr.f32.mxu0 %v395
    %1433 = vmatmul.mubr.f32.gmra.mxu0 %v394
    %v1434 = vpop.f32.mrf.mxu0
    %v1435 = vadd.f32 %v1135, %v1434
    %v1436 = vpop.f32.mrf.mxu0
    %v1437 = vadd.f32 %v1139, %v1436
    %1438 = vmatprep.mubr.f32.mxu0 %v403
    %1439 = vmatmul.mubr.f32.gmra.mxu0 %v402
    %v1440 = vpop.f32.mrf.mxu0
    %v1441 = vadd.f32 %v1135, %v1440
    %v1442 = vpop.f32.mrf.mxu0
    %v1443 = vadd.f32 %v1139, %v1442
    %1444 = vmatprep.mubr.f32.mxu0 %v411
    %1445 = vmatmul.mubr.f32.gmra.mxu0 %v410
    %v1446 = vpop.f32.mrf.mxu0
    %v1447 = vadd.f32 %v1135, %v1446
    %v1448 = vpop.f32.mrf.mxu0
    %v1449 = vadd.f32 %v1139, %v1448
    %1450 = vmatprep.mubr.f32.mxu0 %v419
    %1451 = vmatmul.mubr.f32.gmra.mxu0 %v418
    %v1452 = vpop.f32.mrf.mxu0
    %v1453 = vadd.f32 %v1135, %v1452
    %v1454 = vpop.f32.mrf.mxu0
    %v1455 = vadd.f32 %v1139, %v1454
    %1456 = vmatprep.mubr.f32.mxu0 %v427
    %1457 = vmatmul.mubr.f32.gmra.mxu0 %v426
    %v1458 = vpop.f32.mrf.mxu0
    %v1459 = vadd.f32 %v1135, %v1458
    %v1460 = vpop.f32.mrf.mxu0
    %v1461 = vadd.f32 %v1139, %v1460
    %1462 = vmatprep.mubr.f32.mxu0 %v435
    %1463 = vmatmul.mubr.f32.gmra.mxu0 %v434
    %v1464 = vpop.f32.mrf.mxu0
    %v1465 = vadd.f32 %v1135, %v1464
    %v1466 = vpop.f32.mrf.mxu0
    %v1467 = vadd.f32 %v1139, %v1466
    %1468 = vmatprep.mubr.f32.mxu0 %v443
    %1469 = vmatmul.mubr.f32.gmra.mxu0 %v442
    %v1470 = vpop.f32.mrf.mxu0
    %v1471 = vadd.f32 %v1135, %v1470
    %v1472 = vpop.f32.mrf.mxu0
    %v1473 = vadd.f32 %v1139, %v1472
    %1474 = vmatprep.mubr.f32.mxu0 %v451
    %1475 = vmatmul.mubr.f32.gmra.mxu0 %v450
    %v1476 = vpop.f32.mrf.mxu0
    %v1477 = vadd.f32 %v1135, %v1476
    %v1478 = vpop.f32.mrf.mxu0
    %v1479 = vadd.f32 %v1139, %v1478
    %1480 = vmatprep.mubr.f32.mxu0 %v459
    %1481 = vmatmul.mubr.f32.gmra.mxu0 %v458
    %v1482 = vpop.f32.mrf.mxu0
    %v1483 = vadd.f32 %v1135, %v1482
    %v1484 = vpop.f32.mrf.mxu0
    %v1485 = vadd.f32 %v1139, %v1484
    %1486 = vmatprep.mubr.f32.mxu0 %v467
    %1487 = vmatmul.mubr.f32.gmra.mxu0 %v466
    %v1488 = vpop.f32.mrf.mxu0
    %v1489 = vadd.f32 %v1135, %v1488
    %v1490 = vpop.f32.mrf.mxu0
    %v1491 = vadd.f32 %v1139, %v1490
    %1492 = vmatprep.mubr.f32.mxu0 %v475
    %1493 = vmatmul.mubr.f32.gmra.mxu0 %v474
    %v1494 = vpop.f32.mrf.mxu0
    %v1495 = vadd.f32 %v1135, %v1494
    %v1496 = vpop.f32.mrf.mxu0
    %v1497 = vadd.f32 %v1139, %v1496
    %1498 = vmatprep.mubr.f32.mxu0 %v483
    %1499 = vmatmul.mubr.f32.gmra.mxu0 %v482
    %v1500 = vpop.f32.mrf.mxu0
    %v1501 = vadd.f32 %v1135, %v1500
    %v1502 = vpop.f32.mrf.mxu0
    %v1503 = vadd.f32 %v1139, %v1502
    %1504 = vmatprep.mubr.f32.mxu0 %v491
    %1505 = vmatmul.mubr.f32.gmra.mxu0 %v490
    %v1506 = vpop.f32.mrf.mxu0
    %v1507 = vadd.f32 %v1135, %v1506
    %v1508 = vpop.f32.mrf.mxu0
    %v1509 = vadd.f32 %v1139, %v1508
    %1510 = vmatprep.mubr.f32.mxu0 %v499
    %1511 = vmatmul.mubr.f32.gmra.mxu0 %v498
    %v1512 = vpop.f32.mrf.mxu0
    %v1513 = vadd.f32 %v1135, %v1512
    %v1514 = vpop.f32.mrf.mxu0
    %v1515 = vadd.f32 %v1139, %v1514
    %1516 = vmatprep.mubr.f32.mxu0 %v507
    %1517 = vmatmul.mubr.f32.gmra.mxu0 %v506
    %v1518 = vpop.f32.mrf.mxu0
    %v1519 = vadd.f32 %v1135, %v1518
    %v1520 = vpop.f32.mrf.mxu0
    %v1521 = vadd.f32 %v1139, %v1520
    %1522 = vmatprep.mubr.f32.mxu0 %v515
    %1523 = vmatmul.mubr.f32.gmra.mxu0 %v514
    %v1524 = vpop.f32.mrf.mxu0
    %v1525 = vadd.f32 %v1135, %v1524
    %v1526 = vpop.f32.mrf.mxu0
    %v1527 = vadd.f32 %v1139, %v1526
    %1528 = vmatprep.mubr.f32.mxu0 %v523
    %1529 = vmatmul.mubr.f32.gmra.mxu0 %v522
    %v1530 = vpop.f32.mrf.mxu0
    %v1531 = vadd.f32 %v1135, %v1530
    %v1532 = vpop.f32.mrf.mxu0
    %v1533 = vadd.f32 %v1139, %v1532
    %1534 = vmatprep.mubr.f32.mxu0 %v531
    %1535 = vmatmul.mubr.f32.gmra.mxu0 %v530
    %v1536 = vpop.f32.mrf.mxu0
    %v1537 = vadd.f32 %v1135, %v1536
    %v1538 = vpop.f32.mrf.mxu0
    %v1539 = vadd.f32 %v1139, %v1538
    %1540 = vmatprep.mubr.f32.mxu0 %v539
    %1541 = vmatmul.mubr.f32.gmra.mxu0 %v538
    %v1542 = vpop.f32.mrf.mxu0
    %v1543 = vadd.f32 %v1135, %v1542
    %v1544 = vpop.f32.mrf.mxu0
    %v1545 = vadd.f32 %v1139, %v1544
    %1546 = vmatprep.mubr.f32.mxu0 %v547
    %1547 = vmatmul.mubr.f32.gmra.mxu0 %v546
    %v1548 = vpop.f32.mrf.mxu0
    %v1549 = vadd.f32 %v1135, %v1548
    %v1550 = vpop.f32.mrf.mxu0
    %v1551 = vadd.f32 %v1139, %v1550
    %1552 = vmatprep.mubr.f32.mxu0 %v555
    %1553 = vmatmul.mubr.f32.gmra.mxu0 %v554
    %v1554 = vpop.f32.mrf.mxu0
    %v1555 = vadd.f32 %v1135, %v1554
    %v1556 = vpop.f32.mrf.mxu0
    %v1557 = vadd.f32 %v1139, %v1556
    %1558 = vmatprep.mubr.f32.mxu0 %v563
    %1559 = vmatmul.mubr.f32.gmra.mxu0 %v562
    %v1560 = vpop.f32.mrf.mxu0
    %v1561 = vadd.f32 %v1135, %v1560
    %v1562 = vpop.f32.mrf.mxu0
    %v1563 = vadd.f32 %v1139, %v1562
    %1564 = vmatprep.mubr.f32.mxu0 %v571
    %1565 = vmatmul.mubr.f32.gmra.mxu0 %v570
    %v1566 = vpop.f32.mrf.mxu0
    %v1567 = vadd.f32 %v1135, %v1566
    %v1568 = vpop.f32.mrf.mxu0
    %v1569 = vadd.f32 %v1139, %v1568
    %1570 = vmatprep.mubr.f32.mxu0 %v579
    %1571 = vmatmul.mubr.f32.gmra.mxu0 %v578
    %v1572 = vpop.f32.mrf.mxu0
    %v1573 = vadd.f32 %v1135, %v1572
    %v1574 = vpop.f32.mrf.mxu0
    %v1575 = vadd.f32 %v1139, %v1574
    %1576 = vmatprep.mubr.f32.mxu0 %v587
    %1577 = vmatmul.mubr.f32.gmra.mxu0 %v586
    %v1578 = vpop.f32.mrf.mxu0
    %v1579 = vadd.f32 %v1135, %v1578
    %v1580 = vpop.f32.mrf.mxu0
    %v1581 = vadd.f32 %v1139, %v1580
    %1582 = vmatprep.mubr.f32.mxu0 %v595
    %1583 = vmatmul.mubr.f32.gmra.mxu0 %v594
    %v1584 = vpop.f32.mrf.mxu0
    %v1585 = vadd.f32 %v1135, %v1584
    %v1586 = vpop.f32.mrf.mxu0
    %v1587 = vadd.f32 %v1139, %v1586
    %1588 = vmatprep.mubr.f32.mxu0 %v603
    %1589 = vmatmul.mubr.f32.gmra.mxu0 %v602
    %v1590 = vpop.f32.mrf.mxu0
    %v1591 = vadd.f32 %v1135, %v1590
    %v1592 = vpop.f32.mrf.mxu0
    %v1593 = vadd.f32 %v1139, %v1592
    %1594 = vmatprep.mubr.f32.mxu0 %v611
    %1595 = vmatmul.mubr.f32.gmra.mxu0 %v610
    %v1596 = vpop.f32.mrf.mxu0
    %v1597 = vadd.f32 %v1135, %v1596
    %v1598 = vpop.f32.mrf.mxu0
    %v1599 = vadd.f32 %v1139, %v1598
    %1600 = vdwg.mxu0
    %1601 = vmatprep.subr.mxu0 %v807
    %1602 = vmatpush1.msra.mxu0 %v806
    %1603 = vmatprep.subr.mxu0 %v803
    %1604 = vmatpush1.msra.mxu0 %v802
    %1605 = vmatprep.subr.mxu0 %v799
    %1606 = vmatpush1.msra.mxu0 %v798
    %1607 = vmatprep.subr.mxu0 %v795
    %1608 = vmatpush1.msra.mxu0 %v794
    %1609 = vmatprep.subr.mxu0 %v791
    %1610 = vmatpush1.msra.mxu0 %v790
    %1611 = vmatprep.subr.mxu0 %v787
    %1612 = vmatpush1.msra.mxu0 %v786
    %1613 = vmatprep.subr.mxu0 %v783
    %1614 = vmatpush1.msra.mxu0 %v782
    %1615 = vmatprep.subr.mxu0 %v779
    %1616 = vmatpush1.msra.mxu0 %v778
    %1617 = vmatprep.subr.mxu0 %v775
    %1618 = vmatpush1.msra.mxu0 %v774
    %1619 = vmatprep.subr.mxu0 %v771
    %1620 = vmatpush1.msra.mxu0 %v770
    %1621 = vmatprep.subr.mxu0 %v767
    %1622 = vmatpush1.msra.mxu0 %v766
    %1623 = vmatprep.subr.mxu0 %v763
    %1624 = vmatpush1.msra.mxu0 %v762
    %1625 = vmatprep.subr.mxu0 %v759
    %1626 = vmatpush1.msra.mxu0 %v758
    %1627 = vmatprep.subr.mxu0 %v755
    %1628 = vmatpush1.msra.mxu0 %v754
    %1629 = vmatprep.subr.mxu0 %v751
    %1630 = vmatpush1.msra.mxu0 %v750
    %1631 = vmatprep.subr.mxu0 %v747
    %1632 = vmatpush1.msra.mxu0 %v746
    %1633 = vmatprep.subr.mxu0 %v871
    %1634 = vmatpush2.msra.mxu0 %v870
    %1635 = vmatprep.subr.mxu0 %v867
    %1636 = vmatpush2.msra.mxu0 %v866
    %1637 = vmatprep.subr.mxu0 %v863
    %1638 = vmatpush2.msra.mxu0 %v862
    %1639 = vmatprep.subr.mxu0 %v859
    %1640 = vmatpush2.msra.mxu0 %v858
    %1641 = vmatprep.subr.mxu0 %v855
    %1642 = vmatpush2.msra.mxu0 %v854
    %1643 = vmatprep.subr.mxu0 %v851
    %1644 = vmatpush2.msra.mxu0 %v850
    %1645 = vmatprep.subr.mxu0 %v847
    %1646 = vmatpush2.msra.mxu0 %v846
    %1647 = vmatprep.subr.mxu0 %v843
    %1648 = vmatpush2.msra.mxu0 %v842
    %1649 = vmatprep.subr.mxu0 %v839
    %1650 = vmatpush2.msra.mxu0 %v838
    %1651 = vmatprep.subr.mxu0 %v835
    %1652 = vmatpush2.msra.mxu0 %v834
    %1653 = vmatprep.subr.mxu0 %v831
    %1654 = vmatpush2.msra.mxu0 %v830
    %1655 = vmatprep.subr.mxu0 %v827
    %1656 = vmatpush2.msra.mxu0 %v826
    %1657 = vmatprep.subr.mxu0 %v823
    %1658 = vmatpush2.msra.mxu0 %v822
    %1659 = vmatprep.subr.mxu0 %v819
    %1660 = vmatpush2.msra.mxu0 %v818
    %1661 = vmatprep.subr.mxu0 %v815
    %1662 = vmatpush2.msra.mxu0 %v814
    %1663 = vmatprep.subr.mxu0 %v811
    %1664 = vmatpush2.msra.mxu0 %v810
    %1665 = vmatprep.mubr.f32.mxu0 %v109
    %1666 = vmatmul.mubr.f32.gmra.mxu0 %v108
    %v1667 = vpop.f32.mrf.mxu0
    %v1668 = vadd.f32 %v1219, %v1667
    %v1669 = vpop.f32.mrf.mxu0
    %v1670 = vadd.f32 %v1221, %v1669
    %1671 = vmatprep.mubr.f32.mxu0 %v117
    %1672 = vmatmul.mubr.f32.gmra.mxu0 %v116
    %v1673 = vpop.f32.mrf.mxu0
    %v1674 = vadd.f32 %v1225, %v1673
    %v1675 = vpop.f32.mrf.mxu0
    %v1676 = vadd.f32 %v1227, %v1675
    %1677 = vmatprep.mubr.f32.mxu0 %v125
    %1678 = vmatmul.mubr.f32.gmra.mxu0 %v124
    %v1679 = vpop.f32.mrf.mxu0
    %v1680 = vadd.f32 %v1231, %v1679
    %v1681 = vpop.f32.mrf.mxu0
    %v1682 = vadd.f32 %v1233, %v1681
    %1683 = vmatprep.mubr.f32.mxu0 %v133
    %1684 = vmatmul.mubr.f32.gmra.mxu0 %v132
    %v1685 = vpop.f32.mrf.mxu0
    %v1686 = vadd.f32 %v1237, %v1685
    %v1687 = vpop.f32.mrf.mxu0
    %v1688 = vadd.f32 %v1239, %v1687
    %1689 = vmatprep.mubr.f32.mxu0 %v141
    %1690 = vmatmul.mubr.f32.gmra.mxu0 %v140
    %v1691 = vpop.f32.mrf.mxu0
    %v1692 = vadd.f32 %v1243, %v1691
    %v1693 = vpop.f32.mrf.mxu0
    %v1694 = vadd.f32 %v1245, %v1693
    %1695 = vmatprep.mubr.f32.mxu0 %v149
    %1696 = vmatmul.mubr.f32.gmra.mxu0 %v148
    %v1697 = vpop.f32.mrf.mxu0
    %v1698 = vadd.f32 %v1249, %v1697
    %v1699 = vpop.f32.mrf.mxu0
    %v1700 = vadd.f32 %v1251, %v1699
    %1701 = vmatprep.mubr.f32.mxu0 %v157
    %1702 = vmatmul.mubr.f32.gmra.mxu0 %v156
    %v1703 = vpop.f32.mrf.mxu0
    %v1704 = vadd.f32 %v1255, %v1703
    %v1705 = vpop.f32.mrf.mxu0
    %v1706 = vadd.f32 %v1257, %v1705
    %1707 = vmatprep.mubr.f32.mxu0 %v165
    %1708 = vmatmul.mubr.f32.gmra.mxu0 %v164
    %v1709 = vpop.f32.mrf.mxu0
    %v1710 = vadd.f32 %v1261, %v1709
    %v1711 = vpop.f32.mrf.mxu0
    %v1712 = vadd.f32 %v1263, %v1711
    %1713 = vmatprep.mubr.f32.mxu0 %v173
    %1714 = vmatmul.mubr.f32.gmra.mxu0 %v172
    %v1715 = vpop.f32.mrf.mxu0
    %v1716 = vadd.f32 %v1267, %v1715
    %v1717 = vpop.f32.mrf.mxu0
    %v1718 = vadd.f32 %v1269, %v1717
    %1719 = vmatprep.mubr.f32.mxu0 %v181
    %1720 = vmatmul.mubr.f32.gmra.mxu0 %v180
    %v1721 = vpop.f32.mrf.mxu0
    %v1722 = vadd.f32 %v1273, %v1721
    %v1723 = vpop.f32.mrf.mxu0
    %v1724 = vadd.f32 %v1275, %v1723
    %1725 = vmatprep.mubr.f32.mxu0 %v189
    %1726 = vmatmul.mubr.f32.gmra.mxu0 %v188
    %v1727 = vpop.f32.mrf.mxu0
    %v1728 = vadd.f32 %v1279, %v1727
    %v1729 = vpop.f32.mrf.mxu0
    %v1730 = vadd.f32 %v1281, %v1729
    %1731 = vmatprep.mubr.f32.mxu0 %v197
    %1732 = vmatmul.mubr.f32.gmra.mxu0 %v196
    %v1733 = vpop.f32.mrf.mxu0
    %v1734 = vadd.f32 %v1285, %v1733
    %v1735 = vpop.f32.mrf.mxu0
    %v1736 = vadd.f32 %v1287, %v1735
    %1737 = vmatprep.mubr.f32.mxu0 %v205
    %1738 = vmatmul.mubr.f32.gmra.mxu0 %v204
    %v1739 = vpop.f32.mrf.mxu0
    %v1740 = vadd.f32 %v1291, %v1739
    %v1741 = vpop.f32.mrf.mxu0
    %v1742 = vadd.f32 %v1293, %v1741
    %1743 = vmatprep.mubr.f32.mxu0 %v213
    %1744 = vmatmul.mubr.f32.gmra.mxu0 %v212
    %v1745 = vpop.f32.mrf.mxu0
    %v1746 = vadd.f32 %v1297, %v1745
    %v1747 = vpop.f32.mrf.mxu0
    %v1748 = vadd.f32 %v1299, %v1747
    %1749 = vmatprep.mubr.f32.mxu0 %v221
    %1750 = vmatmul.mubr.f32.gmra.mxu0 %v220
    %v1751 = vpop.f32.mrf.mxu0
    %v1752 = vadd.f32 %v1303, %v1751
    %v1753 = vpop.f32.mrf.mxu0
    %v1754 = vadd.f32 %v1305, %v1753
    %1755 = vmatprep.mubr.f32.mxu0 %v229
    %1756 = vmatmul.mubr.f32.gmra.mxu0 %v228
    %v1757 = vpop.f32.mrf.mxu0
    %v1758 = vadd.f32 %v1309, %v1757
    %v1759 = vpop.f32.mrf.mxu0
    %v1760 = vadd.f32 %v1311, %v1759
    %1761 = vmatprep.mubr.f32.mxu0 %v237
    %1762 = vmatmul.mubr.f32.gmra.mxu0 %v236
    %v1763 = vpop.f32.mrf.mxu0
    %v1764 = vadd.f32 %v1315, %v1763
    %v1765 = vpop.f32.mrf.mxu0
    %v1766 = vadd.f32 %v1317, %v1765
    %1767 = vmatprep.mubr.f32.mxu0 %v245
    %1768 = vmatmul.mubr.f32.gmra.mxu0 %v244
    %v1769 = vpop.f32.mrf.mxu0
    %v1770 = vadd.f32 %v1321, %v1769
    %v1771 = vpop.f32.mrf.mxu0
    %v1772 = vadd.f32 %v1323, %v1771
    %1773 = vmatprep.mubr.f32.mxu0 %v253
    %1774 = vmatmul.mubr.f32.gmra.mxu0 %v252
    %v1775 = vpop.f32.mrf.mxu0
    %v1776 = vadd.f32 %v1327, %v1775
    %v1777 = vpop.f32.mrf.mxu0
    %v1778 = vadd.f32 %v1329, %v1777
    %1779 = vmatprep.mubr.f32.mxu0 %v261
    %1780 = vmatmul.mubr.f32.gmra.mxu0 %v260
    %v1781 = vpop.f32.mrf.mxu0
    %v1782 = vadd.f32 %v1333, %v1781
    %v1783 = vpop.f32.mrf.mxu0
    %v1784 = vadd.f32 %v1335, %v1783
    %1785 = vmatprep.mubr.f32.mxu0 %v269
    %1786 = vmatmul.mubr.f32.gmra.mxu0 %v268
    %v1787 = vpop.f32.mrf.mxu0
    %v1788 = vadd.f32 %v1339, %v1787
    %v1789 = vpop.f32.mrf.mxu0
    %v1790 = vadd.f32 %v1341, %v1789
    %1791 = vmatprep.mubr.f32.mxu0 %v277
    %1792 = vmatmul.mubr.f32.gmra.mxu0 %v276
    %v1793 = vpop.f32.mrf.mxu0
    %v1794 = vadd.f32 %v1345, %v1793
    %v1795 = vpop.f32.mrf.mxu0
    %v1796 = vadd.f32 %v1347, %v1795
    %1797 = vmatprep.mubr.f32.mxu0 %v285
    %1798 = vmatmul.mubr.f32.gmra.mxu0 %v284
    %v1799 = vpop.f32.mrf.mxu0
    %v1800 = vadd.f32 %v1351, %v1799
    %v1801 = vpop.f32.mrf.mxu0
    %v1802 = vadd.f32 %v1353, %v1801
    %1803 = vmatprep.mubr.f32.mxu0 %v293
    %1804 = vmatmul.mubr.f32.gmra.mxu0 %v292
    %v1805 = vpop.f32.mrf.mxu0
    %v1806 = vadd.f32 %v1357, %v1805
    %v1807 = vpop.f32.mrf.mxu0
    %v1808 = vadd.f32 %v1359, %v1807
    %1809 = vmatprep.mubr.f32.mxu0 %v301
    %1810 = vmatmul.mubr.f32.gmra.mxu0 %v300
    %v1811 = vpop.f32.mrf.mxu0
    %v1812 = vadd.f32 %v1363, %v1811
    %v1813 = vpop.f32.mrf.mxu0
    %v1814 = vadd.f32 %v1365, %v1813
    %1815 = vmatprep.mubr.f32.mxu0 %v309
    %1816 = vmatmul.mubr.f32.gmra.mxu0 %v308
    %v1817 = vpop.f32.mrf.mxu0
    %v1818 = vadd.f32 %v1369, %v1817
    %v1819 = vpop.f32.mrf.mxu0
    %v1820 = vadd.f32 %v1371, %v1819
    %1821 = vmatprep.mubr.f32.mxu0 %v317
    %1822 = vmatmul.mubr.f32.gmra.mxu0 %v316
    %v1823 = vpop.f32.mrf.mxu0
    %v1824 = vadd.f32 %v1375, %v1823
    %v1825 = vpop.f32.mrf.mxu0
    %v1826 = vadd.f32 %v1377, %v1825
    %1827 = vmatprep.mubr.f32.mxu0 %v325
    %1828 = vmatmul.mubr.f32.gmra.mxu0 %v324
    %v1829 = vpop.f32.mrf.mxu0
    %v1830 = vadd.f32 %v1381, %v1829
    %v1831 = vpop.f32.mrf.mxu0
    %v1832 = vadd.f32 %v1383, %v1831
    %1833 = vmatprep.mubr.f32.mxu0 %v333
    %1834 = vmatmul.mubr.f32.gmra.mxu0 %v332
    %v1835 = vpop.f32.mrf.mxu0
    %v1836 = vadd.f32 %v1387, %v1835
    %v1837 = vpop.f32.mrf.mxu0
    %v1838 = vadd.f32 %v1389, %v1837
    %1839 = vmatprep.mubr.f32.mxu0 %v341
    %1840 = vmatmul.mubr.f32.gmra.mxu0 %v340
    %v1841 = vpop.f32.mrf.mxu0
    %v1842 = vadd.f32 %v1393, %v1841
    %v1843 = vpop.f32.mrf.mxu0
    %v1844 = vadd.f32 %v1395, %v1843
    %1845 = vmatprep.mubr.f32.mxu0 %v349
    %1846 = vmatmul.mubr.f32.gmra.mxu0 %v348
    %v1847 = vpop.f32.mrf.mxu0
    %v1848 = vadd.f32 %v1399, %v1847
    %v1849 = vpop.f32.mrf.mxu0
    %v1850 = vadd.f32 %v1401, %v1849
    %1851 = vmatprep.mubr.f32.mxu0 %v357
    %1852 = vmatmul.mubr.f32.gmra.mxu0 %v356
    %v1853 = vpop.f32.mrf.mxu0
    %v1854 = vadd.f32 %v1405, %v1853
    %v1855 = vpop.f32.mrf.mxu0
    %v1856 = vadd.f32 %v1407, %v1855
    %1857 = vmatprep.mubr.f32.mxu0 %v365
    %1858 = vmatmul.mubr.f32.gmra.mxu0 %v364
    %v1859 = vpop.f32.mrf.mxu0
    %v1860 = vadd.f32 %v1411, %v1859
    %v1861 = vpop.f32.mrf.mxu0
    %v1862 = vadd.f32 %v1413, %v1861
    %1863 = vmatprep.mubr.f32.mxu0 %v373
    %1864 = vmatmul.mubr.f32.gmra.mxu0 %v372
    %v1865 = vpop.f32.mrf.mxu0
    %v1866 = vadd.f32 %v1417, %v1865
    %v1867 = vpop.f32.mrf.mxu0
    %v1868 = vadd.f32 %v1419, %v1867
    %1869 = vmatprep.mubr.f32.mxu0 %v381
    %1870 = vmatmul.mubr.f32.gmra.mxu0 %v380
    %v1871 = vpop.f32.mrf.mxu0
    %v1872 = vadd.f32 %v1423, %v1871
    %v1873 = vpop.f32.mrf.mxu0
    %v1874 = vadd.f32 %v1425, %v1873
    %1875 = vmatprep.mubr.f32.mxu0 %v389
    %1876 = vmatmul.mubr.f32.gmra.mxu0 %v388
    %v1877 = vpop.f32.mrf.mxu0
    %v1878 = vadd.f32 %v1429, %v1877
    %v1879 = vpop.f32.mrf.mxu0
    %v1880 = vadd.f32 %v1431, %v1879
    %1881 = vmatprep.mubr.f32.mxu0 %v397
    %1882 = vmatmul.mubr.f32.gmra.mxu0 %v396
    %v1883 = vpop.f32.mrf.mxu0
    %v1884 = vadd.f32 %v1435, %v1883
    %v1885 = vpop.f32.mrf.mxu0
    %v1886 = vadd.f32 %v1437, %v1885
    %1887 = vmatprep.mubr.f32.mxu0 %v405
    %1888 = vmatmul.mubr.f32.gmra.mxu0 %v404
    %v1889 = vpop.f32.mrf.mxu0
    %v1890 = vadd.f32 %v1441, %v1889
    %v1891 = vpop.f32.mrf.mxu0
    %v1892 = vadd.f32 %v1443, %v1891
    %1893 = vmatprep.mubr.f32.mxu0 %v413
    %1894 = vmatmul.mubr.f32.gmra.mxu0 %v412
    %v1895 = vpop.f32.mrf.mxu0
    %v1896 = vadd.f32 %v1447, %v1895
    %v1897 = vpop.f32.mrf.mxu0
    %v1898 = vadd.f32 %v1449, %v1897
    %1899 = vmatprep.mubr.f32.mxu0 %v421
    %1900 = vmatmul.mubr.f32.gmra.mxu0 %v420
    %v1901 = vpop.f32.mrf.mxu0
    %v1902 = vadd.f32 %v1453, %v1901
    %v1903 = vpop.f32.mrf.mxu0
    %v1904 = vadd.f32 %v1455, %v1903
    %1905 = vmatprep.mubr.f32.mxu0 %v429
    %1906 = vmatmul.mubr.f32.gmra.mxu0 %v428
    %v1907 = vpop.f32.mrf.mxu0
    %v1908 = vadd.f32 %v1459, %v1907
    %v1909 = vpop.f32.mrf.mxu0
    %v1910 = vadd.f32 %v1461, %v1909
    %1911 = vmatprep.mubr.f32.mxu0 %v437
    %1912 = vmatmul.mubr.f32.gmra.mxu0 %v436
    %v1913 = vpop.f32.mrf.mxu0
    %v1914 = vadd.f32 %v1465, %v1913
    %v1915 = vpop.f32.mrf.mxu0
    %v1916 = vadd.f32 %v1467, %v1915
    %1917 = vmatprep.mubr.f32.mxu0 %v445
    %1918 = vmatmul.mubr.f32.gmra.mxu0 %v444
    %v1919 = vpop.f32.mrf.mxu0
    %v1920 = vadd.f32 %v1471, %v1919
    %v1921 = vpop.f32.mrf.mxu0
    %v1922 = vadd.f32 %v1473, %v1921
    %1923 = vmatprep.mubr.f32.mxu0 %v453
    %1924 = vmatmul.mubr.f32.gmra.mxu0 %v452
    %v1925 = vpop.f32.mrf.mxu0
    %v1926 = vadd.f32 %v1477, %v1925
    %v1927 = vpop.f32.mrf.mxu0
    %v1928 = vadd.f32 %v1479, %v1927
    %1929 = vmatprep.mubr.f32.mxu0 %v461
    %1930 = vmatmul.mubr.f32.gmra.mxu0 %v460
    %v1931 = vpop.f32.mrf.mxu0
    %v1932 = vadd.f32 %v1483, %v1931
    %v1933 = vpop.f32.mrf.mxu0
    %v1934 = vadd.f32 %v1485, %v1933
    %1935 = vmatprep.mubr.f32.mxu0 %v469
    %1936 = vmatmul.mubr.f32.gmra.mxu0 %v468
    %v1937 = vpop.f32.mrf.mxu0
    %v1938 = vadd.f32 %v1489, %v1937
    %v1939 = vpop.f32.mrf.mxu0
    %v1940 = vadd.f32 %v1491, %v1939
    %1941 = vmatprep.mubr.f32.mxu0 %v477
    %1942 = vmatmul.mubr.f32.gmra.mxu0 %v476
    %v1943 = vpop.f32.mrf.mxu0
    %v1944 = vadd.f32 %v1495, %v1943
    %v1945 = vpop.f32.mrf.mxu0
    %v1946 = vadd.f32 %v1497, %v1945
    %1947 = vmatprep.mubr.f32.mxu0 %v485
    %1948 = vmatmul.mubr.f32.gmra.mxu0 %v484
    %v1949 = vpop.f32.mrf.mxu0
    %v1950 = vadd.f32 %v1501, %v1949
    %v1951 = vpop.f32.mrf.mxu0
    %v1952 = vadd.f32 %v1503, %v1951
    %1953 = vmatprep.mubr.f32.mxu0 %v493
    %1954 = vmatmul.mubr.f32.gmra.mxu0 %v492
    %v1955 = vpop.f32.mrf.mxu0
    %v1956 = vadd.f32 %v1507, %v1955
    %v1957 = vpop.f32.mrf.mxu0
    %v1958 = vadd.f32 %v1509, %v1957
    %1959 = vmatprep.mubr.f32.mxu0 %v501
    %1960 = vmatmul.mubr.f32.gmra.mxu0 %v500
    %v1961 = vpop.f32.mrf.mxu0
    %v1962 = vadd.f32 %v1513, %v1961
    %v1963 = vpop.f32.mrf.mxu0
    %v1964 = vadd.f32 %v1515, %v1963
    %1965 = vmatprep.mubr.f32.mxu0 %v509
    %1966 = vmatmul.mubr.f32.gmra.mxu0 %v508
    %v1967 = vpop.f32.mrf.mxu0
    %v1968 = vadd.f32 %v1519, %v1967
    %v1969 = vpop.f32.mrf.mxu0
    %v1970 = vadd.f32 %v1521, %v1969
    %1971 = vmatprep.mubr.f32.mxu0 %v517
    %1972 = vmatmul.mubr.f32.gmra.mxu0 %v516
    %v1973 = vpop.f32.mrf.mxu0
    %v1974 = vadd.f32 %v1525, %v1973
    %v1975 = vpop.f32.mrf.mxu0
    %v1976 = vadd.f32 %v1527, %v1975
    %1977 = vmatprep.mubr.f32.mxu0 %v525
    %1978 = vmatmul.mubr.f32.gmra.mxu0 %v524
    %v1979 = vpop.f32.mrf.mxu0
    %v1980 = vadd.f32 %v1531, %v1979
    %v1981 = vpop.f32.mrf.mxu0
    %v1982 = vadd.f32 %v1533, %v1981
    %1983 = vmatprep.mubr.f32.mxu0 %v533
    %1984 = vmatmul.mubr.f32.gmra.mxu0 %v532
    %v1985 = vpop.f32.mrf.mxu0
    %v1986 = vadd.f32 %v1537, %v1985
    %v1987 = vpop.f32.mrf.mxu0
    %v1988 = vadd.f32 %v1539, %v1987
    %1989 = vmatprep.mubr.f32.mxu0 %v541
    %1990 = vmatmul.mubr.f32.gmra.mxu0 %v540
    %v1991 = vpop.f32.mrf.mxu0
    %v1992 = vadd.f32 %v1543, %v1991
    %v1993 = vpop.f32.mrf.mxu0
    %v1994 = vadd.f32 %v1545, %v1993
    %1995 = vmatprep.mubr.f32.mxu0 %v549
    %1996 = vmatmul.mubr.f32.gmra.mxu0 %v548
    %v1997 = vpop.f32.mrf.mxu0
    %v1998 = vadd.f32 %v1549, %v1997
    %v1999 = vpop.f32.mrf.mxu0
    %v2000 = vadd.f32 %v1551, %v1999
    %2001 = vmatprep.mubr.f32.mxu0 %v557
    %2002 = vmatmul.mubr.f32.gmra.mxu0 %v556
    %v2003 = vpop.f32.mrf.mxu0
    %v2004 = vadd.f32 %v1555, %v2003
    %v2005 = vpop.f32.mrf.mxu0
    %v2006 = vadd.f32 %v1557, %v2005
    %2007 = vmatprep.mubr.f32.mxu0 %v565
    %2008 = vmatmul.mubr.f32.gmra.mxu0 %v564
    %v2009 = vpop.f32.mrf.mxu0
    %v2010 = vadd.f32 %v1561, %v2009
    %v2011 = vpop.f32.mrf.mxu0
    %v2012 = vadd.f32 %v1563, %v2011
    %2013 = vmatprep.mubr.f32.mxu0 %v573
    %2014 = vmatmul.mubr.f32.gmra.mxu0 %v572
    %v2015 = vpop.f32.mrf.mxu0
    %v2016 = vadd.f32 %v1567, %v2015
    %v2017 = vpop.f32.mrf.mxu0
    %v2018 = vadd.f32 %v1569, %v2017
    %2019 = vmatprep.mubr.f32.mxu0 %v581
    %2020 = vmatmul.mubr.f32.gmra.mxu0 %v580
    %v2021 = vpop.f32.mrf.mxu0
    %v2022 = vadd.f32 %v1573, %v2021
    %v2023 = vpop.f32.mrf.mxu0
    %v2024 = vadd.f32 %v1575, %v2023
    %2025 = vmatprep.mubr.f32.mxu0 %v589
    %2026 = vmatmul.mubr.f32.gmra.mxu0 %v588
    %v2027 = vpop.f32.mrf.mxu0
    %v2028 = vadd.f32 %v1579, %v2027
    %v2029 = vpop.f32.mrf.mxu0
    %v2030 = vadd.f32 %v1581, %v2029
    %2031 = vmatprep.mubr.f32.mxu0 %v597
    %2032 = vmatmul.mubr.f32.gmra.mxu0 %v596
    %v2033 = vpop.f32.mrf.mxu0
    %v2034 = vadd.f32 %v1585, %v2033
    %v2035 = vpop.f32.mrf.mxu0
    %v2036 = vadd.f32 %v1587, %v2035
    %2037 = vmatprep.mubr.f32.mxu0 %v605
    %2038 = vmatmul.mubr.f32.gmra.mxu0 %v604
    %v2039 = vpop.f32.mrf.mxu0
    %v2040 = vadd.f32 %v1591, %v2039
    %v2041 = vpop.f32.mrf.mxu0
    %v2042 = vadd.f32 %v1593, %v2041
    %2043 = vmatprep.mubr.f32.mxu0 %v613
    %2044 = vmatmul.mubr.f32.gmra.mxu0 %v612
    %v2045 = vpop.f32.mrf.mxu0
    %v2046 = vadd.f32 %v1597, %v2045
    %v2047 = vpop.f32.mrf.mxu0
    %v2048 = vadd.f32 %v1599, %v2047
    %2049 = vdwg.mxu0
    %2050 = vmatprep.subr.mxu0 %v935
    %2051 = vmatpush1.msra.mxu0 %v934
    %2052 = vmatprep.subr.mxu0 %v931
    %2053 = vmatpush1.msra.mxu0 %v930
    %2054 = vmatprep.subr.mxu0 %v927
    %2055 = vmatpush1.msra.mxu0 %v926
    %2056 = vmatprep.subr.mxu0 %v923
    %2057 = vmatpush1.msra.mxu0 %v922
    %2058 = vmatprep.subr.mxu0 %v919
    %2059 = vmatpush1.msra.mxu0 %v918
    %2060 = vmatprep.subr.mxu0 %v915
    %2061 = vmatpush1.msra.mxu0 %v914
    %2062 = vmatprep.subr.mxu0 %v911
    %2063 = vmatpush1.msra.mxu0 %v910
    %2064 = vmatprep.subr.mxu0 %v907
    %2065 = vmatpush1.msra.mxu0 %v906
    %2066 = vmatprep.subr.mxu0 %v903
    %2067 = vmatpush1.msra.mxu0 %v902
    %2068 = vmatprep.subr.mxu0 %v899
    %2069 = vmatpush1.msra.mxu0 %v898
    %2070 = vmatprep.subr.mxu0 %v895
    %2071 = vmatpush1.msra.mxu0 %v894
    %2072 = vmatprep.subr.mxu0 %v891
    %2073 = vmatpush1.msra.mxu0 %v890
    %2074 = vmatprep.subr.mxu0 %v887
    %2075 = vmatpush1.msra.mxu0 %v886
    %2076 = vmatprep.subr.mxu0 %v883
    %2077 = vmatpush1.msra.mxu0 %v882
    %2078 = vmatprep.subr.mxu0 %v879
    %2079 = vmatpush1.msra.mxu0 %v878
    %2080 = vmatprep.subr.mxu0 %v875
    %2081 = vmatpush1.msra.mxu0 %v874
    %2082 = vmatprep.subr.mxu0 %v999
    %2083 = vmatpush2.msra.mxu0 %v998
    %2084 = vmatprep.subr.mxu0 %v995
    %2085 = vmatpush2.msra.mxu0 %v994
    %2086 = vmatprep.subr.mxu0 %v991
    %2087 = vmatpush2.msra.mxu0 %v990
    %2088 = vmatprep.subr.mxu0 %v987
    %2089 = vmatpush2.msra.mxu0 %v986
    %2090 = vmatprep.subr.mxu0 %v983
    %2091 = vmatpush2.msra.mxu0 %v982
    %2092 = vmatprep.subr.mxu0 %v979
    %2093 = vmatpush2.msra.mxu0 %v978
    %2094 = vmatprep.subr.mxu0 %v975
    %2095 = vmatpush2.msra.mxu0 %v974
    %2096 = vmatprep.subr.mxu0 %v971
    %2097 = vmatpush2.msra.mxu0 %v970
    %2098 = vmatprep.subr.mxu0 %v967
    %2099 = vmatpush2.msra.mxu0 %v966
    %2100 = vmatprep.subr.mxu0 %v963
    %2101 = vmatpush2.msra.mxu0 %v962
    %2102 = vmatprep.subr.mxu0 %v959
    %2103 = vmatpush2.msra.mxu0 %v958
    %2104 = vmatprep.subr.mxu0 %v955
    %2105 = vmatpush2.msra.mxu0 %v954
    %2106 = vmatprep.subr.mxu0 %v951
    %2107 = vmatpush2.msra.mxu0 %v950
    %2108 = vmatprep.subr.mxu0 %v947
    %2109 = vmatpush2.msra.mxu0 %v946
    %2110 = vmatprep.subr.mxu0 %v943
    %2111 = vmatpush2.msra.mxu0 %v942
    %2112 = vmatprep.subr.mxu0 %v939
    %2113 = vmatpush2.msra.mxu0 %v938
    %2114 = vmatprep.mubr.f32.mxu0 %v111
    %2115 = vmatmul.mubr.f32.gmra.mxu0 %v110
    %v2116 = vpop.f32.mrf.mxu0
    %v2117 = vadd.f32 %v1668, %v2116
    %v2118 = vpop.f32.mrf.mxu0
    %v2119 = vadd.f32 %v1670, %v2118
    %2120 = vmatprep.mubr.f32.mxu0 %v119
    %2121 = vmatmul.mubr.f32.gmra.mxu0 %v118
    %v2122 = vpop.f32.mrf.mxu0
    %v2123 = vadd.f32 %v1674, %v2122
    %v2124 = vpop.f32.mrf.mxu0
    %v2125 = vadd.f32 %v1676, %v2124
    %2126 = vmatprep.mubr.f32.mxu0 %v127
    %2127 = vmatmul.mubr.f32.gmra.mxu0 %v126
    %v2128 = vpop.f32.mrf.mxu0
    %v2129 = vadd.f32 %v1680, %v2128
    %v2130 = vpop.f32.mrf.mxu0
    %v2131 = vadd.f32 %v1682, %v2130
    %2132 = vmatprep.mubr.f32.mxu0 %v135
    %2133 = vmatmul.mubr.f32.gmra.mxu0 %v134
    %v2134 = vpop.f32.mrf.mxu0
    %v2135 = vadd.f32 %v1686, %v2134
    %v2136 = vpop.f32.mrf.mxu0
    %v2137 = vadd.f32 %v1688, %v2136
    %2138 = vmatprep.mubr.f32.mxu0 %v143
    %2139 = vmatmul.mubr.f32.gmra.mxu0 %v142
    %v2140 = vpop.f32.mrf.mxu0
    %v2141 = vadd.f32 %v1692, %v2140
    %v2142 = vpop.f32.mrf.mxu0
    %v2143 = vadd.f32 %v1694, %v2142
    %2144 = vmatprep.mubr.f32.mxu0 %v151
    %2145 = vmatmul.mubr.f32.gmra.mxu0 %v150
    %v2146 = vpop.f32.mrf.mxu0
    %v2147 = vadd.f32 %v1698, %v2146
    %v2148 = vpop.f32.mrf.mxu0
    %v2149 = vadd.f32 %v1700, %v2148
    %2150 = vmatprep.mubr.f32.mxu0 %v159
    %2151 = vmatmul.mubr.f32.gmra.mxu0 %v158
    %v2152 = vpop.f32.mrf.mxu0
    %v2153 = vadd.f32 %v1704, %v2152
    %v2154 = vpop.f32.mrf.mxu0
    %v2155 = vadd.f32 %v1706, %v2154
    %2156 = vmatprep.mubr.f32.mxu0 %v167
    %2157 = vmatmul.mubr.f32.gmra.mxu0 %v166
    %v2158 = vpop.f32.mrf.mxu0
    %v2159 = vadd.f32 %v1710, %v2158
    %v2160 = vpop.f32.mrf.mxu0
    %v2161 = vadd.f32 %v1712, %v2160
    %2162 = vmatprep.mubr.f32.mxu0 %v175
    %2163 = vmatmul.mubr.f32.gmra.mxu0 %v174
    %v2164 = vpop.f32.mrf.mxu0
    %v2165 = vadd.f32 %v1716, %v2164
    %v2166 = vpop.f32.mrf.mxu0
    %v2167 = vadd.f32 %v1718, %v2166
    %2168 = vmatprep.mubr.f32.mxu0 %v183
    %2169 = vmatmul.mubr.f32.gmra.mxu0 %v182
    %v2170 = vpop.f32.mrf.mxu0
    %v2171 = vadd.f32 %v1722, %v2170
    %v2172 = vpop.f32.mrf.mxu0
    %v2173 = vadd.f32 %v1724, %v2172
    %2174 = vmatprep.mubr.f32.mxu0 %v191
    %2175 = vmatmul.mubr.f32.gmra.mxu0 %v190
    %v2176 = vpop.f32.mrf.mxu0
    %v2177 = vadd.f32 %v1728, %v2176
    %v2178 = vpop.f32.mrf.mxu0
    %v2179 = vadd.f32 %v1730, %v2178
    %2180 = vmatprep.mubr.f32.mxu0 %v199
    %2181 = vmatmul.mubr.f32.gmra.mxu0 %v198
    %v2182 = vpop.f32.mrf.mxu0
    %v2183 = vadd.f32 %v1734, %v2182
    %v2184 = vpop.f32.mrf.mxu0
    %v2185 = vadd.f32 %v1736, %v2184
    %2186 = vmatprep.mubr.f32.mxu0 %v207
    %2187 = vmatmul.mubr.f32.gmra.mxu0 %v206
    %v2188 = vpop.f32.mrf.mxu0
    %v2189 = vadd.f32 %v1740, %v2188
    %v2190 = vpop.f32.mrf.mxu0
    %v2191 = vadd.f32 %v1742, %v2190
    %2192 = vmatprep.mubr.f32.mxu0 %v215
    %2193 = vmatmul.mubr.f32.gmra.mxu0 %v214
    %v2194 = vpop.f32.mrf.mxu0
    %v2195 = vadd.f32 %v1746, %v2194
    %v2196 = vpop.f32.mrf.mxu0
    %v2197 = vadd.f32 %v1748, %v2196
    %2198 = vmatprep.mubr.f32.mxu0 %v223
    %2199 = vmatmul.mubr.f32.gmra.mxu0 %v222
    %v2200 = vpop.f32.mrf.mxu0
    %v2201 = vadd.f32 %v1752, %v2200
    %v2202 = vpop.f32.mrf.mxu0
    %v2203 = vadd.f32 %v1754, %v2202
    %2204 = vmatprep.mubr.f32.mxu0 %v231
    %2205 = vmatmul.mubr.f32.gmra.mxu0 %v230
    %v2206 = vpop.f32.mrf.mxu0
    %v2207 = vadd.f32 %v1758, %v2206
    %v2208 = vpop.f32.mrf.mxu0
    %v2209 = vadd.f32 %v1760, %v2208
    %2210 = vmatprep.mubr.f32.mxu0 %v239
    %2211 = vmatmul.mubr.f32.gmra.mxu0 %v238
    %v2212 = vpop.f32.mrf.mxu0
    %v2213 = vadd.f32 %v1764, %v2212
    %v2214 = vpop.f32.mrf.mxu0
    %v2215 = vadd.f32 %v1766, %v2214
    %2216 = vmatprep.mubr.f32.mxu0 %v247
    %2217 = vmatmul.mubr.f32.gmra.mxu0 %v246
    %v2218 = vpop.f32.mrf.mxu0
    %v2219 = vadd.f32 %v1770, %v2218
    %v2220 = vpop.f32.mrf.mxu0
    %v2221 = vadd.f32 %v1772, %v2220
    %2222 = vmatprep.mubr.f32.mxu0 %v255
    %2223 = vmatmul.mubr.f32.gmra.mxu0 %v254
    %v2224 = vpop.f32.mrf.mxu0
    %v2225 = vadd.f32 %v1776, %v2224
    %v2226 = vpop.f32.mrf.mxu0
    %v2227 = vadd.f32 %v1778, %v2226
    %2228 = vmatprep.mubr.f32.mxu0 %v263
    %2229 = vmatmul.mubr.f32.gmra.mxu0 %v262
    %v2230 = vpop.f32.mrf.mxu0
    %v2231 = vadd.f32 %v1782, %v2230
    %v2232 = vpop.f32.mrf.mxu0
    %v2233 = vadd.f32 %v1784, %v2232
    %2234 = vmatprep.mubr.f32.mxu0 %v271
    %2235 = vmatmul.mubr.f32.gmra.mxu0 %v270
    %v2236 = vpop.f32.mrf.mxu0
    %v2237 = vadd.f32 %v1788, %v2236
    %v2238 = vpop.f32.mrf.mxu0
    %v2239 = vadd.f32 %v1790, %v2238
    %2240 = vmatprep.mubr.f32.mxu0 %v279
    %2241 = vmatmul.mubr.f32.gmra.mxu0 %v278
    %v2242 = vpop.f32.mrf.mxu0
    %v2243 = vadd.f32 %v1794, %v2242
    %v2244 = vpop.f32.mrf.mxu0
    %v2245 = vadd.f32 %v1796, %v2244
    %2246 = vmatprep.mubr.f32.mxu0 %v287
    %2247 = vmatmul.mubr.f32.gmra.mxu0 %v286
    %v2248 = vpop.f32.mrf.mxu0
    %v2249 = vadd.f32 %v1800, %v2248
    %v2250 = vpop.f32.mrf.mxu0
    %v2251 = vadd.f32 %v1802, %v2250
    %2252 = vmatprep.mubr.f32.mxu0 %v295
    %2253 = vmatmul.mubr.f32.gmra.mxu0 %v294
    %v2254 = vpop.f32.mrf.mxu0
    %v2255 = vadd.f32 %v1806, %v2254
    %v2256 = vpop.f32.mrf.mxu0
    %v2257 = vadd.f32 %v1808, %v2256
    %2258 = vmatprep.mubr.f32.mxu0 %v303
    %2259 = vmatmul.mubr.f32.gmra.mxu0 %v302
    %v2260 = vpop.f32.mrf.mxu0
    %v2261 = vadd.f32 %v1812, %v2260
    %v2262 = vpop.f32.mrf.mxu0
    %v2263 = vadd.f32 %v1814, %v2262
    %2264 = vmatprep.mubr.f32.mxu0 %v311
    %2265 = vmatmul.mubr.f32.gmra.mxu0 %v310
    %v2266 = vpop.f32.mrf.mxu0
    %v2267 = vadd.f32 %v1818, %v2266
    %v2268 = vpop.f32.mrf.mxu0
    %v2269 = vadd.f32 %v1820, %v2268
    %2270 = vmatprep.mubr.f32.mxu0 %v319
    %2271 = vmatmul.mubr.f32.gmra.mxu0 %v318
    %v2272 = vpop.f32.mrf.mxu0
    %v2273 = vadd.f32 %v1824, %v2272
    %v2274 = vpop.f32.mrf.mxu0
    %v2275 = vadd.f32 %v1826, %v2274
    %2276 = vmatprep.mubr.f32.mxu0 %v327
    %2277 = vmatmul.mubr.f32.gmra.mxu0 %v326
    %v2278 = vpop.f32.mrf.mxu0
    %v2279 = vadd.f32 %v1830, %v2278
    %v2280 = vpop.f32.mrf.mxu0
    %v2281 = vadd.f32 %v1832, %v2280
    %2282 = vmatprep.mubr.f32.mxu0 %v335
    %2283 = vmatmul.mubr.f32.gmra.mxu0 %v334
    %v2284 = vpop.f32.mrf.mxu0
    %v2285 = vadd.f32 %v1836, %v2284
    %v2286 = vpop.f32.mrf.mxu0
    %v2287 = vadd.f32 %v1838, %v2286
    %2288 = vmatprep.mubr.f32.mxu0 %v343
    %2289 = vmatmul.mubr.f32.gmra.mxu0 %v342
    %v2290 = vpop.f32.mrf.mxu0
    %v2291 = vadd.f32 %v1842, %v2290
    %v2292 = vpop.f32.mrf.mxu0
    %v2293 = vadd.f32 %v1844, %v2292
    %2294 = vmatprep.mubr.f32.mxu0 %v351
    %2295 = vmatmul.mubr.f32.gmra.mxu0 %v350
    %v2296 = vpop.f32.mrf.mxu0
    %v2297 = vadd.f32 %v1848, %v2296
    %v2298 = vpop.f32.mrf.mxu0
    %v2299 = vadd.f32 %v1850, %v2298
    %2300 = vmatprep.mubr.f32.mxu0 %v359
    %2301 = vmatmul.mubr.f32.gmra.mxu0 %v358
    %v2302 = vpop.f32.mrf.mxu0
    %v2303 = vadd.f32 %v1854, %v2302
    %v2304 = vpop.f32.mrf.mxu0
    %v2305 = vadd.f32 %v1856, %v2304
    %2306 = vmatprep.mubr.f32.mxu0 %v367
    %2307 = vmatmul.mubr.f32.gmra.mxu0 %v366
    %v2308 = vpop.f32.mrf.mxu0
    %v2309 = vadd.f32 %v1860, %v2308
    %v2310 = vpop.f32.mrf.mxu0
    %v2311 = vadd.f32 %v1862, %v2310
    %2312 = vmatprep.mubr.f32.mxu0 %v375
    %2313 = vmatmul.mubr.f32.gmra.mxu0 %v374
    %v2314 = vpop.f32.mrf.mxu0
    %v2315 = vadd.f32 %v1866, %v2314
    %v2316 = vpop.f32.mrf.mxu0
    %v2317 = vadd.f32 %v1868, %v2316
    %2318 = vmatprep.mubr.f32.mxu0 %v383
    %2319 = vmatmul.mubr.f32.gmra.mxu0 %v382
    %v2320 = vpop.f32.mrf.mxu0
    %v2321 = vadd.f32 %v1872, %v2320
    %v2322 = vpop.f32.mrf.mxu0
    %v2323 = vadd.f32 %v1874, %v2322
    %2324 = vmatprep.mubr.f32.mxu0 %v391
    %2325 = vmatmul.mubr.f32.gmra.mxu0 %v390
    %v2326 = vpop.f32.mrf.mxu0
    %v2327 = vadd.f32 %v1878, %v2326
    %v2328 = vpop.f32.mrf.mxu0
    %v2329 = vadd.f32 %v1880, %v2328
    %2330 = vmatprep.mubr.f32.mxu0 %v399
    %2331 = vmatmul.mubr.f32.gmra.mxu0 %v398
    %v2332 = vpop.f32.mrf.mxu0
    %v2333 = vadd.f32 %v1884, %v2332
    %v2334 = vpop.f32.mrf.mxu0
    %v2335 = vadd.f32 %v1886, %v2334
    %2336 = vmatprep.mubr.f32.mxu0 %v407
    %2337 = vmatmul.mubr.f32.gmra.mxu0 %v406
    %v2338 = vpop.f32.mrf.mxu0
    %v2339 = vadd.f32 %v1890, %v2338
    %v2340 = vpop.f32.mrf.mxu0
    %v2341 = vadd.f32 %v1892, %v2340
    %2342 = vmatprep.mubr.f32.mxu0 %v415
    %2343 = vmatmul.mubr.f32.gmra.mxu0 %v414
    %v2344 = vpop.f32.mrf.mxu0
    %v2345 = vadd.f32 %v1896, %v2344
    %v2346 = vpop.f32.mrf.mxu0
    %v2347 = vadd.f32 %v1898, %v2346
    %2348 = vmatprep.mubr.f32.mxu0 %v423
    %2349 = vmatmul.mubr.f32.gmra.mxu0 %v422
    %v2350 = vpop.f32.mrf.mxu0
    %v2351 = vadd.f32 %v1902, %v2350
    %v2352 = vpop.f32.mrf.mxu0
    %v2353 = vadd.f32 %v1904, %v2352
    %2354 = vmatprep.mubr.f32.mxu0 %v431
    %2355 = vmatmul.mubr.f32.gmra.mxu0 %v430
    %v2356 = vpop.f32.mrf.mxu0
    %v2357 = vadd.f32 %v1908, %v2356
    %v2358 = vpop.f32.mrf.mxu0
    %v2359 = vadd.f32 %v1910, %v2358
    %2360 = vmatprep.mubr.f32.mxu0 %v439
    %2361 = vmatmul.mubr.f32.gmra.mxu0 %v438
    %v2362 = vpop.f32.mrf.mxu0
    %v2363 = vadd.f32 %v1914, %v2362
    %v2364 = vpop.f32.mrf.mxu0
    %v2365 = vadd.f32 %v1916, %v2364
    %2366 = vmatprep.mubr.f32.mxu0 %v447
    %2367 = vmatmul.mubr.f32.gmra.mxu0 %v446
    %v2368 = vpop.f32.mrf.mxu0
    %v2369 = vadd.f32 %v1920, %v2368
    %v2370 = vpop.f32.mrf.mxu0
    %v2371 = vadd.f32 %v1922, %v2370
    %2372 = vmatprep.mubr.f32.mxu0 %v455
    %2373 = vmatmul.mubr.f32.gmra.mxu0 %v454
    %v2374 = vpop.f32.mrf.mxu0
    %v2375 = vadd.f32 %v1926, %v2374
    %v2376 = vpop.f32.mrf.mxu0
    %v2377 = vadd.f32 %v1928, %v2376
    %2378 = vmatprep.mubr.f32.mxu0 %v463
    %2379 = vmatmul.mubr.f32.gmra.mxu0 %v462
    %v2380 = vpop.f32.mrf.mxu0
    %v2381 = vadd.f32 %v1932, %v2380
    %v2382 = vpop.f32.mrf.mxu0
    %v2383 = vadd.f32 %v1934, %v2382
    %2384 = vmatprep.mubr.f32.mxu0 %v471
    %2385 = vmatmul.mubr.f32.gmra.mxu0 %v470
    %v2386 = vpop.f32.mrf.mxu0
    %v2387 = vadd.f32 %v1938, %v2386
    %v2388 = vpop.f32.mrf.mxu0
    %v2389 = vadd.f32 %v1940, %v2388
    %2390 = vmatprep.mubr.f32.mxu0 %v479
    %2391 = vmatmul.mubr.f32.gmra.mxu0 %v478
    %v2392 = vpop.f32.mrf.mxu0
    %v2393 = vadd.f32 %v1944, %v2392
    %v2394 = vpop.f32.mrf.mxu0
    %v2395 = vadd.f32 %v1946, %v2394
    %2396 = vmatprep.mubr.f32.mxu0 %v487
    %2397 = vmatmul.mubr.f32.gmra.mxu0 %v486
    %v2398 = vpop.f32.mrf.mxu0
    %v2399 = vadd.f32 %v1950, %v2398
    %v2400 = vpop.f32.mrf.mxu0
    %v2401 = vadd.f32 %v1952, %v2400
    %2402 = vmatprep.mubr.f32.mxu0 %v495
    %2403 = vmatmul.mubr.f32.gmra.mxu0 %v494
    %v2404 = vpop.f32.mrf.mxu0
    %v2405 = vadd.f32 %v1956, %v2404
    %v2406 = vpop.f32.mrf.mxu0
    %v2407 = vadd.f32 %v1958, %v2406
    %2408 = vmatprep.mubr.f32.mxu0 %v503
    %2409 = vmatmul.mubr.f32.gmra.mxu0 %v502
    %v2410 = vpop.f32.mrf.mxu0
    %v2411 = vadd.f32 %v1962, %v2410
    %v2412 = vpop.f32.mrf.mxu0
    %v2413 = vadd.f32 %v1964, %v2412
    %2414 = vmatprep.mubr.f32.mxu0 %v511
    %2415 = vmatmul.mubr.f32.gmra.mxu0 %v510
    %v2416 = vpop.f32.mrf.mxu0
    %v2417 = vadd.f32 %v1968, %v2416
    %v2418 = vpop.f32.mrf.mxu0
    %v2419 = vadd.f32 %v1970, %v2418
    %2420 = vmatprep.mubr.f32.mxu0 %v519
    %2421 = vmatmul.mubr.f32.gmra.mxu0 %v518
    %v2422 = vpop.f32.mrf.mxu0
    %v2423 = vadd.f32 %v1974, %v2422
    %v2424 = vpop.f32.mrf.mxu0
    %v2425 = vadd.f32 %v1976, %v2424
    %2426 = vmatprep.mubr.f32.mxu0 %v527
    %2427 = vmatmul.mubr.f32.gmra.mxu0 %v526
    %v2428 = vpop.f32.mrf.mxu0
    %v2429 = vadd.f32 %v1980, %v2428
    %v2430 = vpop.f32.mrf.mxu0
    %v2431 = vadd.f32 %v1982, %v2430
    %2432 = vmatprep.mubr.f32.mxu0 %v535
    %2433 = vmatmul.mubr.f32.gmra.mxu0 %v534
    %v2434 = vpop.f32.mrf.mxu0
    %v2435 = vadd.f32 %v1986, %v2434
    %v2436 = vpop.f32.mrf.mxu0
    %v2437 = vadd.f32 %v1988, %v2436
    %2438 = vmatprep.mubr.f32.mxu0 %v543
    %2439 = vmatmul.mubr.f32.gmra.mxu0 %v542
    %v2440 = vpop.f32.mrf.mxu0
    %v2441 = vadd.f32 %v1992, %v2440
    %v2442 = vpop.f32.mrf.mxu0
    %v2443 = vadd.f32 %v1994, %v2442
    %2444 = vmatprep.mubr.f32.mxu0 %v551
    %2445 = vmatmul.mubr.f32.gmra.mxu0 %v550
    %v2446 = vpop.f32.mrf.mxu0
    %v2447 = vadd.f32 %v1998, %v2446
    %v2448 = vpop.f32.mrf.mxu0
    %v2449 = vadd.f32 %v2000, %v2448
    %2450 = vmatprep.mubr.f32.mxu0 %v559
    %2451 = vmatmul.mubr.f32.gmra.mxu0 %v558
    %v2452 = vpop.f32.mrf.mxu0
    %v2453 = vadd.f32 %v2004, %v2452
    %v2454 = vpop.f32.mrf.mxu0
    %v2455 = vadd.f32 %v2006, %v2454
    %2456 = vmatprep.mubr.f32.mxu0 %v567
    %2457 = vmatmul.mubr.f32.gmra.mxu0 %v566
    %v2458 = vpop.f32.mrf.mxu0
    %v2459 = vadd.f32 %v2010, %v2458
    %v2460 = vpop.f32.mrf.mxu0
    %v2461 = vadd.f32 %v2012, %v2460
    %2462 = vmatprep.mubr.f32.mxu0 %v575
    %2463 = vmatmul.mubr.f32.gmra.mxu0 %v574
    %v2464 = vpop.f32.mrf.mxu0
    %v2465 = vadd.f32 %v2016, %v2464
    %v2466 = vpop.f32.mrf.mxu0
    %v2467 = vadd.f32 %v2018, %v2466
    %2468 = vmatprep.mubr.f32.mxu0 %v583
    %2469 = vmatmul.mubr.f32.gmra.mxu0 %v582
    %v2470 = vpop.f32.mrf.mxu0
    %v2471 = vadd.f32 %v2022, %v2470
    %v2472 = vpop.f32.mrf.mxu0
    %v2473 = vadd.f32 %v2024, %v2472
    %2474 = vmatprep.mubr.f32.mxu0 %v591
    %2475 = vmatmul.mubr.f32.gmra.mxu0 %v590
    %v2476 = vpop.f32.mrf.mxu0
    %v2477 = vadd.f32 %v2028, %v2476
    %v2478 = vpop.f32.mrf.mxu0
    %v2479 = vadd.f32 %v2030, %v2478
    %2480 = vmatprep.mubr.f32.mxu0 %v599
    %2481 = vmatmul.mubr.f32.gmra.mxu0 %v598
    %v2482 = vpop.f32.mrf.mxu0
    %v2483 = vadd.f32 %v2034, %v2482
    %v2484 = vpop.f32.mrf.mxu0
    %v2485 = vadd.f32 %v2036, %v2484
    %2486 = vmatprep.mubr.f32.mxu0 %v607
    %2487 = vmatmul.mubr.f32.gmra.mxu0 %v606
    %v2488 = vpop.f32.mrf.mxu0
    %v2489 = vadd.f32 %v2040, %v2488
    %v2490 = vpop.f32.mrf.mxu0
    %v2491 = vadd.f32 %v2042, %v2490
    %2492 = vmatprep.mubr.f32.mxu0 %v615
    %2493 = vmatmul.mubr.f32.gmra.mxu0 %v614
    %v2494 = vpop.f32.mrf.mxu0
    %v2495 = vadd.f32 %v2046, %v2494
    %v2496 = vpop.f32.mrf.mxu0
    %v2497 = vadd.f32 %v2048, %v2496
    %2498 = vdwg.mxu0
    %2499 = vmatprep.subr.mxu0 %v1063
    %2500 = vmatpush1.msra.mxu0 %v1062
    %2501 = vmatprep.subr.mxu0 %v1059
    %2502 = vmatpush1.msra.mxu0 %v1058
    %2503 = vmatprep.subr.mxu0 %v1055
    %2504 = vmatpush1.msra.mxu0 %v1054
    %2505 = vmatprep.subr.mxu0 %v1051
    %2506 = vmatpush1.msra.mxu0 %v1050
    %2507 = vmatprep.subr.mxu0 %v1047
    %2508 = vmatpush1.msra.mxu0 %v1046
    %2509 = vmatprep.subr.mxu0 %v1043
    %2510 = vmatpush1.msra.mxu0 %v1042
    %2511 = vmatprep.subr.mxu0 %v1039
    %2512 = vmatpush1.msra.mxu0 %v1038
    %2513 = vmatprep.subr.mxu0 %v1035
    %2514 = vmatpush1.msra.mxu0 %v1034
    %2515 = vmatprep.subr.mxu0 %v1031
    %2516 = vmatpush1.msra.mxu0 %v1030
    %2517 = vmatprep.subr.mxu0 %v1027
    %2518 = vmatpush1.msra.mxu0 %v1026
    %2519 = vmatprep.subr.mxu0 %v1023
    %2520 = vmatpush1.msra.mxu0 %v1022
    %2521 = vmatprep.subr.mxu0 %v1019
    %2522 = vmatpush1.msra.mxu0 %v1018
    %2523 = vmatprep.subr.mxu0 %v1015
    %2524 = vmatpush1.msra.mxu0 %v1014
    %2525 = vmatprep.subr.mxu0 %v1011
    %2526 = vmatpush1.msra.mxu0 %v1010
    %2527 = vmatprep.subr.mxu0 %v1007
    %2528 = vmatpush1.msra.mxu0 %v1006
    %2529 = vmatprep.subr.mxu0 %v1003
    %2530 = vmatpush1.msra.mxu0 %v1002
    %2531 = vmatprep.subr.mxu0 %v1127
    %2532 = vmatpush2.msra.mxu0 %v1126
    %2533 = vmatprep.subr.mxu0 %v1123
    %2534 = vmatpush2.msra.mxu0 %v1122
    %2535 = vmatprep.subr.mxu0 %v1119
    %2536 = vmatpush2.msra.mxu0 %v1118
    %2537 = vmatprep.subr.mxu0 %v1115
    %2538 = vmatpush2.msra.mxu0 %v1114
    %2539 = vmatprep.subr.mxu0 %v1111
    %2540 = vmatpush2.msra.mxu0 %v1110
    %2541 = vmatprep.subr.mxu0 %v1107
    %2542 = vmatpush2.msra.mxu0 %v1106
    %2543 = vmatprep.subr.mxu0 %v1103
    %2544 = vmatpush2.msra.mxu0 %v1102
    %2545 = vmatprep.subr.mxu0 %v1099
    %2546 = vmatpush2.msra.mxu0 %v1098
    %2547 = vmatprep.subr.mxu0 %v1095
    %2548 = vmatpush2.msra.mxu0 %v1094
    %2549 = vmatprep.subr.mxu0 %v1091
    %2550 = vmatpush2.msra.mxu0 %v1090
    %2551 = vmatprep.subr.mxu0 %v1087
    %2552 = vmatpush2.msra.mxu0 %v1086
    %2553 = vmatprep.subr.mxu0 %v1083
    %2554 = vmatpush2.msra.mxu0 %v1082
    %2555 = vmatprep.subr.mxu0 %v1079
    %2556 = vmatpush2.msra.mxu0 %v1078
    %2557 = vmatprep.subr.mxu0 %v1075
    %2558 = vmatpush2.msra.mxu0 %v1074
    %2559 = vmatprep.subr.mxu0 %v1071
    %2560 = vmatpush2.msra.mxu0 %v1070
    %2561 = vmatprep.subr.mxu0 %v1067
    %2562 = vmatpush2.msra.mxu0 %v1066
    %2563 = vmatprep.mubr.f32.mxu0 %v113
    %2564 = vmatmul.mubr.f32.gmra.mxu0 %v112
    %v2565 = vpop.f32.mrf.mxu0
    %v2566 = vadd.f32 %v2117, %v2565
    %v2567 = vpop.f32.mrf.mxu0
    %v2568 = vadd.f32 %v2119, %v2567
    %2569 = vmatprep.mubr.f32.mxu0 %v121
    %2570 = vmatmul.mubr.f32.gmra.mxu0 %v120
    %v2571 = vpop.f32.mrf.mxu0
    %v2572 = vadd.f32 %v2123, %v2571
    %v2573 = vpop.f32.mrf.mxu0
    %v2574 = vadd.f32 %v2125, %v2573
    %2575 = vmatprep.mubr.f32.mxu0 %v129
    %2576 = vmatmul.mubr.f32.gmra.mxu0 %v128
    %v2577 = vpop.f32.mrf.mxu0
    %v2578 = vadd.f32 %v2129, %v2577
    %v2579 = vpop.f32.mrf.mxu0
    %v2580 = vadd.f32 %v2131, %v2579
    %2581 = vmatprep.mubr.f32.mxu0 %v137
    %2582 = vmatmul.mubr.f32.gmra.mxu0 %v136
    %v2583 = vpop.f32.mrf.mxu0
    %v2584 = vadd.f32 %v2135, %v2583
    %v2585 = vpop.f32.mrf.mxu0
    %v2586 = vadd.f32 %v2137, %v2585
    %2587 = vmatprep.mubr.f32.mxu0 %v145
    %2588 = vmatmul.mubr.f32.gmra.mxu0 %v144
    %v2589 = vpop.f32.mrf.mxu0
    %v2590 = vadd.f32 %v2141, %v2589
    %v2591 = vpop.f32.mrf.mxu0
    %v2592 = vadd.f32 %v2143, %v2591
    %2593 = vmatprep.mubr.f32.mxu0 %v153
    %2594 = vmatmul.mubr.f32.gmra.mxu0 %v152
    %v2595 = vpop.f32.mrf.mxu0
    %v2596 = vadd.f32 %v2147, %v2595
    %v2597 = vpop.f32.mrf.mxu0
    %v2598 = vadd.f32 %v2149, %v2597
    %2599 = vmatprep.mubr.f32.mxu0 %v161
    %2600 = vmatmul.mubr.f32.gmra.mxu0 %v160
    %v2601 = vpop.f32.mrf.mxu0
    %v2602 = vadd.f32 %v2153, %v2601
    %v2603 = vpop.f32.mrf.mxu0
    %v2604 = vadd.f32 %v2155, %v2603
    %2605 = vmatprep.mubr.f32.mxu0 %v169
    %2606 = vmatmul.mubr.f32.gmra.mxu0 %v168
    %v2607 = vpop.f32.mrf.mxu0
    %v2608 = vadd.f32 %v2159, %v2607
    %v2609 = vpop.f32.mrf.mxu0
    %v2610 = vadd.f32 %v2161, %v2609
    %2611 = vmatprep.mubr.f32.mxu0 %v177
    %2612 = vmatmul.mubr.f32.gmra.mxu0 %v176
    %v2613 = vpop.f32.mrf.mxu0
    %v2614 = vadd.f32 %v2165, %v2613
    %v2615 = vpop.f32.mrf.mxu0
    %v2616 = vadd.f32 %v2167, %v2615
    %2617 = vmatprep.mubr.f32.mxu0 %v185
    %2618 = vmatmul.mubr.f32.gmra.mxu0 %v184
    %v2619 = vpop.f32.mrf.mxu0
    %v2620 = vadd.f32 %v2171, %v2619
    %v2621 = vpop.f32.mrf.mxu0
    %v2622 = vadd.f32 %v2173, %v2621
    %2623 = vmatprep.mubr.f32.mxu0 %v193
    %2624 = vmatmul.mubr.f32.gmra.mxu0 %v192
    %v2625 = vpop.f32.mrf.mxu0
    %v2626 = vadd.f32 %v2177, %v2625
    %v2627 = vpop.f32.mrf.mxu0
    %v2628 = vadd.f32 %v2179, %v2627
    %2629 = vmatprep.mubr.f32.mxu0 %v201
    %2630 = vmatmul.mubr.f32.gmra.mxu0 %v200
    %v2631 = vpop.f32.mrf.mxu0
    %v2632 = vadd.f32 %v2183, %v2631
    %v2633 = vpop.f32.mrf.mxu0
    %v2634 = vadd.f32 %v2185, %v2633
    %2635 = vmatprep.mubr.f32.mxu0 %v209
    %2636 = vmatmul.mubr.f32.gmra.mxu0 %v208
    %v2637 = vpop.f32.mrf.mxu0
    %v2638 = vadd.f32 %v2189, %v2637
    %v2639 = vpop.f32.mrf.mxu0
    %v2640 = vadd.f32 %v2191, %v2639
    %2641 = vmatprep.mubr.f32.mxu0 %v217
    %2642 = vmatmul.mubr.f32.gmra.mxu0 %v216
    %v2643 = vpop.f32.mrf.mxu0
    %v2644 = vadd.f32 %v2195, %v2643
    %v2645 = vpop.f32.mrf.mxu0
    %v2646 = vadd.f32 %v2197, %v2645
    %2647 = vmatprep.mubr.f32.mxu0 %v225
    %2648 = vmatmul.mubr.f32.gmra.mxu0 %v224
    %v2649 = vpop.f32.mrf.mxu0
    %v2650 = vadd.f32 %v2201, %v2649
    %v2651 = vpop.f32.mrf.mxu0
    %v2652 = vadd.f32 %v2203, %v2651
    %2653 = vmatprep.mubr.f32.mxu0 %v233
    %2654 = vmatmul.mubr.f32.gmra.mxu0 %v232
    %v2655 = vpop.f32.mrf.mxu0
    %v2656 = vadd.f32 %v2207, %v2655
    %v2657 = vpop.f32.mrf.mxu0
    %v2658 = vadd.f32 %v2209, %v2657
    %2659 = vmatprep.mubr.f32.mxu0 %v241
    %2660 = vmatmul.mubr.f32.gmra.mxu0 %v240
    %v2661 = vpop.f32.mrf.mxu0
    %v2662 = vadd.f32 %v2213, %v2661
    %v2663 = vpop.f32.mrf.mxu0
    %v2664 = vadd.f32 %v2215, %v2663
    %2665 = vmatprep.mubr.f32.mxu0 %v249
    %2666 = vmatmul.mubr.f32.gmra.mxu0 %v248
    %v2667 = vpop.f32.mrf.mxu0
    %v2668 = vadd.f32 %v2219, %v2667
    %v2669 = vpop.f32.mrf.mxu0
    %v2670 = vadd.f32 %v2221, %v2669
    %2671 = vmatprep.mubr.f32.mxu0 %v257
    %2672 = vmatmul.mubr.f32.gmra.mxu0 %v256
    %v2673 = vpop.f32.mrf.mxu0
    %v2674 = vadd.f32 %v2225, %v2673
    %v2675 = vpop.f32.mrf.mxu0
    %v2676 = vadd.f32 %v2227, %v2675
    %2677 = vmatprep.mubr.f32.mxu0 %v265
    %2678 = vmatmul.mubr.f32.gmra.mxu0 %v264
    %v2679 = vpop.f32.mrf.mxu0
    %v2680 = vadd.f32 %v2231, %v2679
    %v2681 = vpop.f32.mrf.mxu0
    %v2682 = vadd.f32 %v2233, %v2681
    %2683 = vmatprep.mubr.f32.mxu0 %v273
    %2684 = vmatmul.mubr.f32.gmra.mxu0 %v272
    %v2685 = vpop.f32.mrf.mxu0
    %v2686 = vadd.f32 %v2237, %v2685
    %v2687 = vpop.f32.mrf.mxu0
    %v2688 = vadd.f32 %v2239, %v2687
    %2689 = vmatprep.mubr.f32.mxu0 %v281
    %2690 = vmatmul.mubr.f32.gmra.mxu0 %v280
    %v2691 = vpop.f32.mrf.mxu0
    %v2692 = vadd.f32 %v2243, %v2691
    %v2693 = vpop.f32.mrf.mxu0
    %v2694 = vadd.f32 %v2245, %v2693
    %2695 = vmatprep.mubr.f32.mxu0 %v289
    %2696 = vmatmul.mubr.f32.gmra.mxu0 %v288
    %v2697 = vpop.f32.mrf.mxu0
    %v2698 = vadd.f32 %v2249, %v2697
    %v2699 = vpop.f32.mrf.mxu0
    %v2700 = vadd.f32 %v2251, %v2699
    %2701 = vmatprep.mubr.f32.mxu0 %v297
    %2702 = vmatmul.mubr.f32.gmra.mxu0 %v296
    %v2703 = vpop.f32.mrf.mxu0
    %v2704 = vadd.f32 %v2255, %v2703
    %v2705 = vpop.f32.mrf.mxu0
    %v2706 = vadd.f32 %v2257, %v2705
    %2707 = vmatprep.mubr.f32.mxu0 %v305
    %2708 = vmatmul.mubr.f32.gmra.mxu0 %v304
    %v2709 = vpop.f32.mrf.mxu0
    %v2710 = vadd.f32 %v2261, %v2709
    %v2711 = vpop.f32.mrf.mxu0
    %v2712 = vadd.f32 %v2263, %v2711
    %2713 = vmatprep.mubr.f32.mxu0 %v313
    %2714 = vmatmul.mubr.f32.gmra.mxu0 %v312
    %v2715 = vpop.f32.mrf.mxu0
    %v2716 = vadd.f32 %v2267, %v2715
    %v2717 = vpop.f32.mrf.mxu0
    %v2718 = vadd.f32 %v2269, %v2717
    %2719 = vmatprep.mubr.f32.mxu0 %v321
    %2720 = vmatmul.mubr.f32.gmra.mxu0 %v320
    %v2721 = vpop.f32.mrf.mxu0
    %v2722 = vadd.f32 %v2273, %v2721
    %v2723 = vpop.f32.mrf.mxu0
    %v2724 = vadd.f32 %v2275, %v2723
    %2725 = vmatprep.mubr.f32.mxu0 %v329
    %2726 = vmatmul.mubr.f32.gmra.mxu0 %v328
    %v2727 = vpop.f32.mrf.mxu0
    %v2728 = vadd.f32 %v2279, %v2727
    %v2729 = vpop.f32.mrf.mxu0
    %v2730 = vadd.f32 %v2281, %v2729
    %2731 = vmatprep.mubr.f32.mxu0 %v337
    %2732 = vmatmul.mubr.f32.gmra.mxu0 %v336
    %v2733 = vpop.f32.mrf.mxu0
    %v2734 = vadd.f32 %v2285, %v2733
    %v2735 = vpop.f32.mrf.mxu0
    %v2736 = vadd.f32 %v2287, %v2735
    %2737 = vmatprep.mubr.f32.mxu0 %v345
    %2738 = vmatmul.mubr.f32.gmra.mxu0 %v344
    %v2739 = vpop.f32.mrf.mxu0
    %v2740 = vadd.f32 %v2291, %v2739
    %v2741 = vpop.f32.mrf.mxu0
    %v2742 = vadd.f32 %v2293, %v2741
    %2743 = vmatprep.mubr.f32.mxu0 %v353
    %2744 = vmatmul.mubr.f32.gmra.mxu0 %v352
    %v2745 = vpop.f32.mrf.mxu0
    %v2746 = vadd.f32 %v2297, %v2745
    %v2747 = vpop.f32.mrf.mxu0
    %v2748 = vadd.f32 %v2299, %v2747
    %2749 = vmatprep.mubr.f32.mxu0 %v361
    %2750 = vmatmul.mubr.f32.gmra.mxu0 %v360
    %v2751 = vpop.f32.mrf.mxu0
    %v2752 = vadd.f32 %v2303, %v2751
    %v2753 = vpop.f32.mrf.mxu0
    %v2754 = vadd.f32 %v2305, %v2753
    %2755 = vmatprep.mubr.f32.mxu0 %v369
    %2756 = vmatmul.mubr.f32.gmra.mxu0 %v368
    %v2757 = vpop.f32.mrf.mxu0
    %v2758 = vadd.f32 %v2309, %v2757
    %v2759 = vpop.f32.mrf.mxu0
    %v2760 = vadd.f32 %v2311, %v2759
    %2761 = vmatprep.mubr.f32.mxu0 %v377
    %2762 = vmatmul.mubr.f32.gmra.mxu0 %v376
    %v2763 = vpop.f32.mrf.mxu0
    %v2764 = vadd.f32 %v2315, %v2763
    %v2765 = vpop.f32.mrf.mxu0
    %v2766 = vadd.f32 %v2317, %v2765
    %2767 = vmatprep.mubr.f32.mxu0 %v385
    %2768 = vmatmul.mubr.f32.gmra.mxu0 %v384
    %v2769 = vpop.f32.mrf.mxu0
    %v2770 = vadd.f32 %v2321, %v2769
    %v2771 = vpop.f32.mrf.mxu0
    %v2772 = vadd.f32 %v2323, %v2771
    %2773 = vmatprep.mubr.f32.mxu0 %v393
    %2774 = vmatmul.mubr.f32.gmra.mxu0 %v392
    %v2775 = vpop.f32.mrf.mxu0
    %v2776 = vadd.f32 %v2327, %v2775
    %v2777 = vpop.f32.mrf.mxu0
    %v2778 = vadd.f32 %v2329, %v2777
    %2779 = vmatprep.mubr.f32.mxu0 %v401
    %2780 = vmatmul.mubr.f32.gmra.mxu0 %v400
    %v2781 = vpop.f32.mrf.mxu0
    %v2782 = vadd.f32 %v2333, %v2781
    %v2783 = vpop.f32.mrf.mxu0
    %v2784 = vadd.f32 %v2335, %v2783
    %2785 = vmatprep.mubr.f32.mxu0 %v409
    %2786 = vmatmul.mubr.f32.gmra.mxu0 %v408
    %v2787 = vpop.f32.mrf.mxu0
    %v2788 = vadd.f32 %v2339, %v2787
    %v2789 = vpop.f32.mrf.mxu0
    %v2790 = vadd.f32 %v2341, %v2789
    %2791 = vmatprep.mubr.f32.mxu0 %v417
    %2792 = vmatmul.mubr.f32.gmra.mxu0 %v416
    %v2793 = vpop.f32.mrf.mxu0
    %v2794 = vadd.f32 %v2345, %v2793
    %v2795 = vpop.f32.mrf.mxu0
    %v2796 = vadd.f32 %v2347, %v2795
    %2797 = vmatprep.mubr.f32.mxu0 %v425
    %2798 = vmatmul.mubr.f32.gmra.mxu0 %v424
    %v2799 = vpop.f32.mrf.mxu0
    %v2800 = vadd.f32 %v2351, %v2799
    %v2801 = vpop.f32.mrf.mxu0
    %v2802 = vadd.f32 %v2353, %v2801
    %2803 = vmatprep.mubr.f32.mxu0 %v433
    %2804 = vmatmul.mubr.f32.gmra.mxu0 %v432
    %v2805 = vpop.f32.mrf.mxu0
    %v2806 = vadd.f32 %v2357, %v2805
    %v2807 = vpop.f32.mrf.mxu0
    %v2808 = vadd.f32 %v2359, %v2807
    %2809 = vmatprep.mubr.f32.mxu0 %v441
    %2810 = vmatmul.mubr.f32.gmra.mxu0 %v440
    %v2811 = vpop.f32.mrf.mxu0
    %v2812 = vadd.f32 %v2363, %v2811
    %v2813 = vpop.f32.mrf.mxu0
    %v2814 = vadd.f32 %v2365, %v2813
    %2815 = vmatprep.mubr.f32.mxu0 %v449
    %2816 = vmatmul.mubr.f32.gmra.mxu0 %v448
    %v2817 = vpop.f32.mrf.mxu0
    %v2818 = vadd.f32 %v2369, %v2817
    %v2819 = vpop.f32.mrf.mxu0
    %v2820 = vadd.f32 %v2371, %v2819
    %2821 = vmatprep.mubr.f32.mxu0 %v457
    %2822 = vmatmul.mubr.f32.gmra.mxu0 %v456
    %v2823 = vpop.f32.mrf.mxu0
    %v2824 = vadd.f32 %v2375, %v2823
    %v2825 = vpop.f32.mrf.mxu0
    %v2826 = vadd.f32 %v2377, %v2825
    %2827 = vmatprep.mubr.f32.mxu0 %v465
    %2828 = vmatmul.mubr.f32.gmra.mxu0 %v464
    %v2829 = vpop.f32.mrf.mxu0
    %v2830 = vadd.f32 %v2381, %v2829
    %v2831 = vpop.f32.mrf.mxu0
    %v2832 = vadd.f32 %v2383, %v2831
    %2833 = vmatprep.mubr.f32.mxu0 %v473
    %2834 = vmatmul.mubr.f32.gmra.mxu0 %v472
    %v2835 = vpop.f32.mrf.mxu0
    %v2836 = vadd.f32 %v2387, %v2835
    %v2837 = vpop.f32.mrf.mxu0
    %v2838 = vadd.f32 %v2389, %v2837
    %2839 = vmatprep.mubr.f32.mxu0 %v481
    %2840 = vmatmul.mubr.f32.gmra.mxu0 %v480
    %v2841 = vpop.f32.mrf.mxu0
    %v2842 = vadd.f32 %v2393, %v2841
    %v2843 = vpop.f32.mrf.mxu0
    %v2844 = vadd.f32 %v2395, %v2843
    %2845 = vmatprep.mubr.f32.mxu0 %v489
    %2846 = vmatmul.mubr.f32.gmra.mxu0 %v488
    %v2847 = vpop.f32.mrf.mxu0
    %v2848 = vadd.f32 %v2399, %v2847
    %v2849 = vpop.f32.mrf.mxu0
    %v2850 = vadd.f32 %v2401, %v2849
    %2851 = vmatprep.mubr.f32.mxu0 %v497
    %2852 = vmatmul.mubr.f32.gmra.mxu0 %v496
    %v2853 = vpop.f32.mrf.mxu0
    %v2854 = vadd.f32 %v2405, %v2853
    %v2855 = vpop.f32.mrf.mxu0
    %v2856 = vadd.f32 %v2407, %v2855
    %2857 = vmatprep.mubr.f32.mxu0 %v505
    %2858 = vmatmul.mubr.f32.gmra.mxu0 %v504
    %v2859 = vpop.f32.mrf.mxu0
    %v2860 = vadd.f32 %v2411, %v2859
    %v2861 = vpop.f32.mrf.mxu0
    %v2862 = vadd.f32 %v2413, %v2861
    %2863 = vmatprep.mubr.f32.mxu0 %v513
    %2864 = vmatmul.mubr.f32.gmra.mxu0 %v512
    %v2865 = vpop.f32.mrf.mxu0
    %v2866 = vadd.f32 %v2417, %v2865
    %v2867 = vpop.f32.mrf.mxu0
    %v2868 = vadd.f32 %v2419, %v2867
    %2869 = vmatprep.mubr.f32.mxu0 %v521
    %2870 = vmatmul.mubr.f32.gmra.mxu0 %v520
    %v2871 = vpop.f32.mrf.mxu0
    %v2872 = vadd.f32 %v2423, %v2871
    %v2873 = vpop.f32.mrf.mxu0
    %v2874 = vadd.f32 %v2425, %v2873
    %2875 = vmatprep.mubr.f32.mxu0 %v529
    %2876 = vmatmul.mubr.f32.gmra.mxu0 %v528
    %v2877 = vpop.f32.mrf.mxu0
    %v2878 = vadd.f32 %v2429, %v2877
    %v2879 = vpop.f32.mrf.mxu0
    %v2880 = vadd.f32 %v2431, %v2879
    %2881 = vmatprep.mubr.f32.mxu0 %v537
    %2882 = vmatmul.mubr.f32.gmra.mxu0 %v536
    %v2883 = vpop.f32.mrf.mxu0
    %v2884 = vadd.f32 %v2435, %v2883
    %v2885 = vpop.f32.mrf.mxu0
    %v2886 = vadd.f32 %v2437, %v2885
    %2887 = vmatprep.mubr.f32.mxu0 %v545
    %2888 = vmatmul.mubr.f32.gmra.mxu0 %v544
    %v2889 = vpop.f32.mrf.mxu0
    %v2890 = vadd.f32 %v2441, %v2889
    %v2891 = vpop.f32.mrf.mxu0
    %v2892 = vadd.f32 %v2443, %v2891
    %2893 = vmatprep.mubr.f32.mxu0 %v553
    %2894 = vmatmul.mubr.f32.gmra.mxu0 %v552
    %v2895 = vpop.f32.mrf.mxu0
    %v2896 = vadd.f32 %v2447, %v2895
    %v2897 = vpop.f32.mrf.mxu0
    %v2898 = vadd.f32 %v2449, %v2897
    %2899 = vmatprep.mubr.f32.mxu0 %v561
    %2900 = vmatmul.mubr.f32.gmra.mxu0 %v560
    %v2901 = vpop.f32.mrf.mxu0
    %v2902 = vadd.f32 %v2453, %v2901
    %v2903 = vpop.f32.mrf.mxu0
    %v2904 = vadd.f32 %v2455, %v2903
    %2905 = vmatprep.mubr.f32.mxu0 %v569
    %2906 = vmatmul.mubr.f32.gmra.mxu0 %v568
    %v2907 = vpop.f32.mrf.mxu0
    %v2908 = vadd.f32 %v2459, %v2907
    %v2909 = vpop.f32.mrf.mxu0
    %v2910 = vadd.f32 %v2461, %v2909
    %2911 = vmatprep.mubr.f32.mxu0 %v577
    %2912 = vmatmul.mubr.f32.gmra.mxu0 %v576
    %v2913 = vpop.f32.mrf.mxu0
    %v2914 = vadd.f32 %v2465, %v2913
    %v2915 = vpop.f32.mrf.mxu0
    %v2916 = vadd.f32 %v2467, %v2915
    %2917 = vmatprep.mubr.f32.mxu0 %v585
    %2918 = vmatmul.mubr.f32.gmra.mxu0 %v584
    %v2919 = vpop.f32.mrf.mxu0
    %v2920 = vadd.f32 %v2471, %v2919
    %v2921 = vpop.f32.mrf.mxu0
    %v2922 = vadd.f32 %v2473, %v2921
    %2923 = vmatprep.mubr.f32.mxu0 %v593
    %2924 = vmatmul.mubr.f32.gmra.mxu0 %v592
    %v2925 = vpop.f32.mrf.mxu0
    %v2926 = vadd.f32 %v2477, %v2925
    %v2927 = vpop.f32.mrf.mxu0
    %v2928 = vadd.f32 %v2479, %v2927
    %2929 = vmatprep.mubr.f32.mxu0 %v601
    %2930 = vmatmul.mubr.f32.gmra.mxu0 %v600
    %v2931 = vpop.f32.mrf.mxu0
    %v2932 = vadd.f32 %v2483, %v2931
    %v2933 = vpop.f32.mrf.mxu0
    %v2934 = vadd.f32 %v2485, %v2933
    %2935 = vmatprep.mubr.f32.mxu0 %v609
    %2936 = vmatmul.mubr.f32.gmra.mxu0 %v608
    %v2937 = vpop.f32.mrf.mxu0
    %v2938 = vadd.f32 %v2489, %v2937
    %v2939 = vpop.f32.mrf.mxu0
    %v2940 = vadd.f32 %v2491, %v2939
    %2941 = vmatprep.mubr.f32.mxu0 %v617
    %2942 = vmatmul.mubr.f32.gmra.mxu0 %v616
    %v2943 = vpop.f32.mrf.mxu0
    %v2944 = vadd.f32 %v2495, %v2943
    %v2945 = vpop.f32.mrf.mxu0
    %v2946 = vadd.f32 %v2497, %v2945
    %2947 = vdwg.mxu0
    %2948 = vmatprep.subr.mxu0 %v681
    %2949 = vmatpush1.msra.mxu0 %v680
    %2950 = vmatprep.subr.mxu0 %v677
    %2951 = vmatpush1.msra.mxu0 %v676
    %2952 = vmatprep.subr.mxu0 %v673
    %2953 = vmatpush1.msra.mxu0 %v672
    %2954 = vmatprep.subr.mxu0 %v669
    %2955 = vmatpush1.msra.mxu0 %v668
    %2956 = vmatprep.subr.mxu0 %v665
    %2957 = vmatpush1.msra.mxu0 %v664
    %2958 = vmatprep.subr.mxu0 %v661
    %2959 = vmatpush1.msra.mxu0 %v660
    %2960 = vmatprep.subr.mxu0 %v657
    %2961 = vmatpush1.msra.mxu0 %v656
    %2962 = vmatprep.subr.mxu0 %v653
    %2963 = vmatpush1.msra.mxu0 %v652
    %2964 = vmatprep.subr.mxu0 %v649
    %2965 = vmatpush1.msra.mxu0 %v648
    %2966 = vmatprep.subr.mxu0 %v645
    %2967 = vmatpush1.msra.mxu0 %v644
    %2968 = vmatprep.subr.mxu0 %v641
    %2969 = vmatpush1.msra.mxu0 %v640
    %2970 = vmatprep.subr.mxu0 %v637
    %2971 = vmatpush1.msra.mxu0 %v636
    %2972 = vmatprep.subr.mxu0 %v633
    %2973 = vmatpush1.msra.mxu0 %v632
    %2974 = vmatprep.subr.mxu0 %v629
    %2975 = vmatpush1.msra.mxu0 %v628
    %2976 = vmatprep.subr.mxu0 %v625
    %2977 = vmatpush1.msra.mxu0 %v624
    %2978 = vmatprep.subr.mxu0 %v621
    %2979 = vmatpush1.msra.mxu0 %v620
    %2980 = vmatprep.subr.mxu0 %v745
    %2981 = vmatpush2.msra.mxu0 %v744
    %2982 = vmatprep.subr.mxu0 %v741
    %2983 = vmatpush2.msra.mxu0 %v740
    %2984 = vmatprep.subr.mxu0 %v737
    %2985 = vmatpush2.msra.mxu0 %v736
    %2986 = vmatprep.subr.mxu0 %v733
    %2987 = vmatpush2.msra.mxu0 %v732
    %2988 = vmatprep.subr.mxu0 %v729
    %2989 = vmatpush2.msra.mxu0 %v728
    %2990 = vmatprep.subr.mxu0 %v725
    %2991 = vmatpush2.msra.mxu0 %v724
    %2992 = vmatprep.subr.mxu0 %v721
    %2993 = vmatpush2.msra.mxu0 %v720
    %2994 = vmatprep.subr.mxu0 %v717
    %2995 = vmatpush2.msra.mxu0 %v716
    %2996 = vmatprep.subr.mxu0 %v713
    %2997 = vmatpush2.msra.mxu0 %v712
    %2998 = vmatprep.subr.mxu0 %v709
    %2999 = vmatpush2.msra.mxu0 %v708
    %3000 = vmatprep.subr.mxu0 %v705
    %3001 = vmatpush2.msra.mxu0 %v704
    %3002 = vmatprep.subr.mxu0 %v701
    %3003 = vmatpush2.msra.mxu0 %v700
    %3004 = vmatprep.subr.mxu0 %v697
    %3005 = vmatpush2.msra.mxu0 %v696
    %3006 = vmatprep.subr.mxu0 %v693
    %3007 = vmatpush2.msra.mxu0 %v692
    %3008 = vmatprep.subr.mxu0 %v689
    %3009 = vmatpush2.msra.mxu0 %v688
    %3010 = vmatprep.subr.mxu0 %v685
    %3011 = vmatpush2.msra.mxu0 %v684
    %3012 = vmatprep.mubr.f32.mxu0 %v107
    %3013 = vmatmul.mubr.f32.gmra.mxu0 %v106
    %v3014 = vpop.f32.mrf.mxu0
    %v3015 = vadd.f32 %v1143, %v3014
    %v3016 = vpop.f32.mrf.mxu0
    %v3017 = vadd.f32 %v1147, %v3016
    %3018 = vmatprep.mubr.f32.mxu0 %v115
    %3019 = vmatmul.mubr.f32.gmra.mxu0 %v114
    %v3020 = vpop.f32.mrf.mxu0
    %v3021 = vadd.f32 %v1143, %v3020
    %v3022 = vpop.f32.mrf.mxu0
    %v3023 = vadd.f32 %v1147, %v3022
    %3024 = vmatprep.mubr.f32.mxu0 %v123
    %3025 = vmatmul.mubr.f32.gmra.mxu0 %v122
    %v3026 = vpop.f32.mrf.mxu0
    %v3027 = vadd.f32 %v1143, %v3026
    %v3028 = vpop.f32.mrf.mxu0
    %v3029 = vadd.f32 %v1147, %v3028
    %3030 = vmatprep.mubr.f32.mxu0 %v131
    %3031 = vmatmul.mubr.f32.gmra.mxu0 %v130
    %v3032 = vpop.f32.mrf.mxu0
    %v3033 = vadd.f32 %v1143, %v3032
    %v3034 = vpop.f32.mrf.mxu0
    %v3035 = vadd.f32 %v1147, %v3034
    %3036 = vmatprep.mubr.f32.mxu0 %v139
    %3037 = vmatmul.mubr.f32.gmra.mxu0 %v138
    %v3038 = vpop.f32.mrf.mxu0
    %v3039 = vadd.f32 %v1143, %v3038
    %v3040 = vpop.f32.mrf.mxu0
    %v3041 = vadd.f32 %v1147, %v3040
    %3042 = vmatprep.mubr.f32.mxu0 %v147
    %3043 = vmatmul.mubr.f32.gmra.mxu0 %v146
    %v3044 = vpop.f32.mrf.mxu0
    %v3045 = vadd.f32 %v1143, %v3044
    %v3046 = vpop.f32.mrf.mxu0
    %v3047 = vadd.f32 %v1147, %v3046
    %3048 = vmatprep.mubr.f32.mxu0 %v155
    %3049 = vmatmul.mubr.f32.gmra.mxu0 %v154
    %v3050 = vpop.f32.mrf.mxu0
    %v3051 = vadd.f32 %v1143, %v3050
    %v3052 = vpop.f32.mrf.mxu0
    %v3053 = vadd.f32 %v1147, %v3052
    %3054 = vmatprep.mubr.f32.mxu0 %v163
    %3055 = vmatmul.mubr.f32.gmra.mxu0 %v162
    %v3056 = vpop.f32.mrf.mxu0
    %v3057 = vadd.f32 %v1143, %v3056
    %v3058 = vpop.f32.mrf.mxu0
    %v3059 = vadd.f32 %v1147, %v3058
    %3060 = vmatprep.mubr.f32.mxu0 %v171
    %3061 = vmatmul.mubr.f32.gmra.mxu0 %v170
    %v3062 = vpop.f32.mrf.mxu0
    %v3063 = vadd.f32 %v1143, %v3062
    %v3064 = vpop.f32.mrf.mxu0
    %v3065 = vadd.f32 %v1147, %v3064
    %3066 = vmatprep.mubr.f32.mxu0 %v179
    %3067 = vmatmul.mubr.f32.gmra.mxu0 %v178
    %v3068 = vpop.f32.mrf.mxu0
    %v3069 = vadd.f32 %v1143, %v3068
    %v3070 = vpop.f32.mrf.mxu0
    %v3071 = vadd.f32 %v1147, %v3070
    %3072 = vmatprep.mubr.f32.mxu0 %v187
    %3073 = vmatmul.mubr.f32.gmra.mxu0 %v186
    %v3074 = vpop.f32.mrf.mxu0
    %v3075 = vadd.f32 %v1143, %v3074
    %v3076 = vpop.f32.mrf.mxu0
    %v3077 = vadd.f32 %v1147, %v3076
    %3078 = vmatprep.mubr.f32.mxu0 %v195
    %3079 = vmatmul.mubr.f32.gmra.mxu0 %v194
    %v3080 = vpop.f32.mrf.mxu0
    %v3081 = vadd.f32 %v1143, %v3080
    %v3082 = vpop.f32.mrf.mxu0
    %v3083 = vadd.f32 %v1147, %v3082
    %3084 = vmatprep.mubr.f32.mxu0 %v203
    %3085 = vmatmul.mubr.f32.gmra.mxu0 %v202
    %v3086 = vpop.f32.mrf.mxu0
    %v3087 = vadd.f32 %v1143, %v3086
    %v3088 = vpop.f32.mrf.mxu0
    %v3089 = vadd.f32 %v1147, %v3088
    %3090 = vmatprep.mubr.f32.mxu0 %v211
    %3091 = vmatmul.mubr.f32.gmra.mxu0 %v210
    %v3092 = vpop.f32.mrf.mxu0
    %v3093 = vadd.f32 %v1143, %v3092
    %v3094 = vpop.f32.mrf.mxu0
    %v3095 = vadd.f32 %v1147, %v3094
    %3096 = vmatprep.mubr.f32.mxu0 %v219
    %3097 = vmatmul.mubr.f32.gmra.mxu0 %v218
    %v3098 = vpop.f32.mrf.mxu0
    %v3099 = vadd.f32 %v1143, %v3098
    %v3100 = vpop.f32.mrf.mxu0
    %v3101 = vadd.f32 %v1147, %v3100
    %3102 = vmatprep.mubr.f32.mxu0 %v227
    %3103 = vmatmul.mubr.f32.gmra.mxu0 %v226
    %v3104 = vpop.f32.mrf.mxu0
    %v3105 = vadd.f32 %v1143, %v3104
    %v3106 = vpop.f32.mrf.mxu0
    %v3107 = vadd.f32 %v1147, %v3106
    %3108 = vmatprep.mubr.f32.mxu0 %v235
    %3109 = vmatmul.mubr.f32.gmra.mxu0 %v234
    %v3110 = vpop.f32.mrf.mxu0
    %v3111 = vadd.f32 %v1143, %v3110
    %v3112 = vpop.f32.mrf.mxu0
    %v3113 = vadd.f32 %v1147, %v3112
    %3114 = vmatprep.mubr.f32.mxu0 %v243
    %3115 = vmatmul.mubr.f32.gmra.mxu0 %v242
    %v3116 = vpop.f32.mrf.mxu0
    %v3117 = vadd.f32 %v1143, %v3116
    %v3118 = vpop.f32.mrf.mxu0
    %v3119 = vadd.f32 %v1147, %v3118
    %3120 = vmatprep.mubr.f32.mxu0 %v251
    %3121 = vmatmul.mubr.f32.gmra.mxu0 %v250
    %v3122 = vpop.f32.mrf.mxu0
    %v3123 = vadd.f32 %v1143, %v3122
    %v3124 = vpop.f32.mrf.mxu0
    %v3125 = vadd.f32 %v1147, %v3124
    %3126 = vmatprep.mubr.f32.mxu0 %v259
    %3127 = vmatmul.mubr.f32.gmra.mxu0 %v258
    %v3128 = vpop.f32.mrf.mxu0
    %v3129 = vadd.f32 %v1143, %v3128
    %v3130 = vpop.f32.mrf.mxu0
    %v3131 = vadd.f32 %v1147, %v3130
    %3132 = vmatprep.mubr.f32.mxu0 %v267
    %3133 = vmatmul.mubr.f32.gmra.mxu0 %v266
    %v3134 = vpop.f32.mrf.mxu0
    %v3135 = vadd.f32 %v1143, %v3134
    %v3136 = vpop.f32.mrf.mxu0
    %v3137 = vadd.f32 %v1147, %v3136
    %3138 = vmatprep.mubr.f32.mxu0 %v275
    %3139 = vmatmul.mubr.f32.gmra.mxu0 %v274
    %v3140 = vpop.f32.mrf.mxu0
    %v3141 = vadd.f32 %v1143, %v3140
    %v3142 = vpop.f32.mrf.mxu0
    %v3143 = vadd.f32 %v1147, %v3142
    %3144 = vmatprep.mubr.f32.mxu0 %v283
    %3145 = vmatmul.mubr.f32.gmra.mxu0 %v282
    %v3146 = vpop.f32.mrf.mxu0
    %v3147 = vadd.f32 %v1143, %v3146
    %v3148 = vpop.f32.mrf.mxu0
    %v3149 = vadd.f32 %v1147, %v3148
    %3150 = vmatprep.mubr.f32.mxu0 %v291
    %3151 = vmatmul.mubr.f32.gmra.mxu0 %v290
    %v3152 = vpop.f32.mrf.mxu0
    %v3153 = vadd.f32 %v1143, %v3152
    %v3154 = vpop.f32.mrf.mxu0
    %v3155 = vadd.f32 %v1147, %v3154
    %3156 = vmatprep.mubr.f32.mxu0 %v299
    %3157 = vmatmul.mubr.f32.gmra.mxu0 %v298
    %v3158 = vpop.f32.mrf.mxu0
    %v3159 = vadd.f32 %v1143, %v3158
    %v3160 = vpop.f32.mrf.mxu0
    %v3161 = vadd.f32 %v1147, %v3160
    %3162 = vmatprep.mubr.f32.mxu0 %v307
    %3163 = vmatmul.mubr.f32.gmra.mxu0 %v306
    %v3164 = vpop.f32.mrf.mxu0
    %v3165 = vadd.f32 %v1143, %v3164
    %v3166 = vpop.f32.mrf.mxu0
    %v3167 = vadd.f32 %v1147, %v3166
    %3168 = vmatprep.mubr.f32.mxu0 %v315
    %3169 = vmatmul.mubr.f32.gmra.mxu0 %v314
    %v3170 = vpop.f32.mrf.mxu0
    %v3171 = vadd.f32 %v1143, %v3170
    %v3172 = vpop.f32.mrf.mxu0
    %v3173 = vadd.f32 %v1147, %v3172
    %3174 = vmatprep.mubr.f32.mxu0 %v323
    %3175 = vmatmul.mubr.f32.gmra.mxu0 %v322
    %v3176 = vpop.f32.mrf.mxu0
    %v3177 = vadd.f32 %v1143, %v3176
    %v3178 = vpop.f32.mrf.mxu0
    %v3179 = vadd.f32 %v1147, %v3178
    %3180 = vmatprep.mubr.f32.mxu0 %v331
    %3181 = vmatmul.mubr.f32.gmra.mxu0 %v330
    %v3182 = vpop.f32.mrf.mxu0
    %v3183 = vadd.f32 %v1143, %v3182
    %v3184 = vpop.f32.mrf.mxu0
    %v3185 = vadd.f32 %v1147, %v3184
    %3186 = vmatprep.mubr.f32.mxu0 %v339
    %3187 = vmatmul.mubr.f32.gmra.mxu0 %v338
    %v3188 = vpop.f32.mrf.mxu0
    %v3189 = vadd.f32 %v1143, %v3188
    %v3190 = vpop.f32.mrf.mxu0
    %v3191 = vadd.f32 %v1147, %v3190
    %3192 = vmatprep.mubr.f32.mxu0 %v347
    %3193 = vmatmul.mubr.f32.gmra.mxu0 %v346
    %v3194 = vpop.f32.mrf.mxu0
    %v3195 = vadd.f32 %v1143, %v3194
    %v3196 = vpop.f32.mrf.mxu0
    %v3197 = vadd.f32 %v1147, %v3196
    %3198 = vmatprep.mubr.f32.mxu0 %v355
    %3199 = vmatmul.mubr.f32.gmra.mxu0 %v354
    %v3200 = vpop.f32.mrf.mxu0
    %v3201 = vadd.f32 %v1143, %v3200
    %v3202 = vpop.f32.mrf.mxu0
    %v3203 = vadd.f32 %v1147, %v3202
    %3204 = vmatprep.mubr.f32.mxu0 %v363
    %3205 = vmatmul.mubr.f32.gmra.mxu0 %v362
    %v3206 = vpop.f32.mrf.mxu0
    %v3207 = vadd.f32 %v1143, %v3206
    %v3208 = vpop.f32.mrf.mxu0
    %v3209 = vadd.f32 %v1147, %v3208
    %3210 = vmatprep.mubr.f32.mxu0 %v371
    %3211 = vmatmul.mubr.f32.gmra.mxu0 %v370
    %v3212 = vpop.f32.mrf.mxu0
    %v3213 = vadd.f32 %v1143, %v3212
    %v3214 = vpop.f32.mrf.mxu0
    %v3215 = vadd.f32 %v1147, %v3214
    %3216 = vmatprep.mubr.f32.mxu0 %v379
    %3217 = vmatmul.mubr.f32.gmra.mxu0 %v378
    %v3218 = vpop.f32.mrf.mxu0
    %v3219 = vadd.f32 %v1143, %v3218
    %v3220 = vpop.f32.mrf.mxu0
    %v3221 = vadd.f32 %v1147, %v3220
    %3222 = vmatprep.mubr.f32.mxu0 %v387
    %3223 = vmatmul.mubr.f32.gmra.mxu0 %v386
    %v3224 = vpop.f32.mrf.mxu0
    %v3225 = vadd.f32 %v1143, %v3224
    %v3226 = vpop.f32.mrf.mxu0
    %v3227 = vadd.f32 %v1147, %v3226
    %3228 = vmatprep.mubr.f32.mxu0 %v395
    %3229 = vmatmul.mubr.f32.gmra.mxu0 %v394
    %v3230 = vpop.f32.mrf.mxu0
    %v3231 = vadd.f32 %v1143, %v3230
    %v3232 = vpop.f32.mrf.mxu0
    %v3233 = vadd.f32 %v1147, %v3232
    %3234 = vmatprep.mubr.f32.mxu0 %v403
    %3235 = vmatmul.mubr.f32.gmra.mxu0 %v402
    %v3236 = vpop.f32.mrf.mxu0
    %v3237 = vadd.f32 %v1143, %v3236
    %v3238 = vpop.f32.mrf.mxu0
    %v3239 = vadd.f32 %v1147, %v3238
    %3240 = vmatprep.mubr.f32.mxu0 %v411
    %3241 = vmatmul.mubr.f32.gmra.mxu0 %v410
    %v3242 = vpop.f32.mrf.mxu0
    %v3243 = vadd.f32 %v1143, %v3242
    %v3244 = vpop.f32.mrf.mxu0
    %v3245 = vadd.f32 %v1147, %v3244
    %3246 = vmatprep.mubr.f32.mxu0 %v419
    %3247 = vmatmul.mubr.f32.gmra.mxu0 %v418
    %v3248 = vpop.f32.mrf.mxu0
    %v3249 = vadd.f32 %v1143, %v3248
    %v3250 = vpop.f32.mrf.mxu0
    %v3251 = vadd.f32 %v1147, %v3250
    %3252 = vmatprep.mubr.f32.mxu0 %v427
    %3253 = vmatmul.mubr.f32.gmra.mxu0 %v426
    %v3254 = vpop.f32.mrf.mxu0
    %v3255 = vadd.f32 %v1143, %v3254
    %v3256 = vpop.f32.mrf.mxu0
    %v3257 = vadd.f32 %v1147, %v3256
    %3258 = vmatprep.mubr.f32.mxu0 %v435
    %3259 = vmatmul.mubr.f32.gmra.mxu0 %v434
    %v3260 = vpop.f32.mrf.mxu0
    %v3261 = vadd.f32 %v1143, %v3260
    %v3262 = vpop.f32.mrf.mxu0
    %v3263 = vadd.f32 %v1147, %v3262
    %3264 = vmatprep.mubr.f32.mxu0 %v443
    %3265 = vmatmul.mubr.f32.gmra.mxu0 %v442
    %v3266 = vpop.f32.mrf.mxu0
    %v3267 = vadd.f32 %v1143, %v3266
    %v3268 = vpop.f32.mrf.mxu0
    %v3269 = vadd.f32 %v1147, %v3268
    %3270 = vmatprep.mubr.f32.mxu0 %v451
    %3271 = vmatmul.mubr.f32.gmra.mxu0 %v450
    %v3272 = vpop.f32.mrf.mxu0
    %v3273 = vadd.f32 %v1143, %v3272
    %v3274 = vpop.f32.mrf.mxu0
    %v3275 = vadd.f32 %v1147, %v3274
    %3276 = vmatprep.mubr.f32.mxu0 %v459
    %3277 = vmatmul.mubr.f32.gmra.mxu0 %v458
    %v3278 = vpop.f32.mrf.mxu0
    %v3279 = vadd.f32 %v1143, %v3278
    %v3280 = vpop.f32.mrf.mxu0
    %v3281 = vadd.f32 %v1147, %v3280
    %3282 = vmatprep.mubr.f32.mxu0 %v467
    %3283 = vmatmul.mubr.f32.gmra.mxu0 %v466
    %v3284 = vpop.f32.mrf.mxu0
    %v3285 = vadd.f32 %v1143, %v3284
    %v3286 = vpop.f32.mrf.mxu0
    %v3287 = vadd.f32 %v1147, %v3286
    %3288 = vmatprep.mubr.f32.mxu0 %v475
    %3289 = vmatmul.mubr.f32.gmra.mxu0 %v474
    %v3290 = vpop.f32.mrf.mxu0
    %v3291 = vadd.f32 %v1143, %v3290
    %v3292 = vpop.f32.mrf.mxu0
    %v3293 = vadd.f32 %v1147, %v3292
    %3294 = vmatprep.mubr.f32.mxu0 %v483
    %3295 = vmatmul.mubr.f32.gmra.mxu0 %v482
    %v3296 = vpop.f32.mrf.mxu0
    %v3297 = vadd.f32 %v1143, %v3296
    %v3298 = vpop.f32.mrf.mxu0
    %v3299 = vadd.f32 %v1147, %v3298
    %3300 = vmatprep.mubr.f32.mxu0 %v491
    %3301 = vmatmul.mubr.f32.gmra.mxu0 %v490
    %v3302 = vpop.f32.mrf.mxu0
    %v3303 = vadd.f32 %v1143, %v3302
    %v3304 = vpop.f32.mrf.mxu0
    %v3305 = vadd.f32 %v1147, %v3304
    %3306 = vmatprep.mubr.f32.mxu0 %v499
    %3307 = vmatmul.mubr.f32.gmra.mxu0 %v498
    %v3308 = vpop.f32.mrf.mxu0
    %v3309 = vadd.f32 %v1143, %v3308
    %v3310 = vpop.f32.mrf.mxu0
    %v3311 = vadd.f32 %v1147, %v3310
    %3312 = vmatprep.mubr.f32.mxu0 %v507
    %3313 = vmatmul.mubr.f32.gmra.mxu0 %v506
    %v3314 = vpop.f32.mrf.mxu0
    %v3315 = vadd.f32 %v1143, %v3314
    %v3316 = vpop.f32.mrf.mxu0
    %v3317 = vadd.f32 %v1147, %v3316
    %3318 = vmatprep.mubr.f32.mxu0 %v515
    %3319 = vmatmul.mubr.f32.gmra.mxu0 %v514
    %v3320 = vpop.f32.mrf.mxu0
    %v3321 = vadd.f32 %v1143, %v3320
    %v3322 = vpop.f32.mrf.mxu0
    %v3323 = vadd.f32 %v1147, %v3322
    %3324 = vmatprep.mubr.f32.mxu0 %v523
    %3325 = vmatmul.mubr.f32.gmra.mxu0 %v522
    %v3326 = vpop.f32.mrf.mxu0
    %v3327 = vadd.f32 %v1143, %v3326
    %v3328 = vpop.f32.mrf.mxu0
    %v3329 = vadd.f32 %v1147, %v3328
    %3330 = vmatprep.mubr.f32.mxu0 %v531
    %3331 = vmatmul.mubr.f32.gmra.mxu0 %v530
    %v3332 = vpop.f32.mrf.mxu0
    %v3333 = vadd.f32 %v1143, %v3332
    %v3334 = vpop.f32.mrf.mxu0
    %v3335 = vadd.f32 %v1147, %v3334
    %3336 = vmatprep.mubr.f32.mxu0 %v539
    %3337 = vmatmul.mubr.f32.gmra.mxu0 %v538
    %v3338 = vpop.f32.mrf.mxu0
    %v3339 = vadd.f32 %v1143, %v3338
    %v3340 = vpop.f32.mrf.mxu0
    %v3341 = vadd.f32 %v1147, %v3340
    %3342 = vmatprep.mubr.f32.mxu0 %v547
    %3343 = vmatmul.mubr.f32.gmra.mxu0 %v546
    %v3344 = vpop.f32.mrf.mxu0
    %v3345 = vadd.f32 %v1143, %v3344
    %v3346 = vpop.f32.mrf.mxu0
    %v3347 = vadd.f32 %v1147, %v3346
    %3348 = vmatprep.mubr.f32.mxu0 %v555
    %3349 = vmatmul.mubr.f32.gmra.mxu0 %v554
    %v3350 = vpop.f32.mrf.mxu0
    %v3351 = vadd.f32 %v1143, %v3350
    %v3352 = vpop.f32.mrf.mxu0
    %v3353 = vadd.f32 %v1147, %v3352
    %3354 = vmatprep.mubr.f32.mxu0 %v563
    %3355 = vmatmul.mubr.f32.gmra.mxu0 %v562
    %v3356 = vpop.f32.mrf.mxu0
    %v3357 = vadd.f32 %v1143, %v3356
    %v3358 = vpop.f32.mrf.mxu0
    %v3359 = vadd.f32 %v1147, %v3358
    %3360 = vmatprep.mubr.f32.mxu0 %v571
    %3361 = vmatmul.mubr.f32.gmra.mxu0 %v570
    %v3362 = vpop.f32.mrf.mxu0
    %v3363 = vadd.f32 %v1143, %v3362
    %v3364 = vpop.f32.mrf.mxu0
    %v3365 = vadd.f32 %v1147, %v3364
    %3366 = vmatprep.mubr.f32.mxu0 %v579
    %3367 = vmatmul.mubr.f32.gmra.mxu0 %v578
    %v3368 = vpop.f32.mrf.mxu0
    %v3369 = vadd.f32 %v1143, %v3368
    %v3370 = vpop.f32.mrf.mxu0
    %v3371 = vadd.f32 %v1147, %v3370
    %3372 = vmatprep.mubr.f32.mxu0 %v587
    %3373 = vmatmul.mubr.f32.gmra.mxu0 %v586
    %v3374 = vpop.f32.mrf.mxu0
    %v3375 = vadd.f32 %v1143, %v3374
    %v3376 = vpop.f32.mrf.mxu0
    %v3377 = vadd.f32 %v1147, %v3376
    %3378 = vmatprep.mubr.f32.mxu0 %v595
    %3379 = vmatmul.mubr.f32.gmra.mxu0 %v594
    %v3380 = vpop.f32.mrf.mxu0
    %v3381 = vadd.f32 %v1143, %v3380
    %v3382 = vpop.f32.mrf.mxu0
    %v3383 = vadd.f32 %v1147, %v3382
    %3384 = vmatprep.mubr.f32.mxu0 %v603
    %3385 = vmatmul.mubr.f32.gmra.mxu0 %v602
    %v3386 = vpop.f32.mrf.mxu0
    %v3387 = vadd.f32 %v1143, %v3386
    %v3388 = vpop.f32.mrf.mxu0
    %v3389 = vadd.f32 %v1147, %v3388
    %3390 = vmatprep.mubr.f32.mxu0 %v611
    %3391 = vmatmul.mubr.f32.gmra.mxu0 %v610
    %v3392 = vpop.f32.mrf.mxu0
    %v3393 = vadd.f32 %v1143, %v3392
    %v3394 = vpop.f32.mrf.mxu0
    %v3395 = vadd.f32 %v1147, %v3394
    %3396 = vdwg.mxu0
    %3397 = vmatprep.subr.mxu0 %v809
    %3398 = vmatpush1.msra.mxu0 %v808
    %3399 = vmatprep.subr.mxu0 %v805
    %3400 = vmatpush1.msra.mxu0 %v804
    %3401 = vmatprep.subr.mxu0 %v801
    %3402 = vmatpush1.msra.mxu0 %v800
    %3403 = vmatprep.subr.mxu0 %v797
    %3404 = vmatpush1.msra.mxu0 %v796
    %3405 = vmatprep.subr.mxu0 %v793
    %3406 = vmatpush1.msra.mxu0 %v792
    %3407 = vmatprep.subr.mxu0 %v789
    %3408 = vmatpush1.msra.mxu0 %v788
    %3409 = vmatprep.subr.mxu0 %v785
    %3410 = vmatpush1.msra.mxu0 %v784
    %3411 = vmatprep.subr.mxu0 %v781
    %3412 = vmatpush1.msra.mxu0 %v780
    %3413 = vmatprep.subr.mxu0 %v777
    %3414 = vmatpush1.msra.mxu0 %v776
    %3415 = vmatprep.subr.mxu0 %v773
    %3416 = vmatpush1.msra.mxu0 %v772
    %3417 = vmatprep.subr.mxu0 %v769
    %3418 = vmatpush1.msra.mxu0 %v768
    %3419 = vmatprep.subr.mxu0 %v765
    %3420 = vmatpush1.msra.mxu0 %v764
    %3421 = vmatprep.subr.mxu0 %v761
    %3422 = vmatpush1.msra.mxu0 %v760
    %3423 = vmatprep.subr.mxu0 %v757
    %3424 = vmatpush1.msra.mxu0 %v756
    %3425 = vmatprep.subr.mxu0 %v753
    %3426 = vmatpush1.msra.mxu0 %v752
    %3427 = vmatprep.subr.mxu0 %v749
    %3428 = vmatpush1.msra.mxu0 %v748
    %3429 = vmatprep.subr.mxu0 %v873
    %3430 = vmatpush2.msra.mxu0 %v872
    %3431 = vmatprep.subr.mxu0 %v869
    %3432 = vmatpush2.msra.mxu0 %v868
    %3433 = vmatprep.subr.mxu0 %v865
    %3434 = vmatpush2.msra.mxu0 %v864
    %3435 = vmatprep.subr.mxu0 %v861
    %3436 = vmatpush2.msra.mxu0 %v860
    %3437 = vmatprep.subr.mxu0 %v857
    %3438 = vmatpush2.msra.mxu0 %v856
    %3439 = vmatprep.subr.mxu0 %v853
    %3440 = vmatpush2.msra.mxu0 %v852
    %3441 = vmatprep.subr.mxu0 %v849
    %3442 = vmatpush2.msra.mxu0 %v848
    %3443 = vmatprep.subr.mxu0 %v845
    %3444 = vmatpush2.msra.mxu0 %v844
    %3445 = vmatprep.subr.mxu0 %v841
    %3446 = vmatpush2.msra.mxu0 %v840
    %3447 = vmatprep.subr.mxu0 %v837
    %3448 = vmatpush2.msra.mxu0 %v836
    %3449 = vmatprep.subr.mxu0 %v833
    %3450 = vmatpush2.msra.mxu0 %v832
    %3451 = vmatprep.subr.mxu0 %v829
    %3452 = vmatpush2.msra.mxu0 %v828
    %3453 = vmatprep.subr.mxu0 %v825
    %3454 = vmatpush2.msra.mxu0 %v824
    %3455 = vmatprep.subr.mxu0 %v821
    %3456 = vmatpush2.msra.mxu0 %v820
    %3457 = vmatprep.subr.mxu0 %v817
    %3458 = vmatpush2.msra.mxu0 %v816
    %3459 = vmatprep.subr.mxu0 %v813
    %3460 = vmatpush2.msra.mxu0 %v812
    %3461 = vmatprep.mubr.f32.mxu0 %v109
    %3462 = vmatmul.mubr.f32.gmra.mxu0 %v108
    %v3463 = vpop.f32.mrf.mxu0
    %v3464 = vadd.f32 %v3015, %v3463
    %v3465 = vpop.f32.mrf.mxu0
    %v3466 = vadd.f32 %v3017, %v3465
    %3467 = vmatprep.mubr.f32.mxu0 %v117
    %3468 = vmatmul.mubr.f32.gmra.mxu0 %v116
    %v3469 = vpop.f32.mrf.mxu0
    %v3470 = vadd.f32 %v3021, %v3469
    %v3471 = vpop.f32.mrf.mxu0
    %v3472 = vadd.f32 %v3023, %v3471
    %3473 = vmatprep.mubr.f32.mxu0 %v125
    %3474 = vmatmul.mubr.f32.gmra.mxu0 %v124
    %v3475 = vpop.f32.mrf.mxu0
    %v3476 = vadd.f32 %v3027, %v3475
    %v3477 = vpop.f32.mrf.mxu0
    %v3478 = vadd.f32 %v3029, %v3477
    %3479 = vmatprep.mubr.f32.mxu0 %v133
    %3480 = vmatmul.mubr.f32.gmra.mxu0 %v132
    %v3481 = vpop.f32.mrf.mxu0
    %v3482 = vadd.f32 %v3033, %v3481
    %v3483 = vpop.f32.mrf.mxu0
    %v3484 = vadd.f32 %v3035, %v3483
    %3485 = vmatprep.mubr.f32.mxu0 %v141
    %3486 = vmatmul.mubr.f32.gmra.mxu0 %v140
    %v3487 = vpop.f32.mrf.mxu0
    %v3488 = vadd.f32 %v3039, %v3487
    %v3489 = vpop.f32.mrf.mxu0
    %v3490 = vadd.f32 %v3041, %v3489
    %3491 = vmatprep.mubr.f32.mxu0 %v149
    %3492 = vmatmul.mubr.f32.gmra.mxu0 %v148
    %v3493 = vpop.f32.mrf.mxu0
    %v3494 = vadd.f32 %v3045, %v3493
    %v3495 = vpop.f32.mrf.mxu0
    %v3496 = vadd.f32 %v3047, %v3495
    %3497 = vmatprep.mubr.f32.mxu0 %v157
    %3498 = vmatmul.mubr.f32.gmra.mxu0 %v156
    %v3499 = vpop.f32.mrf.mxu0
    %v3500 = vadd.f32 %v3051, %v3499
    %v3501 = vpop.f32.mrf.mxu0
    %v3502 = vadd.f32 %v3053, %v3501
    %3503 = vmatprep.mubr.f32.mxu0 %v165
    %3504 = vmatmul.mubr.f32.gmra.mxu0 %v164
    %v3505 = vpop.f32.mrf.mxu0
    %v3506 = vadd.f32 %v3057, %v3505
    %v3507 = vpop.f32.mrf.mxu0
    %v3508 = vadd.f32 %v3059, %v3507
    %3509 = vmatprep.mubr.f32.mxu0 %v173
    %3510 = vmatmul.mubr.f32.gmra.mxu0 %v172
    %v3511 = vpop.f32.mrf.mxu0
    %v3512 = vadd.f32 %v3063, %v3511
    %v3513 = vpop.f32.mrf.mxu0
    %v3514 = vadd.f32 %v3065, %v3513
    %3515 = vmatprep.mubr.f32.mxu0 %v181
    %3516 = vmatmul.mubr.f32.gmra.mxu0 %v180
    %v3517 = vpop.f32.mrf.mxu0
    %v3518 = vadd.f32 %v3069, %v3517
    %v3519 = vpop.f32.mrf.mxu0
    %v3520 = vadd.f32 %v3071, %v3519
    %3521 = vmatprep.mubr.f32.mxu0 %v189
    %3522 = vmatmul.mubr.f32.gmra.mxu0 %v188
    %v3523 = vpop.f32.mrf.mxu0
    %v3524 = vadd.f32 %v3075, %v3523
    %v3525 = vpop.f32.mrf.mxu0
    %v3526 = vadd.f32 %v3077, %v3525
    %3527 = vmatprep.mubr.f32.mxu0 %v197
    %3528 = vmatmul.mubr.f32.gmra.mxu0 %v196
    %v3529 = vpop.f32.mrf.mxu0
    %v3530 = vadd.f32 %v3081, %v3529
    %v3531 = vpop.f32.mrf.mxu0
    %v3532 = vadd.f32 %v3083, %v3531
    %3533 = vmatprep.mubr.f32.mxu0 %v205
    %3534 = vmatmul.mubr.f32.gmra.mxu0 %v204
    %v3535 = vpop.f32.mrf.mxu0
    %v3536 = vadd.f32 %v3087, %v3535
    %v3537 = vpop.f32.mrf.mxu0
    %v3538 = vadd.f32 %v3089, %v3537
    %3539 = vmatprep.mubr.f32.mxu0 %v213
    %3540 = vmatmul.mubr.f32.gmra.mxu0 %v212
    %v3541 = vpop.f32.mrf.mxu0
    %v3542 = vadd.f32 %v3093, %v3541
    %v3543 = vpop.f32.mrf.mxu0
    %v3544 = vadd.f32 %v3095, %v3543
    %3545 = vmatprep.mubr.f32.mxu0 %v221
    %3546 = vmatmul.mubr.f32.gmra.mxu0 %v220
    %v3547 = vpop.f32.mrf.mxu0
    %v3548 = vadd.f32 %v3099, %v3547
    %v3549 = vpop.f32.mrf.mxu0
    %v3550 = vadd.f32 %v3101, %v3549
    %3551 = vmatprep.mubr.f32.mxu0 %v229
    %3552 = vmatmul.mubr.f32.gmra.mxu0 %v228
    %v3553 = vpop.f32.mrf.mxu0
    %v3554 = vadd.f32 %v3105, %v3553
    %v3555 = vpop.f32.mrf.mxu0
    %v3556 = vadd.f32 %v3107, %v3555
    %3557 = vmatprep.mubr.f32.mxu0 %v237
    %3558 = vmatmul.mubr.f32.gmra.mxu0 %v236
    %v3559 = vpop.f32.mrf.mxu0
    %v3560 = vadd.f32 %v3111, %v3559
    %v3561 = vpop.f32.mrf.mxu0
    %v3562 = vadd.f32 %v3113, %v3561
    %3563 = vmatprep.mubr.f32.mxu0 %v245
    %3564 = vmatmul.mubr.f32.gmra.mxu0 %v244
    %v3565 = vpop.f32.mrf.mxu0
    %v3566 = vadd.f32 %v3117, %v3565
    %v3567 = vpop.f32.mrf.mxu0
    %v3568 = vadd.f32 %v3119, %v3567
    %3569 = vmatprep.mubr.f32.mxu0 %v253
    %3570 = vmatmul.mubr.f32.gmra.mxu0 %v252
    %v3571 = vpop.f32.mrf.mxu0
    %v3572 = vadd.f32 %v3123, %v3571
    %v3573 = vpop.f32.mrf.mxu0
    %v3574 = vadd.f32 %v3125, %v3573
    %3575 = vmatprep.mubr.f32.mxu0 %v261
    %3576 = vmatmul.mubr.f32.gmra.mxu0 %v260
    %v3577 = vpop.f32.mrf.mxu0
    %v3578 = vadd.f32 %v3129, %v3577
    %v3579 = vpop.f32.mrf.mxu0
    %v3580 = vadd.f32 %v3131, %v3579
    %3581 = vmatprep.mubr.f32.mxu0 %v269
    %3582 = vmatmul.mubr.f32.gmra.mxu0 %v268
    %v3583 = vpop.f32.mrf.mxu0
    %v3584 = vadd.f32 %v3135, %v3583
    %v3585 = vpop.f32.mrf.mxu0
    %v3586 = vadd.f32 %v3137, %v3585
    %3587 = vmatprep.mubr.f32.mxu0 %v277
    %3588 = vmatmul.mubr.f32.gmra.mxu0 %v276
    %v3589 = vpop.f32.mrf.mxu0
    %v3590 = vadd.f32 %v3141, %v3589
    %v3591 = vpop.f32.mrf.mxu0
    %v3592 = vadd.f32 %v3143, %v3591
    %3593 = vmatprep.mubr.f32.mxu0 %v285
    %3594 = vmatmul.mubr.f32.gmra.mxu0 %v284
    %v3595 = vpop.f32.mrf.mxu0
    %v3596 = vadd.f32 %v3147, %v3595
    %v3597 = vpop.f32.mrf.mxu0
    %v3598 = vadd.f32 %v3149, %v3597
    %3599 = vmatprep.mubr.f32.mxu0 %v293
    %3600 = vmatmul.mubr.f32.gmra.mxu0 %v292
    %v3601 = vpop.f32.mrf.mxu0
    %v3602 = vadd.f32 %v3153, %v3601
    %v3603 = vpop.f32.mrf.mxu0
    %v3604 = vadd.f32 %v3155, %v3603
    %3605 = vmatprep.mubr.f32.mxu0 %v301
    %3606 = vmatmul.mubr.f32.gmra.mxu0 %v300
    %v3607 = vpop.f32.mrf.mxu0
    %v3608 = vadd.f32 %v3159, %v3607
    %v3609 = vpop.f32.mrf.mxu0
    %v3610 = vadd.f32 %v3161, %v3609
    %3611 = vmatprep.mubr.f32.mxu0 %v309
    %3612 = vmatmul.mubr.f32.gmra.mxu0 %v308
    %v3613 = vpop.f32.mrf.mxu0
    %v3614 = vadd.f32 %v3165, %v3613
    %v3615 = vpop.f32.mrf.mxu0
    %v3616 = vadd.f32 %v3167, %v3615
    %3617 = vmatprep.mubr.f32.mxu0 %v317
    %3618 = vmatmul.mubr.f32.gmra.mxu0 %v316
    %v3619 = vpop.f32.mrf.mxu0
    %v3620 = vadd.f32 %v3171, %v3619
    %v3621 = vpop.f32.mrf.mxu0
    %v3622 = vadd.f32 %v3173, %v3621
    %3623 = vmatprep.mubr.f32.mxu0 %v325
    %3624 = vmatmul.mubr.f32.gmra.mxu0 %v324
    %v3625 = vpop.f32.mrf.mxu0
    %v3626 = vadd.f32 %v3177, %v3625
    %v3627 = vpop.f32.mrf.mxu0
    %v3628 = vadd.f32 %v3179, %v3627
    %3629 = vmatprep.mubr.f32.mxu0 %v333
    %3630 = vmatmul.mubr.f32.gmra.mxu0 %v332
    %v3631 = vpop.f32.mrf.mxu0
    %v3632 = vadd.f32 %v3183, %v3631
    %v3633 = vpop.f32.mrf.mxu0
    %v3634 = vadd.f32 %v3185, %v3633
    %3635 = vmatprep.mubr.f32.mxu0 %v341
    %3636 = vmatmul.mubr.f32.gmra.mxu0 %v340
    %v3637 = vpop.f32.mrf.mxu0
    %v3638 = vadd.f32 %v3189, %v3637
    %v3639 = vpop.f32.mrf.mxu0
    %v3640 = vadd.f32 %v3191, %v3639
    %3641 = vmatprep.mubr.f32.mxu0 %v349
    %3642 = vmatmul.mubr.f32.gmra.mxu0 %v348
    %v3643 = vpop.f32.mrf.mxu0
    %v3644 = vadd.f32 %v3195, %v3643
    %v3645 = vpop.f32.mrf.mxu0
    %v3646 = vadd.f32 %v3197, %v3645
    %3647 = vmatprep.mubr.f32.mxu0 %v357
    %3648 = vmatmul.mubr.f32.gmra.mxu0 %v356
    %v3649 = vpop.f32.mrf.mxu0
    %v3650 = vadd.f32 %v3201, %v3649
    %v3651 = vpop.f32.mrf.mxu0
    %v3652 = vadd.f32 %v3203, %v3651
    %3653 = vmatprep.mubr.f32.mxu0 %v365
    %3654 = vmatmul.mubr.f32.gmra.mxu0 %v364
    %v3655 = vpop.f32.mrf.mxu0
    %v3656 = vadd.f32 %v3207, %v3655
    %v3657 = vpop.f32.mrf.mxu0
    %v3658 = vadd.f32 %v3209, %v3657
    %3659 = vmatprep.mubr.f32.mxu0 %v373
    %3660 = vmatmul.mubr.f32.gmra.mxu0 %v372
    %v3661 = vpop.f32.mrf.mxu0
    %v3662 = vadd.f32 %v3213, %v3661
    %v3663 = vpop.f32.mrf.mxu0
    %v3664 = vadd.f32 %v3215, %v3663
    %3665 = vmatprep.mubr.f32.mxu0 %v381
    %3666 = vmatmul.mubr.f32.gmra.mxu0 %v380
    %v3667 = vpop.f32.mrf.mxu0
    %v3668 = vadd.f32 %v3219, %v3667
    %v3669 = vpop.f32.mrf.mxu0
    %v3670 = vadd.f32 %v3221, %v3669
    %3671 = vmatprep.mubr.f32.mxu0 %v389
    %3672 = vmatmul.mubr.f32.gmra.mxu0 %v388
    %v3673 = vpop.f32.mrf.mxu0
    %v3674 = vadd.f32 %v3225, %v3673
    %v3675 = vpop.f32.mrf.mxu0
    %v3676 = vadd.f32 %v3227, %v3675
    %3677 = vmatprep.mubr.f32.mxu0 %v397
    %3678 = vmatmul.mubr.f32.gmra.mxu0 %v396
    %v3679 = vpop.f32.mrf.mxu0
    %v3680 = vadd.f32 %v3231, %v3679
    %v3681 = vpop.f32.mrf.mxu0
    %v3682 = vadd.f32 %v3233, %v3681
    %3683 = vmatprep.mubr.f32.mxu0 %v405
    %3684 = vmatmul.mubr.f32.gmra.mxu0 %v404
    %v3685 = vpop.f32.mrf.mxu0
    %v3686 = vadd.f32 %v3237, %v3685
    %v3687 = vpop.f32.mrf.mxu0
    %v3688 = vadd.f32 %v3239, %v3687
    %3689 = vmatprep.mubr.f32.mxu0 %v413
    %3690 = vmatmul.mubr.f32.gmra.mxu0 %v412
    %v3691 = vpop.f32.mrf.mxu0
    %v3692 = vadd.f32 %v3243, %v3691
    %v3693 = vpop.f32.mrf.mxu0
    %v3694 = vadd.f32 %v3245, %v3693
    %3695 = vmatprep.mubr.f32.mxu0 %v421
    %3696 = vmatmul.mubr.f32.gmra.mxu0 %v420
    %v3697 = vpop.f32.mrf.mxu0
    %v3698 = vadd.f32 %v3249, %v3697
    %v3699 = vpop.f32.mrf.mxu0
    %v3700 = vadd.f32 %v3251, %v3699
    %3701 = vmatprep.mubr.f32.mxu0 %v429
    %3702 = vmatmul.mubr.f32.gmra.mxu0 %v428
    %v3703 = vpop.f32.mrf.mxu0
    %v3704 = vadd.f32 %v3255, %v3703
    %v3705 = vpop.f32.mrf.mxu0
    %v3706 = vadd.f32 %v3257, %v3705
    %3707 = vmatprep.mubr.f32.mxu0 %v437
    %3708 = vmatmul.mubr.f32.gmra.mxu0 %v436
    %v3709 = vpop.f32.mrf.mxu0
    %v3710 = vadd.f32 %v3261, %v3709
    %v3711 = vpop.f32.mrf.mxu0
    %v3712 = vadd.f32 %v3263, %v3711
    %3713 = vmatprep.mubr.f32.mxu0 %v445
    %3714 = vmatmul.mubr.f32.gmra.mxu0 %v444
    %v3715 = vpop.f32.mrf.mxu0
    %v3716 = vadd.f32 %v3267, %v3715
    %v3717 = vpop.f32.mrf.mxu0
    %v3718 = vadd.f32 %v3269, %v3717
    %3719 = vmatprep.mubr.f32.mxu0 %v453
    %3720 = vmatmul.mubr.f32.gmra.mxu0 %v452
    %v3721 = vpop.f32.mrf.mxu0
    %v3722 = vadd.f32 %v3273, %v3721
    %v3723 = vpop.f32.mrf.mxu0
    %v3724 = vadd.f32 %v3275, %v3723
    %3725 = vmatprep.mubr.f32.mxu0 %v461
    %3726 = vmatmul.mubr.f32.gmra.mxu0 %v460
    %v3727 = vpop.f32.mrf.mxu0
    %v3728 = vadd.f32 %v3279, %v3727
    %v3729 = vpop.f32.mrf.mxu0
    %v3730 = vadd.f32 %v3281, %v3729
    %3731 = vmatprep.mubr.f32.mxu0 %v469
    %3732 = vmatmul.mubr.f32.gmra.mxu0 %v468
    %v3733 = vpop.f32.mrf.mxu0
    %v3734 = vadd.f32 %v3285, %v3733
    %v3735 = vpop.f32.mrf.mxu0
    %v3736 = vadd.f32 %v3287, %v3735
    %3737 = vmatprep.mubr.f32.mxu0 %v477
    %3738 = vmatmul.mubr.f32.gmra.mxu0 %v476
    %v3739 = vpop.f32.mrf.mxu0
    %v3740 = vadd.f32 %v3291, %v3739
    %v3741 = vpop.f32.mrf.mxu0
    %v3742 = vadd.f32 %v3293, %v3741
    %3743 = vmatprep.mubr.f32.mxu0 %v485
    %3744 = vmatmul.mubr.f32.gmra.mxu0 %v484
    %v3745 = vpop.f32.mrf.mxu0
    %v3746 = vadd.f32 %v3297, %v3745
    %v3747 = vpop.f32.mrf.mxu0
    %v3748 = vadd.f32 %v3299, %v3747
    %3749 = vmatprep.mubr.f32.mxu0 %v493
    %3750 = vmatmul.mubr.f32.gmra.mxu0 %v492
    %v3751 = vpop.f32.mrf.mxu0
    %v3752 = vadd.f32 %v3303, %v3751
    %v3753 = vpop.f32.mrf.mxu0
    %v3754 = vadd.f32 %v3305, %v3753
    %3755 = vmatprep.mubr.f32.mxu0 %v501
    %3756 = vmatmul.mubr.f32.gmra.mxu0 %v500
    %v3757 = vpop.f32.mrf.mxu0
    %v3758 = vadd.f32 %v3309, %v3757
    %v3759 = vpop.f32.mrf.mxu0
    %v3760 = vadd.f32 %v3311, %v3759
    %3761 = vmatprep.mubr.f32.mxu0 %v509
    %3762 = vmatmul.mubr.f32.gmra.mxu0 %v508
    %v3763 = vpop.f32.mrf.mxu0
    %v3764 = vadd.f32 %v3315, %v3763
    %v3765 = vpop.f32.mrf.mxu0
    %v3766 = vadd.f32 %v3317, %v3765
    %3767 = vmatprep.mubr.f32.mxu0 %v517
    %3768 = vmatmul.mubr.f32.gmra.mxu0 %v516
    %v3769 = vpop.f32.mrf.mxu0
    %v3770 = vadd.f32 %v3321, %v3769
    %v3771 = vpop.f32.mrf.mxu0
    %v3772 = vadd.f32 %v3323, %v3771
    %3773 = vmatprep.mubr.f32.mxu0 %v525
    %3774 = vmatmul.mubr.f32.gmra.mxu0 %v524
    %v3775 = vpop.f32.mrf.mxu0
    %v3776 = vadd.f32 %v3327, %v3775
    %v3777 = vpop.f32.mrf.mxu0
    %v3778 = vadd.f32 %v3329, %v3777
    %3779 = vmatprep.mubr.f32.mxu0 %v533
    %3780 = vmatmul.mubr.f32.gmra.mxu0 %v532
    %v3781 = vpop.f32.mrf.mxu0
    %v3782 = vadd.f32 %v3333, %v3781
    %v3783 = vpop.f32.mrf.mxu0
    %v3784 = vadd.f32 %v3335, %v3783
    %3785 = vmatprep.mubr.f32.mxu0 %v541
    %3786 = vmatmul.mubr.f32.gmra.mxu0 %v540
    %v3787 = vpop.f32.mrf.mxu0
    %v3788 = vadd.f32 %v3339, %v3787
    %v3789 = vpop.f32.mrf.mxu0
    %v3790 = vadd.f32 %v3341, %v3789
    %3791 = vmatprep.mubr.f32.mxu0 %v549
    %3792 = vmatmul.mubr.f32.gmra.mxu0 %v548
    %v3793 = vpop.f32.mrf.mxu0
    %v3794 = vadd.f32 %v3345, %v3793
    %v3795 = vpop.f32.mrf.mxu0
    %v3796 = vadd.f32 %v3347, %v3795
    %3797 = vmatprep.mubr.f32.mxu0 %v557
    %3798 = vmatmul.mubr.f32.gmra.mxu0 %v556
    %v3799 = vpop.f32.mrf.mxu0
    %v3800 = vadd.f32 %v3351, %v3799
    %v3801 = vpop.f32.mrf.mxu0
    %v3802 = vadd.f32 %v3353, %v3801
    %3803 = vmatprep.mubr.f32.mxu0 %v565
    %3804 = vmatmul.mubr.f32.gmra.mxu0 %v564
    %v3805 = vpop.f32.mrf.mxu0
    %v3806 = vadd.f32 %v3357, %v3805
    %v3807 = vpop.f32.mrf.mxu0
    %v3808 = vadd.f32 %v3359, %v3807
    %3809 = vmatprep.mubr.f32.mxu0 %v573
    %3810 = vmatmul.mubr.f32.gmra.mxu0 %v572
    %v3811 = vpop.f32.mrf.mxu0
    %v3812 = vadd.f32 %v3363, %v3811
    %v3813 = vpop.f32.mrf.mxu0
    %v3814 = vadd.f32 %v3365, %v3813
    %3815 = vmatprep.mubr.f32.mxu0 %v581
    %3816 = vmatmul.mubr.f32.gmra.mxu0 %v580
    %v3817 = vpop.f32.mrf.mxu0
    %v3818 = vadd.f32 %v3369, %v3817
    %v3819 = vpop.f32.mrf.mxu0
    %v3820 = vadd.f32 %v3371, %v3819
    %3821 = vmatprep.mubr.f32.mxu0 %v589
    %3822 = vmatmul.mubr.f32.gmra.mxu0 %v588
    %v3823 = vpop.f32.mrf.mxu0
    %v3824 = vadd.f32 %v3375, %v3823
    %v3825 = vpop.f32.mrf.mxu0
    %v3826 = vadd.f32 %v3377, %v3825
    %3827 = vmatprep.mubr.f32.mxu0 %v597
    %3828 = vmatmul.mubr.f32.gmra.mxu0 %v596
    %v3829 = vpop.f32.mrf.mxu0
    %v3830 = vadd.f32 %v3381, %v3829
    %v3831 = vpop.f32.mrf.mxu0
    %v3832 = vadd.f32 %v3383, %v3831
    %3833 = vmatprep.mubr.f32.mxu0 %v605
    %3834 = vmatmul.mubr.f32.gmra.mxu0 %v604
    %v3835 = vpop.f32.mrf.mxu0
    %v3836 = vadd.f32 %v3387, %v3835
    %v3837 = vpop.f32.mrf.mxu0
    %v3838 = vadd.f32 %v3389, %v3837
    %3839 = vmatprep.mubr.f32.mxu0 %v613
    %3840 = vmatmul.mubr.f32.gmra.mxu0 %v612
    %v3841 = vpop.f32.mrf.mxu0
    %v3842 = vadd.f32 %v3393, %v3841
    %v3843 = vpop.f32.mrf.mxu0
    %v3844 = vadd.f32 %v3395, %v3843
    %3845 = vdwg.mxu0
    %3846 = vmatprep.subr.mxu0 %v937
    %3847 = vmatpush1.msra.mxu0 %v936
    %3848 = vmatprep.subr.mxu0 %v933
    %3849 = vmatpush1.msra.mxu0 %v932
    %3850 = vmatprep.subr.mxu0 %v929
    %3851 = vmatpush1.msra.mxu0 %v928
    %3852 = vmatprep.subr.mxu0 %v925
    %3853 = vmatpush1.msra.mxu0 %v924
    %3854 = vmatprep.subr.mxu0 %v921
    %3855 = vmatpush1.msra.mxu0 %v920
    %3856 = vmatprep.subr.mxu0 %v917
    %3857 = vmatpush1.msra.mxu0 %v916
    %3858 = vmatprep.subr.mxu0 %v913
    %3859 = vmatpush1.msra.mxu0 %v912
    %3860 = vmatprep.subr.mxu0 %v909
    %3861 = vmatpush1.msra.mxu0 %v908
    %3862 = vmatprep.subr.mxu0 %v905
    %3863 = vmatpush1.msra.mxu0 %v904
    %3864 = vmatprep.subr.mxu0 %v901
    %3865 = vmatpush1.msra.mxu0 %v900
    %3866 = vmatprep.subr.mxu0 %v897
    %3867 = vmatpush1.msra.mxu0 %v896
    %3868 = vmatprep.subr.mxu0 %v893
    %3869 = vmatpush1.msra.mxu0 %v892
    %3870 = vmatprep.subr.mxu0 %v889
    %3871 = vmatpush1.msra.mxu0 %v888
    %3872 = vmatprep.subr.mxu0 %v885
    %3873 = vmatpush1.msra.mxu0 %v884
    %3874 = vmatprep.subr.mxu0 %v881
    %3875 = vmatpush1.msra.mxu0 %v880
    %3876 = vmatprep.subr.mxu0 %v877
    %3877 = vmatpush1.msra.mxu0 %v876
    %3878 = vmatprep.subr.mxu0 %v1001
    %3879 = vmatpush2.msra.mxu0 %v1000
    %3880 = vmatprep.subr.mxu0 %v997
    %3881 = vmatpush2.msra.mxu0 %v996
    %3882 = vmatprep.subr.mxu0 %v993
    %3883 = vmatpush2.msra.mxu0 %v992
    %3884 = vmatprep.subr.mxu0 %v989
    %3885 = vmatpush2.msra.mxu0 %v988
    %3886 = vmatprep.subr.mxu0 %v985
    %3887 = vmatpush2.msra.mxu0 %v984
    %3888 = vmatprep.subr.mxu0 %v981
    %3889 = vmatpush2.msra.mxu0 %v980
    %3890 = vmatprep.subr.mxu0 %v977
    %3891 = vmatpush2.msra.mxu0 %v976
    %3892 = vmatprep.subr.mxu0 %v973
    %3893 = vmatpush2.msra.mxu0 %v972
    %3894 = vmatprep.subr.mxu0 %v969
    %3895 = vmatpush2.msra.mxu0 %v968
    %3896 = vmatprep.subr.mxu0 %v965
    %3897 = vmatpush2.msra.mxu0 %v964
    %3898 = vmatprep.subr.mxu0 %v961
    %3899 = vmatpush2.msra.mxu0 %v960
    %3900 = vmatprep.subr.mxu0 %v957
    %3901 = vmatpush2.msra.mxu0 %v956
    %3902 = vmatprep.subr.mxu0 %v953
    %3903 = vmatpush2.msra.mxu0 %v952
    %3904 = vmatprep.subr.mxu0 %v949
    %3905 = vmatpush2.msra.mxu0 %v948
    %3906 = vmatprep.subr.mxu0 %v945
    %3907 = vmatpush2.msra.mxu0 %v944
    %3908 = vmatprep.subr.mxu0 %v941
    %3909 = vmatpush2.msra.mxu0 %v940
    %3910 = vmatprep.mubr.f32.mxu0 %v111
    %3911 = vmatmul.mubr.f32.gmra.mxu0 %v110
    %v3912 = vpop.f32.mrf.mxu0
    %v3913 = vadd.f32 %v3464, %v3912
    %v3914 = vpop.f32.mrf.mxu0
    %v3915 = vadd.f32 %v3466, %v3914
    %3916 = vmatprep.mubr.f32.mxu0 %v119
    %3917 = vmatmul.mubr.f32.gmra.mxu0 %v118
    %v3918 = vpop.f32.mrf.mxu0
    %v3919 = vadd.f32 %v3470, %v3918
    %v3920 = vpop.f32.mrf.mxu0
    %v3921 = vadd.f32 %v3472, %v3920
    %3922 = vmatprep.mubr.f32.mxu0 %v127
    %3923 = vmatmul.mubr.f32.gmra.mxu0 %v126
    %v3924 = vpop.f32.mrf.mxu0
    %v3925 = vadd.f32 %v3476, %v3924
    %v3926 = vpop.f32.mrf.mxu0
    %v3927 = vadd.f32 %v3478, %v3926
    %3928 = vmatprep.mubr.f32.mxu0 %v135
    %3929 = vmatmul.mubr.f32.gmra.mxu0 %v134
    %v3930 = vpop.f32.mrf.mxu0
    %v3931 = vadd.f32 %v3482, %v3930
    %v3932 = vpop.f32.mrf.mxu0
    %v3933 = vadd.f32 %v3484, %v3932
    %3934 = vmatprep.mubr.f32.mxu0 %v143
    %3935 = vmatmul.mubr.f32.gmra.mxu0 %v142
    %v3936 = vpop.f32.mrf.mxu0
    %v3937 = vadd.f32 %v3488, %v3936
    %v3938 = vpop.f32.mrf.mxu0
    %v3939 = vadd.f32 %v3490, %v3938
    %3940 = vmatprep.mubr.f32.mxu0 %v151
    %3941 = vmatmul.mubr.f32.gmra.mxu0 %v150
    %v3942 = vpop.f32.mrf.mxu0
    %v3943 = vadd.f32 %v3494, %v3942
    %v3944 = vpop.f32.mrf.mxu0
    %v3945 = vadd.f32 %v3496, %v3944
    %3946 = vmatprep.mubr.f32.mxu0 %v159
    %3947 = vmatmul.mubr.f32.gmra.mxu0 %v158
    %v3948 = vpop.f32.mrf.mxu0
    %v3949 = vadd.f32 %v3500, %v3948
    %v3950 = vpop.f32.mrf.mxu0
    %v3951 = vadd.f32 %v3502, %v3950
    %3952 = vmatprep.mubr.f32.mxu0 %v167
    %3953 = vmatmul.mubr.f32.gmra.mxu0 %v166
    %v3954 = vpop.f32.mrf.mxu0
    %v3955 = vadd.f32 %v3506, %v3954
    %v3956 = vpop.f32.mrf.mxu0
    %v3957 = vadd.f32 %v3508, %v3956
    %3958 = vmatprep.mubr.f32.mxu0 %v175
    %3959 = vmatmul.mubr.f32.gmra.mxu0 %v174
    %v3960 = vpop.f32.mrf.mxu0
    %v3961 = vadd.f32 %v3512, %v3960
    %v3962 = vpop.f32.mrf.mxu0
    %v3963 = vadd.f32 %v3514, %v3962
    %3964 = vmatprep.mubr.f32.mxu0 %v183
    %3965 = vmatmul.mubr.f32.gmra.mxu0 %v182
    %v3966 = vpop.f32.mrf.mxu0
    %v3967 = vadd.f32 %v3518, %v3966
    %v3968 = vpop.f32.mrf.mxu0
    %v3969 = vadd.f32 %v3520, %v3968
    %3970 = vmatprep.mubr.f32.mxu0 %v191
    %3971 = vmatmul.mubr.f32.gmra.mxu0 %v190
    %v3972 = vpop.f32.mrf.mxu0
    %v3973 = vadd.f32 %v3524, %v3972
    %v3974 = vpop.f32.mrf.mxu0
    %v3975 = vadd.f32 %v3526, %v3974
    %3976 = vmatprep.mubr.f32.mxu0 %v199
    %3977 = vmatmul.mubr.f32.gmra.mxu0 %v198
    %v3978 = vpop.f32.mrf.mxu0
    %v3979 = vadd.f32 %v3530, %v3978
    %v3980 = vpop.f32.mrf.mxu0
    %v3981 = vadd.f32 %v3532, %v3980
    %3982 = vmatprep.mubr.f32.mxu0 %v207
    %3983 = vmatmul.mubr.f32.gmra.mxu0 %v206
    %v3984 = vpop.f32.mrf.mxu0
    %v3985 = vadd.f32 %v3536, %v3984
    %v3986 = vpop.f32.mrf.mxu0
    %v3987 = vadd.f32 %v3538, %v3986
    %3988 = vmatprep.mubr.f32.mxu0 %v215
    %3989 = vmatmul.mubr.f32.gmra.mxu0 %v214
    %v3990 = vpop.f32.mrf.mxu0
    %v3991 = vadd.f32 %v3542, %v3990
    %v3992 = vpop.f32.mrf.mxu0
    %v3993 = vadd.f32 %v3544, %v3992
    %3994 = vmatprep.mubr.f32.mxu0 %v223
    %3995 = vmatmul.mubr.f32.gmra.mxu0 %v222
    %v3996 = vpop.f32.mrf.mxu0
    %v3997 = vadd.f32 %v3548, %v3996
    %v3998 = vpop.f32.mrf.mxu0
    %v3999 = vadd.f32 %v3550, %v3998
    %4000 = vmatprep.mubr.f32.mxu0 %v231
    %4001 = vmatmul.mubr.f32.gmra.mxu0 %v230
    %v4002 = vpop.f32.mrf.mxu0
    %v4003 = vadd.f32 %v3554, %v4002
    %v4004 = vpop.f32.mrf.mxu0
    %v4005 = vadd.f32 %v3556, %v4004
    %4006 = vmatprep.mubr.f32.mxu0 %v239
    %4007 = vmatmul.mubr.f32.gmra.mxu0 %v238
    %v4008 = vpop.f32.mrf.mxu0
    %v4009 = vadd.f32 %v3560, %v4008
    %v4010 = vpop.f32.mrf.mxu0
    %v4011 = vadd.f32 %v3562, %v4010
    %4012 = vmatprep.mubr.f32.mxu0 %v247
    %4013 = vmatmul.mubr.f32.gmra.mxu0 %v246
    %v4014 = vpop.f32.mrf.mxu0
    %v4015 = vadd.f32 %v3566, %v4014
    %v4016 = vpop.f32.mrf.mxu0
    %v4017 = vadd.f32 %v3568, %v4016
    %4018 = vmatprep.mubr.f32.mxu0 %v255
    %4019 = vmatmul.mubr.f32.gmra.mxu0 %v254
    %v4020 = vpop.f32.mrf.mxu0
    %v4021 = vadd.f32 %v3572, %v4020
    %v4022 = vpop.f32.mrf.mxu0
    %v4023 = vadd.f32 %v3574, %v4022
    %4024 = vmatprep.mubr.f32.mxu0 %v263
    %4025 = vmatmul.mubr.f32.gmra.mxu0 %v262
    %v4026 = vpop.f32.mrf.mxu0
    %v4027 = vadd.f32 %v3578, %v4026
    %v4028 = vpop.f32.mrf.mxu0
    %v4029 = vadd.f32 %v3580, %v4028
    %4030 = vmatprep.mubr.f32.mxu0 %v271
    %4031 = vmatmul.mubr.f32.gmra.mxu0 %v270
    %v4032 = vpop.f32.mrf.mxu0
    %v4033 = vadd.f32 %v3584, %v4032
    %v4034 = vpop.f32.mrf.mxu0
    %v4035 = vadd.f32 %v3586, %v4034
    %4036 = vmatprep.mubr.f32.mxu0 %v279
    %4037 = vmatmul.mubr.f32.gmra.mxu0 %v278
    %v4038 = vpop.f32.mrf.mxu0
    %v4039 = vadd.f32 %v3590, %v4038
    %v4040 = vpop.f32.mrf.mxu0
    %v4041 = vadd.f32 %v3592, %v4040
    %4042 = vmatprep.mubr.f32.mxu0 %v287
    %4043 = vmatmul.mubr.f32.gmra.mxu0 %v286
    %v4044 = vpop.f32.mrf.mxu0
    %v4045 = vadd.f32 %v3596, %v4044
    %v4046 = vpop.f32.mrf.mxu0
    %v4047 = vadd.f32 %v3598, %v4046
    %4048 = vmatprep.mubr.f32.mxu0 %v295
    %4049 = vmatmul.mubr.f32.gmra.mxu0 %v294
    %v4050 = vpop.f32.mrf.mxu0
    %v4051 = vadd.f32 %v3602, %v4050
    %v4052 = vpop.f32.mrf.mxu0
    %v4053 = vadd.f32 %v3604, %v4052
    %4054 = vmatprep.mubr.f32.mxu0 %v303
    %4055 = vmatmul.mubr.f32.gmra.mxu0 %v302
    %v4056 = vpop.f32.mrf.mxu0
    %v4057 = vadd.f32 %v3608, %v4056
    %v4058 = vpop.f32.mrf.mxu0
    %v4059 = vadd.f32 %v3610, %v4058
    %4060 = vmatprep.mubr.f32.mxu0 %v311
    %4061 = vmatmul.mubr.f32.gmra.mxu0 %v310
    %v4062 = vpop.f32.mrf.mxu0
    %v4063 = vadd.f32 %v3614, %v4062
    %v4064 = vpop.f32.mrf.mxu0
    %v4065 = vadd.f32 %v3616, %v4064
    %4066 = vmatprep.mubr.f32.mxu0 %v319
    %4067 = vmatmul.mubr.f32.gmra.mxu0 %v318
    %v4068 = vpop.f32.mrf.mxu0
    %v4069 = vadd.f32 %v3620, %v4068
    %v4070 = vpop.f32.mrf.mxu0
    %v4071 = vadd.f32 %v3622, %v4070
    %4072 = vmatprep.mubr.f32.mxu0 %v327
    %4073 = vmatmul.mubr.f32.gmra.mxu0 %v326
    %v4074 = vpop.f32.mrf.mxu0
    %v4075 = vadd.f32 %v3626, %v4074
    %v4076 = vpop.f32.mrf.mxu0
    %v4077 = vadd.f32 %v3628, %v4076
    %4078 = vmatprep.mubr.f32.mxu0 %v335
    %4079 = vmatmul.mubr.f32.gmra.mxu0 %v334
    %v4080 = vpop.f32.mrf.mxu0
    %v4081 = vadd.f32 %v3632, %v4080
    %v4082 = vpop.f32.mrf.mxu0
    %v4083 = vadd.f32 %v3634, %v4082
    %4084 = vmatprep.mubr.f32.mxu0 %v343
    %4085 = vmatmul.mubr.f32.gmra.mxu0 %v342
    %v4086 = vpop.f32.mrf.mxu0
    %v4087 = vadd.f32 %v3638, %v4086
    %v4088 = vpop.f32.mrf.mxu0
    %v4089 = vadd.f32 %v3640, %v4088
    %4090 = vmatprep.mubr.f32.mxu0 %v351
    %4091 = vmatmul.mubr.f32.gmra.mxu0 %v350
    %v4092 = vpop.f32.mrf.mxu0
    %v4093 = vadd.f32 %v3644, %v4092
    %v4094 = vpop.f32.mrf.mxu0
    %v4095 = vadd.f32 %v3646, %v4094
    %4096 = vmatprep.mubr.f32.mxu0 %v359
    %4097 = vmatmul.mubr.f32.gmra.mxu0 %v358
    %v4098 = vpop.f32.mrf.mxu0
    %v4099 = vadd.f32 %v3650, %v4098
    %v4100 = vpop.f32.mrf.mxu0
    %v4101 = vadd.f32 %v3652, %v4100
    %4102 = vmatprep.mubr.f32.mxu0 %v367
    %4103 = vmatmul.mubr.f32.gmra.mxu0 %v366
    %v4104 = vpop.f32.mrf.mxu0
    %v4105 = vadd.f32 %v3656, %v4104
    %v4106 = vpop.f32.mrf.mxu0
    %v4107 = vadd.f32 %v3658, %v4106
    %4108 = vmatprep.mubr.f32.mxu0 %v375
    %4109 = vmatmul.mubr.f32.gmra.mxu0 %v374
    %v4110 = vpop.f32.mrf.mxu0
    %v4111 = vadd.f32 %v3662, %v4110
    %v4112 = vpop.f32.mrf.mxu0
    %v4113 = vadd.f32 %v3664, %v4112
    %4114 = vmatprep.mubr.f32.mxu0 %v383
    %4115 = vmatmul.mubr.f32.gmra.mxu0 %v382
    %v4116 = vpop.f32.mrf.mxu0
    %v4117 = vadd.f32 %v3668, %v4116
    %v4118 = vpop.f32.mrf.mxu0
    %v4119 = vadd.f32 %v3670, %v4118
    %4120 = vmatprep.mubr.f32.mxu0 %v391
    %4121 = vmatmul.mubr.f32.gmra.mxu0 %v390
    %v4122 = vpop.f32.mrf.mxu0
    %v4123 = vadd.f32 %v3674, %v4122
    %v4124 = vpop.f32.mrf.mxu0
    %v4125 = vadd.f32 %v3676, %v4124
    %4126 = vmatprep.mubr.f32.mxu0 %v399
    %4127 = vmatmul.mubr.f32.gmra.mxu0 %v398
    %v4128 = vpop.f32.mrf.mxu0
    %v4129 = vadd.f32 %v3680, %v4128
    %v4130 = vpop.f32.mrf.mxu0
    %v4131 = vadd.f32 %v3682, %v4130
    %4132 = vmatprep.mubr.f32.mxu0 %v407
    %4133 = vmatmul.mubr.f32.gmra.mxu0 %v406
    %v4134 = vpop.f32.mrf.mxu0
    %v4135 = vadd.f32 %v3686, %v4134
    %v4136 = vpop.f32.mrf.mxu0
    %v4137 = vadd.f32 %v3688, %v4136
    %4138 = vmatprep.mubr.f32.mxu0 %v415
    %4139 = vmatmul.mubr.f32.gmra.mxu0 %v414
    %v4140 = vpop.f32.mrf.mxu0
    %v4141 = vadd.f32 %v3692, %v4140
    %v4142 = vpop.f32.mrf.mxu0
    %v4143 = vadd.f32 %v3694, %v4142
    %4144 = vmatprep.mubr.f32.mxu0 %v423
    %4145 = vmatmul.mubr.f32.gmra.mxu0 %v422
    %v4146 = vpop.f32.mrf.mxu0
    %v4147 = vadd.f32 %v3698, %v4146
    %v4148 = vpop.f32.mrf.mxu0
    %v4149 = vadd.f32 %v3700, %v4148
    %4150 = vmatprep.mubr.f32.mxu0 %v431
    %4151 = vmatmul.mubr.f32.gmra.mxu0 %v430
    %v4152 = vpop.f32.mrf.mxu0
    %v4153 = vadd.f32 %v3704, %v4152
    %v4154 = vpop.f32.mrf.mxu0
    %v4155 = vadd.f32 %v3706, %v4154
    %4156 = vmatprep.mubr.f32.mxu0 %v439
    %4157 = vmatmul.mubr.f32.gmra.mxu0 %v438
    %v4158 = vpop.f32.mrf.mxu0
    %v4159 = vadd.f32 %v3710, %v4158
    %v4160 = vpop.f32.mrf.mxu0
    %v4161 = vadd.f32 %v3712, %v4160
    %4162 = vmatprep.mubr.f32.mxu0 %v447
    %4163 = vmatmul.mubr.f32.gmra.mxu0 %v446
    %v4164 = vpop.f32.mrf.mxu0
    %v4165 = vadd.f32 %v3716, %v4164
    %v4166 = vpop.f32.mrf.mxu0
    %v4167 = vadd.f32 %v3718, %v4166
    %4168 = vmatprep.mubr.f32.mxu0 %v455
    %4169 = vmatmul.mubr.f32.gmra.mxu0 %v454
    %v4170 = vpop.f32.mrf.mxu0
    %v4171 = vadd.f32 %v3722, %v4170
    %v4172 = vpop.f32.mrf.mxu0
    %v4173 = vadd.f32 %v3724, %v4172
    %4174 = vmatprep.mubr.f32.mxu0 %v463
    %4175 = vmatmul.mubr.f32.gmra.mxu0 %v462
    %v4176 = vpop.f32.mrf.mxu0
    %v4177 = vadd.f32 %v3728, %v4176
    %v4178 = vpop.f32.mrf.mxu0
    %v4179 = vadd.f32 %v3730, %v4178
    %4180 = vmatprep.mubr.f32.mxu0 %v471
    %4181 = vmatmul.mubr.f32.gmra.mxu0 %v470
    %v4182 = vpop.f32.mrf.mxu0
    %v4183 = vadd.f32 %v3734, %v4182
    %v4184 = vpop.f32.mrf.mxu0
    %v4185 = vadd.f32 %v3736, %v4184
    %4186 = vmatprep.mubr.f32.mxu0 %v479
    %4187 = vmatmul.mubr.f32.gmra.mxu0 %v478
    %v4188 = vpop.f32.mrf.mxu0
    %v4189 = vadd.f32 %v3740, %v4188
    %v4190 = vpop.f32.mrf.mxu0
    %v4191 = vadd.f32 %v3742, %v4190
    %4192 = vmatprep.mubr.f32.mxu0 %v487
    %4193 = vmatmul.mubr.f32.gmra.mxu0 %v486
    %v4194 = vpop.f32.mrf.mxu0
    %v4195 = vadd.f32 %v3746, %v4194
    %v4196 = vpop.f32.mrf.mxu0
    %v4197 = vadd.f32 %v3748, %v4196
    %4198 = vmatprep.mubr.f32.mxu0 %v495
    %4199 = vmatmul.mubr.f32.gmra.mxu0 %v494
    %v4200 = vpop.f32.mrf.mxu0
    %v4201 = vadd.f32 %v3752, %v4200
    %v4202 = vpop.f32.mrf.mxu0
    %v4203 = vadd.f32 %v3754, %v4202
    %4204 = vmatprep.mubr.f32.mxu0 %v503
    %4205 = vmatmul.mubr.f32.gmra.mxu0 %v502
    %v4206 = vpop.f32.mrf.mxu0
    %v4207 = vadd.f32 %v3758, %v4206
    %v4208 = vpop.f32.mrf.mxu0
    %v4209 = vadd.f32 %v3760, %v4208
    %4210 = vmatprep.mubr.f32.mxu0 %v511
    %4211 = vmatmul.mubr.f32.gmra.mxu0 %v510
    %v4212 = vpop.f32.mrf.mxu0
    %v4213 = vadd.f32 %v3764, %v4212
    %v4214 = vpop.f32.mrf.mxu0
    %v4215 = vadd.f32 %v3766, %v4214
    %4216 = vmatprep.mubr.f32.mxu0 %v519
    %4217 = vmatmul.mubr.f32.gmra.mxu0 %v518
    %v4218 = vpop.f32.mrf.mxu0
    %v4219 = vadd.f32 %v3770, %v4218
    %v4220 = vpop.f32.mrf.mxu0
    %v4221 = vadd.f32 %v3772, %v4220
    %4222 = vmatprep.mubr.f32.mxu0 %v527
    %4223 = vmatmul.mubr.f32.gmra.mxu0 %v526
    %v4224 = vpop.f32.mrf.mxu0
    %v4225 = vadd.f32 %v3776, %v4224
    %v4226 = vpop.f32.mrf.mxu0
    %v4227 = vadd.f32 %v3778, %v4226
    %4228 = vmatprep.mubr.f32.mxu0 %v535
    %4229 = vmatmul.mubr.f32.gmra.mxu0 %v534
    %v4230 = vpop.f32.mrf.mxu0
    %v4231 = vadd.f32 %v3782, %v4230
    %v4232 = vpop.f32.mrf.mxu0
    %v4233 = vadd.f32 %v3784, %v4232
    %4234 = vmatprep.mubr.f32.mxu0 %v543
    %4235 = vmatmul.mubr.f32.gmra.mxu0 %v542
    %v4236 = vpop.f32.mrf.mxu0
    %v4237 = vadd.f32 %v3788, %v4236
    %v4238 = vpop.f32.mrf.mxu0
    %v4239 = vadd.f32 %v3790, %v4238
    %4240 = vmatprep.mubr.f32.mxu0 %v551
    %4241 = vmatmul.mubr.f32.gmra.mxu0 %v550
    %v4242 = vpop.f32.mrf.mxu0
    %v4243 = vadd.f32 %v3794, %v4242
    %v4244 = vpop.f32.mrf.mxu0
    %v4245 = vadd.f32 %v3796, %v4244
    %4246 = vmatprep.mubr.f32.mxu0 %v559
    %4247 = vmatmul.mubr.f32.gmra.mxu0 %v558
    %v4248 = vpop.f32.mrf.mxu0
    %v4249 = vadd.f32 %v3800, %v4248
    %v4250 = vpop.f32.mrf.mxu0
    %v4251 = vadd.f32 %v3802, %v4250
    %4252 = vmatprep.mubr.f32.mxu0 %v567
    %4253 = vmatmul.mubr.f32.gmra.mxu0 %v566
    %v4254 = vpop.f32.mrf.mxu0
    %v4255 = vadd.f32 %v3806, %v4254
    %v4256 = vpop.f32.mrf.mxu0
    %v4257 = vadd.f32 %v3808, %v4256
    %4258 = vmatprep.mubr.f32.mxu0 %v575
    %4259 = vmatmul.mubr.f32.gmra.mxu0 %v574
    %v4260 = vpop.f32.mrf.mxu0
    %v4261 = vadd.f32 %v3812, %v4260
    %v4262 = vpop.f32.mrf.mxu0
    %v4263 = vadd.f32 %v3814, %v4262
    %4264 = vmatprep.mubr.f32.mxu0 %v583
    %4265 = vmatmul.mubr.f32.gmra.mxu0 %v582
    %v4266 = vpop.f32.mrf.mxu0
    %v4267 = vadd.f32 %v3818, %v4266
    %v4268 = vpop.f32.mrf.mxu0
    %v4269 = vadd.f32 %v3820, %v4268
    %4270 = vmatprep.mubr.f32.mxu0 %v591
    %4271 = vmatmul.mubr.f32.gmra.mxu0 %v590
    %v4272 = vpop.f32.mrf.mxu0
    %v4273 = vadd.f32 %v3824, %v4272
    %v4274 = vpop.f32.mrf.mxu0
    %v4275 = vadd.f32 %v3826, %v4274
    %4276 = vmatprep.mubr.f32.mxu0 %v599
    %4277 = vmatmul.mubr.f32.gmra.mxu0 %v598
    %v4278 = vpop.f32.mrf.mxu0
    %v4279 = vadd.f32 %v3830, %v4278
    %v4280 = vpop.f32.mrf.mxu0
    %v4281 = vadd.f32 %v3832, %v4280
    %4282 = vmatprep.mubr.f32.mxu0 %v607
    %4283 = vmatmul.mubr.f32.gmra.mxu0 %v606
    %v4284 = vpop.f32.mrf.mxu0
    %v4285 = vadd.f32 %v3836, %v4284
    %v4286 = vpop.f32.mrf.mxu0
    %v4287 = vadd.f32 %v3838, %v4286
    %4288 = vmatprep.mubr.f32.mxu0 %v615
    %4289 = vmatmul.mubr.f32.gmra.mxu0 %v614
    %v4290 = vpop.f32.mrf.mxu0
    %v4291 = vadd.f32 %v3842, %v4290
    %v4292 = vpop.f32.mrf.mxu0
    %v4293 = vadd.f32 %v3844, %v4292
    %4294 = vdwg.mxu0
    %4295 = vmatprep.subr.mxu0 %v1065
    %4296 = vmatpush1.msra.mxu0 %v1064
    %4297 = vmatprep.subr.mxu0 %v1061
    %4298 = vmatpush1.msra.mxu0 %v1060
    %4299 = vmatprep.subr.mxu0 %v1057
    %4300 = vmatpush1.msra.mxu0 %v1056
    %4301 = vmatprep.subr.mxu0 %v1053
    %4302 = vmatpush1.msra.mxu0 %v1052
    %4303 = vmatprep.subr.mxu0 %v1049
    %4304 = vmatpush1.msra.mxu0 %v1048
    %4305 = vmatprep.subr.mxu0 %v1045
    %4306 = vmatpush1.msra.mxu0 %v1044
    %4307 = vmatprep.subr.mxu0 %v1041
    %4308 = vmatpush1.msra.mxu0 %v1040
    %4309 = vmatprep.subr.mxu0 %v1037
    %4310 = vmatpush1.msra.mxu0 %v1036
    %4311 = vmatprep.subr.mxu0 %v1033
    %4312 = vmatpush1.msra.mxu0 %v1032
    %4313 = vmatprep.subr.mxu0 %v1029
    %4314 = vmatpush1.msra.mxu0 %v1028
    %4315 = vmatprep.subr.mxu0 %v1025
    %4316 = vmatpush1.msra.mxu0 %v1024
    %4317 = vmatprep.subr.mxu0 %v1021
    %4318 = vmatpush1.msra.mxu0 %v1020
    %4319 = vmatprep.subr.mxu0 %v1017
    %4320 = vmatpush1.msra.mxu0 %v1016
    %4321 = vmatprep.subr.mxu0 %v1013
    %4322 = vmatpush1.msra.mxu0 %v1012
    %4323 = vmatprep.subr.mxu0 %v1009
    %4324 = vmatpush1.msra.mxu0 %v1008
    %4325 = vmatprep.subr.mxu0 %v1005
    %4326 = vmatpush1.msra.mxu0 %v1004
    %4327 = vmatprep.subr.mxu0 %v1129
    %4328 = vmatpush2.msra.mxu0 %v1128
    %4329 = vmatprep.subr.mxu0 %v1125
    %4330 = vmatpush2.msra.mxu0 %v1124
    %4331 = vmatprep.subr.mxu0 %v1121
    %4332 = vmatpush2.msra.mxu0 %v1120
    %4333 = vmatprep.subr.mxu0 %v1117
    %4334 = vmatpush2.msra.mxu0 %v1116
    %4335 = vmatprep.subr.mxu0 %v1113
    %4336 = vmatpush2.msra.mxu0 %v1112
    %4337 = vmatprep.subr.mxu0 %v1109
    %4338 = vmatpush2.msra.mxu0 %v1108
    %4339 = vmatprep.subr.mxu0 %v1105
    %4340 = vmatpush2.msra.mxu0 %v1104
    %4341 = vmatprep.subr.mxu0 %v1101
    %4342 = vmatpush2.msra.mxu0 %v1100
    %4343 = vmatprep.subr.mxu0 %v1097
    %4344 = vmatpush2.msra.mxu0 %v1096
    %4345 = vmatprep.subr.mxu0 %v1093
    %4346 = vmatpush2.msra.mxu0 %v1092
    %4347 = vmatprep.subr.mxu0 %v1089
    %4348 = vmatpush2.msra.mxu0 %v1088
    %4349 = vmatprep.subr.mxu0 %v1085
    %4350 = vmatpush2.msra.mxu0 %v1084
    %4351 = vmatprep.subr.mxu0 %v1081
    %4352 = vmatpush2.msra.mxu0 %v1080
    %4353 = vmatprep.subr.mxu0 %v1077
    %4354 = vmatpush2.msra.mxu0 %v1076
    %4355 = vmatprep.subr.mxu0 %v1073
    %4356 = vmatpush2.msra.mxu0 %v1072
    %4357 = vmatprep.subr.mxu0 %v1069
    %4358 = vmatpush2.msra.mxu0 %v1068
    %4359 = vmatprep.mubr.f32.mxu0 %v113
    %4360 = vmatmul.mubr.f32.gmra.mxu0 %v112
    %v4361 = vpop.f32.mrf.mxu0
    %v4362 = vadd.f32 %v3913, %v4361
    %v4363 = vpop.f32.mrf.mxu0
    %v4364 = vadd.f32 %v3915, %v4363
    %4365 = vmatprep.mubr.f32.mxu0 %v121
    %4366 = vmatmul.mubr.f32.gmra.mxu0 %v120
    %v4367 = vpop.f32.mrf.mxu0
    %v4368 = vadd.f32 %v3919, %v4367
    %v4369 = vpop.f32.mrf.mxu0
    %v4370 = vadd.f32 %v3921, %v4369
    %4371 = vmatprep.mubr.f32.mxu0 %v129
    %4372 = vmatmul.mubr.f32.gmra.mxu0 %v128
    %v4373 = vpop.f32.mrf.mxu0
    %v4374 = vadd.f32 %v3925, %v4373
    %v4375 = vpop.f32.mrf.mxu0
    %v4376 = vadd.f32 %v3927, %v4375
    %4377 = vmatprep.mubr.f32.mxu0 %v137
    %4378 = vmatmul.mubr.f32.gmra.mxu0 %v136
    %v4379 = vpop.f32.mrf.mxu0
    %v4380 = vadd.f32 %v3931, %v4379
    %v4381 = vpop.f32.mrf.mxu0
    %v4382 = vadd.f32 %v3933, %v4381
    %4383 = vmatprep.mubr.f32.mxu0 %v145
    %4384 = vmatmul.mubr.f32.gmra.mxu0 %v144
    %v4385 = vpop.f32.mrf.mxu0
    %v4386 = vadd.f32 %v3937, %v4385
    %v4387 = vpop.f32.mrf.mxu0
    %v4388 = vadd.f32 %v3939, %v4387
    %4389 = vmatprep.mubr.f32.mxu0 %v153
    %4390 = vmatmul.mubr.f32.gmra.mxu0 %v152
    %v4391 = vpop.f32.mrf.mxu0
    %v4392 = vadd.f32 %v3943, %v4391
    %v4393 = vpop.f32.mrf.mxu0
    %v4394 = vadd.f32 %v3945, %v4393
    %4395 = vmatprep.mubr.f32.mxu0 %v161
    %4396 = vmatmul.mubr.f32.gmra.mxu0 %v160
    %v4397 = vpop.f32.mrf.mxu0
    %v4398 = vadd.f32 %v3949, %v4397
    %v4399 = vpop.f32.mrf.mxu0
    %v4400 = vadd.f32 %v3951, %v4399
    %4401 = vmatprep.mubr.f32.mxu0 %v169
    %4402 = vmatmul.mubr.f32.gmra.mxu0 %v168
    %v4403 = vpop.f32.mrf.mxu0
    %v4404 = vadd.f32 %v3955, %v4403
    %v4405 = vpop.f32.mrf.mxu0
    %v4406 = vadd.f32 %v3957, %v4405
    %4407 = vmatprep.mubr.f32.mxu0 %v177
    %4408 = vmatmul.mubr.f32.gmra.mxu0 %v176
    %v4409 = vpop.f32.mrf.mxu0
    %v4410 = vadd.f32 %v3961, %v4409
    %v4411 = vpop.f32.mrf.mxu0
    %v4412 = vadd.f32 %v3963, %v4411
    %4413 = vmatprep.mubr.f32.mxu0 %v185
    %4414 = vmatmul.mubr.f32.gmra.mxu0 %v184
    %v4415 = vpop.f32.mrf.mxu0
    %v4416 = vadd.f32 %v3967, %v4415
    %v4417 = vpop.f32.mrf.mxu0
    %v4418 = vadd.f32 %v3969, %v4417
    %4419 = vmatprep.mubr.f32.mxu0 %v193
    %4420 = vmatmul.mubr.f32.gmra.mxu0 %v192
    %v4421 = vpop.f32.mrf.mxu0
    %v4422 = vadd.f32 %v3973, %v4421
    %v4423 = vpop.f32.mrf.mxu0
    %v4424 = vadd.f32 %v3975, %v4423
    %4425 = vmatprep.mubr.f32.mxu0 %v201
    %4426 = vmatmul.mubr.f32.gmra.mxu0 %v200
    %v4427 = vpop.f32.mrf.mxu0
    %v4428 = vadd.f32 %v3979, %v4427
    %v4429 = vpop.f32.mrf.mxu0
    %v4430 = vadd.f32 %v3981, %v4429
    %4431 = vmatprep.mubr.f32.mxu0 %v209
    %4432 = vmatmul.mubr.f32.gmra.mxu0 %v208
    %v4433 = vpop.f32.mrf.mxu0
    %v4434 = vadd.f32 %v3985, %v4433
    %v4435 = vpop.f32.mrf.mxu0
    %v4436 = vadd.f32 %v3987, %v4435
    %4437 = vmatprep.mubr.f32.mxu0 %v217
    %4438 = vmatmul.mubr.f32.gmra.mxu0 %v216
    %v4439 = vpop.f32.mrf.mxu0
    %v4440 = vadd.f32 %v3991, %v4439
    %v4441 = vpop.f32.mrf.mxu0
    %v4442 = vadd.f32 %v3993, %v4441
    %4443 = vmatprep.mubr.f32.mxu0 %v225
    %4444 = vmatmul.mubr.f32.gmra.mxu0 %v224
    %v4445 = vpop.f32.mrf.mxu0
    %v4446 = vadd.f32 %v3997, %v4445
    %v4447 = vpop.f32.mrf.mxu0
    %v4448 = vadd.f32 %v3999, %v4447
    %4449 = vmatprep.mubr.f32.mxu0 %v233
    %4450 = vmatmul.mubr.f32.gmra.mxu0 %v232
    %v4451 = vpop.f32.mrf.mxu0
    %v4452 = vadd.f32 %v4003, %v4451
    %v4453 = vpop.f32.mrf.mxu0
    %v4454 = vadd.f32 %v4005, %v4453
    %4455 = vmatprep.mubr.f32.mxu0 %v241
    %4456 = vmatmul.mubr.f32.gmra.mxu0 %v240
    %v4457 = vpop.f32.mrf.mxu0
    %v4458 = vadd.f32 %v4009, %v4457
    %v4459 = vpop.f32.mrf.mxu0
    %v4460 = vadd.f32 %v4011, %v4459
    %4461 = vmatprep.mubr.f32.mxu0 %v249
    %4462 = vmatmul.mubr.f32.gmra.mxu0 %v248
    %v4463 = vpop.f32.mrf.mxu0
    %v4464 = vadd.f32 %v4015, %v4463
    %v4465 = vpop.f32.mrf.mxu0
    %v4466 = vadd.f32 %v4017, %v4465
    %4467 = vmatprep.mubr.f32.mxu0 %v257
    %4468 = vmatmul.mubr.f32.gmra.mxu0 %v256
    %v4469 = vpop.f32.mrf.mxu0
    %v4470 = vadd.f32 %v4021, %v4469
    %v4471 = vpop.f32.mrf.mxu0
    %v4472 = vadd.f32 %v4023, %v4471
    %4473 = vmatprep.mubr.f32.mxu0 %v265
    %4474 = vmatmul.mubr.f32.gmra.mxu0 %v264
    %v4475 = vpop.f32.mrf.mxu0
    %v4476 = vadd.f32 %v4027, %v4475
    %v4477 = vpop.f32.mrf.mxu0
    %v4478 = vadd.f32 %v4029, %v4477
    %4479 = vmatprep.mubr.f32.mxu0 %v273
    %4480 = vmatmul.mubr.f32.gmra.mxu0 %v272
    %v4481 = vpop.f32.mrf.mxu0
    %v4482 = vadd.f32 %v4033, %v4481
    %v4483 = vpop.f32.mrf.mxu0
    %v4484 = vadd.f32 %v4035, %v4483
    %4485 = vmatprep.mubr.f32.mxu0 %v281
    %4486 = vmatmul.mubr.f32.gmra.mxu0 %v280
    %v4487 = vpop.f32.mrf.mxu0
    %v4488 = vadd.f32 %v4039, %v4487
    %v4489 = vpop.f32.mrf.mxu0
    %v4490 = vadd.f32 %v4041, %v4489
    %4491 = vmatprep.mubr.f32.mxu0 %v289
    %4492 = vmatmul.mubr.f32.gmra.mxu0 %v288
    %v4493 = vpop.f32.mrf.mxu0
    %v4494 = vadd.f32 %v4045, %v4493
    %v4495 = vpop.f32.mrf.mxu0
    %v4496 = vadd.f32 %v4047, %v4495
    %4497 = vmatprep.mubr.f32.mxu0 %v297
    %4498 = vmatmul.mubr.f32.gmra.mxu0 %v296
    %v4499 = vpop.f32.mrf.mxu0
    %v4500 = vadd.f32 %v4051, %v4499
    %v4501 = vpop.f32.mrf.mxu0
    %v4502 = vadd.f32 %v4053, %v4501
    %4503 = vmatprep.mubr.f32.mxu0 %v305
    %4504 = vmatmul.mubr.f32.gmra.mxu0 %v304
    %v4505 = vpop.f32.mrf.mxu0
    %v4506 = vadd.f32 %v4057, %v4505
    %v4507 = vpop.f32.mrf.mxu0
    %v4508 = vadd.f32 %v4059, %v4507
    %4509 = vmatprep.mubr.f32.mxu0 %v313
    %4510 = vmatmul.mubr.f32.gmra.mxu0 %v312
    %v4511 = vpop.f32.mrf.mxu0
    %v4512 = vadd.f32 %v4063, %v4511
    %v4513 = vpop.f32.mrf.mxu0
    %v4514 = vadd.f32 %v4065, %v4513
    %4515 = vmatprep.mubr.f32.mxu0 %v321
    %4516 = vmatmul.mubr.f32.gmra.mxu0 %v320
    %v4517 = vpop.f32.mrf.mxu0
    %v4518 = vadd.f32 %v4069, %v4517
    %v4519 = vpop.f32.mrf.mxu0
    %v4520 = vadd.f32 %v4071, %v4519
    %4521 = vmatprep.mubr.f32.mxu0 %v329
    %4522 = vmatmul.mubr.f32.gmra.mxu0 %v328
    %v4523 = vpop.f32.mrf.mxu0
    %v4524 = vadd.f32 %v4075, %v4523
    %v4525 = vpop.f32.mrf.mxu0
    %v4526 = vadd.f32 %v4077, %v4525
    %4527 = vmatprep.mubr.f32.mxu0 %v337
    %4528 = vmatmul.mubr.f32.gmra.mxu0 %v336
    %v4529 = vpop.f32.mrf.mxu0
    %v4530 = vadd.f32 %v4081, %v4529
    %v4531 = vpop.f32.mrf.mxu0
    %v4532 = vadd.f32 %v4083, %v4531
    %4533 = vmatprep.mubr.f32.mxu0 %v345
    %4534 = vmatmul.mubr.f32.gmra.mxu0 %v344
    %v4535 = vpop.f32.mrf.mxu0
    %v4536 = vadd.f32 %v4087, %v4535
    %v4537 = vpop.f32.mrf.mxu0
    %v4538 = vadd.f32 %v4089, %v4537
    %4539 = vmatprep.mubr.f32.mxu0 %v353
    %4540 = vmatmul.mubr.f32.gmra.mxu0 %v352
    %v4541 = vpop.f32.mrf.mxu0
    %v4542 = vadd.f32 %v4093, %v4541
    %v4543 = vpop.f32.mrf.mxu0
    %v4544 = vadd.f32 %v4095, %v4543
    %4545 = vmatprep.mubr.f32.mxu0 %v361
    %4546 = vmatmul.mubr.f32.gmra.mxu0 %v360
    %v4547 = vpop.f32.mrf.mxu0
    %v4548 = vadd.f32 %v4099, %v4547
    %v4549 = vpop.f32.mrf.mxu0
    %v4550 = vadd.f32 %v4101, %v4549
    %4551 = vmatprep.mubr.f32.mxu0 %v369
    %4552 = vmatmul.mubr.f32.gmra.mxu0 %v368
    %v4553 = vpop.f32.mrf.mxu0
    %v4554 = vadd.f32 %v4105, %v4553
    %v4555 = vpop.f32.mrf.mxu0
    %v4556 = vadd.f32 %v4107, %v4555
    %4557 = vmatprep.mubr.f32.mxu0 %v377
    %4558 = vmatmul.mubr.f32.gmra.mxu0 %v376
    %v4559 = vpop.f32.mrf.mxu0
    %v4560 = vadd.f32 %v4111, %v4559
    %v4561 = vpop.f32.mrf.mxu0
    %v4562 = vadd.f32 %v4113, %v4561
    %4563 = vmatprep.mubr.f32.mxu0 %v385
    %4564 = vmatmul.mubr.f32.gmra.mxu0 %v384
    %v4565 = vpop.f32.mrf.mxu0
    %v4566 = vadd.f32 %v4117, %v4565
    %v4567 = vpop.f32.mrf.mxu0
    %v4568 = vadd.f32 %v4119, %v4567
    %4569 = vmatprep.mubr.f32.mxu0 %v393
    %4570 = vmatmul.mubr.f32.gmra.mxu0 %v392
    %v4571 = vpop.f32.mrf.mxu0
    %v4572 = vadd.f32 %v4123, %v4571
    %v4573 = vpop.f32.mrf.mxu0
    %v4574 = vadd.f32 %v4125, %v4573
    %4575 = vmatprep.mubr.f32.mxu0 %v401
    %4576 = vmatmul.mubr.f32.gmra.mxu0 %v400
    %v4577 = vpop.f32.mrf.mxu0
    %v4578 = vadd.f32 %v4129, %v4577
    %v4579 = vpop.f32.mrf.mxu0
    %v4580 = vadd.f32 %v4131, %v4579
    %4581 = vmatprep.mubr.f32.mxu0 %v409
    %4582 = vmatmul.mubr.f32.gmra.mxu0 %v408
    %v4583 = vpop.f32.mrf.mxu0
    %v4584 = vadd.f32 %v4135, %v4583
    %v4585 = vpop.f32.mrf.mxu0
    %v4586 = vadd.f32 %v4137, %v4585
    %4587 = vmatprep.mubr.f32.mxu0 %v417
    %4588 = vmatmul.mubr.f32.gmra.mxu0 %v416
    %v4589 = vpop.f32.mrf.mxu0
    %v4590 = vadd.f32 %v4141, %v4589
    %v4591 = vpop.f32.mrf.mxu0
    %v4592 = vadd.f32 %v4143, %v4591
    %4593 = vmatprep.mubr.f32.mxu0 %v425
    %4594 = vmatmul.mubr.f32.gmra.mxu0 %v424
    %v4595 = vpop.f32.mrf.mxu0
    %v4596 = vadd.f32 %v4147, %v4595
    %v4597 = vpop.f32.mrf.mxu0
    %v4598 = vadd.f32 %v4149, %v4597
    %4599 = vmatprep.mubr.f32.mxu0 %v433
    %4600 = vmatmul.mubr.f32.gmra.mxu0 %v432
    %v4601 = vpop.f32.mrf.mxu0
    %v4602 = vadd.f32 %v4153, %v4601
    %v4603 = vpop.f32.mrf.mxu0
    %v4604 = vadd.f32 %v4155, %v4603
    %4605 = vmatprep.mubr.f32.mxu0 %v441
    %4606 = vmatmul.mubr.f32.gmra.mxu0 %v440
    %v4607 = vpop.f32.mrf.mxu0
    %v4608 = vadd.f32 %v4159, %v4607
    %v4609 = vpop.f32.mrf.mxu0
    %v4610 = vadd.f32 %v4161, %v4609
    %4611 = vmatprep.mubr.f32.mxu0 %v449
    %4612 = vmatmul.mubr.f32.gmra.mxu0 %v448
    %v4613 = vpop.f32.mrf.mxu0
    %v4614 = vadd.f32 %v4165, %v4613
    %v4615 = vpop.f32.mrf.mxu0
    %v4616 = vadd.f32 %v4167, %v4615
    %4617 = vmatprep.mubr.f32.mxu0 %v457
    %4618 = vmatmul.mubr.f32.gmra.mxu0 %v456
    %v4619 = vpop.f32.mrf.mxu0
    %v4620 = vadd.f32 %v4171, %v4619
    %v4621 = vpop.f32.mrf.mxu0
    %v4622 = vadd.f32 %v4173, %v4621
    %4623 = vmatprep.mubr.f32.mxu0 %v465
    %4624 = vmatmul.mubr.f32.gmra.mxu0 %v464
    %v4625 = vpop.f32.mrf.mxu0
    %v4626 = vadd.f32 %v4177, %v4625
    %v4627 = vpop.f32.mrf.mxu0
    %v4628 = vadd.f32 %v4179, %v4627
    %4629 = vmatprep.mubr.f32.mxu0 %v473
    %4630 = vmatmul.mubr.f32.gmra.mxu0 %v472
    %v4631 = vpop.f32.mrf.mxu0
    %v4632 = vadd.f32 %v4183, %v4631
    %v4633 = vpop.f32.mrf.mxu0
    %v4634 = vadd.f32 %v4185, %v4633
    %4635 = vmatprep.mubr.f32.mxu0 %v481
    %4636 = vmatmul.mubr.f32.gmra.mxu0 %v480
    %v4637 = vpop.f32.mrf.mxu0
    %v4638 = vadd.f32 %v4189, %v4637
    %v4639 = vpop.f32.mrf.mxu0
    %v4640 = vadd.f32 %v4191, %v4639
    %4641 = vmatprep.mubr.f32.mxu0 %v489
    %4642 = vmatmul.mubr.f32.gmra.mxu0 %v488
    %v4643 = vpop.f32.mrf.mxu0
    %v4644 = vadd.f32 %v4195, %v4643
    %v4645 = vpop.f32.mrf.mxu0
    %v4646 = vadd.f32 %v4197, %v4645
    %4647 = vmatprep.mubr.f32.mxu0 %v497
    %4648 = vmatmul.mubr.f32.gmra.mxu0 %v496
    %v4649 = vpop.f32.mrf.mxu0
    %v4650 = vadd.f32 %v4201, %v4649
    %v4651 = vpop.f32.mrf.mxu0
    %v4652 = vadd.f32 %v4203, %v4651
    %4653 = vmatprep.mubr.f32.mxu0 %v505
    %4654 = vmatmul.mubr.f32.gmra.mxu0 %v504
    %v4655 = vpop.f32.mrf.mxu0
    %v4656 = vadd.f32 %v4207, %v4655
    %v4657 = vpop.f32.mrf.mxu0
    %v4658 = vadd.f32 %v4209, %v4657
    %4659 = vmatprep.mubr.f32.mxu0 %v513
    %4660 = vmatmul.mubr.f32.gmra.mxu0 %v512
    %v4661 = vpop.f32.mrf.mxu0
    %v4662 = vadd.f32 %v4213, %v4661
    %v4663 = vpop.f32.mrf.mxu0
    %v4664 = vadd.f32 %v4215, %v4663
    %4665 = vmatprep.mubr.f32.mxu0 %v521
    %4666 = vmatmul.mubr.f32.gmra.mxu0 %v520
    %v4667 = vpop.f32.mrf.mxu0
    %v4668 = vadd.f32 %v4219, %v4667
    %v4669 = vpop.f32.mrf.mxu0
    %v4670 = vadd.f32 %v4221, %v4669
    %4671 = vmatprep.mubr.f32.mxu0 %v529
    %4672 = vmatmul.mubr.f32.gmra.mxu0 %v528
    %v4673 = vpop.f32.mrf.mxu0
    %v4674 = vadd.f32 %v4225, %v4673
    %v4675 = vpop.f32.mrf.mxu0
    %v4676 = vadd.f32 %v4227, %v4675
    %4677 = vmatprep.mubr.f32.mxu0 %v537
    %4678 = vmatmul.mubr.f32.gmra.mxu0 %v536
    %v4679 = vpop.f32.mrf.mxu0
    %v4680 = vadd.f32 %v4231, %v4679
    %v4681 = vpop.f32.mrf.mxu0
    %v4682 = vadd.f32 %v4233, %v4681
    %4683 = vmatprep.mubr.f32.mxu0 %v545
    %4684 = vmatmul.mubr.f32.gmra.mxu0 %v544
    %v4685 = vpop.f32.mrf.mxu0
    %v4686 = vadd.f32 %v4237, %v4685
    %v4687 = vpop.f32.mrf.mxu0
    %v4688 = vadd.f32 %v4239, %v4687
    %4689 = vmatprep.mubr.f32.mxu0 %v553
    %4690 = vmatmul.mubr.f32.gmra.mxu0 %v552
    %v4691 = vpop.f32.mrf.mxu0
    %v4692 = vadd.f32 %v4243, %v4691
    %v4693 = vpop.f32.mrf.mxu0
    %v4694 = vadd.f32 %v4245, %v4693
    %4695 = vmatprep.mubr.f32.mxu0 %v561
    %4696 = vmatmul.mubr.f32.gmra.mxu0 %v560
    %v4697 = vpop.f32.mrf.mxu0
    %v4698 = vadd.f32 %v4249, %v4697
    %v4699 = vpop.f32.mrf.mxu0
    %v4700 = vadd.f32 %v4251, %v4699
    %4701 = vmatprep.mubr.f32.mxu0 %v569
    %4702 = vmatmul.mubr.f32.gmra.mxu0 %v568
    %v4703 = vpop.f32.mrf.mxu0
    %v4704 = vadd.f32 %v4255, %v4703
    %v4705 = vpop.f32.mrf.mxu0
    %v4706 = vadd.f32 %v4257, %v4705
    %4707 = vmatprep.mubr.f32.mxu0 %v577
    %4708 = vmatmul.mubr.f32.gmra.mxu0 %v576
    %v4709 = vpop.f32.mrf.mxu0
    %v4710 = vadd.f32 %v4261, %v4709
    %v4711 = vpop.f32.mrf.mxu0
    %v4712 = vadd.f32 %v4263, %v4711
    %4713 = vmatprep.mubr.f32.mxu0 %v585
    %4714 = vmatmul.mubr.f32.gmra.mxu0 %v584
    %v4715 = vpop.f32.mrf.mxu0
    %v4716 = vadd.f32 %v4267, %v4715
    %v4717 = vpop.f32.mrf.mxu0
    %v4718 = vadd.f32 %v4269, %v4717
    %4719 = vmatprep.mubr.f32.mxu0 %v593
    %4720 = vmatmul.mubr.f32.gmra.mxu0 %v592
    %v4721 = vpop.f32.mrf.mxu0
    %v4722 = vadd.f32 %v4273, %v4721
    %v4723 = vpop.f32.mrf.mxu0
    %v4724 = vadd.f32 %v4275, %v4723
    %4725 = vmatprep.mubr.f32.mxu0 %v601
    %4726 = vmatmul.mubr.f32.gmra.mxu0 %v600
    %v4727 = vpop.f32.mrf.mxu0
    %v4728 = vadd.f32 %v4279, %v4727
    %v4729 = vpop.f32.mrf.mxu0
    %v4730 = vadd.f32 %v4281, %v4729
    %4731 = vmatprep.mubr.f32.mxu0 %v609
    %4732 = vmatmul.mubr.f32.gmra.mxu0 %v608
    %v4733 = vpop.f32.mrf.mxu0
    %v4734 = vadd.f32 %v4285, %v4733
    %v4735 = vpop.f32.mrf.mxu0
    %v4736 = vadd.f32 %v4287, %v4735
    %4737 = vmatprep.mubr.f32.mxu0 %v617
    %4738 = vmatmul.mubr.f32.gmra.mxu0 %v616
    %v4739 = vpop.f32.mrf.mxu0
    %v4740 = vadd.f32 %v4291, %v4739
    %v4741 = vpop.f32.mrf.mxu0
    %v4742 = vadd.f32 %v4293, %v4741
    %4743 = vdwg.mxu0
    %v4744 = vmax.f32 %v2566, 0.0
    %v4745 = vmax.f32 %v2568, 0.0
    %v4746 = vmax.f32 %v4362, 0.0
    %v4747 = vmax.f32 %v4364, 0.0
    %v4748 = vmax.f32 %v2572, 0.0
    %v4749 = vmax.f32 %v2574, 0.0
    %v4750 = vmax.f32 %v4368, 0.0
    %v4751 = vmax.f32 %v4370, 0.0
    %v4752 = vmax.f32 %v2578, 0.0
    %v4753 = vmax.f32 %v2580, 0.0
    %v4754 = vmax.f32 %v4374, 0.0
    %v4755 = vmax.f32 %v4376, 0.0
    %v4756 = vmax.f32 %v2584, 0.0
    %v4757 = vmax.f32 %v2586, 0.0
    %v4758 = vmax.f32 %v4380, 0.0
    %v4759 = vmax.f32 %v4382, 0.0
    %v4760 = vmax.f32 %v2590, 0.0
    %v4761 = vmax.f32 %v2592, 0.0
    %v4762 = vmax.f32 %v4386, 0.0
    %v4763 = vmax.f32 %v4388, 0.0
    %v4764 = vmax.f32 %v2596, 0.0
    %v4765 = vmax.f32 %v2598, 0.0
    %v4766 = vmax.f32 %v4392, 0.0
    %v4767 = vmax.f32 %v4394, 0.0
    %v4768 = vmax.f32 %v2602, 0.0
    %v4769 = vmax.f32 %v2604, 0.0
    %v4770 = vmax.f32 %v4398, 0.0
    %v4771 = vmax.f32 %v4400, 0.0
    %v4772 = vmax.f32 %v2608, 0.0
    %v4773 = vmax.f32 %v2610, 0.0
    %v4774 = vmax.f32 %v4404, 0.0
    %v4775 = vmax.f32 %v4406, 0.0
    %v4776 = vmax.f32 %v2614, 0.0
    %v4777 = vmax.f32 %v2616, 0.0
    %v4778 = vmax.f32 %v4410, 0.0
    %v4779 = vmax.f32 %v4412, 0.0
    %v4780 = vmax.f32 %v2620, 0.0
    %v4781 = vmax.f32 %v2622, 0.0
    %v4782 = vmax.f32 %v4416, 0.0
    %v4783 = vmax.f32 %v4418, 0.0
    %v4784 = vmax.f32 %v2626, 0.0
    %v4785 = vmax.f32 %v2628, 0.0
    %v4786 = vmax.f32 %v4422, 0.0
    %v4787 = vmax.f32 %v4424, 0.0
    %v4788 = vmax.f32 %v2632, 0.0
    %v4789 = vmax.f32 %v2634, 0.0
    %v4790 = vmax.f32 %v4428, 0.0
    %v4791 = vmax.f32 %v4430, 0.0
    %v4792 = vmax.f32 %v2638, 0.0
    %v4793 = vmax.f32 %v2640, 0.0
    %v4794 = vmax.f32 %v4434, 0.0
    %v4795 = vmax.f32 %v4436, 0.0
    %v4796 = vmax.f32 %v2644, 0.0
    %v4797 = vmax.f32 %v2646, 0.0
    %v4798 = vmax.f32 %v4440, 0.0
    %v4799 = vmax.f32 %v4442, 0.0
    %v4800 = vmax.f32 %v2650, 0.0
    %v4801 = vmax.f32 %v2652, 0.0
    %v4802 = vmax.f32 %v4446, 0.0
    %v4803 = vmax.f32 %v4448, 0.0
    %v4804 = vmax.f32 %v2656, 0.0
    %v4805 = vmax.f32 %v2658, 0.0
    %v4806 = vmax.f32 %v4452, 0.0
    %v4807 = vmax.f32 %v4454, 0.0
    %v4808 = vmax.f32 %v2662, 0.0
    %v4809 = vmax.f32 %v2664, 0.0
    %v4810 = vmax.f32 %v4458, 0.0
    %v4811 = vmax.f32 %v4460, 0.0
    %v4812 = vmax.f32 %v2668, 0.0
    %v4813 = vmax.f32 %v2670, 0.0
    %v4814 = vmax.f32 %v4464, 0.0
    %v4815 = vmax.f32 %v4466, 0.0
    %v4816 = vmax.f32 %v2674, 0.0
    %v4817 = vmax.f32 %v2676, 0.0
    %v4818 = vmax.f32 %v4470, 0.0
    %v4819 = vmax.f32 %v4472, 0.0
    %v4820 = vmax.f32 %v2680, 0.0
    %v4821 = vmax.f32 %v2682, 0.0
    %v4822 = vmax.f32 %v4476, 0.0
    %v4823 = vmax.f32 %v4478, 0.0
    %v4824 = vmax.f32 %v2686, 0.0
    %v4825 = vmax.f32 %v2688, 0.0
    %v4826 = vmax.f32 %v4482, 0.0
    %v4827 = vmax.f32 %v4484, 0.0
    %v4828 = vmax.f32 %v2692, 0.0
    %v4829 = vmax.f32 %v2694, 0.0
    %v4830 = vmax.f32 %v4488, 0.0
    %v4831 = vmax.f32 %v4490, 0.0
    %v4832 = vmax.f32 %v2698, 0.0
    %v4833 = vmax.f32 %v2700, 0.0
    %v4834 = vmax.f32 %v4494, 0.0
    %v4835 = vmax.f32 %v4496, 0.0
    %v4836 = vmax.f32 %v2704, 0.0
    %v4837 = vmax.f32 %v2706, 0.0
    %v4838 = vmax.f32 %v4500, 0.0
    %v4839 = vmax.f32 %v4502, 0.0
    %v4840 = vmax.f32 %v2710, 0.0
    %v4841 = vmax.f32 %v2712, 0.0
    %v4842 = vmax.f32 %v4506, 0.0
    %v4843 = vmax.f32 %v4508, 0.0
    %v4844 = vmax.f32 %v2716, 0.0
    %v4845 = vmax.f32 %v2718, 0.0
    %v4846 = vmax.f32 %v4512, 0.0
    %v4847 = vmax.f32 %v4514, 0.0
    %v4848 = vmax.f32 %v2722, 0.0
    %v4849 = vmax.f32 %v2724, 0.0
    %v4850 = vmax.f32 %v4518, 0.0
    %v4851 = vmax.f32 %v4520, 0.0
    %v4852 = vmax.f32 %v2728, 0.0
    %v4853 = vmax.f32 %v2730, 0.0
    %v4854 = vmax.f32 %v4524, 0.0
    %v4855 = vmax.f32 %v4526, 0.0
    %v4856 = vmax.f32 %v2734, 0.0
    %v4857 = vmax.f32 %v2736, 0.0
    %v4858 = vmax.f32 %v4530, 0.0
    %v4859 = vmax.f32 %v4532, 0.0
    %v4860 = vmax.f32 %v2740, 0.0
    %v4861 = vmax.f32 %v2742, 0.0
    %v4862 = vmax.f32 %v4536, 0.0
    %v4863 = vmax.f32 %v4538, 0.0
    %v4864 = vmax.f32 %v2746, 0.0
    %v4865 = vmax.f32 %v2748, 0.0
    %v4866 = vmax.f32 %v4542, 0.0
    %v4867 = vmax.f32 %v4544, 0.0
    %v4868 = vmax.f32 %v2752, 0.0
    %v4869 = vmax.f32 %v2754, 0.0
    %v4870 = vmax.f32 %v4548, 0.0
    %v4871 = vmax.f32 %v4550, 0.0
    %v4872 = vmax.f32 %v2758, 0.0
    %v4873 = vmax.f32 %v2760, 0.0
    %v4874 = vmax.f32 %v4554, 0.0
    %v4875 = vmax.f32 %v4556, 0.0
    %v4876 = vmax.f32 %v2764, 0.0
    %v4877 = vmax.f32 %v2766, 0.0
    %v4878 = vmax.f32 %v4560, 0.0
    %v4879 = vmax.f32 %v4562, 0.0
    %v4880 = vmax.f32 %v2770, 0.0
    %v4881 = vmax.f32 %v2772, 0.0
    %v4882 = vmax.f32 %v4566, 0.0
    %v4883 = vmax.f32 %v4568, 0.0
    %v4884 = vmax.f32 %v2776, 0.0
    %v4885 = vmax.f32 %v2778, 0.0
    %v4886 = vmax.f32 %v4572, 0.0
    %v4887 = vmax.f32 %v4574, 0.0
    %v4888 = vmax.f32 %v2782, 0.0
    %v4889 = vmax.f32 %v2784, 0.0
    %v4890 = vmax.f32 %v4578, 0.0
    %v4891 = vmax.f32 %v4580, 0.0
    %v4892 = vmax.f32 %v2788, 0.0
    %v4893 = vmax.f32 %v2790, 0.0
    %v4894 = vmax.f32 %v4584, 0.0
    %v4895 = vmax.f32 %v4586, 0.0
    %v4896 = vmax.f32 %v2794, 0.0
    %v4897 = vmax.f32 %v2796, 0.0
    %v4898 = vmax.f32 %v4590, 0.0
    %v4899 = vmax.f32 %v4592, 0.0
    %v4900 = vmax.f32 %v2800, 0.0
    %v4901 = vmax.f32 %v2802, 0.0
    %v4902 = vmax.f32 %v4596, 0.0
    %v4903 = vmax.f32 %v4598, 0.0
    %v4904 = vmax.f32 %v2806, 0.0
    %v4905 = vmax.f32 %v2808, 0.0
    %v4906 = vmax.f32 %v4602, 0.0
    %v4907 = vmax.f32 %v4604, 0.0
    %v4908 = vmax.f32 %v2812, 0.0
    %v4909 = vmax.f32 %v2814, 0.0
    %v4910 = vmax.f32 %v4608, 0.0
    %v4911 = vmax.f32 %v4610, 0.0
    %v4912 = vmax.f32 %v2818, 0.0
    %v4913 = vmax.f32 %v2820, 0.0
    %v4914 = vmax.f32 %v4614, 0.0
    %v4915 = vmax.f32 %v4616, 0.0
    %v4916 = vmax.f32 %v2824, 0.0
    %v4917 = vmax.f32 %v2826, 0.0
    %v4918 = vmax.f32 %v4620, 0.0
    %v4919 = vmax.f32 %v4622, 0.0
    %v4920 = vmax.f32 %v2830, 0.0
    %v4921 = vmax.f32 %v2832, 0.0
    %v4922 = vmax.f32 %v4626, 0.0
    %v4923 = vmax.f32 %v4628, 0.0
    %v4924 = vmax.f32 %v2836, 0.0
    %v4925 = vmax.f32 %v2838, 0.0
    %v4926 = vmax.f32 %v4632, 0.0
    %v4927 = vmax.f32 %v4634, 0.0
    %v4928 = vmax.f32 %v2842, 0.0
    %v4929 = vmax.f32 %v2844, 0.0
    %v4930 = vmax.f32 %v4638, 0.0
    %v4931 = vmax.f32 %v4640, 0.0
    %v4932 = vmax.f32 %v2848, 0.0
    %v4933 = vmax.f32 %v2850, 0.0
    %v4934 = vmax.f32 %v4644, 0.0
    %v4935 = vmax.f32 %v4646, 0.0
    %v4936 = vmax.f32 %v2854, 0.0
    %v4937 = vmax.f32 %v2856, 0.0
    %v4938 = vmax.f32 %v4650, 0.0
    %v4939 = vmax.f32 %v4652, 0.0
    %v4940 = vmax.f32 %v2860, 0.0
    %v4941 = vmax.f32 %v2862, 0.0
    %v4942 = vmax.f32 %v4656, 0.0
    %v4943 = vmax.f32 %v4658, 0.0
    %v4944 = vmax.f32 %v2866, 0.0
    %v4945 = vmax.f32 %v2868, 0.0
    %v4946 = vmax.f32 %v4662, 0.0
    %v4947 = vmax.f32 %v4664, 0.0
    %v4948 = vmax.f32 %v2872, 0.0
    %v4949 = vmax.f32 %v2874, 0.0
    %v4950 = vmax.f32 %v4668, 0.0
    %v4951 = vmax.f32 %v4670, 0.0
    %v4952 = vmax.f32 %v2878, 0.0
    %v4953 = vmax.f32 %v2880, 0.0
    %v4954 = vmax.f32 %v4674, 0.0
    %v4955 = vmax.f32 %v4676, 0.0
    %v4956 = vmax.f32 %v2884, 0.0
    %v4957 = vmax.f32 %v2886, 0.0
    %v4958 = vmax.f32 %v4680, 0.0
    %v4959 = vmax.f32 %v4682, 0.0
    %v4960 = vmax.f32 %v2890, 0.0
    %v4961 = vmax.f32 %v2892, 0.0
    %v4962 = vmax.f32 %v4686, 0.0
    %v4963 = vmax.f32 %v4688, 0.0
    %v4964 = vmax.f32 %v2896, 0.0
    %v4965 = vmax.f32 %v2898, 0.0
    %v4966 = vmax.f32 %v4692, 0.0
    %v4967 = vmax.f32 %v4694, 0.0
    %v4968 = vmax.f32 %v2902, 0.0
    %v4969 = vmax.f32 %v2904, 0.0
    %v4970 = vmax.f32 %v4698, 0.0
    %v4971 = vmax.f32 %v4700, 0.0
    %v4972 = vmax.f32 %v2908, 0.0
    %v4973 = vmax.f32 %v2910, 0.0
    %v4974 = vmax.f32 %v4704, 0.0
    %v4975 = vmax.f32 %v4706, 0.0
    %v4976 = vmax.f32 %v2914, 0.0
    %v4977 = vmax.f32 %v2916, 0.0
    %v4978 = vmax.f32 %v4710, 0.0
    %v4979 = vmax.f32 %v4712, 0.0
    %v4980 = vmax.f32 %v2920, 0.0
    %v4981 = vmax.f32 %v2922, 0.0
    %v4982 = vmax.f32 %v4716, 0.0
    %v4983 = vmax.f32 %v4718, 0.0
    %v4984 = vmax.f32 %v2926, 0.0
    %v4985 = vmax.f32 %v2928, 0.0
    %v4986 = vmax.f32 %v4722, 0.0
    %v4987 = vmax.f32 %v4724, 0.0
    %v4988 = vmax.f32 %v2932, 0.0
    %v4989 = vmax.f32 %v2934, 0.0
    %v4990 = vmax.f32 %v4728, 0.0
    %v4991 = vmax.f32 %v4730, 0.0
    %v4992 = vmax.f32 %v2938, 0.0
    %v4993 = vmax.f32 %v2940, 0.0
    %v4994 = vmax.f32 %v4734, 0.0
    %v4995 = vmax.f32 %v4736, 0.0
    %v4996 = vmax.f32 %v2944, 0.0
    %v4997 = vmax.f32 %v2946, 0.0
    %v4998 = vmax.f32 %v4740, 0.0
    %v4999 = vmax.f32 %v4742, 0.0
    %5000 = vst [vmem:[#allocation13] sm:$0xff] %v4744
    %5001 = vst [vmem:[#allocation13 + $0x8] sm:$0xff] %v4745
    %5002 = vst [vmem:[#allocation13 + $0x10] sm:$0xff] %v4746
    %5003 = vst [vmem:[#allocation13 + $0x18] sm:$0xff] %v4747
    %5004 = vst [vmem:[#allocation13 + $0x20] sm:$0xff] %v4748
    %5005 = vst [vmem:[#allocation13 + $0x28] sm:$0xff] %v4749
    %5006 = vst [vmem:[#allocation13 + $0x30] sm:$0xff] %v4750
    %5007 = vst [vmem:[#allocation13 + $0x38] sm:$0xff] %v4751
    %5008 = vst [vmem:[#allocation13 + $0x40] sm:$0xff] %v4752
    %5009 = vst [vmem:[#allocation13 + $0x48] sm:$0xff] %v4753
    %5010 = vst [vmem:[#allocation13 + $0x50] sm:$0xff] %v4754
    %5011 = vst [vmem:[#allocation13 + $0x58] sm:$0xff] %v4755
    %5012 = vst [vmem:[#allocation13 + $0x60] sm:$0xff] %v4756
    %5013 = vst [vmem:[#allocation13 + $0x68] sm:$0xff] %v4757
    %5014 = vst [vmem:[#allocation13 + $0x70] sm:$0xff] %v4758
    %5015 = vst [vmem:[#allocation13 + $0x78] sm:$0xff] %v4759
    %5016 = vst [vmem:[#allocation13 + $0x80] sm:$0xff] %v4760
    %5017 = vst [vmem:[#allocation13 + $0x88] sm:$0xff] %v4761
    %5018 = vst [vmem:[#allocation13 + $0x90] sm:$0xff] %v4762
    %5019 = vst [vmem:[#allocation13 + $0x98] sm:$0xff] %v4763
    %5020 = vst [vmem:[#allocation13 + $0xa0] sm:$0xff] %v4764
    %5021 = vst [vmem:[#allocation13 + $0xa8] sm:$0xff] %v4765
    %5022 = vst [vmem:[#allocation13 + $0xb0] sm:$0xff] %v4766
    %5023 = vst [vmem:[#allocation13 + $0xb8] sm:$0xff] %v4767
    %5024 = vst [vmem:[#allocation13 + $0xc0] sm:$0xff] %v4768
    %5025 = vst [vmem:[#allocation13 + $0xc8] sm:$0xff] %v4769
    %5026 = vst [vmem:[#allocation13 + $0xd0] sm:$0xff] %v4770
    %5027 = vst [vmem:[#allocation13 + $0xd8] sm:$0xff] %v4771
    %5028 = vst [vmem:[#allocation13 + $0xe0] sm:$0xff] %v4772
    %5029 = vst [vmem:[#allocation13 + $0xe8] sm:$0xff] %v4773
    %5030 = vst [vmem:[#allocation13 + $0xf0] sm:$0xff] %v4774
    %5031 = vst [vmem:[#allocation13 + $0xf8] sm:$0xff] %v4775
    %5032 = vst [vmem:[#allocation13 + $0x100] sm:$0xff] %v4776
    %5033 = vst [vmem:[#allocation13 + $0x108] sm:$0xff] %v4777
    %5034 = vst [vmem:[#allocation13 + $0x110] sm:$0xff] %v4778
    %5035 = vst [vmem:[#allocation13 + $0x118] sm:$0xff] %v4779
    %5036 = vst [vmem:[#allocation13 + $0x120] sm:$0xff] %v4780
    %5037 = vst [vmem:[#allocation13 + $0x128] sm:$0xff] %v4781
    %5038 = vst [vmem:[#allocation13 + $0x130] sm:$0xff] %v4782
    %5039 = vst [vmem:[#allocation13 + $0x138] sm:$0xff] %v4783
    %5040 = vst [vmem:[#allocation13 + $0x140] sm:$0xff] %v4784
    %5041 = vst [vmem:[#allocation13 + $0x148] sm:$0xff] %v4785
    %5042 = vst [vmem:[#allocation13 + $0x150] sm:$0xff] %v4786
    %5043 = vst [vmem:[#allocation13 + $0x158] sm:$0xff] %v4787
    %5044 = vst [vmem:[#allocation13 + $0x160] sm:$0xff] %v4788
    %5045 = vst [vmem:[#allocation13 + $0x168] sm:$0xff] %v4789
    %5046 = vst [vmem:[#allocation13 + $0x170] sm:$0xff] %v4790
    %5047 = vst [vmem:[#allocation13 + $0x178] sm:$0xff] %v4791
    %5048 = vst [vmem:[#allocation13 + $0x180] sm:$0xff] %v4792
    %5049 = vst [vmem:[#allocation13 + $0x188] sm:$0xff] %v4793
    %5050 = vst [vmem:[#allocation13 + $0x190] sm:$0xff] %v4794
    %5051 = vst [vmem:[#allocation13 + $0x198] sm:$0xff] %v4795
    %5052 = vst [vmem:[#allocation13 + $0x1a0] sm:$0xff] %v4796
    %5053 = vst [vmem:[#allocation13 + $0x1a8] sm:$0xff] %v4797
    %5054 = vst [vmem:[#allocation13 + $0x1b0] sm:$0xff] %v4798
    %5055 = vst [vmem:[#allocation13 + $0x1b8] sm:$0xff] %v4799
    %5056 = vst [vmem:[#allocation13 + $0x1c0] sm:$0xff] %v4800
    %5057 = vst [vmem:[#allocation13 + $0x1c8] sm:$0xff] %v4801
    %5058 = vst [vmem:[#allocation13 + $0x1d0] sm:$0xff] %v4802
    %5059 = vst [vmem:[#allocation13 + $0x1d8] sm:$0xff] %v4803
    %5060 = vst [vmem:[#allocation13 + $0x1e0] sm:$0xff] %v4804
    %5061 = vst [vmem:[#allocation13 + $0x1e8] sm:$0xff] %v4805
    %5062 = vst [vmem:[#allocation13 + $0x1f0] sm:$0xff] %v4806
    %5063 = vst [vmem:[#allocation13 + $0x1f8] sm:$0xff] %v4807
    %5064 = vst [vmem:[#allocation13 + $0x200] sm:$0xff] %v4808
    %5065 = vst [vmem:[#allocation13 + $0x208] sm:$0xff] %v4809
    %5066 = vst [vmem:[#allocation13 + $0x210] sm:$0xff] %v4810
    %5067 = vst [vmem:[#allocation13 + $0x218] sm:$0xff] %v4811
    %5068 = vst [vmem:[#allocation13 + $0x220] sm:$0xff] %v4812
    %5069 = vst [vmem:[#allocation13 + $0x228] sm:$0xff] %v4813
    %5070 = vst [vmem:[#allocation13 + $0x230] sm:$0xff] %v4814
    %5071 = vst [vmem:[#allocation13 + $0x238] sm:$0xff] %v4815
    %5072 = vst [vmem:[#allocation13 + $0x240] sm:$0xff] %v4816
    %5073 = vst [vmem:[#allocation13 + $0x248] sm:$0xff] %v4817
    %5074 = vst [vmem:[#allocation13 + $0x250] sm:$0xff] %v4818
    %5075 = vst [vmem:[#allocation13 + $0x258] sm:$0xff] %v4819
    %5076 = vst [vmem:[#allocation13 + $0x260] sm:$0xff] %v4820
    %5077 = vst [vmem:[#allocation13 + $0x268] sm:$0xff] %v4821
    %5078 = vst [vmem:[#allocation13 + $0x270] sm:$0xff] %v4822
    %5079 = vst [vmem:[#allocation13 + $0x278] sm:$0xff] %v4823
    %5080 = vst [vmem:[#allocation13 + $0x280] sm:$0xff] %v4824
    %5081 = vst [vmem:[#allocation13 + $0x288] sm:$0xff] %v4825
    %5082 = vst [vmem:[#allocation13 + $0x290] sm:$0xff] %v4826
    %5083 = vst [vmem:[#allocation13 + $0x298] sm:$0xff] %v4827
    %5084 = vst [vmem:[#allocation13 + $0x2a0] sm:$0xff] %v4828
    %5085 = vst [vmem:[#allocation13 + $0x2a8] sm:$0xff] %v4829
    %5086 = vst [vmem:[#allocation13 + $0x2b0] sm:$0xff] %v4830
    %5087 = vst [vmem:[#allocation13 + $0x2b8] sm:$0xff] %v4831
    %5088 = vst [vmem:[#allocation13 + $0x2c0] sm:$0xff] %v4832
    %5089 = vst [vmem:[#allocation13 + $0x2c8] sm:$0xff] %v4833
    %5090 = vst [vmem:[#allocation13 + $0x2d0] sm:$0xff] %v4834
    %5091 = vst [vmem:[#allocation13 + $0x2d8] sm:$0xff] %v4835
    %5092 = vst [vmem:[#allocation13 + $0x2e0] sm:$0xff] %v4836
    %5093 = vst [vmem:[#allocation13 + $0x2e8] sm:$0xff] %v4837
    %5094 = vst [vmem:[#allocation13 + $0x2f0] sm:$0xff] %v4838
    %5095 = vst [vmem:[#allocation13 + $0x2f8] sm:$0xff] %v4839
    %5096 = vst [vmem:[#allocation13 + $0x300] sm:$0xff] %v4840
    %5097 = vst [vmem:[#allocation13 + $0x308] sm:$0xff] %v4841
    %5098 = vst [vmem:[#allocation13 + $0x310] sm:$0xff] %v4842
    %5099 = vst [vmem:[#allocation13 + $0x318] sm:$0xff] %v4843
    %5100 = vst [vmem:[#allocation13 + $0x320] sm:$0xff] %v4844
    %5101 = vst [vmem:[#allocation13 + $0x328] sm:$0xff] %v4845
    %5102 = vst [vmem:[#allocation13 + $0x330] sm:$0xff] %v4846
    %5103 = vst [vmem:[#allocation13 + $0x338] sm:$0xff] %v4847
    %5104 = vst [vmem:[#allocation13 + $0x340] sm:$0xff] %v4848
    %5105 = vst [vmem:[#allocation13 + $0x348] sm:$0xff] %v4849
    %5106 = vst [vmem:[#allocation13 + $0x350] sm:$0xff] %v4850
    %5107 = vst [vmem:[#allocation13 + $0x358] sm:$0xff] %v4851
    %5108 = vst [vmem:[#allocation13 + $0x360] sm:$0xff] %v4852
    %5109 = vst [vmem:[#allocation13 + $0x368] sm:$0xff] %v4853
    %5110 = vst [vmem:[#allocation13 + $0x370] sm:$0xff] %v4854
    %5111 = vst [vmem:[#allocation13 + $0x378] sm:$0xff] %v4855
    %5112 = vst [vmem:[#allocation13 + $0x380] sm:$0xff] %v4856
    %5113 = vst [vmem:[#allocation13 + $0x388] sm:$0xff] %v4857
    %5114 = vst [vmem:[#allocation13 + $0x390] sm:$0xff] %v4858
    %5115 = vst [vmem:[#allocation13 + $0x398] sm:$0xff] %v4859
    %5116 = vst [vmem:[#allocation13 + $0x3a0] sm:$0xff] %v4860
    %5117 = vst [vmem:[#allocation13 + $0x3a8] sm:$0xff] %v4861
    %5118 = vst [vmem:[#allocation13 + $0x3b0] sm:$0xff] %v4862
    %5119 = vst [vmem:[#allocation13 + $0x3b8] sm:$0xff] %v4863
    %5120 = vst [vmem:[#allocation13 + $0x3c0] sm:$0xff] %v4864
    %5121 = vst [vmem:[#allocation13 + $0x3c8] sm:$0xff] %v4865
    %5122 = vst [vmem:[#allocation13 + $0x3d0] sm:$0xff] %v4866
    %5123 = vst [vmem:[#allocation13 + $0x3d8] sm:$0xff] %v4867
    %5124 = vst [vmem:[#allocation13 + $0x3e0] sm:$0xff] %v4868
    %5125 = vst [vmem:[#allocation13 + $0x3e8] sm:$0xff] %v4869
    %5126 = vst [vmem:[#allocation13 + $0x3f0] sm:$0xff] %v4870
    %5127 = vst [vmem:[#allocation13 + $0x3f8] sm:$0xff] %v4871
    %5128 = vst [vmem:[#allocation13 + $0x400] sm:$0xff] %v4872
    %5129 = vst [vmem:[#allocation13 + $0x408] sm:$0xff] %v4873
    %5130 = vst [vmem:[#allocation13 + $0x410] sm:$0xff] %v4874
    %5131 = vst [vmem:[#allocation13 + $0x418] sm:$0xff] %v4875
    %5132 = vst [vmem:[#allocation13 + $0x420] sm:$0xff] %v4876
    %5133 = vst [vmem:[#allocation13 + $0x428] sm:$0xff] %v4877
    %5134 = vst [vmem:[#allocation13 + $0x430] sm:$0xff] %v4878
    %5135 = vst [vmem:[#allocation13 + $0x438] sm:$0xff] %v4879
    %5136 = vst [vmem:[#allocation13 + $0x440] sm:$0xff] %v4880
    %5137 = vst [vmem:[#allocation13 + $0x448] sm:$0xff] %v4881
    %5138 = vst [vmem:[#allocation13 + $0x450] sm:$0xff] %v4882
    %5139 = vst [vmem:[#allocation13 + $0x458] sm:$0xff] %v4883
    %5140 = vst [vmem:[#allocation13 + $0x460] sm:$0xff] %v4884
    %5141 = vst [vmem:[#allocation13 + $0x468] sm:$0xff] %v4885
    %5142 = vst [vmem:[#allocation13 + $0x470] sm:$0xff] %v4886
    %5143 = vst [vmem:[#allocation13 + $0x478] sm:$0xff] %v4887
    %5144 = vst [vmem:[#allocation13 + $0x480] sm:$0xff] %v4888
    %5145 = vst [vmem:[#allocation13 + $0x488] sm:$0xff] %v4889
    %5146 = vst [vmem:[#allocation13 + $0x490] sm:$0xff] %v4890
    %5147 = vst [vmem:[#allocation13 + $0x498] sm:$0xff] %v4891
    %5148 = vst [vmem:[#allocation13 + $0x4a0] sm:$0xff] %v4892
    %5149 = vst [vmem:[#allocation13 + $0x4a8] sm:$0xff] %v4893
    %5150 = vst [vmem:[#allocation13 + $0x4b0] sm:$0xff] %v4894
    %5151 = vst [vmem:[#allocation13 + $0x4b8] sm:$0xff] %v4895
    %5152 = vst [vmem:[#allocation13 + $0x4c0] sm:$0xff] %v4896
    %5153 = vst [vmem:[#allocation13 + $0x4c8] sm:$0xff] %v4897
    %5154 = vst [vmem:[#allocation13 + $0x4d0] sm:$0xff] %v4898
    %5155 = vst [vmem:[#allocation13 + $0x4d8] sm:$0xff] %v4899
    %5156 = vst [vmem:[#allocation13 + $0x4e0] sm:$0xff] %v4900
    %5157 = vst [vmem:[#allocation13 + $0x4e8] sm:$0xff] %v4901
    %5158 = vst [vmem:[#allocation13 + $0x4f0] sm:$0xff] %v4902
    %5159 = vst [vmem:[#allocation13 + $0x4f8] sm:$0xff] %v4903
    %5160 = vst [vmem:[#allocation13 + $0x500] sm:$0xff] %v4904
    %5161 = vst [vmem:[#allocation13 + $0x508] sm:$0xff] %v4905
    %5162 = vst [vmem:[#allocation13 + $0x510] sm:$0xff] %v4906
    %5163 = vst [vmem:[#allocation13 + $0x518] sm:$0xff] %v4907
    %5164 = vst [vmem:[#allocation13 + $0x520] sm:$0xff] %v4908
    %5165 = vst [vmem:[#allocation13 + $0x528] sm:$0xff] %v4909
    %5166 = vst [vmem:[#allocation13 + $0x530] sm:$0xff] %v4910
    %5167 = vst [vmem:[#allocation13 + $0x538] sm:$0xff] %v4911
    %5168 = vst [vmem:[#allocation13 + $0x540] sm:$0xff] %v4912
    %5169 = vst [vmem:[#allocation13 + $0x548] sm:$0xff] %v4913
    %5170 = vst [vmem:[#allocation13 + $0x550] sm:$0xff] %v4914
    %5171 = vst [vmem:[#allocation13 + $0x558] sm:$0xff] %v4915
    %5172 = vst [vmem:[#allocation13 + $0x560] sm:$0xff] %v4916
    %5173 = vst [vmem:[#allocation13 + $0x568] sm:$0xff] %v4917
    %5174 = vst [vmem:[#allocation13 + $0x570] sm:$0xff] %v4918
    %5175 = vst [vmem:[#allocation13 + $0x578] sm:$0xff] %v4919
    %5176 = vst [vmem:[#allocation13 + $0x580] sm:$0xff] %v4920
    %5177 = vst [vmem:[#allocation13 + $0x588] sm:$0xff] %v4921
    %5178 = vst [vmem:[#allocation13 + $0x590] sm:$0xff] %v4922
    %5179 = vst [vmem:[#allocation13 + $0x598] sm:$0xff] %v4923
    %5180 = vst [vmem:[#allocation13 + $0x5a0] sm:$0xff] %v4924
    %5181 = vst [vmem:[#allocation13 + $0x5a8] sm:$0xff] %v4925
    %5182 = vst [vmem:[#allocation13 + $0x5b0] sm:$0xff] %v4926
    %5183 = vst [vmem:[#allocation13 + $0x5b8] sm:$0xff] %v4927
    %5184 = vst [vmem:[#allocation13 + $0x5c0] sm:$0xff] %v4928
    %5185 = vst [vmem:[#allocation13 + $0x5c8] sm:$0xff] %v4929
    %5186 = vst [vmem:[#allocation13 + $0x5d0] sm:$0xff] %v4930
    %5187 = vst [vmem:[#allocation13 + $0x5d8] sm:$0xff] %v4931
    %5188 = vst [vmem:[#allocation13 + $0x5e0] sm:$0xff] %v4932
    %5189 = vst [vmem:[#allocation13 + $0x5e8] sm:$0xff] %v4933
    %5190 = vst [vmem:[#allocation13 + $0x5f0] sm:$0xff] %v4934
    %5191 = vst [vmem:[#allocation13 + $0x5f8] sm:$0xff] %v4935
    %5192 = vst [vmem:[#allocation13 + $0x600] sm:$0xff] %v4936
    %5193 = vst [vmem:[#allocation13 + $0x608] sm:$0xff] %v4937
    %5194 = vst [vmem:[#allocation13 + $0x610] sm:$0xff] %v4938
    %5195 = vst [vmem:[#allocation13 + $0x618] sm:$0xff] %v4939
    %5196 = vst [vmem:[#allocation13 + $0x620] sm:$0xff] %v4940
    %5197 = vst [vmem:[#allocation13 + $0x628] sm:$0xff] %v4941
    %5198 = vst [vmem:[#allocation13 + $0x630] sm:$0xff] %v4942
    %5199 = vst [vmem:[#allocation13 + $0x638] sm:$0xff] %v4943
    %5200 = vst [vmem:[#allocation13 + $0x640] sm:$0xff] %v4944
    %5201 = vst [vmem:[#allocation13 + $0x648] sm:$0xff] %v4945
    %5202 = vst [vmem:[#allocation13 + $0x650] sm:$0xff] %v4946
    %5203 = vst [vmem:[#allocation13 + $0x658] sm:$0xff] %v4947
    %5204 = vst [vmem:[#allocation13 + $0x660] sm:$0xff] %v4948
    %5205 = vst [vmem:[#allocation13 + $0x668] sm:$0xff] %v4949
    %5206 = vst [vmem:[#allocation13 + $0x670] sm:$0xff] %v4950
    %5207 = vst [vmem:[#allocation13 + $0x678] sm:$0xff] %v4951
    %5208 = vst [vmem:[#allocation13 + $0x680] sm:$0xff] %v4952
    %5209 = vst [vmem:[#allocation13 + $0x688] sm:$0xff] %v4953
    %5210 = vst [vmem:[#allocation13 + $0x690] sm:$0xff] %v4954
    %5211 = vst [vmem:[#allocation13 + $0x698] sm:$0xff] %v4955
    %5212 = vst [vmem:[#allocation13 + $0x6a0] sm:$0xff] %v4956
    %5213 = vst [vmem:[#allocation13 + $0x6a8] sm:$0xff] %v4957
    %5214 = vst [vmem:[#allocation13 + $0x6b0] sm:$0xff] %v4958
    %5215 = vst [vmem:[#allocation13 + $0x6b8] sm:$0xff] %v4959
    %5216 = vst [vmem:[#allocation13 + $0x6c0] sm:$0xff] %v4960
    %5217 = vst [vmem:[#allocation13 + $0x6c8] sm:$0xff] %v4961
    %5218 = vst [vmem:[#allocation13 + $0x6d0] sm:$0xff] %v4962
    %5219 = vst [vmem:[#allocation13 + $0x6d8] sm:$0xff] %v4963
    %5220 = vst [vmem:[#allocation13 + $0x6e0] sm:$0xff] %v4964
    %5221 = vst [vmem:[#allocation13 + $0x6e8] sm:$0xff] %v4965
    %5222 = vst [vmem:[#allocation13 + $0x6f0] sm:$0xff] %v4966
    %5223 = vst [vmem:[#allocation13 + $0x6f8] sm:$0xff] %v4967
    %5224 = vst [vmem:[#allocation13 + $0x700] sm:$0xff] %v4968
    %5225 = vst [vmem:[#allocation13 + $0x708] sm:$0xff] %v4969
    %5226 = vst [vmem:[#allocation13 + $0x710] sm:$0xff] %v4970
    %5227 = vst [vmem:[#allocation13 + $0x718] sm:$0xff] %v4971
    %5228 = vst [vmem:[#allocation13 + $0x720] sm:$0xff] %v4972
    %5229 = vst [vmem:[#allocation13 + $0x728] sm:$0xff] %v4973
    %5230 = vst [vmem:[#allocation13 + $0x730] sm:$0xff] %v4974
    %5231 = vst [vmem:[#allocation13 + $0x738] sm:$0xff] %v4975
    %5232 = vst [vmem:[#allocation13 + $0x740] sm:$0xff] %v4976
    %5233 = vst [vmem:[#allocation13 + $0x748] sm:$0xff] %v4977
    %5234 = vst [vmem:[#allocation13 + $0x750] sm:$0xff] %v4978
    %5235 = vst [vmem:[#allocation13 + $0x758] sm:$0xff] %v4979
    %5236 = vst [vmem:[#allocation13 + $0x760] sm:$0xff] %v4980
    %5237 = vst [vmem:[#allocation13 + $0x768] sm:$0xff] %v4981
    %5238 = vst [vmem:[#allocation13 + $0x770] sm:$0xff] %v4982
    %5239 = vst [vmem:[#allocation13 + $0x778] sm:$0xff] %v4983
    %5240 = vst [vmem:[#allocation13 + $0x780] sm:$0xff] %v4984
    %5241 = vst [vmem:[#allocation13 + $0x788] sm:$0xff] %v4985
    %5242 = vst [vmem:[#allocation13 + $0x790] sm:$0xff] %v4986
    %5243 = vst [vmem:[#allocation13 + $0x798] sm:$0xff] %v4987
    %5244 = vst [vmem:[#allocation13 + $0x7a0] sm:$0xff] %v4988
    %5245 = vst [vmem:[#allocation13 + $0x7a8] sm:$0xff] %v4989
    %5246 = vst [vmem:[#allocation13 + $0x7b0] sm:$0xff] %v4990
    %5247 = vst [vmem:[#allocation13 + $0x7b8] sm:$0xff] %v4991
    %5248 = vst [vmem:[#allocation13 + $0x7c0] sm:$0xff] %v4992
    %5249 = vst [vmem:[#allocation13 + $0x7c8] sm:$0xff] %v4993
    %5250 = vst [vmem:[#allocation13 + $0x7d0] sm:$0xff] %v4994
    %5251 = vst [vmem:[#allocation13 + $0x7d8] sm:$0xff] %v4995
    %5252 = vst [vmem:[#allocation13 + $0x7e0] sm:$0xff] %v4996
    %5253 = vst [vmem:[#allocation13 + $0x7e8] sm:$0xff] %v4997
    %5254 = vst [vmem:[#allocation13 + $0x7f0] sm:$0xff] %v4998
    %5255 = vst [vmem:[#allocation13 + $0x7f8] sm:$0xff] %v4999
    %v5256 = vld [vmem:[#allocation8] sm:$0xff]
    %v5257 = vld [vmem:[#allocation8 + $0x8] sm:$0xff]
    %v5258 = vld [vmem:[#allocation8 + $0x10] sm:$0xff]
    %v5259 = vld [vmem:[#allocation8 + $0x18] sm:$0xff]
    %v5260 = vld [vmem:[#allocation8 + $0x20] sm:$0xff]
    %v5261 = vld [vmem:[#allocation8 + $0x28] sm:$0xff]
    %v5262 = vld [vmem:[#allocation8 + $0x30] sm:$0xff]
    %v5263 = vld [vmem:[#allocation8 + $0x38] sm:$0xff]
    %v5264 = vld [vmem:[#allocation8 + $0x40] sm:$0xff]
    %v5265 = vld [vmem:[#allocation8 + $0x48] sm:$0xff]
    %v5266 = vld [vmem:[#allocation8 + $0x50] sm:$0xff]
    %v5267 = vld [vmem:[#allocation8 + $0x58] sm:$0xff]
    %v5268 = vld [vmem:[#allocation8 + $0x60] sm:$0xff]
    %v5269 = vld [vmem:[#allocation8 + $0x68] sm:$0xff]
    %v5270 = vld [vmem:[#allocation8 + $0x70] sm:$0xff]
    %v5271 = vld [vmem:[#allocation8 + $0x78] sm:$0xff]
    %v5272 = vld [vmem:[#allocation8 + $0x80] sm:$0xff]
    %v5273 = vld [vmem:[#allocation8 + $0x88] sm:$0xff]
    %v5274 = vld [vmem:[#allocation8 + $0x90] sm:$0xff]
    %v5275 = vld [vmem:[#allocation8 + $0x98] sm:$0xff]
    %v5276 = vld [vmem:[#allocation8 + $0xa0] sm:$0xff]
    %v5277 = vld [vmem:[#allocation8 + $0xa8] sm:$0xff]
    %v5278 = vld [vmem:[#allocation8 + $0xb0] sm:$0xff]
    %v5279 = vld [vmem:[#allocation8 + $0xb8] sm:$0xff]
    %v5280 = vld [vmem:[#allocation8 + $0xc0] sm:$0xff]
    %v5281 = vld [vmem:[#allocation8 + $0xc8] sm:$0xff]
    %v5282 = vld [vmem:[#allocation8 + $0xd0] sm:$0xff]
    %v5283 = vld [vmem:[#allocation8 + $0xd8] sm:$0xff]
    %v5284 = vld [vmem:[#allocation8 + $0xe0] sm:$0xff]
    %v5285 = vld [vmem:[#allocation8 + $0xe8] sm:$0xff]
    %v5286 = vld [vmem:[#allocation8 + $0xf0] sm:$0xff]
    %v5287 = vld [vmem:[#allocation8 + $0xf8] sm:$0xff]
    %v5288 = vld [vmem:[#allocation8 + $0x100] sm:$0xff]
    %v5289 = vld [vmem:[#allocation8 + $0x108] sm:$0xff]
    %v5290 = vld [vmem:[#allocation8 + $0x110] sm:$0xff]
    %v5291 = vld [vmem:[#allocation8 + $0x118] sm:$0xff]
    %v5292 = vld [vmem:[#allocation8 + $0x120] sm:$0xff]
    %v5293 = vld [vmem:[#allocation8 + $0x128] sm:$0xff]
    %v5294 = vld [vmem:[#allocation8 + $0x130] sm:$0xff]
    %v5295 = vld [vmem:[#allocation8 + $0x138] sm:$0xff]
    %v5296 = vld [vmem:[#allocation8 + $0x140] sm:$0xff]
    %v5297 = vld [vmem:[#allocation8 + $0x148] sm:$0xff]
    %v5298 = vld [vmem:[#allocation8 + $0x150] sm:$0xff]
    %v5299 = vld [vmem:[#allocation8 + $0x158] sm:$0xff]
    %v5300 = vld [vmem:[#allocation8 + $0x160] sm:$0xff]
    %v5301 = vld [vmem:[#allocation8 + $0x168] sm:$0xff]
    %v5302 = vld [vmem:[#allocation8 + $0x170] sm:$0xff]
    %v5303 = vld [vmem:[#allocation8 + $0x178] sm:$0xff]
    %v5304 = vld [vmem:[#allocation8 + $0x180] sm:$0xff]
    %v5305 = vld [vmem:[#allocation8 + $0x188] sm:$0xff]
    %v5306 = vld [vmem:[#allocation8 + $0x190] sm:$0xff]
    %v5307 = vld [vmem:[#allocation8 + $0x198] sm:$0xff]
    %v5308 = vld [vmem:[#allocation8 + $0x1a0] sm:$0xff]
    %v5309 = vld [vmem:[#allocation8 + $0x1a8] sm:$0xff]
    %v5310 = vld [vmem:[#allocation8 + $0x1b0] sm:$0xff]
    %v5311 = vld [vmem:[#allocation8 + $0x1b8] sm:$0xff]
    %v5312 = vld [vmem:[#allocation8 + $0x1c0] sm:$0xff]
    %v5313 = vld [vmem:[#allocation8 + $0x1c8] sm:$0xff]
    %v5314 = vld [vmem:[#allocation8 + $0x1d0] sm:$0xff]
    %v5315 = vld [vmem:[#allocation8 + $0x1d8] sm:$0xff]
    %v5316 = vld [vmem:[#allocation8 + $0x1e0] sm:$0xff]
    %v5317 = vld [vmem:[#allocation8 + $0x1e8] sm:$0xff]
    %v5318 = vld [vmem:[#allocation8 + $0x1f0] sm:$0xff]
    %v5319 = vld [vmem:[#allocation8 + $0x1f8] sm:$0xff]
    %v5320 = vld [vmem:[#allocation8 + $0x200] sm:$0xff]
    %v5321 = vld [vmem:[#allocation8 + $0x208] sm:$0xff]
    %v5322 = vld [vmem:[#allocation8 + $0x210] sm:$0xff]
    %v5323 = vld [vmem:[#allocation8 + $0x218] sm:$0xff]
    %v5324 = vld [vmem:[#allocation8 + $0x220] sm:$0xff]
    %v5325 = vld [vmem:[#allocation8 + $0x228] sm:$0xff]
    %v5326 = vld [vmem:[#allocation8 + $0x230] sm:$0xff]
    %v5327 = vld [vmem:[#allocation8 + $0x238] sm:$0xff]
    %v5328 = vld [vmem:[#allocation8 + $0x240] sm:$0xff]
    %v5329 = vld [vmem:[#allocation8 + $0x248] sm:$0xff]
    %v5330 = vld [vmem:[#allocation8 + $0x250] sm:$0xff]
    %v5331 = vld [vmem:[#allocation8 + $0x258] sm:$0xff]
    %v5332 = vld [vmem:[#allocation8 + $0x260] sm:$0xff]
    %v5333 = vld [vmem:[#allocation8 + $0x268] sm:$0xff]
    %v5334 = vld [vmem:[#allocation8 + $0x270] sm:$0xff]
    %v5335 = vld [vmem:[#allocation8 + $0x278] sm:$0xff]
    %v5336 = vld [vmem:[#allocation8 + $0x280] sm:$0xff]
    %v5337 = vld [vmem:[#allocation8 + $0x288] sm:$0xff]
    %v5338 = vld [vmem:[#allocation8 + $0x290] sm:$0xff]
    %v5339 = vld [vmem:[#allocation8 + $0x298] sm:$0xff]
    %v5340 = vld [vmem:[#allocation8 + $0x2a0] sm:$0xff]
    %v5341 = vld [vmem:[#allocation8 + $0x2a8] sm:$0xff]
    %v5342 = vld [vmem:[#allocation8 + $0x2b0] sm:$0xff]
    %v5343 = vld [vmem:[#allocation8 + $0x2b8] sm:$0xff]
    %v5344 = vld [vmem:[#allocation8 + $0x2c0] sm:$0xff]
    %v5345 = vld [vmem:[#allocation8 + $0x2c8] sm:$0xff]
    %v5346 = vld [vmem:[#allocation8 + $0x2d0] sm:$0xff]
    %v5347 = vld [vmem:[#allocation8 + $0x2d8] sm:$0xff]
    %v5348 = vld [vmem:[#allocation8 + $0x2e0] sm:$0xff]
    %v5349 = vld [vmem:[#allocation8 + $0x2e8] sm:$0xff]
    %v5350 = vld [vmem:[#allocation8 + $0x2f0] sm:$0xff]
    %v5351 = vld [vmem:[#allocation8 + $0x2f8] sm:$0xff]
    %v5352 = vld [vmem:[#allocation8 + $0x300] sm:$0xff]
    %v5353 = vld [vmem:[#allocation8 + $0x308] sm:$0xff]
    %v5354 = vld [vmem:[#allocation8 + $0x310] sm:$0xff]
    %v5355 = vld [vmem:[#allocation8 + $0x318] sm:$0xff]
    %v5356 = vld [vmem:[#allocation8 + $0x320] sm:$0xff]
    %v5357 = vld [vmem:[#allocation8 + $0x328] sm:$0xff]
    %v5358 = vld [vmem:[#allocation8 + $0x330] sm:$0xff]
    %v5359 = vld [vmem:[#allocation8 + $0x338] sm:$0xff]
    %v5360 = vld [vmem:[#allocation8 + $0x340] sm:$0xff]
    %v5361 = vld [vmem:[#allocation8 + $0x348] sm:$0xff]
    %v5362 = vld [vmem:[#allocation8 + $0x350] sm:$0xff]
    %v5363 = vld [vmem:[#allocation8 + $0x358] sm:$0xff]
    %v5364 = vld [vmem:[#allocation8 + $0x360] sm:$0xff]
    %v5365 = vld [vmem:[#allocation8 + $0x368] sm:$0xff]
    %v5366 = vld [vmem:[#allocation8 + $0x370] sm:$0xff]
    %v5367 = vld [vmem:[#allocation8 + $0x378] sm:$0xff]
    %v5368 = vld [vmem:[#allocation8 + $0x380] sm:$0xff]
    %v5369 = vld [vmem:[#allocation8 + $0x388] sm:$0xff]
    %v5370 = vld [vmem:[#allocation8 + $0x390] sm:$0xff]
    %v5371 = vld [vmem:[#allocation8 + $0x398] sm:$0xff]
    %v5372 = vld [vmem:[#allocation8 + $0x3a0] sm:$0xff]
    %v5373 = vld [vmem:[#allocation8 + $0x3a8] sm:$0xff]
    %v5374 = vld [vmem:[#allocation8 + $0x3b0] sm:$0xff]
    %v5375 = vld [vmem:[#allocation8 + $0x3b8] sm:$0xff]
    %v5376 = vld [vmem:[#allocation8 + $0x3c0] sm:$0xff]
    %v5377 = vld [vmem:[#allocation8 + $0x3c8] sm:$0xff]
    %v5378 = vld [vmem:[#allocation8 + $0x3d0] sm:$0xff]
    %v5379 = vld [vmem:[#allocation8 + $0x3d8] sm:$0xff]
    %v5380 = vld [vmem:[#allocation8 + $0x3e0] sm:$0xff]
    %v5381 = vld [vmem:[#allocation8 + $0x3e8] sm:$0xff]
    %v5382 = vld [vmem:[#allocation8 + $0x3f0] sm:$0xff]
    %v5383 = vld [vmem:[#allocation8 + $0x3f8] sm:$0xff]
    %v5384 = vld [vmem:[#allocation8 + $0x400] sm:$0xff]
    %v5385 = vld [vmem:[#allocation8 + $0x408] sm:$0xff]
    %v5386 = vld [vmem:[#allocation8 + $0x410] sm:$0xff]
    %v5387 = vld [vmem:[#allocation8 + $0x418] sm:$0xff]
    %v5388 = vld [vmem:[#allocation8 + $0x420] sm:$0xff]
    %v5389 = vld [vmem:[#allocation8 + $0x428] sm:$0xff]
    %v5390 = vld [vmem:[#allocation8 + $0x430] sm:$0xff]
    %v5391 = vld [vmem:[#allocation8 + $0x438] sm:$0xff]
    %v5392 = vld [vmem:[#allocation8 + $0x440] sm:$0xff]
    %v5393 = vld [vmem:[#allocation8 + $0x448] sm:$0xff]
    %v5394 = vld [vmem:[#allocation8 + $0x450] sm:$0xff]
    %v5395 = vld [vmem:[#allocation8 + $0x458] sm:$0xff]
    %v5396 = vld [vmem:[#allocation8 + $0x460] sm:$0xff]
    %v5397 = vld [vmem:[#allocation8 + $0x468] sm:$0xff]
    %v5398 = vld [vmem:[#allocation8 + $0x470] sm:$0xff]
    %v5399 = vld [vmem:[#allocation8 + $0x478] sm:$0xff]
    %v5400 = vld [vmem:[#allocation8 + $0x480] sm:$0xff]
    %v5401 = vld [vmem:[#allocation8 + $0x488] sm:$0xff]
    %v5402 = vld [vmem:[#allocation8 + $0x490] sm:$0xff]
    %v5403 = vld [vmem:[#allocation8 + $0x498] sm:$0xff]
    %v5404 = vld [vmem:[#allocation8 + $0x4a0] sm:$0xff]
    %v5405 = vld [vmem:[#allocation8 + $0x4a8] sm:$0xff]
    %v5406 = vld [vmem:[#allocation8 + $0x4b0] sm:$0xff]
    %v5407 = vld [vmem:[#allocation8 + $0x4b8] sm:$0xff]
    %v5408 = vld [vmem:[#allocation8 + $0x4c0] sm:$0xff]
    %v5409 = vld [vmem:[#allocation8 + $0x4c8] sm:$0xff]
    %v5410 = vld [vmem:[#allocation8 + $0x4d0] sm:$0xff]
    %v5411 = vld [vmem:[#allocation8 + $0x4d8] sm:$0xff]
    %v5412 = vld [vmem:[#allocation8 + $0x4e0] sm:$0xff]
    %v5413 = vld [vmem:[#allocation8 + $0x4e8] sm:$0xff]
    %v5414 = vld [vmem:[#allocation8 + $0x4f0] sm:$0xff]
    %v5415 = vld [vmem:[#allocation8 + $0x4f8] sm:$0xff]
    %v5416 = vld [vmem:[#allocation8 + $0x500] sm:$0xff]
    %v5417 = vld [vmem:[#allocation8 + $0x508] sm:$0xff]
    %v5418 = vld [vmem:[#allocation8 + $0x510] sm:$0xff]
    %v5419 = vld [vmem:[#allocation8 + $0x518] sm:$0xff]
    %v5420 = vld [vmem:[#allocation8 + $0x520] sm:$0xff]
    %v5421 = vld [vmem:[#allocation8 + $0x528] sm:$0xff]
    %v5422 = vld [vmem:[#allocation8 + $0x530] sm:$0xff]
    %v5423 = vld [vmem:[#allocation8 + $0x538] sm:$0xff]
    %v5424 = vld [vmem:[#allocation8 + $0x540] sm:$0xff]
    %v5425 = vld [vmem:[#allocation8 + $0x548] sm:$0xff]
    %v5426 = vld [vmem:[#allocation8 + $0x550] sm:$0xff]
    %v5427 = vld [vmem:[#allocation8 + $0x558] sm:$0xff]
    %v5428 = vld [vmem:[#allocation8 + $0x560] sm:$0xff]
    %v5429 = vld [vmem:[#allocation8 + $0x568] sm:$0xff]
    %v5430 = vld [vmem:[#allocation8 + $0x570] sm:$0xff]
    %v5431 = vld [vmem:[#allocation8 + $0x578] sm:$0xff]
    %v5432 = vld [vmem:[#allocation8 + $0x580] sm:$0xff]
    %v5433 = vld [vmem:[#allocation8 + $0x588] sm:$0xff]
    %v5434 = vld [vmem:[#allocation8 + $0x590] sm:$0xff]
    %v5435 = vld [vmem:[#allocation8 + $0x598] sm:$0xff]
    %v5436 = vld [vmem:[#allocation8 + $0x5a0] sm:$0xff]
    %v5437 = vld [vmem:[#allocation8 + $0x5a8] sm:$0xff]
    %v5438 = vld [vmem:[#allocation8 + $0x5b0] sm:$0xff]
    %v5439 = vld [vmem:[#allocation8 + $0x5b8] sm:$0xff]
    %v5440 = vld [vmem:[#allocation8 + $0x5c0] sm:$0xff]
    %v5441 = vld [vmem:[#allocation8 + $0x5c8] sm:$0xff]
    %v5442 = vld [vmem:[#allocation8 + $0x5d0] sm:$0xff]
    %v5443 = vld [vmem:[#allocation8 + $0x5d8] sm:$0xff]
    %v5444 = vld [vmem:[#allocation8 + $0x5e0] sm:$0xff]
    %v5445 = vld [vmem:[#allocation8 + $0x5e8] sm:$0xff]
    %v5446 = vld [vmem:[#allocation8 + $0x5f0] sm:$0xff]
    %v5447 = vld [vmem:[#allocation8 + $0x5f8] sm:$0xff]
    %v5448 = vld [vmem:[#allocation8 + $0x600] sm:$0xff]
    %v5449 = vld [vmem:[#allocation8 + $0x608] sm:$0xff]
    %v5450 = vld [vmem:[#allocation8 + $0x610] sm:$0xff]
    %v5451 = vld [vmem:[#allocation8 + $0x618] sm:$0xff]
    %v5452 = vld [vmem:[#allocation8 + $0x620] sm:$0xff]
    %v5453 = vld [vmem:[#allocation8 + $0x628] sm:$0xff]
    %v5454 = vld [vmem:[#allocation8 + $0x630] sm:$0xff]
    %v5455 = vld [vmem:[#allocation8 + $0x638] sm:$0xff]
    %v5456 = vld [vmem:[#allocation8 + $0x640] sm:$0xff]
    %v5457 = vld [vmem:[#allocation8 + $0x648] sm:$0xff]
    %v5458 = vld [vmem:[#allocation8 + $0x650] sm:$0xff]
    %v5459 = vld [vmem:[#allocation8 + $0x658] sm:$0xff]
    %v5460 = vld [vmem:[#allocation8 + $0x660] sm:$0xff]
    %v5461 = vld [vmem:[#allocation8 + $0x668] sm:$0xff]
    %v5462 = vld [vmem:[#allocation8 + $0x670] sm:$0xff]
    %v5463 = vld [vmem:[#allocation8 + $0x678] sm:$0xff]
    %v5464 = vld [vmem:[#allocation8 + $0x680] sm:$0xff]
    %v5465 = vld [vmem:[#allocation8 + $0x688] sm:$0xff]
    %v5466 = vld [vmem:[#allocation8 + $0x690] sm:$0xff]
    %v5467 = vld [vmem:[#allocation8 + $0x698] sm:$0xff]
    %v5468 = vld [vmem:[#allocation8 + $0x6a0] sm:$0xff]
    %v5469 = vld [vmem:[#allocation8 + $0x6a8] sm:$0xff]
    %v5470 = vld [vmem:[#allocation8 + $0x6b0] sm:$0xff]
    %v5471 = vld [vmem:[#allocation8 + $0x6b8] sm:$0xff]
    %v5472 = vld [vmem:[#allocation8 + $0x6c0] sm:$0xff]
    %v5473 = vld [vmem:[#allocation8 + $0x6c8] sm:$0xff]
    %v5474 = vld [vmem:[#allocation8 + $0x6d0] sm:$0xff]
    %v5475 = vld [vmem:[#allocation8 + $0x6d8] sm:$0xff]
    %v5476 = vld [vmem:[#allocation8 + $0x6e0] sm:$0xff]
    %v5477 = vld [vmem:[#allocation8 + $0x6e8] sm:$0xff]
    %v5478 = vld [vmem:[#allocation8 + $0x6f0] sm:$0xff]
    %v5479 = vld [vmem:[#allocation8 + $0x6f8] sm:$0xff]
    %v5480 = vld [vmem:[#allocation8 + $0x700] sm:$0xff]
    %v5481 = vld [vmem:[#allocation8 + $0x708] sm:$0xff]
    %v5482 = vld [vmem:[#allocation8 + $0x710] sm:$0xff]
    %v5483 = vld [vmem:[#allocation8 + $0x718] sm:$0xff]
    %v5484 = vld [vmem:[#allocation8 + $0x720] sm:$0xff]
    %v5485 = vld [vmem:[#allocation8 + $0x728] sm:$0xff]
    %v5486 = vld [vmem:[#allocation8 + $0x730] sm:$0xff]
    %v5487 = vld [vmem:[#allocation8 + $0x738] sm:$0xff]
    %v5488 = vld [vmem:[#allocation8 + $0x740] sm:$0xff]
    %v5489 = vld [vmem:[#allocation8 + $0x748] sm:$0xff]
    %v5490 = vld [vmem:[#allocation8 + $0x750] sm:$0xff]
    %v5491 = vld [vmem:[#allocation8 + $0x758] sm:$0xff]
    %v5492 = vld [vmem:[#allocation8 + $0x760] sm:$0xff]
    %v5493 = vld [vmem:[#allocation8 + $0x768] sm:$0xff]
    %v5494 = vld [vmem:[#allocation8 + $0x770] sm:$0xff]
    %v5495 = vld [vmem:[#allocation8 + $0x778] sm:$0xff]
    %v5496 = vld [vmem:[#allocation8 + $0x780] sm:$0xff]
    %v5497 = vld [vmem:[#allocation8 + $0x788] sm:$0xff]
    %v5498 = vld [vmem:[#allocation8 + $0x790] sm:$0xff]
    %v5499 = vld [vmem:[#allocation8 + $0x798] sm:$0xff]
    %v5500 = vld [vmem:[#allocation8 + $0x7a0] sm:$0xff]
    %v5501 = vld [vmem:[#allocation8 + $0x7a8] sm:$0xff]
    %v5502 = vld [vmem:[#allocation8 + $0x7b0] sm:$0xff]
    %v5503 = vld [vmem:[#allocation8 + $0x7b8] sm:$0xff]
    %v5504 = vld [vmem:[#allocation8 + $0x7c0] sm:$0xff]
    %v5505 = vld [vmem:[#allocation8 + $0x7c8] sm:$0xff]
    %v5506 = vld [vmem:[#allocation8 + $0x7d0] sm:$0xff]
    %v5507 = vld [vmem:[#allocation8 + $0x7d8] sm:$0xff]
    %v5508 = vld [vmem:[#allocation8 + $0x7e0] sm:$0xff]
    %v5509 = vld [vmem:[#allocation8 + $0x7e8] sm:$0xff]
    %v5510 = vld [vmem:[#allocation8 + $0x7f0] sm:$0xff]
    %v5511 = vld [vmem:[#allocation8 + $0x7f8] sm:$0xff]
    %v5512 = vld [vmem:[#allocation10] sm:$0xf]
    %v5514 = vlaneseq
    %v5515 = vshrl.u32 %v5514, 7
    %v5516 = vsub.s32 0, %v5515
    %v5517 = vrot.slane %v5512, %v5516
    %v5518 = vlaneseq
    %v5519 = vshrl.u32 %v5518, 7
    %v5520 = vsub.s32 1, %v5519
    %v5521 = vrot.slane %v5512, %v5520
    %v5522 = vlaneseq
    %v5523 = vshrl.u32 %v5522, 7
    %v5524 = vsub.s32 2, %v5523
    %v5525 = vrot.slane %v5512, %v5524
    %v5526 = vlaneseq
    %v5527 = vshrl.u32 %v5526, 7
    %v5528 = vsub.s32 3, %v5527
    %v5529 = vrot.slane %v5512, %v5528
    %5534 = vmatprep.subr.mxu0 %v5317
    %5535 = vmatpush1.msra.mxu0 %v5316
    %5536 = vmatprep.subr.mxu0 %v5313
    %5537 = vmatpush1.msra.mxu0 %v5312
    %5538 = vmatprep.subr.mxu0 %v5309
    %5539 = vmatpush1.msra.mxu0 %v5308
    %5540 = vmatprep.subr.mxu0 %v5305
    %5541 = vmatpush1.msra.mxu0 %v5304
    %5542 = vmatprep.subr.mxu0 %v5301
    %5543 = vmatpush1.msra.mxu0 %v5300
    %5544 = vmatprep.subr.mxu0 %v5297
    %5545 = vmatpush1.msra.mxu0 %v5296
    %5546 = vmatprep.subr.mxu0 %v5293
    %5547 = vmatpush1.msra.mxu0 %v5292
    %5548 = vmatprep.subr.mxu0 %v5289
    %5549 = vmatpush1.msra.mxu0 %v5288
    %5550 = vmatprep.subr.mxu0 %v5285
    %5551 = vmatpush1.msra.mxu0 %v5284
    %5552 = vmatprep.subr.mxu0 %v5281
    %5553 = vmatpush1.msra.mxu0 %v5280
    %5554 = vmatprep.subr.mxu0 %v5277
    %5555 = vmatpush1.msra.mxu0 %v5276
    %5556 = vmatprep.subr.mxu0 %v5273
    %5557 = vmatpush1.msra.mxu0 %v5272
    %5558 = vmatprep.subr.mxu0 %v5269
    %5559 = vmatpush1.msra.mxu0 %v5268
    %5560 = vmatprep.subr.mxu0 %v5265
    %5561 = vmatpush1.msra.mxu0 %v5264
    %5562 = vmatprep.subr.mxu0 %v5261
    %5563 = vmatpush1.msra.mxu0 %v5260
    %5564 = vmatprep.subr.mxu0 %v5257
    %5565 = vmatpush1.msra.mxu0 %v5256
    %5566 = vmatprep.subr.mxu0 %v5381
    %5567 = vmatpush2.msra.mxu0 %v5380
    %5568 = vmatprep.subr.mxu0 %v5377
    %5569 = vmatpush2.msra.mxu0 %v5376
    %5570 = vmatprep.subr.mxu0 %v5373
    %5571 = vmatpush2.msra.mxu0 %v5372
    %5572 = vmatprep.subr.mxu0 %v5369
    %5573 = vmatpush2.msra.mxu0 %v5368
    %5574 = vmatprep.subr.mxu0 %v5365
    %5575 = vmatpush2.msra.mxu0 %v5364
    %5576 = vmatprep.subr.mxu0 %v5361
    %5577 = vmatpush2.msra.mxu0 %v5360
    %5578 = vmatprep.subr.mxu0 %v5357
    %5579 = vmatpush2.msra.mxu0 %v5356
    %5580 = vmatprep.subr.mxu0 %v5353
    %5581 = vmatpush2.msra.mxu0 %v5352
    %5582 = vmatprep.subr.mxu0 %v5349
    %5583 = vmatpush2.msra.mxu0 %v5348
    %5584 = vmatprep.subr.mxu0 %v5345
    %5585 = vmatpush2.msra.mxu0 %v5344
    %5586 = vmatprep.subr.mxu0 %v5341
    %5587 = vmatpush2.msra.mxu0 %v5340
    %5588 = vmatprep.subr.mxu0 %v5337
    %5589 = vmatpush2.msra.mxu0 %v5336
    %5590 = vmatprep.subr.mxu0 %v5333
    %5591 = vmatpush2.msra.mxu0 %v5332
    %5592 = vmatprep.subr.mxu0 %v5329
    %5593 = vmatpush2.msra.mxu0 %v5328
    %5594 = vmatprep.subr.mxu0 %v5325
    %5595 = vmatpush2.msra.mxu0 %v5324
    %5596 = vmatprep.subr.mxu0 %v5321
    %5597 = vmatpush2.msra.mxu0 %v5320
    %5598 = vmatprep.mubr.f32.mxu0 %v4745
    %5599 = vmatmul.mubr.f32.gmra.mxu0 %v4744
    %v5600 = vpop.f32.mrf.mxu0
    %v5601 = vadd.f32 %v5517, %v5600
    %v5602 = vpop.f32.mrf.mxu0
    %v5603 = vadd.f32 %v5521, %v5602
    %5604 = vmatprep.mubr.f32.mxu0 %v4749
    %5605 = vmatmul.mubr.f32.gmra.mxu0 %v4748
    %v5606 = vpop.f32.mrf.mxu0
    %v5607 = vadd.f32 %v5517, %v5606
    %v5608 = vpop.f32.mrf.mxu0
    %v5609 = vadd.f32 %v5521, %v5608
    %5610 = vmatprep.mubr.f32.mxu0 %v4753
    %5611 = vmatmul.mubr.f32.gmra.mxu0 %v4752
    %v5612 = vpop.f32.mrf.mxu0
    %v5613 = vadd.f32 %v5517, %v5612
    %v5614 = vpop.f32.mrf.mxu0
    %v5615 = vadd.f32 %v5521, %v5614
    %5616 = vmatprep.mubr.f32.mxu0 %v4757
    %5617 = vmatmul.mubr.f32.gmra.mxu0 %v4756
    %v5618 = vpop.f32.mrf.mxu0
    %v5619 = vadd.f32 %v5517, %v5618
    %v5620 = vpop.f32.mrf.mxu0
    %v5621 = vadd.f32 %v5521, %v5620
    %5622 = vmatprep.mubr.f32.mxu0 %v4761
    %5623 = vmatmul.mubr.f32.gmra.mxu0 %v4760
    %v5624 = vpop.f32.mrf.mxu0
    %v5625 = vadd.f32 %v5517, %v5624
    %v5626 = vpop.f32.mrf.mxu0
    %v5627 = vadd.f32 %v5521, %v5626
    %5628 = vmatprep.mubr.f32.mxu0 %v4765
    %5629 = vmatmul.mubr.f32.gmra.mxu0 %v4764
    %v5630 = vpop.f32.mrf.mxu0
    %v5631 = vadd.f32 %v5517, %v5630
    %v5632 = vpop.f32.mrf.mxu0
    %v5633 = vadd.f32 %v5521, %v5632
    %5634 = vmatprep.mubr.f32.mxu0 %v4769
    %5635 = vmatmul.mubr.f32.gmra.mxu0 %v4768
    %v5636 = vpop.f32.mrf.mxu0
    %v5637 = vadd.f32 %v5517, %v5636
    %v5638 = vpop.f32.mrf.mxu0
    %v5639 = vadd.f32 %v5521, %v5638
    %5640 = vmatprep.mubr.f32.mxu0 %v4773
    %5641 = vmatmul.mubr.f32.gmra.mxu0 %v4772
    %v5642 = vpop.f32.mrf.mxu0
    %v5643 = vadd.f32 %v5517, %v5642
    %v5644 = vpop.f32.mrf.mxu0
    %v5645 = vadd.f32 %v5521, %v5644
    %5646 = vmatprep.mubr.f32.mxu0 %v4777
    %5647 = vmatmul.mubr.f32.gmra.mxu0 %v4776
    %v5648 = vpop.f32.mrf.mxu0
    %v5649 = vadd.f32 %v5517, %v5648
    %v5650 = vpop.f32.mrf.mxu0
    %v5651 = vadd.f32 %v5521, %v5650
    %5652 = vmatprep.mubr.f32.mxu0 %v4781
    %5653 = vmatmul.mubr.f32.gmra.mxu0 %v4780
    %v5654 = vpop.f32.mrf.mxu0
    %v5655 = vadd.f32 %v5517, %v5654
    %v5656 = vpop.f32.mrf.mxu0
    %v5657 = vadd.f32 %v5521, %v5656
    %5658 = vmatprep.mubr.f32.mxu0 %v4785
    %5659 = vmatmul.mubr.f32.gmra.mxu0 %v4784
    %v5660 = vpop.f32.mrf.mxu0
    %v5661 = vadd.f32 %v5517, %v5660
    %v5662 = vpop.f32.mrf.mxu0
    %v5663 = vadd.f32 %v5521, %v5662
    %5664 = vmatprep.mubr.f32.mxu0 %v4789
    %5665 = vmatmul.mubr.f32.gmra.mxu0 %v4788
    %v5666 = vpop.f32.mrf.mxu0
    %v5667 = vadd.f32 %v5517, %v5666
    %v5668 = vpop.f32.mrf.mxu0
    %v5669 = vadd.f32 %v5521, %v5668
    %5670 = vmatprep.mubr.f32.mxu0 %v4793
    %5671 = vmatmul.mubr.f32.gmra.mxu0 %v4792
    %v5672 = vpop.f32.mrf.mxu0
    %v5673 = vadd.f32 %v5517, %v5672
    %v5674 = vpop.f32.mrf.mxu0
    %v5675 = vadd.f32 %v5521, %v5674
    %5676 = vmatprep.mubr.f32.mxu0 %v4797
    %5677 = vmatmul.mubr.f32.gmra.mxu0 %v4796
    %v5678 = vpop.f32.mrf.mxu0
    %v5679 = vadd.f32 %v5517, %v5678
    %v5680 = vpop.f32.mrf.mxu0
    %v5681 = vadd.f32 %v5521, %v5680
    %5682 = vmatprep.mubr.f32.mxu0 %v4801
    %5683 = vmatmul.mubr.f32.gmra.mxu0 %v4800
    %v5684 = vpop.f32.mrf.mxu0
    %v5685 = vadd.f32 %v5517, %v5684
    %v5686 = vpop.f32.mrf.mxu0
    %v5687 = vadd.f32 %v5521, %v5686
    %5688 = vmatprep.mubr.f32.mxu0 %v4805
    %5689 = vmatmul.mubr.f32.gmra.mxu0 %v4804
    %v5690 = vpop.f32.mrf.mxu0
    %v5691 = vadd.f32 %v5517, %v5690
    %v5692 = vpop.f32.mrf.mxu0
    %v5693 = vadd.f32 %v5521, %v5692
    %5694 = vmatprep.mubr.f32.mxu0 %v4809
    %5695 = vmatmul.mubr.f32.gmra.mxu0 %v4808
    %v5696 = vpop.f32.mrf.mxu0
    %v5697 = vadd.f32 %v5517, %v5696
    %v5698 = vpop.f32.mrf.mxu0
    %v5699 = vadd.f32 %v5521, %v5698
    %5700 = vmatprep.mubr.f32.mxu0 %v4813
    %5701 = vmatmul.mubr.f32.gmra.mxu0 %v4812
    %v5702 = vpop.f32.mrf.mxu0
    %v5703 = vadd.f32 %v5517, %v5702
    %v5704 = vpop.f32.mrf.mxu0
    %v5705 = vadd.f32 %v5521, %v5704
    %5706 = vmatprep.mubr.f32.mxu0 %v4817
    %5707 = vmatmul.mubr.f32.gmra.mxu0 %v4816
    %v5708 = vpop.f32.mrf.mxu0
    %v5709 = vadd.f32 %v5517, %v5708
    %v5710 = vpop.f32.mrf.mxu0
    %v5711 = vadd.f32 %v5521, %v5710
    %5712 = vmatprep.mubr.f32.mxu0 %v4821
    %5713 = vmatmul.mubr.f32.gmra.mxu0 %v4820
    %v5714 = vpop.f32.mrf.mxu0
    %v5715 = vadd.f32 %v5517, %v5714
    %v5716 = vpop.f32.mrf.mxu0
    %v5717 = vadd.f32 %v5521, %v5716
    %5718 = vmatprep.mubr.f32.mxu0 %v4825
    %5719 = vmatmul.mubr.f32.gmra.mxu0 %v4824
    %v5720 = vpop.f32.mrf.mxu0
    %v5721 = vadd.f32 %v5517, %v5720
    %v5722 = vpop.f32.mrf.mxu0
    %v5723 = vadd.f32 %v5521, %v5722
    %5724 = vmatprep.mubr.f32.mxu0 %v4829
    %5725 = vmatmul.mubr.f32.gmra.mxu0 %v4828
    %v5726 = vpop.f32.mrf.mxu0
    %v5727 = vadd.f32 %v5517, %v5726
    %v5728 = vpop.f32.mrf.mxu0
    %v5729 = vadd.f32 %v5521, %v5728
    %5730 = vmatprep.mubr.f32.mxu0 %v4833
    %5731 = vmatmul.mubr.f32.gmra.mxu0 %v4832
    %v5732 = vpop.f32.mrf.mxu0
    %v5733 = vadd.f32 %v5517, %v5732
    %v5734 = vpop.f32.mrf.mxu0
    %v5735 = vadd.f32 %v5521, %v5734
    %5736 = vmatprep.mubr.f32.mxu0 %v4837
    %5737 = vmatmul.mubr.f32.gmra.mxu0 %v4836
    %v5738 = vpop.f32.mrf.mxu0
    %v5739 = vadd.f32 %v5517, %v5738
    %v5740 = vpop.f32.mrf.mxu0
    %v5741 = vadd.f32 %v5521, %v5740
    %5742 = vmatprep.mubr.f32.mxu0 %v4841
    %5743 = vmatmul.mubr.f32.gmra.mxu0 %v4840
    %v5744 = vpop.f32.mrf.mxu0
    %v5745 = vadd.f32 %v5517, %v5744
    %v5746 = vpop.f32.mrf.mxu0
    %v5747 = vadd.f32 %v5521, %v5746
    %5748 = vmatprep.mubr.f32.mxu0 %v4845
    %5749 = vmatmul.mubr.f32.gmra.mxu0 %v4844
    %v5750 = vpop.f32.mrf.mxu0
    %v5751 = vadd.f32 %v5517, %v5750
    %v5752 = vpop.f32.mrf.mxu0
    %v5753 = vadd.f32 %v5521, %v5752
    %5754 = vmatprep.mubr.f32.mxu0 %v4849
    %5755 = vmatmul.mubr.f32.gmra.mxu0 %v4848
    %v5756 = vpop.f32.mrf.mxu0
    %v5757 = vadd.f32 %v5517, %v5756
    %v5758 = vpop.f32.mrf.mxu0
    %v5759 = vadd.f32 %v5521, %v5758
    %5760 = vmatprep.mubr.f32.mxu0 %v4853
    %5761 = vmatmul.mubr.f32.gmra.mxu0 %v4852
    %v5762 = vpop.f32.mrf.mxu0
    %v5763 = vadd.f32 %v5517, %v5762
    %v5764 = vpop.f32.mrf.mxu0
    %v5765 = vadd.f32 %v5521, %v5764
    %5766 = vmatprep.mubr.f32.mxu0 %v4857
    %5767 = vmatmul.mubr.f32.gmra.mxu0 %v4856
    %v5768 = vpop.f32.mrf.mxu0
    %v5769 = vadd.f32 %v5517, %v5768
    %v5770 = vpop.f32.mrf.mxu0
    %v5771 = vadd.f32 %v5521, %v5770
    %5772 = vmatprep.mubr.f32.mxu0 %v4861
    %5773 = vmatmul.mubr.f32.gmra.mxu0 %v4860
    %v5774 = vpop.f32.mrf.mxu0
    %v5775 = vadd.f32 %v5517, %v5774
    %v5776 = vpop.f32.mrf.mxu0
    %v5777 = vadd.f32 %v5521, %v5776
    %5778 = vmatprep.mubr.f32.mxu0 %v4865
    %5779 = vmatmul.mubr.f32.gmra.mxu0 %v4864
    %v5780 = vpop.f32.mrf.mxu0
    %v5781 = vadd.f32 %v5517, %v5780
    %v5782 = vpop.f32.mrf.mxu0
    %v5783 = vadd.f32 %v5521, %v5782
    %5784 = vmatprep.mubr.f32.mxu0 %v4869
    %5785 = vmatmul.mubr.f32.gmra.mxu0 %v4868
    %v5786 = vpop.f32.mrf.mxu0
    %v5787 = vadd.f32 %v5517, %v5786
    %v5788 = vpop.f32.mrf.mxu0
    %v5789 = vadd.f32 %v5521, %v5788
    %5790 = vmatprep.mubr.f32.mxu0 %v4873
    %5791 = vmatmul.mubr.f32.gmra.mxu0 %v4872
    %v5792 = vpop.f32.mrf.mxu0
    %v5793 = vadd.f32 %v5517, %v5792
    %v5794 = vpop.f32.mrf.mxu0
    %v5795 = vadd.f32 %v5521, %v5794
    %5796 = vmatprep.mubr.f32.mxu0 %v4877
    %5797 = vmatmul.mubr.f32.gmra.mxu0 %v4876
    %v5798 = vpop.f32.mrf.mxu0
    %v5799 = vadd.f32 %v5517, %v5798
    %v5800 = vpop.f32.mrf.mxu0
    %v5801 = vadd.f32 %v5521, %v5800
    %5802 = vmatprep.mubr.f32.mxu0 %v4881
    %5803 = vmatmul.mubr.f32.gmra.mxu0 %v4880
    %v5804 = vpop.f32.mrf.mxu0
    %v5805 = vadd.f32 %v5517, %v5804
    %v5806 = vpop.f32.mrf.mxu0
    %v5807 = vadd.f32 %v5521, %v5806
    %5808 = vmatprep.mubr.f32.mxu0 %v4885
    %5809 = vmatmul.mubr.f32.gmra.mxu0 %v4884
    %v5810 = vpop.f32.mrf.mxu0
    %v5811 = vadd.f32 %v5517, %v5810
    %v5812 = vpop.f32.mrf.mxu0
    %v5813 = vadd.f32 %v5521, %v5812
    %5814 = vmatprep.mubr.f32.mxu0 %v4889
    %5815 = vmatmul.mubr.f32.gmra.mxu0 %v4888
    %v5816 = vpop.f32.mrf.mxu0
    %v5817 = vadd.f32 %v5517, %v5816
    %v5818 = vpop.f32.mrf.mxu0
    %v5819 = vadd.f32 %v5521, %v5818
    %5820 = vmatprep.mubr.f32.mxu0 %v4893
    %5821 = vmatmul.mubr.f32.gmra.mxu0 %v4892
    %v5822 = vpop.f32.mrf.mxu0
    %v5823 = vadd.f32 %v5517, %v5822
    %v5824 = vpop.f32.mrf.mxu0
    %v5825 = vadd.f32 %v5521, %v5824
    %5826 = vmatprep.mubr.f32.mxu0 %v4897
    %5827 = vmatmul.mubr.f32.gmra.mxu0 %v4896
    %v5828 = vpop.f32.mrf.mxu0
    %v5829 = vadd.f32 %v5517, %v5828
    %v5830 = vpop.f32.mrf.mxu0
    %v5831 = vadd.f32 %v5521, %v5830
    %5832 = vmatprep.mubr.f32.mxu0 %v4901
    %5833 = vmatmul.mubr.f32.gmra.mxu0 %v4900
    %v5834 = vpop.f32.mrf.mxu0
    %v5835 = vadd.f32 %v5517, %v5834
    %v5836 = vpop.f32.mrf.mxu0
    %v5837 = vadd.f32 %v5521, %v5836
    %5838 = vmatprep.mubr.f32.mxu0 %v4905
    %5839 = vmatmul.mubr.f32.gmra.mxu0 %v4904
    %v5840 = vpop.f32.mrf.mxu0
    %v5841 = vadd.f32 %v5517, %v5840
    %v5842 = vpop.f32.mrf.mxu0
    %v5843 = vadd.f32 %v5521, %v5842
    %5844 = vmatprep.mubr.f32.mxu0 %v4909
    %5845 = vmatmul.mubr.f32.gmra.mxu0 %v4908
    %v5846 = vpop.f32.mrf.mxu0
    %v5847 = vadd.f32 %v5517, %v5846
    %v5848 = vpop.f32.mrf.mxu0
    %v5849 = vadd.f32 %v5521, %v5848
    %5850 = vmatprep.mubr.f32.mxu0 %v4913
    %5851 = vmatmul.mubr.f32.gmra.mxu0 %v4912
    %v5852 = vpop.f32.mrf.mxu0
    %v5853 = vadd.f32 %v5517, %v5852
    %v5854 = vpop.f32.mrf.mxu0
    %v5855 = vadd.f32 %v5521, %v5854
    %5856 = vmatprep.mubr.f32.mxu0 %v4917
    %5857 = vmatmul.mubr.f32.gmra.mxu0 %v4916
    %v5858 = vpop.f32.mrf.mxu0
    %v5859 = vadd.f32 %v5517, %v5858
    %v5860 = vpop.f32.mrf.mxu0
    %v5861 = vadd.f32 %v5521, %v5860
    %5862 = vmatprep.mubr.f32.mxu0 %v4921
    %5863 = vmatmul.mubr.f32.gmra.mxu0 %v4920
    %v5864 = vpop.f32.mrf.mxu0
    %v5865 = vadd.f32 %v5517, %v5864
    %v5866 = vpop.f32.mrf.mxu0
    %v5867 = vadd.f32 %v5521, %v5866
    %5868 = vmatprep.mubr.f32.mxu0 %v4925
    %5869 = vmatmul.mubr.f32.gmra.mxu0 %v4924
    %v5870 = vpop.f32.mrf.mxu0
    %v5871 = vadd.f32 %v5517, %v5870
    %v5872 = vpop.f32.mrf.mxu0
    %v5873 = vadd.f32 %v5521, %v5872
    %5874 = vmatprep.mubr.f32.mxu0 %v4929
    %5875 = vmatmul.mubr.f32.gmra.mxu0 %v4928
    %v5876 = vpop.f32.mrf.mxu0
    %v5877 = vadd.f32 %v5517, %v5876
    %v5878 = vpop.f32.mrf.mxu0
    %v5879 = vadd.f32 %v5521, %v5878
    %5880 = vmatprep.mubr.f32.mxu0 %v4933
    %5881 = vmatmul.mubr.f32.gmra.mxu0 %v4932
    %v5882 = vpop.f32.mrf.mxu0
    %v5883 = vadd.f32 %v5517, %v5882
    %v5884 = vpop.f32.mrf.mxu0
    %v5885 = vadd.f32 %v5521, %v5884
    %5886 = vmatprep.mubr.f32.mxu0 %v4937
    %5887 = vmatmul.mubr.f32.gmra.mxu0 %v4936
    %v5888 = vpop.f32.mrf.mxu0
    %v5889 = vadd.f32 %v5517, %v5888
    %v5890 = vpop.f32.mrf.mxu0
    %v5891 = vadd.f32 %v5521, %v5890
    %5892 = vmatprep.mubr.f32.mxu0 %v4941
    %5893 = vmatmul.mubr.f32.gmra.mxu0 %v4940
    %v5894 = vpop.f32.mrf.mxu0
    %v5895 = vadd.f32 %v5517, %v5894
    %v5896 = vpop.f32.mrf.mxu0
    %v5897 = vadd.f32 %v5521, %v5896
    %5898 = vmatprep.mubr.f32.mxu0 %v4945
    %5899 = vmatmul.mubr.f32.gmra.mxu0 %v4944
    %v5900 = vpop.f32.mrf.mxu0
    %v5901 = vadd.f32 %v5517, %v5900
    %v5902 = vpop.f32.mrf.mxu0
    %v5903 = vadd.f32 %v5521, %v5902
    %5904 = vmatprep.mubr.f32.mxu0 %v4949
    %5905 = vmatmul.mubr.f32.gmra.mxu0 %v4948
    %v5906 = vpop.f32.mrf.mxu0
    %v5907 = vadd.f32 %v5517, %v5906
    %v5908 = vpop.f32.mrf.mxu0
    %v5909 = vadd.f32 %v5521, %v5908
    %5910 = vmatprep.mubr.f32.mxu0 %v4953
    %5911 = vmatmul.mubr.f32.gmra.mxu0 %v4952
    %v5912 = vpop.f32.mrf.mxu0
    %v5913 = vadd.f32 %v5517, %v5912
    %v5914 = vpop.f32.mrf.mxu0
    %v5915 = vadd.f32 %v5521, %v5914
    %5916 = vmatprep.mubr.f32.mxu0 %v4957
    %5917 = vmatmul.mubr.f32.gmra.mxu0 %v4956
    %v5918 = vpop.f32.mrf.mxu0
    %v5919 = vadd.f32 %v5517, %v5918
    %v5920 = vpop.f32.mrf.mxu0
    %v5921 = vadd.f32 %v5521, %v5920
    %5922 = vmatprep.mubr.f32.mxu0 %v4961
    %5923 = vmatmul.mubr.f32.gmra.mxu0 %v4960
    %v5924 = vpop.f32.mrf.mxu0
    %v5925 = vadd.f32 %v5517, %v5924
    %v5926 = vpop.f32.mrf.mxu0
    %v5927 = vadd.f32 %v5521, %v5926
    %5928 = vmatprep.mubr.f32.mxu0 %v4965
    %5929 = vmatmul.mubr.f32.gmra.mxu0 %v4964
    %v5930 = vpop.f32.mrf.mxu0
    %v5931 = vadd.f32 %v5517, %v5930
    %v5932 = vpop.f32.mrf.mxu0
    %v5933 = vadd.f32 %v5521, %v5932
    %5934 = vmatprep.mubr.f32.mxu0 %v4969
    %5935 = vmatmul.mubr.f32.gmra.mxu0 %v4968
    %v5936 = vpop.f32.mrf.mxu0
    %v5937 = vadd.f32 %v5517, %v5936
    %v5938 = vpop.f32.mrf.mxu0
    %v5939 = vadd.f32 %v5521, %v5938
    %5940 = vmatprep.mubr.f32.mxu0 %v4973
    %5941 = vmatmul.mubr.f32.gmra.mxu0 %v4972
    %v5942 = vpop.f32.mrf.mxu0
    %v5943 = vadd.f32 %v5517, %v5942
    %v5944 = vpop.f32.mrf.mxu0
    %v5945 = vadd.f32 %v5521, %v5944
    %5946 = vmatprep.mubr.f32.mxu0 %v4977
    %5947 = vmatmul.mubr.f32.gmra.mxu0 %v4976
    %v5948 = vpop.f32.mrf.mxu0
    %v5949 = vadd.f32 %v5517, %v5948
    %v5950 = vpop.f32.mrf.mxu0
    %v5951 = vadd.f32 %v5521, %v5950
    %5952 = vmatprep.mubr.f32.mxu0 %v4981
    %5953 = vmatmul.mubr.f32.gmra.mxu0 %v4980
    %v5954 = vpop.f32.mrf.mxu0
    %v5955 = vadd.f32 %v5517, %v5954
    %v5956 = vpop.f32.mrf.mxu0
    %v5957 = vadd.f32 %v5521, %v5956
    %5958 = vmatprep.mubr.f32.mxu0 %v4985
    %5959 = vmatmul.mubr.f32.gmra.mxu0 %v4984
    %v5960 = vpop.f32.mrf.mxu0
    %v5961 = vadd.f32 %v5517, %v5960
    %v5962 = vpop.f32.mrf.mxu0
    %v5963 = vadd.f32 %v5521, %v5962
    %5964 = vmatprep.mubr.f32.mxu0 %v4989
    %5965 = vmatmul.mubr.f32.gmra.mxu0 %v4988
    %v5966 = vpop.f32.mrf.mxu0
    %v5967 = vadd.f32 %v5517, %v5966
    %v5968 = vpop.f32.mrf.mxu0
    %v5969 = vadd.f32 %v5521, %v5968
    %5970 = vmatprep.mubr.f32.mxu0 %v4993
    %5971 = vmatmul.mubr.f32.gmra.mxu0 %v4992
    %v5972 = vpop.f32.mrf.mxu0
    %v5973 = vadd.f32 %v5517, %v5972
    %v5974 = vpop.f32.mrf.mxu0
    %v5975 = vadd.f32 %v5521, %v5974
    %5976 = vmatprep.mubr.f32.mxu0 %v4997
    %5977 = vmatmul.mubr.f32.gmra.mxu0 %v4996
    %v5978 = vpop.f32.mrf.mxu0
    %v5979 = vadd.f32 %v5517, %v5978
    %v5980 = vpop.f32.mrf.mxu0
    %v5981 = vadd.f32 %v5521, %v5980
    %5982 = vdwg.mxu0
    %5983 = vmatprep.subr.mxu0 %v5445
    %5984 = vmatpush1.msra.mxu0 %v5444
    %5985 = vmatprep.subr.mxu0 %v5441
    %5986 = vmatpush1.msra.mxu0 %v5440
    %5987 = vmatprep.subr.mxu0 %v5437
    %5988 = vmatpush1.msra.mxu0 %v5436
    %5989 = vmatprep.subr.mxu0 %v5433
    %5990 = vmatpush1.msra.mxu0 %v5432
    %5991 = vmatprep.subr.mxu0 %v5429
    %5992 = vmatpush1.msra.mxu0 %v5428
    %5993 = vmatprep.subr.mxu0 %v5425
    %5994 = vmatpush1.msra.mxu0 %v5424
    %5995 = vmatprep.subr.mxu0 %v5421
    %5996 = vmatpush1.msra.mxu0 %v5420
    %5997 = vmatprep.subr.mxu0 %v5417
    %5998 = vmatpush1.msra.mxu0 %v5416
    %5999 = vmatprep.subr.mxu0 %v5413
    %6000 = vmatpush1.msra.mxu0 %v5412
    %6001 = vmatprep.subr.mxu0 %v5409
    %6002 = vmatpush1.msra.mxu0 %v5408
    %6003 = vmatprep.subr.mxu0 %v5405
    %6004 = vmatpush1.msra.mxu0 %v5404
    %6005 = vmatprep.subr.mxu0 %v5401
    %6006 = vmatpush1.msra.mxu0 %v5400
    %6007 = vmatprep.subr.mxu0 %v5397
    %6008 = vmatpush1.msra.mxu0 %v5396
    %6009 = vmatprep.subr.mxu0 %v5393
    %6010 = vmatpush1.msra.mxu0 %v5392
    %6011 = vmatprep.subr.mxu0 %v5389
    %6012 = vmatpush1.msra.mxu0 %v5388
    %6013 = vmatprep.subr.mxu0 %v5385
    %6014 = vmatpush1.msra.mxu0 %v5384
    %6015 = vmatprep.subr.mxu0 %v5509
    %6016 = vmatpush2.msra.mxu0 %v5508
    %6017 = vmatprep.subr.mxu0 %v5505
    %6018 = vmatpush2.msra.mxu0 %v5504
    %6019 = vmatprep.subr.mxu0 %v5501
    %6020 = vmatpush2.msra.mxu0 %v5500
    %6021 = vmatprep.subr.mxu0 %v5497
    %6022 = vmatpush2.msra.mxu0 %v5496
    %6023 = vmatprep.subr.mxu0 %v5493
    %6024 = vmatpush2.msra.mxu0 %v5492
    %6025 = vmatprep.subr.mxu0 %v5489
    %6026 = vmatpush2.msra.mxu0 %v5488
    %6027 = vmatprep.subr.mxu0 %v5485
    %6028 = vmatpush2.msra.mxu0 %v5484
    %6029 = vmatprep.subr.mxu0 %v5481
    %6030 = vmatpush2.msra.mxu0 %v5480
    %6031 = vmatprep.subr.mxu0 %v5477
    %6032 = vmatpush2.msra.mxu0 %v5476
    %6033 = vmatprep.subr.mxu0 %v5473
    %6034 = vmatpush2.msra.mxu0 %v5472
    %6035 = vmatprep.subr.mxu0 %v5469
    %6036 = vmatpush2.msra.mxu0 %v5468
    %6037 = vmatprep.subr.mxu0 %v5465
    %6038 = vmatpush2.msra.mxu0 %v5464
    %6039 = vmatprep.subr.mxu0 %v5461
    %6040 = vmatpush2.msra.mxu0 %v5460
    %6041 = vmatprep.subr.mxu0 %v5457
    %6042 = vmatpush2.msra.mxu0 %v5456
    %6043 = vmatprep.subr.mxu0 %v5453
    %6044 = vmatpush2.msra.mxu0 %v5452
    %6045 = vmatprep.subr.mxu0 %v5449
    %6046 = vmatpush2.msra.mxu0 %v5448
    %6047 = vmatprep.mubr.f32.mxu0 %v4747
    %6048 = vmatmul.mubr.f32.gmra.mxu0 %v4746
    %v6049 = vpop.f32.mrf.mxu0
    %v6050 = vadd.f32 %v5601, %v6049
    %v6051 = vpop.f32.mrf.mxu0
    %v6052 = vadd.f32 %v5603, %v6051
    %6053 = vmatprep.mubr.f32.mxu0 %v4751
    %6054 = vmatmul.mubr.f32.gmra.mxu0 %v4750
    %v6055 = vpop.f32.mrf.mxu0
    %v6056 = vadd.f32 %v5607, %v6055
    %v6057 = vpop.f32.mrf.mxu0
    %v6058 = vadd.f32 %v5609, %v6057
    %6059 = vmatprep.mubr.f32.mxu0 %v4755
    %6060 = vmatmul.mubr.f32.gmra.mxu0 %v4754
    %v6061 = vpop.f32.mrf.mxu0
    %v6062 = vadd.f32 %v5613, %v6061
    %v6063 = vpop.f32.mrf.mxu0
    %v6064 = vadd.f32 %v5615, %v6063
    %6065 = vmatprep.mubr.f32.mxu0 %v4759
    %6066 = vmatmul.mubr.f32.gmra.mxu0 %v4758
    %v6067 = vpop.f32.mrf.mxu0
    %v6068 = vadd.f32 %v5619, %v6067
    %v6069 = vpop.f32.mrf.mxu0
    %v6070 = vadd.f32 %v5621, %v6069
    %6071 = vmatprep.mubr.f32.mxu0 %v4763
    %6072 = vmatmul.mubr.f32.gmra.mxu0 %v4762
    %v6073 = vpop.f32.mrf.mxu0
    %v6074 = vadd.f32 %v5625, %v6073
    %v6075 = vpop.f32.mrf.mxu0
    %v6076 = vadd.f32 %v5627, %v6075
    %6077 = vmatprep.mubr.f32.mxu0 %v4767
    %6078 = vmatmul.mubr.f32.gmra.mxu0 %v4766
    %v6079 = vpop.f32.mrf.mxu0
    %v6080 = vadd.f32 %v5631, %v6079
    %v6081 = vpop.f32.mrf.mxu0
    %v6082 = vadd.f32 %v5633, %v6081
    %6083 = vmatprep.mubr.f32.mxu0 %v4771
    %6084 = vmatmul.mubr.f32.gmra.mxu0 %v4770
    %v6085 = vpop.f32.mrf.mxu0
    %v6086 = vadd.f32 %v5637, %v6085
    %v6087 = vpop.f32.mrf.mxu0
    %v6088 = vadd.f32 %v5639, %v6087
    %6089 = vmatprep.mubr.f32.mxu0 %v4775
    %6090 = vmatmul.mubr.f32.gmra.mxu0 %v4774
    %v6091 = vpop.f32.mrf.mxu0
    %v6092 = vadd.f32 %v5643, %v6091
    %v6093 = vpop.f32.mrf.mxu0
    %v6094 = vadd.f32 %v5645, %v6093
    %6095 = vmatprep.mubr.f32.mxu0 %v4779
    %6096 = vmatmul.mubr.f32.gmra.mxu0 %v4778
    %v6097 = vpop.f32.mrf.mxu0
    %v6098 = vadd.f32 %v5649, %v6097
    %v6099 = vpop.f32.mrf.mxu0
    %v6100 = vadd.f32 %v5651, %v6099
    %6101 = vmatprep.mubr.f32.mxu0 %v4783
    %6102 = vmatmul.mubr.f32.gmra.mxu0 %v4782
    %v6103 = vpop.f32.mrf.mxu0
    %v6104 = vadd.f32 %v5655, %v6103
    %v6105 = vpop.f32.mrf.mxu0
    %v6106 = vadd.f32 %v5657, %v6105
    %6107 = vmatprep.mubr.f32.mxu0 %v4787
    %6108 = vmatmul.mubr.f32.gmra.mxu0 %v4786
    %v6109 = vpop.f32.mrf.mxu0
    %v6110 = vadd.f32 %v5661, %v6109
    %v6111 = vpop.f32.mrf.mxu0
    %v6112 = vadd.f32 %v5663, %v6111
    %6113 = vmatprep.mubr.f32.mxu0 %v4791
    %6114 = vmatmul.mubr.f32.gmra.mxu0 %v4790
    %v6115 = vpop.f32.mrf.mxu0
    %v6116 = vadd.f32 %v5667, %v6115
    %v6117 = vpop.f32.mrf.mxu0
    %v6118 = vadd.f32 %v5669, %v6117
    %6119 = vmatprep.mubr.f32.mxu0 %v4795
    %6120 = vmatmul.mubr.f32.gmra.mxu0 %v4794
    %v6121 = vpop.f32.mrf.mxu0
    %v6122 = vadd.f32 %v5673, %v6121
    %v6123 = vpop.f32.mrf.mxu0
    %v6124 = vadd.f32 %v5675, %v6123
    %6125 = vmatprep.mubr.f32.mxu0 %v4799
    %6126 = vmatmul.mubr.f32.gmra.mxu0 %v4798
    %v6127 = vpop.f32.mrf.mxu0
    %v6128 = vadd.f32 %v5679, %v6127
    %v6129 = vpop.f32.mrf.mxu0
    %v6130 = vadd.f32 %v5681, %v6129
    %6131 = vmatprep.mubr.f32.mxu0 %v4803
    %6132 = vmatmul.mubr.f32.gmra.mxu0 %v4802
    %v6133 = vpop.f32.mrf.mxu0
    %v6134 = vadd.f32 %v5685, %v6133
    %v6135 = vpop.f32.mrf.mxu0
    %v6136 = vadd.f32 %v5687, %v6135
    %6137 = vmatprep.mubr.f32.mxu0 %v4807
    %6138 = vmatmul.mubr.f32.gmra.mxu0 %v4806
    %v6139 = vpop.f32.mrf.mxu0
    %v6140 = vadd.f32 %v5691, %v6139
    %v6141 = vpop.f32.mrf.mxu0
    %v6142 = vadd.f32 %v5693, %v6141
    %6143 = vmatprep.mubr.f32.mxu0 %v4811
    %6144 = vmatmul.mubr.f32.gmra.mxu0 %v4810
    %v6145 = vpop.f32.mrf.mxu0
    %v6146 = vadd.f32 %v5697, %v6145
    %v6147 = vpop.f32.mrf.mxu0
    %v6148 = vadd.f32 %v5699, %v6147
    %6149 = vmatprep.mubr.f32.mxu0 %v4815
    %6150 = vmatmul.mubr.f32.gmra.mxu0 %v4814
    %v6151 = vpop.f32.mrf.mxu0
    %v6152 = vadd.f32 %v5703, %v6151
    %v6153 = vpop.f32.mrf.mxu0
    %v6154 = vadd.f32 %v5705, %v6153
    %6155 = vmatprep.mubr.f32.mxu0 %v4819
    %6156 = vmatmul.mubr.f32.gmra.mxu0 %v4818
    %v6157 = vpop.f32.mrf.mxu0
    %v6158 = vadd.f32 %v5709, %v6157
    %v6159 = vpop.f32.mrf.mxu0
    %v6160 = vadd.f32 %v5711, %v6159
    %6161 = vmatprep.mubr.f32.mxu0 %v4823
    %6162 = vmatmul.mubr.f32.gmra.mxu0 %v4822
    %v6163 = vpop.f32.mrf.mxu0
    %v6164 = vadd.f32 %v5715, %v6163
    %v6165 = vpop.f32.mrf.mxu0
    %v6166 = vadd.f32 %v5717, %v6165
    %6167 = vmatprep.mubr.f32.mxu0 %v4827
    %6168 = vmatmul.mubr.f32.gmra.mxu0 %v4826
    %v6169 = vpop.f32.mrf.mxu0
    %v6170 = vadd.f32 %v5721, %v6169
    %v6171 = vpop.f32.mrf.mxu0
    %v6172 = vadd.f32 %v5723, %v6171
    %6173 = vmatprep.mubr.f32.mxu0 %v4831
    %6174 = vmatmul.mubr.f32.gmra.mxu0 %v4830
    %v6175 = vpop.f32.mrf.mxu0
    %v6176 = vadd.f32 %v5727, %v6175
    %v6177 = vpop.f32.mrf.mxu0
    %v6178 = vadd.f32 %v5729, %v6177
    %6179 = vmatprep.mubr.f32.mxu0 %v4835
    %6180 = vmatmul.mubr.f32.gmra.mxu0 %v4834
    %v6181 = vpop.f32.mrf.mxu0
    %v6182 = vadd.f32 %v5733, %v6181
    %v6183 = vpop.f32.mrf.mxu0
    %v6184 = vadd.f32 %v5735, %v6183
    %6185 = vmatprep.mubr.f32.mxu0 %v4839
    %6186 = vmatmul.mubr.f32.gmra.mxu0 %v4838
    %v6187 = vpop.f32.mrf.mxu0
    %v6188 = vadd.f32 %v5739, %v6187
    %v6189 = vpop.f32.mrf.mxu0
    %v6190 = vadd.f32 %v5741, %v6189
    %6191 = vmatprep.mubr.f32.mxu0 %v4843
    %6192 = vmatmul.mubr.f32.gmra.mxu0 %v4842
    %v6193 = vpop.f32.mrf.mxu0
    %v6194 = vadd.f32 %v5745, %v6193
    %v6195 = vpop.f32.mrf.mxu0
    %v6196 = vadd.f32 %v5747, %v6195
    %6197 = vmatprep.mubr.f32.mxu0 %v4847
    %6198 = vmatmul.mubr.f32.gmra.mxu0 %v4846
    %v6199 = vpop.f32.mrf.mxu0
    %v6200 = vadd.f32 %v5751, %v6199
    %v6201 = vpop.f32.mrf.mxu0
    %v6202 = vadd.f32 %v5753, %v6201
    %6203 = vmatprep.mubr.f32.mxu0 %v4851
    %6204 = vmatmul.mubr.f32.gmra.mxu0 %v4850
    %v6205 = vpop.f32.mrf.mxu0
    %v6206 = vadd.f32 %v5757, %v6205
    %v6207 = vpop.f32.mrf.mxu0
    %v6208 = vadd.f32 %v5759, %v6207
    %6209 = vmatprep.mubr.f32.mxu0 %v4855
    %6210 = vmatmul.mubr.f32.gmra.mxu0 %v4854
    %v6211 = vpop.f32.mrf.mxu0
    %v6212 = vadd.f32 %v5763, %v6211
    %v6213 = vpop.f32.mrf.mxu0
    %v6214 = vadd.f32 %v5765, %v6213
    %6215 = vmatprep.mubr.f32.mxu0 %v4859
    %6216 = vmatmul.mubr.f32.gmra.mxu0 %v4858
    %v6217 = vpop.f32.mrf.mxu0
    %v6218 = vadd.f32 %v5769, %v6217
    %v6219 = vpop.f32.mrf.mxu0
    %v6220 = vadd.f32 %v5771, %v6219
    %6221 = vmatprep.mubr.f32.mxu0 %v4863
    %6222 = vmatmul.mubr.f32.gmra.mxu0 %v4862
    %v6223 = vpop.f32.mrf.mxu0
    %v6224 = vadd.f32 %v5775, %v6223
    %v6225 = vpop.f32.mrf.mxu0
    %v6226 = vadd.f32 %v5777, %v6225
    %6227 = vmatprep.mubr.f32.mxu0 %v4867
    %6228 = vmatmul.mubr.f32.gmra.mxu0 %v4866
    %v6229 = vpop.f32.mrf.mxu0
    %v6230 = vadd.f32 %v5781, %v6229
    %v6231 = vpop.f32.mrf.mxu0
    %v6232 = vadd.f32 %v5783, %v6231
    %6233 = vmatprep.mubr.f32.mxu0 %v4871
    %6234 = vmatmul.mubr.f32.gmra.mxu0 %v4870
    %v6235 = vpop.f32.mrf.mxu0
    %v6236 = vadd.f32 %v5787, %v6235
    %v6237 = vpop.f32.mrf.mxu0
    %v6238 = vadd.f32 %v5789, %v6237
    %6239 = vmatprep.mubr.f32.mxu0 %v4875
    %6240 = vmatmul.mubr.f32.gmra.mxu0 %v4874
    %v6241 = vpop.f32.mrf.mxu0
    %v6242 = vadd.f32 %v5793, %v6241
    %v6243 = vpop.f32.mrf.mxu0
    %v6244 = vadd.f32 %v5795, %v6243
    %6245 = vmatprep.mubr.f32.mxu0 %v4879
    %6246 = vmatmul.mubr.f32.gmra.mxu0 %v4878
    %v6247 = vpop.f32.mrf.mxu0
    %v6248 = vadd.f32 %v5799, %v6247
    %v6249 = vpop.f32.mrf.mxu0
    %v6250 = vadd.f32 %v5801, %v6249
    %6251 = vmatprep.mubr.f32.mxu0 %v4883
    %6252 = vmatmul.mubr.f32.gmra.mxu0 %v4882
    %v6253 = vpop.f32.mrf.mxu0
    %v6254 = vadd.f32 %v5805, %v6253
    %v6255 = vpop.f32.mrf.mxu0
    %v6256 = vadd.f32 %v5807, %v6255
    %6257 = vmatprep.mubr.f32.mxu0 %v4887
    %6258 = vmatmul.mubr.f32.gmra.mxu0 %v4886
    %v6259 = vpop.f32.mrf.mxu0
    %v6260 = vadd.f32 %v5811, %v6259
    %v6261 = vpop.f32.mrf.mxu0
    %v6262 = vadd.f32 %v5813, %v6261
    %6263 = vmatprep.mubr.f32.mxu0 %v4891
    %6264 = vmatmul.mubr.f32.gmra.mxu0 %v4890
    %v6265 = vpop.f32.mrf.mxu0
    %v6266 = vadd.f32 %v5817, %v6265
    %v6267 = vpop.f32.mrf.mxu0
    %v6268 = vadd.f32 %v5819, %v6267
    %6269 = vmatprep.mubr.f32.mxu0 %v4895
    %6270 = vmatmul.mubr.f32.gmra.mxu0 %v4894
    %v6271 = vpop.f32.mrf.mxu0
    %v6272 = vadd.f32 %v5823, %v6271
    %v6273 = vpop.f32.mrf.mxu0
    %v6274 = vadd.f32 %v5825, %v6273
    %6275 = vmatprep.mubr.f32.mxu0 %v4899
    %6276 = vmatmul.mubr.f32.gmra.mxu0 %v4898
    %v6277 = vpop.f32.mrf.mxu0
    %v6278 = vadd.f32 %v5829, %v6277
    %v6279 = vpop.f32.mrf.mxu0
    %v6280 = vadd.f32 %v5831, %v6279
    %6281 = vmatprep.mubr.f32.mxu0 %v4903
    %6282 = vmatmul.mubr.f32.gmra.mxu0 %v4902
    %v6283 = vpop.f32.mrf.mxu0
    %v6284 = vadd.f32 %v5835, %v6283
    %v6285 = vpop.f32.mrf.mxu0
    %v6286 = vadd.f32 %v5837, %v6285
    %6287 = vmatprep.mubr.f32.mxu0 %v4907
    %6288 = vmatmul.mubr.f32.gmra.mxu0 %v4906
    %v6289 = vpop.f32.mrf.mxu0
    %v6290 = vadd.f32 %v5841, %v6289
    %v6291 = vpop.f32.mrf.mxu0
    %v6292 = vadd.f32 %v5843, %v6291
    %6293 = vmatprep.mubr.f32.mxu0 %v4911
    %6294 = vmatmul.mubr.f32.gmra.mxu0 %v4910
    %v6295 = vpop.f32.mrf.mxu0
    %v6296 = vadd.f32 %v5847, %v6295
    %v6297 = vpop.f32.mrf.mxu0
    %v6298 = vadd.f32 %v5849, %v6297
    %6299 = vmatprep.mubr.f32.mxu0 %v4915
    %6300 = vmatmul.mubr.f32.gmra.mxu0 %v4914
    %v6301 = vpop.f32.mrf.mxu0
    %v6302 = vadd.f32 %v5853, %v6301
    %v6303 = vpop.f32.mrf.mxu0
    %v6304 = vadd.f32 %v5855, %v6303
    %6305 = vmatprep.mubr.f32.mxu0 %v4919
    %6306 = vmatmul.mubr.f32.gmra.mxu0 %v4918
    %v6307 = vpop.f32.mrf.mxu0
    %v6308 = vadd.f32 %v5859, %v6307
    %v6309 = vpop.f32.mrf.mxu0
    %v6310 = vadd.f32 %v5861, %v6309
    %6311 = vmatprep.mubr.f32.mxu0 %v4923
    %6312 = vmatmul.mubr.f32.gmra.mxu0 %v4922
    %v6313 = vpop.f32.mrf.mxu0
    %v6314 = vadd.f32 %v5865, %v6313
    %v6315 = vpop.f32.mrf.mxu0
    %v6316 = vadd.f32 %v5867, %v6315
    %6317 = vmatprep.mubr.f32.mxu0 %v4927
    %6318 = vmatmul.mubr.f32.gmra.mxu0 %v4926
    %v6319 = vpop.f32.mrf.mxu0
    %v6320 = vadd.f32 %v5871, %v6319
    %v6321 = vpop.f32.mrf.mxu0
    %v6322 = vadd.f32 %v5873, %v6321
    %6323 = vmatprep.mubr.f32.mxu0 %v4931
    %6324 = vmatmul.mubr.f32.gmra.mxu0 %v4930
    %v6325 = vpop.f32.mrf.mxu0
    %v6326 = vadd.f32 %v5877, %v6325
    %v6327 = vpop.f32.mrf.mxu0
    %v6328 = vadd.f32 %v5879, %v6327
    %6329 = vmatprep.mubr.f32.mxu0 %v4935
    %6330 = vmatmul.mubr.f32.gmra.mxu0 %v4934
    %v6331 = vpop.f32.mrf.mxu0
    %v6332 = vadd.f32 %v5883, %v6331
    %v6333 = vpop.f32.mrf.mxu0
    %v6334 = vadd.f32 %v5885, %v6333
    %6335 = vmatprep.mubr.f32.mxu0 %v4939
    %6336 = vmatmul.mubr.f32.gmra.mxu0 %v4938
    %v6337 = vpop.f32.mrf.mxu0
    %v6338 = vadd.f32 %v5889, %v6337
    %v6339 = vpop.f32.mrf.mxu0
    %v6340 = vadd.f32 %v5891, %v6339
    %6341 = vmatprep.mubr.f32.mxu0 %v4943
    %6342 = vmatmul.mubr.f32.gmra.mxu0 %v4942
    %v6343 = vpop.f32.mrf.mxu0
    %v6344 = vadd.f32 %v5895, %v6343
    %v6345 = vpop.f32.mrf.mxu0
    %v6346 = vadd.f32 %v5897, %v6345
    %6347 = vmatprep.mubr.f32.mxu0 %v4947
    %6348 = vmatmul.mubr.f32.gmra.mxu0 %v4946
    %v6349 = vpop.f32.mrf.mxu0
    %v6350 = vadd.f32 %v5901, %v6349
    %v6351 = vpop.f32.mrf.mxu0
    %v6352 = vadd.f32 %v5903, %v6351
    %6353 = vmatprep.mubr.f32.mxu0 %v4951
    %6354 = vmatmul.mubr.f32.gmra.mxu0 %v4950
    %v6355 = vpop.f32.mrf.mxu0
    %v6356 = vadd.f32 %v5907, %v6355
    %v6357 = vpop.f32.mrf.mxu0
    %v6358 = vadd.f32 %v5909, %v6357
    %6359 = vmatprep.mubr.f32.mxu0 %v4955
    %6360 = vmatmul.mubr.f32.gmra.mxu0 %v4954
    %v6361 = vpop.f32.mrf.mxu0
    %v6362 = vadd.f32 %v5913, %v6361
    %v6363 = vpop.f32.mrf.mxu0
    %v6364 = vadd.f32 %v5915, %v6363
    %6365 = vmatprep.mubr.f32.mxu0 %v4959
    %6366 = vmatmul.mubr.f32.gmra.mxu0 %v4958
    %v6367 = vpop.f32.mrf.mxu0
    %v6368 = vadd.f32 %v5919, %v6367
    %v6369 = vpop.f32.mrf.mxu0
    %v6370 = vadd.f32 %v5921, %v6369
    %6371 = vmatprep.mubr.f32.mxu0 %v4963
    %6372 = vmatmul.mubr.f32.gmra.mxu0 %v4962
    %v6373 = vpop.f32.mrf.mxu0
    %v6374 = vadd.f32 %v5925, %v6373
    %v6375 = vpop.f32.mrf.mxu0
    %v6376 = vadd.f32 %v5927, %v6375
    %6377 = vmatprep.mubr.f32.mxu0 %v4967
    %6378 = vmatmul.mubr.f32.gmra.mxu0 %v4966
    %v6379 = vpop.f32.mrf.mxu0
    %v6380 = vadd.f32 %v5931, %v6379
    %v6381 = vpop.f32.mrf.mxu0
    %v6382 = vadd.f32 %v5933, %v6381
    %6383 = vmatprep.mubr.f32.mxu0 %v4971
    %6384 = vmatmul.mubr.f32.gmra.mxu0 %v4970
    %v6385 = vpop.f32.mrf.mxu0
    %v6386 = vadd.f32 %v5937, %v6385
    %v6387 = vpop.f32.mrf.mxu0
    %v6388 = vadd.f32 %v5939, %v6387
    %6389 = vmatprep.mubr.f32.mxu0 %v4975
    %6390 = vmatmul.mubr.f32.gmra.mxu0 %v4974
    %v6391 = vpop.f32.mrf.mxu0
    %v6392 = vadd.f32 %v5943, %v6391
    %v6393 = vpop.f32.mrf.mxu0
    %v6394 = vadd.f32 %v5945, %v6393
    %6395 = vmatprep.mubr.f32.mxu0 %v4979
    %6396 = vmatmul.mubr.f32.gmra.mxu0 %v4978
    %v6397 = vpop.f32.mrf.mxu0
    %v6398 = vadd.f32 %v5949, %v6397
    %v6399 = vpop.f32.mrf.mxu0
    %v6400 = vadd.f32 %v5951, %v6399
    %6401 = vmatprep.mubr.f32.mxu0 %v4983
    %6402 = vmatmul.mubr.f32.gmra.mxu0 %v4982
    %v6403 = vpop.f32.mrf.mxu0
    %v6404 = vadd.f32 %v5955, %v6403
    %v6405 = vpop.f32.mrf.mxu0
    %v6406 = vadd.f32 %v5957, %v6405
    %6407 = vmatprep.mubr.f32.mxu0 %v4987
    %6408 = vmatmul.mubr.f32.gmra.mxu0 %v4986
    %v6409 = vpop.f32.mrf.mxu0
    %v6410 = vadd.f32 %v5961, %v6409
    %v6411 = vpop.f32.mrf.mxu0
    %v6412 = vadd.f32 %v5963, %v6411
    %6413 = vmatprep.mubr.f32.mxu0 %v4991
    %6414 = vmatmul.mubr.f32.gmra.mxu0 %v4990
    %v6415 = vpop.f32.mrf.mxu0
    %v6416 = vadd.f32 %v5967, %v6415
    %v6417 = vpop.f32.mrf.mxu0
    %v6418 = vadd.f32 %v5969, %v6417
    %6419 = vmatprep.mubr.f32.mxu0 %v4995
    %6420 = vmatmul.mubr.f32.gmra.mxu0 %v4994
    %v6421 = vpop.f32.mrf.mxu0
    %v6422 = vadd.f32 %v5973, %v6421
    %v6423 = vpop.f32.mrf.mxu0
    %v6424 = vadd.f32 %v5975, %v6423
    %6425 = vmatprep.mubr.f32.mxu0 %v4999
    %6426 = vmatmul.mubr.f32.gmra.mxu0 %v4998
    %v6427 = vpop.f32.mrf.mxu0
    %v6428 = vadd.f32 %v5979, %v6427
    %v6429 = vpop.f32.mrf.mxu0
    %v6430 = vadd.f32 %v5981, %v6429
    %6431 = vdwg.mxu0
    %6432 = vmatprep.subr.mxu0 %v5319
    %6433 = vmatpush1.msra.mxu0 %v5318
    %6434 = vmatprep.subr.mxu0 %v5315
    %6435 = vmatpush1.msra.mxu0 %v5314
    %6436 = vmatprep.subr.mxu0 %v5311
    %6437 = vmatpush1.msra.mxu0 %v5310
    %6438 = vmatprep.subr.mxu0 %v5307
    %6439 = vmatpush1.msra.mxu0 %v5306
    %6440 = vmatprep.subr.mxu0 %v5303
    %6441 = vmatpush1.msra.mxu0 %v5302
    %6442 = vmatprep.subr.mxu0 %v5299
    %6443 = vmatpush1.msra.mxu0 %v5298
    %6444 = vmatprep.subr.mxu0 %v5295
    %6445 = vmatpush1.msra.mxu0 %v5294
    %6446 = vmatprep.subr.mxu0 %v5291
    %6447 = vmatpush1.msra.mxu0 %v5290
    %6448 = vmatprep.subr.mxu0 %v5287
    %6449 = vmatpush1.msra.mxu0 %v5286
    %6450 = vmatprep.subr.mxu0 %v5283
    %6451 = vmatpush1.msra.mxu0 %v5282
    %6452 = vmatprep.subr.mxu0 %v5279
    %6453 = vmatpush1.msra.mxu0 %v5278
    %6454 = vmatprep.subr.mxu0 %v5275
    %6455 = vmatpush1.msra.mxu0 %v5274
    %6456 = vmatprep.subr.mxu0 %v5271
    %6457 = vmatpush1.msra.mxu0 %v5270
    %6458 = vmatprep.subr.mxu0 %v5267
    %6459 = vmatpush1.msra.mxu0 %v5266
    %6460 = vmatprep.subr.mxu0 %v5263
    %6461 = vmatpush1.msra.mxu0 %v5262
    %6462 = vmatprep.subr.mxu0 %v5259
    %6463 = vmatpush1.msra.mxu0 %v5258
    %6464 = vmatprep.subr.mxu0 %v5383
    %6465 = vmatpush2.msra.mxu0 %v5382
    %6466 = vmatprep.subr.mxu0 %v5379
    %6467 = vmatpush2.msra.mxu0 %v5378
    %6468 = vmatprep.subr.mxu0 %v5375
    %6469 = vmatpush2.msra.mxu0 %v5374
    %6470 = vmatprep.subr.mxu0 %v5371
    %6471 = vmatpush2.msra.mxu0 %v5370
    %6472 = vmatprep.subr.mxu0 %v5367
    %6473 = vmatpush2.msra.mxu0 %v5366
    %6474 = vmatprep.subr.mxu0 %v5363
    %6475 = vmatpush2.msra.mxu0 %v5362
    %6476 = vmatprep.subr.mxu0 %v5359
    %6477 = vmatpush2.msra.mxu0 %v5358
    %6478 = vmatprep.subr.mxu0 %v5355
    %6479 = vmatpush2.msra.mxu0 %v5354
    %6480 = vmatprep.subr.mxu0 %v5351
    %6481 = vmatpush2.msra.mxu0 %v5350
    %6482 = vmatprep.subr.mxu0 %v5347
    %6483 = vmatpush2.msra.mxu0 %v5346
    %6484 = vmatprep.subr.mxu0 %v5343
    %6485 = vmatpush2.msra.mxu0 %v5342
    %6486 = vmatprep.subr.mxu0 %v5339
    %6487 = vmatpush2.msra.mxu0 %v5338
    %6488 = vmatprep.subr.mxu0 %v5335
    %6489 = vmatpush2.msra.mxu0 %v5334
    %6490 = vmatprep.subr.mxu0 %v5331
    %6491 = vmatpush2.msra.mxu0 %v5330
    %6492 = vmatprep.subr.mxu0 %v5327
    %6493 = vmatpush2.msra.mxu0 %v5326
    %6494 = vmatprep.subr.mxu0 %v5323
    %6495 = vmatpush2.msra.mxu0 %v5322
    %6496 = vmatprep.mubr.f32.mxu0 %v4745
    %6497 = vmatmul.mubr.f32.gmra.mxu0 %v4744
    %v6498 = vpop.f32.mrf.mxu0
    %v6499 = vadd.f32 %v5525, %v6498
    %v6500 = vpop.f32.mrf.mxu0
    %v6501 = vadd.f32 %v5529, %v6500
    %6502 = vmatprep.mubr.f32.mxu0 %v4749
    %6503 = vmatmul.mubr.f32.gmra.mxu0 %v4748
    %v6504 = vpop.f32.mrf.mxu0
    %v6505 = vadd.f32 %v5525, %v6504
    %v6506 = vpop.f32.mrf.mxu0
    %v6507 = vadd.f32 %v5529, %v6506
    %6508 = vmatprep.mubr.f32.mxu0 %v4753
    %6509 = vmatmul.mubr.f32.gmra.mxu0 %v4752
    %v6510 = vpop.f32.mrf.mxu0
    %v6511 = vadd.f32 %v5525, %v6510
    %v6512 = vpop.f32.mrf.mxu0
    %v6513 = vadd.f32 %v5529, %v6512
    %6514 = vmatprep.mubr.f32.mxu0 %v4757
    %6515 = vmatmul.mubr.f32.gmra.mxu0 %v4756
    %v6516 = vpop.f32.mrf.mxu0
    %v6517 = vadd.f32 %v5525, %v6516
    %v6518 = vpop.f32.mrf.mxu0
    %v6519 = vadd.f32 %v5529, %v6518
    %6520 = vmatprep.mubr.f32.mxu0 %v4761
    %6521 = vmatmul.mubr.f32.gmra.mxu0 %v4760
    %v6522 = vpop.f32.mrf.mxu0
    %v6523 = vadd.f32 %v5525, %v6522
    %v6524 = vpop.f32.mrf.mxu0
    %v6525 = vadd.f32 %v5529, %v6524
    %6526 = vmatprep.mubr.f32.mxu0 %v4765
    %6527 = vmatmul.mubr.f32.gmra.mxu0 %v4764
    %v6528 = vpop.f32.mrf.mxu0
    %v6529 = vadd.f32 %v5525, %v6528
    %v6530 = vpop.f32.mrf.mxu0
    %v6531 = vadd.f32 %v5529, %v6530
    %6532 = vmatprep.mubr.f32.mxu0 %v4769
    %6533 = vmatmul.mubr.f32.gmra.mxu0 %v4768
    %v6534 = vpop.f32.mrf.mxu0
    %v6535 = vadd.f32 %v5525, %v6534
    %v6536 = vpop.f32.mrf.mxu0
    %v6537 = vadd.f32 %v5529, %v6536
    %6538 = vmatprep.mubr.f32.mxu0 %v4773
    %6539 = vmatmul.mubr.f32.gmra.mxu0 %v4772
    %v6540 = vpop.f32.mrf.mxu0
    %v6541 = vadd.f32 %v5525, %v6540
    %v6542 = vpop.f32.mrf.mxu0
    %v6543 = vadd.f32 %v5529, %v6542
    %6544 = vmatprep.mubr.f32.mxu0 %v4777
    %6545 = vmatmul.mubr.f32.gmra.mxu0 %v4776
    %v6546 = vpop.f32.mrf.mxu0
    %v6547 = vadd.f32 %v5525, %v6546
    %v6548 = vpop.f32.mrf.mxu0
    %v6549 = vadd.f32 %v5529, %v6548
    %6550 = vmatprep.mubr.f32.mxu0 %v4781
    %6551 = vmatmul.mubr.f32.gmra.mxu0 %v4780
    %v6552 = vpop.f32.mrf.mxu0
    %v6553 = vadd.f32 %v5525, %v6552
    %v6554 = vpop.f32.mrf.mxu0
    %v6555 = vadd.f32 %v5529, %v6554
    %6556 = vmatprep.mubr.f32.mxu0 %v4785
    %6557 = vmatmul.mubr.f32.gmra.mxu0 %v4784
    %v6558 = vpop.f32.mrf.mxu0
    %v6559 = vadd.f32 %v5525, %v6558
    %v6560 = vpop.f32.mrf.mxu0
    %v6561 = vadd.f32 %v5529, %v6560
    %6562 = vmatprep.mubr.f32.mxu0 %v4789
    %6563 = vmatmul.mubr.f32.gmra.mxu0 %v4788
    %v6564 = vpop.f32.mrf.mxu0
    %v6565 = vadd.f32 %v5525, %v6564
    %v6566 = vpop.f32.mrf.mxu0
    %v6567 = vadd.f32 %v5529, %v6566
    %6568 = vmatprep.mubr.f32.mxu0 %v4793
    %6569 = vmatmul.mubr.f32.gmra.mxu0 %v4792
    %v6570 = vpop.f32.mrf.mxu0
    %v6571 = vadd.f32 %v5525, %v6570
    %v6572 = vpop.f32.mrf.mxu0
    %v6573 = vadd.f32 %v5529, %v6572
    %6574 = vmatprep.mubr.f32.mxu0 %v4797
    %6575 = vmatmul.mubr.f32.gmra.mxu0 %v4796
    %v6576 = vpop.f32.mrf.mxu0
    %v6577 = vadd.f32 %v5525, %v6576
    %v6578 = vpop.f32.mrf.mxu0
    %v6579 = vadd.f32 %v5529, %v6578
    %6580 = vmatprep.mubr.f32.mxu0 %v4801
    %6581 = vmatmul.mubr.f32.gmra.mxu0 %v4800
    %v6582 = vpop.f32.mrf.mxu0
    %v6583 = vadd.f32 %v5525, %v6582
    %v6584 = vpop.f32.mrf.mxu0
    %v6585 = vadd.f32 %v5529, %v6584
    %6586 = vmatprep.mubr.f32.mxu0 %v4805
    %6587 = vmatmul.mubr.f32.gmra.mxu0 %v4804
    %v6588 = vpop.f32.mrf.mxu0
    %v6589 = vadd.f32 %v5525, %v6588
    %v6590 = vpop.f32.mrf.mxu0
    %v6591 = vadd.f32 %v5529, %v6590
    %6592 = vmatprep.mubr.f32.mxu0 %v4809
    %6593 = vmatmul.mubr.f32.gmra.mxu0 %v4808
    %v6594 = vpop.f32.mrf.mxu0
    %v6595 = vadd.f32 %v5525, %v6594
    %v6596 = vpop.f32.mrf.mxu0
    %v6597 = vadd.f32 %v5529, %v6596
    %6598 = vmatprep.mubr.f32.mxu0 %v4813
    %6599 = vmatmul.mubr.f32.gmra.mxu0 %v4812
    %v6600 = vpop.f32.mrf.mxu0
    %v6601 = vadd.f32 %v5525, %v6600
    %v6602 = vpop.f32.mrf.mxu0
    %v6603 = vadd.f32 %v5529, %v6602
    %6604 = vmatprep.mubr.f32.mxu0 %v4817
    %6605 = vmatmul.mubr.f32.gmra.mxu0 %v4816
    %v6606 = vpop.f32.mrf.mxu0
    %v6607 = vadd.f32 %v5525, %v6606
    %v6608 = vpop.f32.mrf.mxu0
    %v6609 = vadd.f32 %v5529, %v6608
    %6610 = vmatprep.mubr.f32.mxu0 %v4821
    %6611 = vmatmul.mubr.f32.gmra.mxu0 %v4820
    %v6612 = vpop.f32.mrf.mxu0
    %v6613 = vadd.f32 %v5525, %v6612
    %v6614 = vpop.f32.mrf.mxu0
    %v6615 = vadd.f32 %v5529, %v6614
    %6616 = vmatprep.mubr.f32.mxu0 %v4825
    %6617 = vmatmul.mubr.f32.gmra.mxu0 %v4824
    %v6618 = vpop.f32.mrf.mxu0
    %v6619 = vadd.f32 %v5525, %v6618
    %v6620 = vpop.f32.mrf.mxu0
    %v6621 = vadd.f32 %v5529, %v6620
    %6622 = vmatprep.mubr.f32.mxu0 %v4829
    %6623 = vmatmul.mubr.f32.gmra.mxu0 %v4828
    %v6624 = vpop.f32.mrf.mxu0
    %v6625 = vadd.f32 %v5525, %v6624
    %v6626 = vpop.f32.mrf.mxu0
    %v6627 = vadd.f32 %v5529, %v6626
    %6628 = vmatprep.mubr.f32.mxu0 %v4833
    %6629 = vmatmul.mubr.f32.gmra.mxu0 %v4832
    %v6630 = vpop.f32.mrf.mxu0
    %v6631 = vadd.f32 %v5525, %v6630
    %v6632 = vpop.f32.mrf.mxu0
    %v6633 = vadd.f32 %v5529, %v6632
    %6634 = vmatprep.mubr.f32.mxu0 %v4837
    %6635 = vmatmul.mubr.f32.gmra.mxu0 %v4836
    %v6636 = vpop.f32.mrf.mxu0
    %v6637 = vadd.f32 %v5525, %v6636
    %v6638 = vpop.f32.mrf.mxu0
    %v6639 = vadd.f32 %v5529, %v6638
    %6640 = vmatprep.mubr.f32.mxu0 %v4841
    %6641 = vmatmul.mubr.f32.gmra.mxu0 %v4840
    %v6642 = vpop.f32.mrf.mxu0
    %v6643 = vadd.f32 %v5525, %v6642
    %v6644 = vpop.f32.mrf.mxu0
    %v6645 = vadd.f32 %v5529, %v6644
    %6646 = vmatprep.mubr.f32.mxu0 %v4845
    %6647 = vmatmul.mubr.f32.gmra.mxu0 %v4844
    %v6648 = vpop.f32.mrf.mxu0
    %v6649 = vadd.f32 %v5525, %v6648
    %v6650 = vpop.f32.mrf.mxu0
    %v6651 = vadd.f32 %v5529, %v6650
    %6652 = vmatprep.mubr.f32.mxu0 %v4849
    %6653 = vmatmul.mubr.f32.gmra.mxu0 %v4848
    %v6654 = vpop.f32.mrf.mxu0
    %v6655 = vadd.f32 %v5525, %v6654
    %v6656 = vpop.f32.mrf.mxu0
    %v6657 = vadd.f32 %v5529, %v6656
    %6658 = vmatprep.mubr.f32.mxu0 %v4853
    %6659 = vmatmul.mubr.f32.gmra.mxu0 %v4852
    %v6660 = vpop.f32.mrf.mxu0
    %v6661 = vadd.f32 %v5525, %v6660
    %v6662 = vpop.f32.mrf.mxu0
    %v6663 = vadd.f32 %v5529, %v6662
    %6664 = vmatprep.mubr.f32.mxu0 %v4857
    %6665 = vmatmul.mubr.f32.gmra.mxu0 %v4856
    %v6666 = vpop.f32.mrf.mxu0
    %v6667 = vadd.f32 %v5525, %v6666
    %v6668 = vpop.f32.mrf.mxu0
    %v6669 = vadd.f32 %v5529, %v6668
    %6670 = vmatprep.mubr.f32.mxu0 %v4861
    %6671 = vmatmul.mubr.f32.gmra.mxu0 %v4860
    %v6672 = vpop.f32.mrf.mxu0
    %v6673 = vadd.f32 %v5525, %v6672
    %v6674 = vpop.f32.mrf.mxu0
    %v6675 = vadd.f32 %v5529, %v6674
    %6676 = vmatprep.mubr.f32.mxu0 %v4865
    %6677 = vmatmul.mubr.f32.gmra.mxu0 %v4864
    %v6678 = vpop.f32.mrf.mxu0
    %v6679 = vadd.f32 %v5525, %v6678
    %v6680 = vpop.f32.mrf.mxu0
    %v6681 = vadd.f32 %v5529, %v6680
    %6682 = vmatprep.mubr.f32.mxu0 %v4869
    %6683 = vmatmul.mubr.f32.gmra.mxu0 %v4868
    %v6684 = vpop.f32.mrf.mxu0
    %v6685 = vadd.f32 %v5525, %v6684
    %v6686 = vpop.f32.mrf.mxu0
    %v6687 = vadd.f32 %v5529, %v6686
    %6688 = vmatprep.mubr.f32.mxu0 %v4873
    %6689 = vmatmul.mubr.f32.gmra.mxu0 %v4872
    %v6690 = vpop.f32.mrf.mxu0
    %v6691 = vadd.f32 %v5525, %v6690
    %v6692 = vpop.f32.mrf.mxu0
    %v6693 = vadd.f32 %v5529, %v6692
    %6694 = vmatprep.mubr.f32.mxu0 %v4877
    %6695 = vmatmul.mubr.f32.gmra.mxu0 %v4876
    %v6696 = vpop.f32.mrf.mxu0
    %v6697 = vadd.f32 %v5525, %v6696
    %v6698 = vpop.f32.mrf.mxu0
    %v6699 = vadd.f32 %v5529, %v6698
    %6700 = vmatprep.mubr.f32.mxu0 %v4881
    %6701 = vmatmul.mubr.f32.gmra.mxu0 %v4880
    %v6702 = vpop.f32.mrf.mxu0
    %v6703 = vadd.f32 %v5525, %v6702
    %v6704 = vpop.f32.mrf.mxu0
    %v6705 = vadd.f32 %v5529, %v6704
    %6706 = vmatprep.mubr.f32.mxu0 %v4885
    %6707 = vmatmul.mubr.f32.gmra.mxu0 %v4884
    %v6708 = vpop.f32.mrf.mxu0
    %v6709 = vadd.f32 %v5525, %v6708
    %v6710 = vpop.f32.mrf.mxu0
    %v6711 = vadd.f32 %v5529, %v6710
    %6712 = vmatprep.mubr.f32.mxu0 %v4889
    %6713 = vmatmul.mubr.f32.gmra.mxu0 %v4888
    %v6714 = vpop.f32.mrf.mxu0
    %v6715 = vadd.f32 %v5525, %v6714
    %v6716 = vpop.f32.mrf.mxu0
    %v6717 = vadd.f32 %v5529, %v6716
    %6718 = vmatprep.mubr.f32.mxu0 %v4893
    %6719 = vmatmul.mubr.f32.gmra.mxu0 %v4892
    %v6720 = vpop.f32.mrf.mxu0
    %v6721 = vadd.f32 %v5525, %v6720
    %v6722 = vpop.f32.mrf.mxu0
    %v6723 = vadd.f32 %v5529, %v6722
    %6724 = vmatprep.mubr.f32.mxu0 %v4897
    %6725 = vmatmul.mubr.f32.gmra.mxu0 %v4896
    %v6726 = vpop.f32.mrf.mxu0
    %v6727 = vadd.f32 %v5525, %v6726
    %v6728 = vpop.f32.mrf.mxu0
    %v6729 = vadd.f32 %v5529, %v6728
    %6730 = vmatprep.mubr.f32.mxu0 %v4901
    %6731 = vmatmul.mubr.f32.gmra.mxu0 %v4900
    %v6732 = vpop.f32.mrf.mxu0
    %v6733 = vadd.f32 %v5525, %v6732
    %v6734 = vpop.f32.mrf.mxu0
    %v6735 = vadd.f32 %v5529, %v6734
    %6736 = vmatprep.mubr.f32.mxu0 %v4905
    %6737 = vmatmul.mubr.f32.gmra.mxu0 %v4904
    %v6738 = vpop.f32.mrf.mxu0
    %v6739 = vadd.f32 %v5525, %v6738
    %v6740 = vpop.f32.mrf.mxu0
    %v6741 = vadd.f32 %v5529, %v6740
    %6742 = vmatprep.mubr.f32.mxu0 %v4909
    %6743 = vmatmul.mubr.f32.gmra.mxu0 %v4908
    %v6744 = vpop.f32.mrf.mxu0
    %v6745 = vadd.f32 %v5525, %v6744
    %v6746 = vpop.f32.mrf.mxu0
    %v6747 = vadd.f32 %v5529, %v6746
    %6748 = vmatprep.mubr.f32.mxu0 %v4913
    %6749 = vmatmul.mubr.f32.gmra.mxu0 %v4912
    %v6750 = vpop.f32.mrf.mxu0
    %v6751 = vadd.f32 %v5525, %v6750
    %v6752 = vpop.f32.mrf.mxu0
    %v6753 = vadd.f32 %v5529, %v6752
    %6754 = vmatprep.mubr.f32.mxu0 %v4917
    %6755 = vmatmul.mubr.f32.gmra.mxu0 %v4916
    %v6756 = vpop.f32.mrf.mxu0
    %v6757 = vadd.f32 %v5525, %v6756
    %v6758 = vpop.f32.mrf.mxu0
    %v6759 = vadd.f32 %v5529, %v6758
    %6760 = vmatprep.mubr.f32.mxu0 %v4921
    %6761 = vmatmul.mubr.f32.gmra.mxu0 %v4920
    %v6762 = vpop.f32.mrf.mxu0
    %v6763 = vadd.f32 %v5525, %v6762
    %v6764 = vpop.f32.mrf.mxu0
    %v6765 = vadd.f32 %v5529, %v6764
    %6766 = vmatprep.mubr.f32.mxu0 %v4925
    %6767 = vmatmul.mubr.f32.gmra.mxu0 %v4924
    %v6768 = vpop.f32.mrf.mxu0
    %v6769 = vadd.f32 %v5525, %v6768
    %v6770 = vpop.f32.mrf.mxu0
    %v6771 = vadd.f32 %v5529, %v6770
    %6772 = vmatprep.mubr.f32.mxu0 %v4929
    %6773 = vmatmul.mubr.f32.gmra.mxu0 %v4928
    %v6774 = vpop.f32.mrf.mxu0
    %v6775 = vadd.f32 %v5525, %v6774
    %v6776 = vpop.f32.mrf.mxu0
    %v6777 = vadd.f32 %v5529, %v6776
    %6778 = vmatprep.mubr.f32.mxu0 %v4933
    %6779 = vmatmul.mubr.f32.gmra.mxu0 %v4932
    %v6780 = vpop.f32.mrf.mxu0
    %v6781 = vadd.f32 %v5525, %v6780
    %v6782 = vpop.f32.mrf.mxu0
    %v6783 = vadd.f32 %v5529, %v6782
    %6784 = vmatprep.mubr.f32.mxu0 %v4937
    %6785 = vmatmul.mubr.f32.gmra.mxu0 %v4936
    %v6786 = vpop.f32.mrf.mxu0
    %v6787 = vadd.f32 %v5525, %v6786
    %v6788 = vpop.f32.mrf.mxu0
    %v6789 = vadd.f32 %v5529, %v6788
    %6790 = vmatprep.mubr.f32.mxu0 %v4941
    %6791 = vmatmul.mubr.f32.gmra.mxu0 %v4940
    %v6792 = vpop.f32.mrf.mxu0
    %v6793 = vadd.f32 %v5525, %v6792
    %v6794 = vpop.f32.mrf.mxu0
    %v6795 = vadd.f32 %v5529, %v6794
    %6796 = vmatprep.mubr.f32.mxu0 %v4945
    %6797 = vmatmul.mubr.f32.gmra.mxu0 %v4944
    %v6798 = vpop.f32.mrf.mxu0
    %v6799 = vadd.f32 %v5525, %v6798
    %v6800 = vpop.f32.mrf.mxu0
    %v6801 = vadd.f32 %v5529, %v6800
    %6802 = vmatprep.mubr.f32.mxu0 %v4949
    %6803 = vmatmul.mubr.f32.gmra.mxu0 %v4948
    %v6804 = vpop.f32.mrf.mxu0
    %v6805 = vadd.f32 %v5525, %v6804
    %v6806 = vpop.f32.mrf.mxu0
    %v6807 = vadd.f32 %v5529, %v6806
    %6808 = vmatprep.mubr.f32.mxu0 %v4953
    %6809 = vmatmul.mubr.f32.gmra.mxu0 %v4952
    %v6810 = vpop.f32.mrf.mxu0
    %v6811 = vadd.f32 %v5525, %v6810
    %v6812 = vpop.f32.mrf.mxu0
    %v6813 = vadd.f32 %v5529, %v6812
    %6814 = vmatprep.mubr.f32.mxu0 %v4957
    %6815 = vmatmul.mubr.f32.gmra.mxu0 %v4956
    %v6816 = vpop.f32.mrf.mxu0
    %v6817 = vadd.f32 %v5525, %v6816
    %v6818 = vpop.f32.mrf.mxu0
    %v6819 = vadd.f32 %v5529, %v6818
    %6820 = vmatprep.mubr.f32.mxu0 %v4961
    %6821 = vmatmul.mubr.f32.gmra.mxu0 %v4960
    %v6822 = vpop.f32.mrf.mxu0
    %v6823 = vadd.f32 %v5525, %v6822
    %v6824 = vpop.f32.mrf.mxu0
    %v6825 = vadd.f32 %v5529, %v6824
    %6826 = vmatprep.mubr.f32.mxu0 %v4965
    %6827 = vmatmul.mubr.f32.gmra.mxu0 %v4964
    %v6828 = vpop.f32.mrf.mxu0
    %v6829 = vadd.f32 %v5525, %v6828
    %v6830 = vpop.f32.mrf.mxu0
    %v6831 = vadd.f32 %v5529, %v6830
    %6832 = vmatprep.mubr.f32.mxu0 %v4969
    %6833 = vmatmul.mubr.f32.gmra.mxu0 %v4968
    %v6834 = vpop.f32.mrf.mxu0
    %v6835 = vadd.f32 %v5525, %v6834
    %v6836 = vpop.f32.mrf.mxu0
    %v6837 = vadd.f32 %v5529, %v6836
    %6838 = vmatprep.mubr.f32.mxu0 %v4973
    %6839 = vmatmul.mubr.f32.gmra.mxu0 %v4972
    %v6840 = vpop.f32.mrf.mxu0
    %v6841 = vadd.f32 %v5525, %v6840
    %v6842 = vpop.f32.mrf.mxu0
    %v6843 = vadd.f32 %v5529, %v6842
    %6844 = vmatprep.mubr.f32.mxu0 %v4977
    %6845 = vmatmul.mubr.f32.gmra.mxu0 %v4976
    %v6846 = vpop.f32.mrf.mxu0
    %v6847 = vadd.f32 %v5525, %v6846
    %v6848 = vpop.f32.mrf.mxu0
    %v6849 = vadd.f32 %v5529, %v6848
    %6850 = vmatprep.mubr.f32.mxu0 %v4981
    %6851 = vmatmul.mubr.f32.gmra.mxu0 %v4980
    %v6852 = vpop.f32.mrf.mxu0
    %v6853 = vadd.f32 %v5525, %v6852
    %v6854 = vpop.f32.mrf.mxu0
    %v6855 = vadd.f32 %v5529, %v6854
    %6856 = vmatprep.mubr.f32.mxu0 %v4985
    %6857 = vmatmul.mubr.f32.gmra.mxu0 %v4984
    %v6858 = vpop.f32.mrf.mxu0
    %v6859 = vadd.f32 %v5525, %v6858
    %v6860 = vpop.f32.mrf.mxu0
    %v6861 = vadd.f32 %v5529, %v6860
    %6862 = vmatprep.mubr.f32.mxu0 %v4989
    %6863 = vmatmul.mubr.f32.gmra.mxu0 %v4988
    %v6864 = vpop.f32.mrf.mxu0
    %v6865 = vadd.f32 %v5525, %v6864
    %v6866 = vpop.f32.mrf.mxu0
    %v6867 = vadd.f32 %v5529, %v6866
    %6868 = vmatprep.mubr.f32.mxu0 %v4993
    %6869 = vmatmul.mubr.f32.gmra.mxu0 %v4992
    %v6870 = vpop.f32.mrf.mxu0
    %v6871 = vadd.f32 %v5525, %v6870
    %v6872 = vpop.f32.mrf.mxu0
    %v6873 = vadd.f32 %v5529, %v6872
    %6874 = vmatprep.mubr.f32.mxu0 %v4997
    %6875 = vmatmul.mubr.f32.gmra.mxu0 %v4996
    %v6876 = vpop.f32.mrf.mxu0
    %v6877 = vadd.f32 %v5525, %v6876
    %v6878 = vpop.f32.mrf.mxu0
    %v6879 = vadd.f32 %v5529, %v6878
    %6880 = vdwg.mxu0
    %6881 = vmatprep.subr.mxu0 %v5447
    %6882 = vmatpush1.msra.mxu0 %v5446
    %6883 = vmatprep.subr.mxu0 %v5443
    %6884 = vmatpush1.msra.mxu0 %v5442
    %6885 = vmatprep.subr.mxu0 %v5439
    %6886 = vmatpush1.msra.mxu0 %v5438
    %6887 = vmatprep.subr.mxu0 %v5435
    %6888 = vmatpush1.msra.mxu0 %v5434
    %6889 = vmatprep.subr.mxu0 %v5431
    %6890 = vmatpush1.msra.mxu0 %v5430
    %6891 = vmatprep.subr.mxu0 %v5427
    %6892 = vmatpush1.msra.mxu0 %v5426
    %6893 = vmatprep.subr.mxu0 %v5423
    %6894 = vmatpush1.msra.mxu0 %v5422
    %6895 = vmatprep.subr.mxu0 %v5419
    %6896 = vmatpush1.msra.mxu0 %v5418
    %6897 = vmatprep.subr.mxu0 %v5415
    %6898 = vmatpush1.msra.mxu0 %v5414
    %6899 = vmatprep.subr.mxu0 %v5411
    %6900 = vmatpush1.msra.mxu0 %v5410
    %6901 = vmatprep.subr.mxu0 %v5407
    %6902 = vmatpush1.msra.mxu0 %v5406
    %6903 = vmatprep.subr.mxu0 %v5403
    %6904 = vmatpush1.msra.mxu0 %v5402
    %6905 = vmatprep.subr.mxu0 %v5399
    %6906 = vmatpush1.msra.mxu0 %v5398
    %6907 = vmatprep.subr.mxu0 %v5395
    %6908 = vmatpush1.msra.mxu0 %v5394
    %6909 = vmatprep.subr.mxu0 %v5391
    %6910 = vmatpush1.msra.mxu0 %v5390
    %6911 = vmatprep.subr.mxu0 %v5387
    %6912 = vmatpush1.msra.mxu0 %v5386
    %6913 = vmatprep.subr.mxu0 %v5511
    %6914 = vmatpush2.msra.mxu0 %v5510
    %6915 = vmatprep.subr.mxu0 %v5507
    %6916 = vmatpush2.msra.mxu0 %v5506
    %6917 = vmatprep.subr.mxu0 %v5503
    %6918 = vmatpush2.msra.mxu0 %v5502
    %6919 = vmatprep.subr.mxu0 %v5499
    %6920 = vmatpush2.msra.mxu0 %v5498
    %6921 = vmatprep.subr.mxu0 %v5495
    %6922 = vmatpush2.msra.mxu0 %v5494
    %6923 = vmatprep.subr.mxu0 %v5491
    %6924 = vmatpush2.msra.mxu0 %v5490
    %6925 = vmatprep.subr.mxu0 %v5487
    %6926 = vmatpush2.msra.mxu0 %v5486
    %6927 = vmatprep.subr.mxu0 %v5483
    %6928 = vmatpush2.msra.mxu0 %v5482
    %6929 = vmatprep.subr.mxu0 %v5479
    %6930 = vmatpush2.msra.mxu0 %v5478
    %6931 = vmatprep.subr.mxu0 %v5475
    %6932 = vmatpush2.msra.mxu0 %v5474
    %6933 = vmatprep.subr.mxu0 %v5471
    %6934 = vmatpush2.msra.mxu0 %v5470
    %6935 = vmatprep.subr.mxu0 %v5467
    %6936 = vmatpush2.msra.mxu0 %v5466
    %6937 = vmatprep.subr.mxu0 %v5463
    %6938 = vmatpush2.msra.mxu0 %v5462
    %6939 = vmatprep.subr.mxu0 %v5459
    %6940 = vmatpush2.msra.mxu0 %v5458
    %6941 = vmatprep.subr.mxu0 %v5455
    %6942 = vmatpush2.msra.mxu0 %v5454
    %6943 = vmatprep.subr.mxu0 %v5451
    %6944 = vmatpush2.msra.mxu0 %v5450
    %6945 = vmatprep.mubr.f32.mxu0 %v4747
    %6946 = vmatmul.mubr.f32.gmra.mxu0 %v4746
    %v6947 = vpop.f32.mrf.mxu0
    %v6948 = vadd.f32 %v6499, %v6947
    %v6949 = vpop.f32.mrf.mxu0
    %v6950 = vadd.f32 %v6501, %v6949
    %6951 = vmatprep.mubr.f32.mxu0 %v4751
    %6952 = vmatmul.mubr.f32.gmra.mxu0 %v4750
    %v6953 = vpop.f32.mrf.mxu0
    %v6954 = vadd.f32 %v6505, %v6953
    %v6955 = vpop.f32.mrf.mxu0
    %v6956 = vadd.f32 %v6507, %v6955
    %6957 = vmatprep.mubr.f32.mxu0 %v4755
    %6958 = vmatmul.mubr.f32.gmra.mxu0 %v4754
    %v6959 = vpop.f32.mrf.mxu0
    %v6960 = vadd.f32 %v6511, %v6959
    %v6961 = vpop.f32.mrf.mxu0
    %v6962 = vadd.f32 %v6513, %v6961
    %6963 = vmatprep.mubr.f32.mxu0 %v4759
    %6964 = vmatmul.mubr.f32.gmra.mxu0 %v4758
    %v6965 = vpop.f32.mrf.mxu0
    %v6966 = vadd.f32 %v6517, %v6965
    %v6967 = vpop.f32.mrf.mxu0
    %v6968 = vadd.f32 %v6519, %v6967
    %6969 = vmatprep.mubr.f32.mxu0 %v4763
    %6970 = vmatmul.mubr.f32.gmra.mxu0 %v4762
    %v6971 = vpop.f32.mrf.mxu0
    %v6972 = vadd.f32 %v6523, %v6971
    %v6973 = vpop.f32.mrf.mxu0
    %v6974 = vadd.f32 %v6525, %v6973
    %6975 = vmatprep.mubr.f32.mxu0 %v4767
    %6976 = vmatmul.mubr.f32.gmra.mxu0 %v4766
    %v6977 = vpop.f32.mrf.mxu0
    %v6978 = vadd.f32 %v6529, %v6977
    %v6979 = vpop.f32.mrf.mxu0
    %v6980 = vadd.f32 %v6531, %v6979
    %6981 = vmatprep.mubr.f32.mxu0 %v4771
    %6982 = vmatmul.mubr.f32.gmra.mxu0 %v4770
    %v6983 = vpop.f32.mrf.mxu0
    %v6984 = vadd.f32 %v6535, %v6983
    %v6985 = vpop.f32.mrf.mxu0
    %v6986 = vadd.f32 %v6537, %v6985
    %6987 = vmatprep.mubr.f32.mxu0 %v4775
    %6988 = vmatmul.mubr.f32.gmra.mxu0 %v4774
    %v6989 = vpop.f32.mrf.mxu0
    %v6990 = vadd.f32 %v6541, %v6989
    %v6991 = vpop.f32.mrf.mxu0
    %v6992 = vadd.f32 %v6543, %v6991
    %6993 = vmatprep.mubr.f32.mxu0 %v4779
    %6994 = vmatmul.mubr.f32.gmra.mxu0 %v4778
    %v6995 = vpop.f32.mrf.mxu0
    %v6996 = vadd.f32 %v6547, %v6995
    %v6997 = vpop.f32.mrf.mxu0
    %v6998 = vadd.f32 %v6549, %v6997
    %6999 = vmatprep.mubr.f32.mxu0 %v4783
    %7000 = vmatmul.mubr.f32.gmra.mxu0 %v4782
    %v7001 = vpop.f32.mrf.mxu0
    %v7002 = vadd.f32 %v6553, %v7001
    %v7003 = vpop.f32.mrf.mxu0
    %v7004 = vadd.f32 %v6555, %v7003
    %7005 = vmatprep.mubr.f32.mxu0 %v4787
    %7006 = vmatmul.mubr.f32.gmra.mxu0 %v4786
    %v7007 = vpop.f32.mrf.mxu0
    %v7008 = vadd.f32 %v6559, %v7007
    %v7009 = vpop.f32.mrf.mxu0
    %v7010 = vadd.f32 %v6561, %v7009
    %7011 = vmatprep.mubr.f32.mxu0 %v4791
    %7012 = vmatmul.mubr.f32.gmra.mxu0 %v4790
    %v7013 = vpop.f32.mrf.mxu0
    %v7014 = vadd.f32 %v6565, %v7013
    %v7015 = vpop.f32.mrf.mxu0
    %v7016 = vadd.f32 %v6567, %v7015
    %7017 = vmatprep.mubr.f32.mxu0 %v4795
    %7018 = vmatmul.mubr.f32.gmra.mxu0 %v4794
    %v7019 = vpop.f32.mrf.mxu0
    %v7020 = vadd.f32 %v6571, %v7019
    %v7021 = vpop.f32.mrf.mxu0
    %v7022 = vadd.f32 %v6573, %v7021
    %7023 = vmatprep.mubr.f32.mxu0 %v4799
    %7024 = vmatmul.mubr.f32.gmra.mxu0 %v4798
    %v7025 = vpop.f32.mrf.mxu0
    %v7026 = vadd.f32 %v6577, %v7025
    %v7027 = vpop.f32.mrf.mxu0
    %v7028 = vadd.f32 %v6579, %v7027
    %7029 = vmatprep.mubr.f32.mxu0 %v4803
    %7030 = vmatmul.mubr.f32.gmra.mxu0 %v4802
    %v7031 = vpop.f32.mrf.mxu0
    %v7032 = vadd.f32 %v6583, %v7031
    %v7033 = vpop.f32.mrf.mxu0
    %v7034 = vadd.f32 %v6585, %v7033
    %7035 = vmatprep.mubr.f32.mxu0 %v4807
    %7036 = vmatmul.mubr.f32.gmra.mxu0 %v4806
    %v7037 = vpop.f32.mrf.mxu0
    %v7038 = vadd.f32 %v6589, %v7037
    %v7039 = vpop.f32.mrf.mxu0
    %v7040 = vadd.f32 %v6591, %v7039
    %7041 = vmatprep.mubr.f32.mxu0 %v4811
    %7042 = vmatmul.mubr.f32.gmra.mxu0 %v4810
    %v7043 = vpop.f32.mrf.mxu0
    %v7044 = vadd.f32 %v6595, %v7043
    %v7045 = vpop.f32.mrf.mxu0
    %v7046 = vadd.f32 %v6597, %v7045
    %7047 = vmatprep.mubr.f32.mxu0 %v4815
    %7048 = vmatmul.mubr.f32.gmra.mxu0 %v4814
    %v7049 = vpop.f32.mrf.mxu0
    %v7050 = vadd.f32 %v6601, %v7049
    %v7051 = vpop.f32.mrf.mxu0
    %v7052 = vadd.f32 %v6603, %v7051
    %7053 = vmatprep.mubr.f32.mxu0 %v4819
    %7054 = vmatmul.mubr.f32.gmra.mxu0 %v4818
    %v7055 = vpop.f32.mrf.mxu0
    %v7056 = vadd.f32 %v6607, %v7055
    %v7057 = vpop.f32.mrf.mxu0
    %v7058 = vadd.f32 %v6609, %v7057
    %7059 = vmatprep.mubr.f32.mxu0 %v4823
    %7060 = vmatmul.mubr.f32.gmra.mxu0 %v4822
    %v7061 = vpop.f32.mrf.mxu0
    %v7062 = vadd.f32 %v6613, %v7061
    %v7063 = vpop.f32.mrf.mxu0
    %v7064 = vadd.f32 %v6615, %v7063
    %7065 = vmatprep.mubr.f32.mxu0 %v4827
    %7066 = vmatmul.mubr.f32.gmra.mxu0 %v4826
    %v7067 = vpop.f32.mrf.mxu0
    %v7068 = vadd.f32 %v6619, %v7067
    %v7069 = vpop.f32.mrf.mxu0
    %v7070 = vadd.f32 %v6621, %v7069
    %7071 = vmatprep.mubr.f32.mxu0 %v4831
    %7072 = vmatmul.mubr.f32.gmra.mxu0 %v4830
    %v7073 = vpop.f32.mrf.mxu0
    %v7074 = vadd.f32 %v6625, %v7073
    %v7075 = vpop.f32.mrf.mxu0
    %v7076 = vadd.f32 %v6627, %v7075
    %7077 = vmatprep.mubr.f32.mxu0 %v4835
    %7078 = vmatmul.mubr.f32.gmra.mxu0 %v4834
    %v7079 = vpop.f32.mrf.mxu0
    %v7080 = vadd.f32 %v6631, %v7079
    %v7081 = vpop.f32.mrf.mxu0
    %v7082 = vadd.f32 %v6633, %v7081
    %7083 = vmatprep.mubr.f32.mxu0 %v4839
    %7084 = vmatmul.mubr.f32.gmra.mxu0 %v4838
    %v7085 = vpop.f32.mrf.mxu0
    %v7086 = vadd.f32 %v6637, %v7085
    %v7087 = vpop.f32.mrf.mxu0
    %v7088 = vadd.f32 %v6639, %v7087
    %7089 = vmatprep.mubr.f32.mxu0 %v4843
    %7090 = vmatmul.mubr.f32.gmra.mxu0 %v4842
    %v7091 = vpop.f32.mrf.mxu0
    %v7092 = vadd.f32 %v6643, %v7091
    %v7093 = vpop.f32.mrf.mxu0
    %v7094 = vadd.f32 %v6645, %v7093
    %7095 = vmatprep.mubr.f32.mxu0 %v4847
    %7096 = vmatmul.mubr.f32.gmra.mxu0 %v4846
    %v7097 = vpop.f32.mrf.mxu0
    %v7098 = vadd.f32 %v6649, %v7097
    %v7099 = vpop.f32.mrf.mxu0
    %v7100 = vadd.f32 %v6651, %v7099
    %7101 = vmatprep.mubr.f32.mxu0 %v4851
    %7102 = vmatmul.mubr.f32.gmra.mxu0 %v4850
    %v7103 = vpop.f32.mrf.mxu0
    %v7104 = vadd.f32 %v6655, %v7103
    %v7105 = vpop.f32.mrf.mxu0
    %v7106 = vadd.f32 %v6657, %v7105
    %7107 = vmatprep.mubr.f32.mxu0 %v4855
    %7108 = vmatmul.mubr.f32.gmra.mxu0 %v4854
    %v7109 = vpop.f32.mrf.mxu0
    %v7110 = vadd.f32 %v6661, %v7109
    %v7111 = vpop.f32.mrf.mxu0
    %v7112 = vadd.f32 %v6663, %v7111
    %7113 = vmatprep.mubr.f32.mxu0 %v4859
    %7114 = vmatmul.mubr.f32.gmra.mxu0 %v4858
    %v7115 = vpop.f32.mrf.mxu0
    %v7116 = vadd.f32 %v6667, %v7115
    %v7117 = vpop.f32.mrf.mxu0
    %v7118 = vadd.f32 %v6669, %v7117
    %7119 = vmatprep.mubr.f32.mxu0 %v4863
    %7120 = vmatmul.mubr.f32.gmra.mxu0 %v4862
    %v7121 = vpop.f32.mrf.mxu0
    %v7122 = vadd.f32 %v6673, %v7121
    %v7123 = vpop.f32.mrf.mxu0
    %v7124 = vadd.f32 %v6675, %v7123
    %7125 = vmatprep.mubr.f32.mxu0 %v4867
    %7126 = vmatmul.mubr.f32.gmra.mxu0 %v4866
    %v7127 = vpop.f32.mrf.mxu0
    %v7128 = vadd.f32 %v6679, %v7127
    %v7129 = vpop.f32.mrf.mxu0
    %v7130 = vadd.f32 %v6681, %v7129
    %7131 = vmatprep.mubr.f32.mxu0 %v4871
    %7132 = vmatmul.mubr.f32.gmra.mxu0 %v4870
    %v7133 = vpop.f32.mrf.mxu0
    %v7134 = vadd.f32 %v6685, %v7133
    %v7135 = vpop.f32.mrf.mxu0
    %v7136 = vadd.f32 %v6687, %v7135
    %7137 = vmatprep.mubr.f32.mxu0 %v4875
    %7138 = vmatmul.mubr.f32.gmra.mxu0 %v4874
    %v7139 = vpop.f32.mrf.mxu0
    %v7140 = vadd.f32 %v6691, %v7139
    %v7141 = vpop.f32.mrf.mxu0
    %v7142 = vadd.f32 %v6693, %v7141
    %7143 = vmatprep.mubr.f32.mxu0 %v4879
    %7144 = vmatmul.mubr.f32.gmra.mxu0 %v4878
    %v7145 = vpop.f32.mrf.mxu0
    %v7146 = vadd.f32 %v6697, %v7145
    %v7147 = vpop.f32.mrf.mxu0
    %v7148 = vadd.f32 %v6699, %v7147
    %7149 = vmatprep.mubr.f32.mxu0 %v4883
    %7150 = vmatmul.mubr.f32.gmra.mxu0 %v4882
    %v7151 = vpop.f32.mrf.mxu0
    %v7152 = vadd.f32 %v6703, %v7151
    %v7153 = vpop.f32.mrf.mxu0
    %v7154 = vadd.f32 %v6705, %v7153
    %7155 = vmatprep.mubr.f32.mxu0 %v4887
    %7156 = vmatmul.mubr.f32.gmra.mxu0 %v4886
    %v7157 = vpop.f32.mrf.mxu0
    %v7158 = vadd.f32 %v6709, %v7157
    %v7159 = vpop.f32.mrf.mxu0
    %v7160 = vadd.f32 %v6711, %v7159
    %7161 = vmatprep.mubr.f32.mxu0 %v4891
    %7162 = vmatmul.mubr.f32.gmra.mxu0 %v4890
    %v7163 = vpop.f32.mrf.mxu0
    %v7164 = vadd.f32 %v6715, %v7163
    %v7165 = vpop.f32.mrf.mxu0
    %v7166 = vadd.f32 %v6717, %v7165
    %7167 = vmatprep.mubr.f32.mxu0 %v4895
    %7168 = vmatmul.mubr.f32.gmra.mxu0 %v4894
    %v7169 = vpop.f32.mrf.mxu0
    %v7170 = vadd.f32 %v6721, %v7169
    %v7171 = vpop.f32.mrf.mxu0
    %v7172 = vadd.f32 %v6723, %v7171
    %7173 = vmatprep.mubr.f32.mxu0 %v4899
    %7174 = vmatmul.mubr.f32.gmra.mxu0 %v4898
    %v7175 = vpop.f32.mrf.mxu0
    %v7176 = vadd.f32 %v6727, %v7175
    %v7177 = vpop.f32.mrf.mxu0
    %v7178 = vadd.f32 %v6729, %v7177
    %7179 = vmatprep.mubr.f32.mxu0 %v4903
    %7180 = vmatmul.mubr.f32.gmra.mxu0 %v4902
    %v7181 = vpop.f32.mrf.mxu0
    %v7182 = vadd.f32 %v6733, %v7181
    %v7183 = vpop.f32.mrf.mxu0
    %v7184 = vadd.f32 %v6735, %v7183
    %7185 = vmatprep.mubr.f32.mxu0 %v4907
    %7186 = vmatmul.mubr.f32.gmra.mxu0 %v4906
    %v7187 = vpop.f32.mrf.mxu0
    %v7188 = vadd.f32 %v6739, %v7187
    %v7189 = vpop.f32.mrf.mxu0
    %v7190 = vadd.f32 %v6741, %v7189
    %7191 = vmatprep.mubr.f32.mxu0 %v4911
    %7192 = vmatmul.mubr.f32.gmra.mxu0 %v4910
    %v7193 = vpop.f32.mrf.mxu0
    %v7194 = vadd.f32 %v6745, %v7193
    %v7195 = vpop.f32.mrf.mxu0
    %v7196 = vadd.f32 %v6747, %v7195
    %7197 = vmatprep.mubr.f32.mxu0 %v4915
    %7198 = vmatmul.mubr.f32.gmra.mxu0 %v4914
    %v7199 = vpop.f32.mrf.mxu0
    %v7200 = vadd.f32 %v6751, %v7199
    %v7201 = vpop.f32.mrf.mxu0
    %v7202 = vadd.f32 %v6753, %v7201
    %7203 = vmatprep.mubr.f32.mxu0 %v4919
    %7204 = vmatmul.mubr.f32.gmra.mxu0 %v4918
    %v7205 = vpop.f32.mrf.mxu0
    %v7206 = vadd.f32 %v6757, %v7205
    %v7207 = vpop.f32.mrf.mxu0
    %v7208 = vadd.f32 %v6759, %v7207
    %7209 = vmatprep.mubr.f32.mxu0 %v4923
    %7210 = vmatmul.mubr.f32.gmra.mxu0 %v4922
    %v7211 = vpop.f32.mrf.mxu0
    %v7212 = vadd.f32 %v6763, %v7211
    %v7213 = vpop.f32.mrf.mxu0
    %v7214 = vadd.f32 %v6765, %v7213
    %7215 = vmatprep.mubr.f32.mxu0 %v4927
    %7216 = vmatmul.mubr.f32.gmra.mxu0 %v4926
    %v7217 = vpop.f32.mrf.mxu0
    %v7218 = vadd.f32 %v6769, %v7217
    %v7219 = vpop.f32.mrf.mxu0
    %v7220 = vadd.f32 %v6771, %v7219
    %7221 = vmatprep.mubr.f32.mxu0 %v4931
    %7222 = vmatmul.mubr.f32.gmra.mxu0 %v4930
    %v7223 = vpop.f32.mrf.mxu0
    %v7224 = vadd.f32 %v6775, %v7223
    %v7225 = vpop.f32.mrf.mxu0
    %v7226 = vadd.f32 %v6777, %v7225
    %7227 = vmatprep.mubr.f32.mxu0 %v4935
    %7228 = vmatmul.mubr.f32.gmra.mxu0 %v4934
    %v7229 = vpop.f32.mrf.mxu0
    %v7230 = vadd.f32 %v6781, %v7229
    %v7231 = vpop.f32.mrf.mxu0
    %v7232 = vadd.f32 %v6783, %v7231
    %7233 = vmatprep.mubr.f32.mxu0 %v4939
    %7234 = vmatmul.mubr.f32.gmra.mxu0 %v4938
    %v7235 = vpop.f32.mrf.mxu0
    %v7236 = vadd.f32 %v6787, %v7235
    %v7237 = vpop.f32.mrf.mxu0
    %v7238 = vadd.f32 %v6789, %v7237
    %7239 = vmatprep.mubr.f32.mxu0 %v4943
    %7240 = vmatmul.mubr.f32.gmra.mxu0 %v4942
    %v7241 = vpop.f32.mrf.mxu0
    %v7242 = vadd.f32 %v6793, %v7241
    %v7243 = vpop.f32.mrf.mxu0
    %v7244 = vadd.f32 %v6795, %v7243
    %7245 = vmatprep.mubr.f32.mxu0 %v4947
    %7246 = vmatmul.mubr.f32.gmra.mxu0 %v4946
    %v7247 = vpop.f32.mrf.mxu0
    %v7248 = vadd.f32 %v6799, %v7247
    %v7249 = vpop.f32.mrf.mxu0
    %v7250 = vadd.f32 %v6801, %v7249
    %7251 = vmatprep.mubr.f32.mxu0 %v4951
    %7252 = vmatmul.mubr.f32.gmra.mxu0 %v4950
    %v7253 = vpop.f32.mrf.mxu0
    %v7254 = vadd.f32 %v6805, %v7253
    %v7255 = vpop.f32.mrf.mxu0
    %v7256 = vadd.f32 %v6807, %v7255
    %7257 = vmatprep.mubr.f32.mxu0 %v4955
    %7258 = vmatmul.mubr.f32.gmra.mxu0 %v4954
    %v7259 = vpop.f32.mrf.mxu0
    %v7260 = vadd.f32 %v6811, %v7259
    %v7261 = vpop.f32.mrf.mxu0
    %v7262 = vadd.f32 %v6813, %v7261
    %7263 = vmatprep.mubr.f32.mxu0 %v4959
    %7264 = vmatmul.mubr.f32.gmra.mxu0 %v4958
    %v7265 = vpop.f32.mrf.mxu0
    %v7266 = vadd.f32 %v6817, %v7265
    %v7267 = vpop.f32.mrf.mxu0
    %v7268 = vadd.f32 %v6819, %v7267
    %7269 = vmatprep.mubr.f32.mxu0 %v4963
    %7270 = vmatmul.mubr.f32.gmra.mxu0 %v4962
    %v7271 = vpop.f32.mrf.mxu0
    %v7272 = vadd.f32 %v6823, %v7271
    %v7273 = vpop.f32.mrf.mxu0
    %v7274 = vadd.f32 %v6825, %v7273
    %7275 = vmatprep.mubr.f32.mxu0 %v4967
    %7276 = vmatmul.mubr.f32.gmra.mxu0 %v4966
    %v7277 = vpop.f32.mrf.mxu0
    %v7278 = vadd.f32 %v6829, %v7277
    %v7279 = vpop.f32.mrf.mxu0
    %v7280 = vadd.f32 %v6831, %v7279
    %7281 = vmatprep.mubr.f32.mxu0 %v4971
    %7282 = vmatmul.mubr.f32.gmra.mxu0 %v4970
    %v7283 = vpop.f32.mrf.mxu0
    %v7284 = vadd.f32 %v6835, %v7283
    %v7285 = vpop.f32.mrf.mxu0
    %v7286 = vadd.f32 %v6837, %v7285
    %7287 = vmatprep.mubr.f32.mxu0 %v4975
    %7288 = vmatmul.mubr.f32.gmra.mxu0 %v4974
    %v7289 = vpop.f32.mrf.mxu0
    %v7290 = vadd.f32 %v6841, %v7289
    %v7291 = vpop.f32.mrf.mxu0
    %v7292 = vadd.f32 %v6843, %v7291
    %7293 = vmatprep.mubr.f32.mxu0 %v4979
    %7294 = vmatmul.mubr.f32.gmra.mxu0 %v4978
    %v7295 = vpop.f32.mrf.mxu0
    %v7296 = vadd.f32 %v6847, %v7295
    %v7297 = vpop.f32.mrf.mxu0
    %v7298 = vadd.f32 %v6849, %v7297
    %7299 = vmatprep.mubr.f32.mxu0 %v4983
    %7300 = vmatmul.mubr.f32.gmra.mxu0 %v4982
    %v7301 = vpop.f32.mrf.mxu0
    %v7302 = vadd.f32 %v6853, %v7301
    %v7303 = vpop.f32.mrf.mxu0
    %v7304 = vadd.f32 %v6855, %v7303
    %7305 = vmatprep.mubr.f32.mxu0 %v4987
    %7306 = vmatmul.mubr.f32.gmra.mxu0 %v4986
    %v7307 = vpop.f32.mrf.mxu0
    %v7308 = vadd.f32 %v6859, %v7307
    %v7309 = vpop.f32.mrf.mxu0
    %v7310 = vadd.f32 %v6861, %v7309
    %7311 = vmatprep.mubr.f32.mxu0 %v4991
    %7312 = vmatmul.mubr.f32.gmra.mxu0 %v4990
    %v7313 = vpop.f32.mrf.mxu0
    %v7314 = vadd.f32 %v6865, %v7313
    %v7315 = vpop.f32.mrf.mxu0
    %v7316 = vadd.f32 %v6867, %v7315
    %7317 = vmatprep.mubr.f32.mxu0 %v4995
    %7318 = vmatmul.mubr.f32.gmra.mxu0 %v4994
    %v7319 = vpop.f32.mrf.mxu0
    %v7320 = vadd.f32 %v6871, %v7319
    %v7321 = vpop.f32.mrf.mxu0
    %v7322 = vadd.f32 %v6873, %v7321
    %7323 = vmatprep.mubr.f32.mxu0 %v4999
    %7324 = vmatmul.mubr.f32.gmra.mxu0 %v4998
    %v7325 = vpop.f32.mrf.mxu0
    %v7326 = vadd.f32 %v6877, %v7325
    %v7327 = vpop.f32.mrf.mxu0
    %v7328 = vadd.f32 %v6879, %v7327
    %7329 = vdwg.mxu0
    %v7330 = vtanh.pop %v6050
    %v7331 = vtanh.pop %v6052
    %v7332 = vtanh.pop %v6056
    %v7333 = vtanh.pop %v6058
    %v7334 = vtanh.pop %v6062
    %v7335 = vtanh.pop %v6064
    %v7336 = vtanh.pop %v6068
    %v7337 = vtanh.pop %v6070
    %v7338 = vtanh.pop %v6074
    %v7339 = vtanh.pop %v6076
    %v7340 = vtanh.pop %v6080
    %v7341 = vtanh.pop %v6082
    %v7342 = vtanh.pop %v6086
    %v7343 = vtanh.pop %v6088
    %v7344 = vtanh.pop %v6092
    %v7345 = vtanh.pop %v6094
    %v7346 = vtanh.pop %v6098
    %v7347 = vtanh.pop %v6100
    %v7348 = vtanh.pop %v6104
    %v7349 = vtanh.pop %v6106
    %v7350 = vtanh.pop %v6110
    %v7351 = vtanh.pop %v6112
    %v7352 = vtanh.pop %v6116
    %v7353 = vtanh.pop %v6118
    %v7354 = vtanh.pop %v6122
    %v7355 = vtanh.pop %v6124
    %v7356 = vtanh.pop %v6128
    %v7357 = vtanh.pop %v6130
    %v7358 = vtanh.pop %v6134
    %v7359 = vtanh.pop %v6136
    %v7360 = vtanh.pop %v6140
    %v7361 = vtanh.pop %v6142
    %v7362 = vtanh.pop %v6146
    %v7363 = vtanh.pop %v6148
    %v7364 = vtanh.pop %v6152
    %v7365 = vtanh.pop %v6154
    %v7366 = vtanh.pop %v6158
    %v7367 = vtanh.pop %v6160
    %v7368 = vtanh.pop %v6164
    %v7369 = vtanh.pop %v6166
    %v7370 = vtanh.pop %v6170
    %v7371 = vtanh.pop %v6172
    %v7372 = vtanh.pop %v6176
    %v7373 = vtanh.pop %v6178
    %v7374 = vtanh.pop %v6182
    %v7375 = vtanh.pop %v6184
    %v7376 = vtanh.pop %v6188
    %v7377 = vtanh.pop %v6190
    %v7378 = vtanh.pop %v6194
    %v7379 = vtanh.pop %v6196
    %v7380 = vtanh.pop %v6200
    %v7381 = vtanh.pop %v6202
    %v7382 = vtanh.pop %v6206
    %v7383 = vtanh.pop %v6208
    %v7384 = vtanh.pop %v6212
    %v7385 = vtanh.pop %v6214
    %v7386 = vtanh.pop %v6218
    %v7387 = vtanh.pop %v6220
    %v7388 = vtanh.pop %v6224
    %v7389 = vtanh.pop %v6226
    %v7390 = vtanh.pop %v6230
    %v7391 = vtanh.pop %v6232
    %v7392 = vtanh.pop %v6236
    %v7393 = vtanh.pop %v6238
    %v7394 = vtanh.pop %v6242
    %v7395 = vtanh.pop %v6244
    %v7396 = vtanh.pop %v6248
    %v7397 = vtanh.pop %v6250
    %v7398 = vtanh.pop %v6254
    %v7399 = vtanh.pop %v6256
    %v7400 = vtanh.pop %v6260
    %v7401 = vtanh.pop %v6262
    %v7402 = vtanh.pop %v6266
    %v7403 = vtanh.pop %v6268
    %v7404 = vtanh.pop %v6272
    %v7405 = vtanh.pop %v6274
    %v7406 = vtanh.pop %v6278
    %v7407 = vtanh.pop %v6280
    %v7408 = vtanh.pop %v6284
    %v7409 = vtanh.pop %v6286
    %v7410 = vtanh.pop %v6290
    %v7411 = vtanh.pop %v6292
    %v7412 = vtanh.pop %v6296
    %v7413 = vtanh.pop %v6298
    %v7414 = vtanh.pop %v6302
    %v7415 = vtanh.pop %v6304
    %v7416 = vtanh.pop %v6308
    %v7417 = vtanh.pop %v6310
    %v7418 = vtanh.pop %v6314
    %v7419 = vtanh.pop %v6316
    %v7420 = vtanh.pop %v6320
    %v7421 = vtanh.pop %v6322
    %v7422 = vtanh.pop %v6326
    %v7423 = vtanh.pop %v6328
    %v7424 = vtanh.pop %v6332
    %v7425 = vtanh.pop %v6334
    %v7426 = vtanh.pop %v6338
    %v7427 = vtanh.pop %v6340
    %v7428 = vtanh.pop %v6344
    %v7429 = vtanh.pop %v6346
    %v7430 = vtanh.pop %v6350
    %v7431 = vtanh.pop %v6352
    %v7432 = vtanh.pop %v6356
    %v7433 = vtanh.pop %v6358
    %v7434 = vtanh.pop %v6362
    %v7435 = vtanh.pop %v6364
    %v7436 = vtanh.pop %v6368
    %v7437 = vtanh.pop %v6370
    %v7438 = vtanh.pop %v6374
    %v7439 = vtanh.pop %v6376
    %v7440 = vtanh.pop %v6380
    %v7441 = vtanh.pop %v6382
    %v7442 = vtanh.pop %v6386
    %v7443 = vtanh.pop %v6388
    %v7444 = vtanh.pop %v6392
    %v7445 = vtanh.pop %v6394
    %v7446 = vtanh.pop %v6398
    %v7447 = vtanh.pop %v6400
    %v7448 = vtanh.pop %v6404
    %v7449 = vtanh.pop %v6406
    %v7450 = vtanh.pop %v6410
    %v7451 = vtanh.pop %v6412
    %v7452 = vtanh.pop %v6416
    %v7453 = vtanh.pop %v6418
    %v7454 = vtanh.pop %v6422
    %v7455 = vtanh.pop %v6424
    %v7456 = vtanh.pop %v6428
    %v7457 = vtanh.pop %v6430
    %v7458 = vxor.u32 %v6948, 2147483648
    %v7459 = vxor.u32 %v6950, 2147483648
    %v7460 = vxor.u32 %v6954, 2147483648
    %v7461 = vxor.u32 %v6956, 2147483648
    %v7462 = vxor.u32 %v6960, 2147483648
    %v7463 = vxor.u32 %v6962, 2147483648
    %v7464 = vxor.u32 %v6966, 2147483648
    %v7465 = vxor.u32 %v6968, 2147483648
    %v7466 = vxor.u32 %v6972, 2147483648
    %v7467 = vxor.u32 %v6974, 2147483648
    %v7468 = vxor.u32 %v6978, 2147483648
    %v7469 = vxor.u32 %v6980, 2147483648
    %v7470 = vxor.u32 %v6984, 2147483648
    %v7471 = vxor.u32 %v6986, 2147483648
    %v7472 = vxor.u32 %v6990, 2147483648
    %v7473 = vxor.u32 %v6992, 2147483648
    %v7474 = vxor.u32 %v6996, 2147483648
    %v7475 = vxor.u32 %v6998, 2147483648
    %v7476 = vxor.u32 %v7002, 2147483648
    %v7477 = vxor.u32 %v7004, 2147483648
    %v7478 = vxor.u32 %v7008, 2147483648
    %v7479 = vxor.u32 %v7010, 2147483648
    %v7480 = vxor.u32 %v7014, 2147483648
    %v7481 = vxor.u32 %v7016, 2147483648
    %v7482 = vxor.u32 %v7020, 2147483648
    %v7483 = vxor.u32 %v7022, 2147483648
    %v7484 = vxor.u32 %v7026, 2147483648
    %v7485 = vxor.u32 %v7028, 2147483648
    %v7486 = vxor.u32 %v7032, 2147483648
    %v7487 = vxor.u32 %v7034, 2147483648
    %v7488 = vxor.u32 %v7038, 2147483648
    %v7489 = vxor.u32 %v7040, 2147483648
    %v7490 = vxor.u32 %v7044, 2147483648
    %v7491 = vxor.u32 %v7046, 2147483648
    %v7492 = vxor.u32 %v7050, 2147483648
    %v7493 = vxor.u32 %v7052, 2147483648
    %v7494 = vxor.u32 %v7056, 2147483648
    %v7495 = vxor.u32 %v7058, 2147483648
    %v7496 = vxor.u32 %v7062, 2147483648
    %v7497 = vxor.u32 %v7064, 2147483648
    %v7498 = vxor.u32 %v7068, 2147483648
    %v7499 = vxor.u32 %v7070, 2147483648
    %v7500 = vxor.u32 %v7074, 2147483648
    %v7501 = vxor.u32 %v7076, 2147483648
    %v7502 = vxor.u32 %v7080, 2147483648
    %v7503 = vxor.u32 %v7082, 2147483648
    %v7504 = vxor.u32 %v7086, 2147483648
    %v7505 = vxor.u32 %v7088, 2147483648
    %v7506 = vxor.u32 %v7092, 2147483648
    %v7507 = vxor.u32 %v7094, 2147483648
    %v7508 = vxor.u32 %v7098, 2147483648
    %v7509 = vxor.u32 %v7100, 2147483648
    %v7510 = vxor.u32 %v7104, 2147483648
    %v7511 = vxor.u32 %v7106, 2147483648
    %v7512 = vxor.u32 %v7110, 2147483648
    %v7513 = vxor.u32 %v7112, 2147483648
    %v7514 = vxor.u32 %v7116, 2147483648
    %v7515 = vxor.u32 %v7118, 2147483648
    %v7516 = vxor.u32 %v7122, 2147483648
    %v7517 = vxor.u32 %v7124, 2147483648
    %v7518 = vxor.u32 %v7128, 2147483648
    %v7519 = vxor.u32 %v7130, 2147483648
    %v7520 = vxor.u32 %v7134, 2147483648
    %v7521 = vxor.u32 %v7136, 2147483648
    %v7522 = vxor.u32 %v7140, 2147483648
    %v7523 = vxor.u32 %v7142, 2147483648
    %v7524 = vxor.u32 %v7146, 2147483648
    %v7525 = vxor.u32 %v7148, 2147483648
    %v7526 = vxor.u32 %v7152, 2147483648
    %v7527 = vxor.u32 %v7154, 2147483648
    %v7528 = vxor.u32 %v7158, 2147483648
    %v7529 = vxor.u32 %v7160, 2147483648
    %v7530 = vxor.u32 %v7164, 2147483648
    %v7531 = vxor.u32 %v7166, 2147483648
    %v7532 = vxor.u32 %v7170, 2147483648
    %v7533 = vxor.u32 %v7172, 2147483648
    %v7534 = vxor.u32 %v7176, 2147483648
    %v7535 = vxor.u32 %v7178, 2147483648
    %v7536 = vxor.u32 %v7182, 2147483648
    %v7537 = vxor.u32 %v7184, 2147483648
    %v7538 = vxor.u32 %v7188, 2147483648
    %v7539 = vxor.u32 %v7190, 2147483648
    %v7540 = vxor.u32 %v7194, 2147483648
    %v7541 = vxor.u32 %v7196, 2147483648
    %v7542 = vxor.u32 %v7200, 2147483648
    %v7543 = vxor.u32 %v7202, 2147483648
    %v7544 = vxor.u32 %v7206, 2147483648
    %v7545 = vxor.u32 %v7208, 2147483648
    %v7546 = vxor.u32 %v7212, 2147483648
    %v7547 = vxor.u32 %v7214, 2147483648
    %v7548 = vxor.u32 %v7218, 2147483648
    %v7549 = vxor.u32 %v7220, 2147483648
    %v7550 = vxor.u32 %v7224, 2147483648
    %v7551 = vxor.u32 %v7226, 2147483648
    %v7552 = vxor.u32 %v7230, 2147483648
    %v7553 = vxor.u32 %v7232, 2147483648
    %v7554 = vxor.u32 %v7236, 2147483648
    %v7555 = vxor.u32 %v7238, 2147483648
    %v7556 = vxor.u32 %v7242, 2147483648
    %v7557 = vxor.u32 %v7244, 2147483648
    %v7558 = vxor.u32 %v7248, 2147483648
    %v7559 = vxor.u32 %v7250, 2147483648
    %v7560 = vxor.u32 %v7254, 2147483648
    %v7561 = vxor.u32 %v7256, 2147483648
    %v7562 = vxor.u32 %v7260, 2147483648
    %v7563 = vxor.u32 %v7262, 2147483648
    %v7564 = vxor.u32 %v7266, 2147483648
    %v7565 = vxor.u32 %v7268, 2147483648
    %v7566 = vxor.u32 %v7272, 2147483648
    %v7567 = vxor.u32 %v7274, 2147483648
    %v7568 = vxor.u32 %v7278, 2147483648
    %v7569 = vxor.u32 %v7280, 2147483648
    %v7570 = vxor.u32 %v7284, 2147483648
    %v7571 = vxor.u32 %v7286, 2147483648
    %v7572 = vxor.u32 %v7290, 2147483648
    %v7573 = vxor.u32 %v7292, 2147483648
    %v7574 = vxor.u32 %v7296, 2147483648
    %v7575 = vxor.u32 %v7298, 2147483648
    %v7576 = vxor.u32 %v7302, 2147483648
    %v7577 = vxor.u32 %v7304, 2147483648
    %v7578 = vxor.u32 %v7308, 2147483648
    %v7579 = vxor.u32 %v7310, 2147483648
    %v7580 = vxor.u32 %v7314, 2147483648
    %v7581 = vxor.u32 %v7316, 2147483648
    %v7582 = vxor.u32 %v7320, 2147483648
    %v7583 = vxor.u32 %v7322, 2147483648
    %v7584 = vxor.u32 %v7326, 2147483648
    %v7585 = vxor.u32 %v7328, 2147483648
    %v7586 = vmul.f32 %v7458, 1.442695
    %v7587 = vpow.pop %v7586
    %v7588 = vmul.f32 %v7459, 1.442695
    %v7589 = vpow.pop %v7588
    %v7590 = vmul.f32 %v7460, 1.442695
    %v7591 = vpow.pop %v7590
    %v7592 = vmul.f32 %v7461, 1.442695
    %v7593 = vpow.pop %v7592
    %v7594 = vmul.f32 %v7462, 1.442695
    %v7595 = vpow.pop %v7594
    %v7596 = vmul.f32 %v7463, 1.442695
    %v7597 = vpow.pop %v7596
    %v7598 = vmul.f32 %v7464, 1.442695
    %v7599 = vpow.pop %v7598
    %v7600 = vmul.f32 %v7465, 1.442695
    %v7601 = vpow.pop %v7600
    %v7602 = vmul.f32 %v7466, 1.442695
    %v7603 = vpow.pop %v7602
    %v7604 = vmul.f32 %v7467, 1.442695
    %v7605 = vpow.pop %v7604
    %v7606 = vmul.f32 %v7468, 1.442695
    %v7607 = vpow.pop %v7606
    %v7608 = vmul.f32 %v7469, 1.442695
    %v7609 = vpow.pop %v7608
    %v7610 = vmul.f32 %v7470, 1.442695
    %v7611 = vpow.pop %v7610
    %v7612 = vmul.f32 %v7471, 1.442695
    %v7613 = vpow.pop %v7612
    %v7614 = vmul.f32 %v7472, 1.442695
    %v7615 = vpow.pop %v7614
    %v7616 = vmul.f32 %v7473, 1.442695
    %v7617 = vpow.pop %v7616
    %v7618 = vmul.f32 %v7474, 1.442695
    %v7619 = vpow.pop %v7618
    %v7620 = vmul.f32 %v7475, 1.442695
    %v7621 = vpow.pop %v7620
    %v7622 = vmul.f32 %v7476, 1.442695
    %v7623 = vpow.pop %v7622
    %v7624 = vmul.f32 %v7477, 1.442695
    %v7625 = vpow.pop %v7624
    %v7626 = vmul.f32 %v7478, 1.442695
    %v7627 = vpow.pop %v7626
    %v7628 = vmul.f32 %v7479, 1.442695
    %v7629 = vpow.pop %v7628
    %v7630 = vmul.f32 %v7480, 1.442695
    %v7631 = vpow.pop %v7630
    %v7632 = vmul.f32 %v7481, 1.442695
    %v7633 = vpow.pop %v7632
    %v7634 = vmul.f32 %v7482, 1.442695
    %v7635 = vpow.pop %v7634
    %v7636 = vmul.f32 %v7483, 1.442695
    %v7637 = vpow.pop %v7636
    %v7638 = vmul.f32 %v7484, 1.442695
    %v7639 = vpow.pop %v7638
    %v7640 = vmul.f32 %v7485, 1.442695
    %v7641 = vpow.pop %v7640
    %v7642 = vmul.f32 %v7486, 1.442695
    %v7643 = vpow.pop %v7642
    %v7644 = vmul.f32 %v7487, 1.442695
    %v7645 = vpow.pop %v7644
    %v7646 = vmul.f32 %v7488, 1.442695
    %v7647 = vpow.pop %v7646
    %v7648 = vmul.f32 %v7489, 1.442695
    %v7649 = vpow.pop %v7648
    %v7650 = vmul.f32 %v7490, 1.442695
    %v7651 = vpow.pop %v7650
    %v7652 = vmul.f32 %v7491, 1.442695
    %v7653 = vpow.pop %v7652
    %v7654 = vmul.f32 %v7492, 1.442695
    %v7655 = vpow.pop %v7654
    %v7656 = vmul.f32 %v7493, 1.442695
    %v7657 = vpow.pop %v7656
    %v7658 = vmul.f32 %v7494, 1.442695
    %v7659 = vpow.pop %v7658
    %v7660 = vmul.f32 %v7495, 1.442695
    %v7661 = vpow.pop %v7660
    %v7662 = vmul.f32 %v7496, 1.442695
    %v7663 = vpow.pop %v7662
    %v7664 = vmul.f32 %v7497, 1.442695
    %v7665 = vpow.pop %v7664
    %v7666 = vmul.f32 %v7498, 1.442695
    %v7667 = vpow.pop %v7666
    %v7668 = vmul.f32 %v7499, 1.442695
    %v7669 = vpow.pop %v7668
    %v7670 = vmul.f32 %v7500, 1.442695
    %v7671 = vpow.pop %v7670
    %v7672 = vmul.f32 %v7501, 1.442695
    %v7673 = vpow.pop %v7672
    %v7674 = vmul.f32 %v7502, 1.442695
    %v7675 = vpow.pop %v7674
    %v7676 = vmul.f32 %v7503, 1.442695
    %v7677 = vpow.pop %v7676
    %v7678 = vmul.f32 %v7504, 1.442695
    %v7679 = vpow.pop %v7678
    %v7680 = vmul.f32 %v7505, 1.442695
    %v7681 = vpow.pop %v7680
    %v7682 = vmul.f32 %v7506, 1.442695
    %v7683 = vpow.pop %v7682
    %v7684 = vmul.f32 %v7507, 1.442695
    %v7685 = vpow.pop %v7684
    %v7686 = vmul.f32 %v7508, 1.442695
    %v7687 = vpow.pop %v7686
    %v7688 = vmul.f32 %v7509, 1.442695
    %v7689 = vpow.pop %v7688
    %v7690 = vmul.f32 %v7510, 1.442695
    %v7691 = vpow.pop %v7690
    %v7692 = vmul.f32 %v7511, 1.442695
    %v7693 = vpow.pop %v7692
    %v7694 = vmul.f32 %v7512, 1.442695
    %v7695 = vpow.pop %v7694
    %v7696 = vmul.f32 %v7513, 1.442695
    %v7697 = vpow.pop %v7696
    %v7698 = vmul.f32 %v7514, 1.442695
    %v7699 = vpow.pop %v7698
    %v7700 = vmul.f32 %v7515, 1.442695
    %v7701 = vpow.pop %v7700
    %v7702 = vmul.f32 %v7516, 1.442695
    %v7703 = vpow.pop %v7702
    %v7704 = vmul.f32 %v7517, 1.442695
    %v7705 = vpow.pop %v7704
    %v7706 = vmul.f32 %v7518, 1.442695
    %v7707 = vpow.pop %v7706
    %v7708 = vmul.f32 %v7519, 1.442695
    %v7709 = vpow.pop %v7708
    %v7710 = vmul.f32 %v7520, 1.442695
    %v7711 = vpow.pop %v7710
    %v7712 = vmul.f32 %v7521, 1.442695
    %v7713 = vpow.pop %v7712
    %v7714 = vmul.f32 %v7522, 1.442695
    %v7715 = vpow.pop %v7714
    %v7716 = vmul.f32 %v7523, 1.442695
    %v7717 = vpow.pop %v7716
    %v7718 = vmul.f32 %v7524, 1.442695
    %v7719 = vpow.pop %v7718
    %v7720 = vmul.f32 %v7525, 1.442695
    %v7721 = vpow.pop %v7720
    %v7722 = vmul.f32 %v7526, 1.442695
    %v7723 = vpow.pop %v7722
    %v7724 = vmul.f32 %v7527, 1.442695
    %v7725 = vpow.pop %v7724
    %v7726 = vmul.f32 %v7528, 1.442695
    %v7727 = vpow.pop %v7726
    %v7728 = vmul.f32 %v7529, 1.442695
    %v7729 = vpow.pop %v7728
    %v7730 = vmul.f32 %v7530, 1.442695
    %v7731 = vpow.pop %v7730
    %v7732 = vmul.f32 %v7531, 1.442695
    %v7733 = vpow.pop %v7732
    %v7734 = vmul.f32 %v7532, 1.442695
    %v7735 = vpow.pop %v7734
    %v7736 = vmul.f32 %v7533, 1.442695
    %v7737 = vpow.pop %v7736
    %v7738 = vmul.f32 %v7534, 1.442695
    %v7739 = vpow.pop %v7738
    %v7740 = vmul.f32 %v7535, 1.442695
    %v7741 = vpow.pop %v7740
    %v7742 = vmul.f32 %v7536, 1.442695
    %v7743 = vpow.pop %v7742
    %v7744 = vmul.f32 %v7537, 1.442695
    %v7745 = vpow.pop %v7744
    %v7746 = vmul.f32 %v7538, 1.442695
    %v7747 = vpow.pop %v7746
    %v7748 = vmul.f32 %v7539, 1.442695
    %v7749 = vpow.pop %v7748
    %v7750 = vmul.f32 %v7540, 1.442695
    %v7751 = vpow.pop %v7750
    %v7752 = vmul.f32 %v7541, 1.442695
    %v7753 = vpow.pop %v7752
    %v7754 = vmul.f32 %v7542, 1.442695
    %v7755 = vpow.pop %v7754
    %v7756 = vmul.f32 %v7543, 1.442695
    %v7757 = vpow.pop %v7756
    %v7758 = vmul.f32 %v7544, 1.442695
    %v7759 = vpow.pop %v7758
    %v7760 = vmul.f32 %v7545, 1.442695
    %v7761 = vpow.pop %v7760
    %v7762 = vmul.f32 %v7546, 1.442695
    %v7763 = vpow.pop %v7762
    %v7764 = vmul.f32 %v7547, 1.442695
    %v7765 = vpow.pop %v7764
    %v7766 = vmul.f32 %v7548, 1.442695
    %v7767 = vpow.pop %v7766
    %v7768 = vmul.f32 %v7549, 1.442695
    %v7769 = vpow.pop %v7768
    %v7770 = vmul.f32 %v7550, 1.442695
    %v7771 = vpow.pop %v7770
    %v7772 = vmul.f32 %v7551, 1.442695
    %v7773 = vpow.pop %v7772
    %v7774 = vmul.f32 %v7552, 1.442695
    %v7775 = vpow.pop %v7774
    %v7776 = vmul.f32 %v7553, 1.442695
    %v7777 = vpow.pop %v7776
    %v7778 = vmul.f32 %v7554, 1.442695
    %v7779 = vpow.pop %v7778
    %v7780 = vmul.f32 %v7555, 1.442695
    %v7781 = vpow.pop %v7780
    %v7782 = vmul.f32 %v7556, 1.442695
    %v7783 = vpow.pop %v7782
    %v7784 = vmul.f32 %v7557, 1.442695
    %v7785 = vpow.pop %v7784
    %v7786 = vmul.f32 %v7558, 1.442695
    %v7787 = vpow.pop %v7786
    %v7788 = vmul.f32 %v7559, 1.442695
    %v7789 = vpow.pop %v7788
    %v7790 = vmul.f32 %v7560, 1.442695
    %v7791 = vpow.pop %v7790
    %v7792 = vmul.f32 %v7561, 1.442695
    %v7793 = vpow.pop %v7792
    %v7794 = vmul.f32 %v7562, 1.442695
    %v7795 = vpow.pop %v7794
    %v7796 = vmul.f32 %v7563, 1.442695
    %v7797 = vpow.pop %v7796
    %v7798 = vmul.f32 %v7564, 1.442695
    %v7799 = vpow.pop %v7798
    %v7800 = vmul.f32 %v7565, 1.442695
    %v7801 = vpow.pop %v7800
    %v7802 = vmul.f32 %v7566, 1.442695
    %v7803 = vpow.pop %v7802
    %v7804 = vmul.f32 %v7567, 1.442695
    %v7805 = vpow.pop %v7804
    %v7806 = vmul.f32 %v7568, 1.442695
    %v7807 = vpow.pop %v7806
    %v7808 = vmul.f32 %v7569, 1.442695
    %v7809 = vpow.pop %v7808
    %v7810 = vmul.f32 %v7570, 1.442695
    %v7811 = vpow.pop %v7810
    %v7812 = vmul.f32 %v7571, 1.442695
    %v7813 = vpow.pop %v7812
    %v7814 = vmul.f32 %v7572, 1.442695
    %v7815 = vpow.pop %v7814
    %v7816 = vmul.f32 %v7573, 1.442695
    %v7817 = vpow.pop %v7816
    %v7818 = vmul.f32 %v7574, 1.442695
    %v7819 = vpow.pop %v7818
    %v7820 = vmul.f32 %v7575, 1.442695
    %v7821 = vpow.pop %v7820
    %v7822 = vmul.f32 %v7576, 1.442695
    %v7823 = vpow.pop %v7822
    %v7824 = vmul.f32 %v7577, 1.442695
    %v7825 = vpow.pop %v7824
    %v7826 = vmul.f32 %v7578, 1.442695
    %v7827 = vpow.pop %v7826
    %v7828 = vmul.f32 %v7579, 1.442695
    %v7829 = vpow.pop %v7828
    %v7830 = vmul.f32 %v7580, 1.442695
    %v7831 = vpow.pop %v7830
    %v7832 = vmul.f32 %v7581, 1.442695
    %v7833 = vpow.pop %v7832
    %v7834 = vmul.f32 %v7582, 1.442695
    %v7835 = vpow.pop %v7834
    %v7836 = vmul.f32 %v7583, 1.442695
    %v7837 = vpow.pop %v7836
    %v7838 = vmul.f32 %v7584, 1.442695
    %v7839 = vpow.pop %v7838
    %v7840 = vmul.f32 %v7585, 1.442695
    %v7841 = vpow.pop %v7840
    %v7842 = vadd.f32 %v7587, 1.0
    %v7843 = vadd.f32 %v7589, 1.0
    %v7844 = vadd.f32 %v7591, 1.0
    %v7845 = vadd.f32 %v7593, 1.0
    %v7846 = vadd.f32 %v7595, 1.0
    %v7847 = vadd.f32 %v7597, 1.0
    %v7848 = vadd.f32 %v7599, 1.0
    %v7849 = vadd.f32 %v7601, 1.0
    %v7850 = vadd.f32 %v7603, 1.0
    %v7851 = vadd.f32 %v7605, 1.0
    %v7852 = vadd.f32 %v7607, 1.0
    %v7853 = vadd.f32 %v7609, 1.0
    %v7854 = vadd.f32 %v7611, 1.0
    %v7855 = vadd.f32 %v7613, 1.0
    %v7856 = vadd.f32 %v7615, 1.0
    %v7857 = vadd.f32 %v7617, 1.0
    %v7858 = vadd.f32 %v7619, 1.0
    %v7859 = vadd.f32 %v7621, 1.0
    %v7860 = vadd.f32 %v7623, 1.0
    %v7861 = vadd.f32 %v7625, 1.0
    %v7862 = vadd.f32 %v7627, 1.0
    %v7863 = vadd.f32 %v7629, 1.0
    %v7864 = vadd.f32 %v7631, 1.0
    %v7865 = vadd.f32 %v7633, 1.0
    %v7866 = vadd.f32 %v7635, 1.0
    %v7867 = vadd.f32 %v7637, 1.0
    %v7868 = vadd.f32 %v7639, 1.0
    %v7869 = vadd.f32 %v7641, 1.0
    %v7870 = vadd.f32 %v7643, 1.0
    %v7871 = vadd.f32 %v7645, 1.0
    %v7872 = vadd.f32 %v7647, 1.0
    %v7873 = vadd.f32 %v7649, 1.0
    %v7874 = vadd.f32 %v7651, 1.0
    %v7875 = vadd.f32 %v7653, 1.0
    %v7876 = vadd.f32 %v7655, 1.0
    %v7877 = vadd.f32 %v7657, 1.0
    %v7878 = vadd.f32 %v7659, 1.0
    %v7879 = vadd.f32 %v7661, 1.0
    %v7880 = vadd.f32 %v7663, 1.0
    %v7881 = vadd.f32 %v7665, 1.0
    %v7882 = vadd.f32 %v7667, 1.0
    %v7883 = vadd.f32 %v7669, 1.0
    %v7884 = vadd.f32 %v7671, 1.0
    %v7885 = vadd.f32 %v7673, 1.0
    %v7886 = vadd.f32 %v7675, 1.0
    %v7887 = vadd.f32 %v7677, 1.0
    %v7888 = vadd.f32 %v7679, 1.0
    %v7889 = vadd.f32 %v7681, 1.0
    %v7890 = vadd.f32 %v7683, 1.0
    %v7891 = vadd.f32 %v7685, 1.0
    %v7892 = vadd.f32 %v7687, 1.0
    %v7893 = vadd.f32 %v7689, 1.0
    %v7894 = vadd.f32 %v7691, 1.0
    %v7895 = vadd.f32 %v7693, 1.0
    %v7896 = vadd.f32 %v7695, 1.0
    %v7897 = vadd.f32 %v7697, 1.0
    %v7898 = vadd.f32 %v7699, 1.0
    %v7899 = vadd.f32 %v7701, 1.0
    %v7900 = vadd.f32 %v7703, 1.0
    %v7901 = vadd.f32 %v7705, 1.0
    %v7902 = vadd.f32 %v7707, 1.0
    %v7903 = vadd.f32 %v7709, 1.0
    %v7904 = vadd.f32 %v7711, 1.0
    %v7905 = vadd.f32 %v7713, 1.0
    %v7906 = vadd.f32 %v7715, 1.0
    %v7907 = vadd.f32 %v7717, 1.0
    %v7908 = vadd.f32 %v7719, 1.0
    %v7909 = vadd.f32 %v7721, 1.0
    %v7910 = vadd.f32 %v7723, 1.0
    %v7911 = vadd.f32 %v7725, 1.0
    %v7912 = vadd.f32 %v7727, 1.0
    %v7913 = vadd.f32 %v7729, 1.0
    %v7914 = vadd.f32 %v7731, 1.0
    %v7915 = vadd.f32 %v7733, 1.0
    %v7916 = vadd.f32 %v7735, 1.0
    %v7917 = vadd.f32 %v7737, 1.0
    %v7918 = vadd.f32 %v7739, 1.0
    %v7919 = vadd.f32 %v7741, 1.0
    %v7920 = vadd.f32 %v7743, 1.0
    %v7921 = vadd.f32 %v7745, 1.0
    %v7922 = vadd.f32 %v7747, 1.0
    %v7923 = vadd.f32 %v7749, 1.0
    %v7924 = vadd.f32 %v7751, 1.0
    %v7925 = vadd.f32 %v7753, 1.0
    %v7926 = vadd.f32 %v7755, 1.0
    %v7927 = vadd.f32 %v7757, 1.0
    %v7928 = vadd.f32 %v7759, 1.0
    %v7929 = vadd.f32 %v7761, 1.0
    %v7930 = vadd.f32 %v7763, 1.0
    %v7931 = vadd.f32 %v7765, 1.0
    %v7932 = vadd.f32 %v7767, 1.0
    %v7933 = vadd.f32 %v7769, 1.0
    %v7934 = vadd.f32 %v7771, 1.0
    %v7935 = vadd.f32 %v7773, 1.0
    %v7936 = vadd.f32 %v7775, 1.0
    %v7937 = vadd.f32 %v7777, 1.0
    %v7938 = vadd.f32 %v7779, 1.0
    %v7939 = vadd.f32 %v7781, 1.0
    %v7940 = vadd.f32 %v7783, 1.0
    %v7941 = vadd.f32 %v7785, 1.0
    %v7942 = vadd.f32 %v7787, 1.0
    %v7943 = vadd.f32 %v7789, 1.0
    %v7944 = vadd.f32 %v7791, 1.0
    %v7945 = vadd.f32 %v7793, 1.0
    %v7946 = vadd.f32 %v7795, 1.0
    %v7947 = vadd.f32 %v7797, 1.0
    %v7948 = vadd.f32 %v7799, 1.0
    %v7949 = vadd.f32 %v7801, 1.0
    %v7950 = vadd.f32 %v7803, 1.0
    %v7951 = vadd.f32 %v7805, 1.0
    %v7952 = vadd.f32 %v7807, 1.0
    %v7953 = vadd.f32 %v7809, 1.0
    %v7954 = vadd.f32 %v7811, 1.0
    %v7955 = vadd.f32 %v7813, 1.0
    %v7956 = vadd.f32 %v7815, 1.0
    %v7957 = vadd.f32 %v7817, 1.0
    %v7958 = vadd.f32 %v7819, 1.0
    %v7959 = vadd.f32 %v7821, 1.0
    %v7960 = vadd.f32 %v7823, 1.0
    %v7961 = vadd.f32 %v7825, 1.0
    %v7962 = vadd.f32 %v7827, 1.0
    %v7963 = vadd.f32 %v7829, 1.0
    %v7964 = vadd.f32 %v7831, 1.0
    %v7965 = vadd.f32 %v7833, 1.0
    %v7966 = vadd.f32 %v7835, 1.0
    %v7967 = vadd.f32 %v7837, 1.0
    %v7968 = vadd.f32 %v7839, 1.0
    %v7969 = vadd.f32 %v7841, 1.0
    %v7970 = vrcp.pop %v7842
    %v7971 = vmul.f32 1.0, %v7970
    %v7972 = vrcp.pop %v7843
    %v7973 = vmul.f32 1.0, %v7972
    %v7974 = vrcp.pop %v7844
    %v7975 = vmul.f32 1.0, %v7974
    %v7976 = vrcp.pop %v7845
    %v7977 = vmul.f32 1.0, %v7976
    %v7978 = vrcp.pop %v7846
    %v7979 = vmul.f32 1.0, %v7978
    %v7980 = vrcp.pop %v7847
    %v7981 = vmul.f32 1.0, %v7980
    %v7982 = vrcp.pop %v7848
    %v7983 = vmul.f32 1.0, %v7982
    %v7984 = vrcp.pop %v7849
    %v7985 = vmul.f32 1.0, %v7984
    %v7986 = vrcp.pop %v7850
    %v7987 = vmul.f32 1.0, %v7986
    %v7988 = vrcp.pop %v7851
    %v7989 = vmul.f32 1.0, %v7988
    %v7990 = vrcp.pop %v7852
    %v7991 = vmul.f32 1.0, %v7990
    %v7992 = vrcp.pop %v7853
    %v7993 = vmul.f32 1.0, %v7992
    %v7994 = vrcp.pop %v7854
    %v7995 = vmul.f32 1.0, %v7994
    %v7996 = vrcp.pop %v7855
    %v7997 = vmul.f32 1.0, %v7996
    %v7998 = vrcp.pop %v7856
    %v7999 = vmul.f32 1.0, %v7998
    %v8000 = vrcp.pop %v7857
    %v8001 = vmul.f32 1.0, %v8000
    %v8002 = vrcp.pop %v7858
    %v8003 = vmul.f32 1.0, %v8002
    %v8004 = vrcp.pop %v7859
    %v8005 = vmul.f32 1.0, %v8004
    %v8006 = vrcp.pop %v7860
    %v8007 = vmul.f32 1.0, %v8006
    %v8008 = vrcp.pop %v7861
    %v8009 = vmul.f32 1.0, %v8008
    %v8010 = vrcp.pop %v7862
    %v8011 = vmul.f32 1.0, %v8010
    %v8012 = vrcp.pop %v7863
    %v8013 = vmul.f32 1.0, %v8012
    %v8014 = vrcp.pop %v7864
    %v8015 = vmul.f32 1.0, %v8014
    %v8016 = vrcp.pop %v7865
    %v8017 = vmul.f32 1.0, %v8016
    %v8018 = vrcp.pop %v7866
    %v8019 = vmul.f32 1.0, %v8018
    %v8020 = vrcp.pop %v7867
    %v8021 = vmul.f32 1.0, %v8020
    %v8022 = vrcp.pop %v7868
    %v8023 = vmul.f32 1.0, %v8022
    %v8024 = vrcp.pop %v7869
    %v8025 = vmul.f32 1.0, %v8024
    %v8026 = vrcp.pop %v7870
    %v8027 = vmul.f32 1.0, %v8026
    %v8028 = vrcp.pop %v7871
    %v8029 = vmul.f32 1.0, %v8028
    %v8030 = vrcp.pop %v7872
    %v8031 = vmul.f32 1.0, %v8030
    %v8032 = vrcp.pop %v7873
    %v8033 = vmul.f32 1.0, %v8032
    %v8034 = vrcp.pop %v7874
    %v8035 = vmul.f32 1.0, %v8034
    %v8036 = vrcp.pop %v7875
    %v8037 = vmul.f32 1.0, %v8036
    %v8038 = vrcp.pop %v7876
    %v8039 = vmul.f32 1.0, %v8038
    %v8040 = vrcp.pop %v7877
    %v8041 = vmul.f32 1.0, %v8040
    %v8042 = vrcp.pop %v7878
    %v8043 = vmul.f32 1.0, %v8042
    %v8044 = vrcp.pop %v7879
    %v8045 = vmul.f32 1.0, %v8044
    %v8046 = vrcp.pop %v7880
    %v8047 = vmul.f32 1.0, %v8046
    %v8048 = vrcp.pop %v7881
    %v8049 = vmul.f32 1.0, %v8048
    %v8050 = vrcp.pop %v7882
    %v8051 = vmul.f32 1.0, %v8050
    %v8052 = vrcp.pop %v7883
    %v8053 = vmul.f32 1.0, %v8052
    %v8054 = vrcp.pop %v7884
    %v8055 = vmul.f32 1.0, %v8054
    %v8056 = vrcp.pop %v7885
    %v8057 = vmul.f32 1.0, %v8056
    %v8058 = vrcp.pop %v7886
    %v8059 = vmul.f32 1.0, %v8058
    %v8060 = vrcp.pop %v7887
    %v8061 = vmul.f32 1.0, %v8060
    %v8062 = vrcp.pop %v7888
    %v8063 = vmul.f32 1.0, %v8062
    %v8064 = vrcp.pop %v7889
    %v8065 = vmul.f32 1.0, %v8064
    %v8066 = vrcp.pop %v7890
    %v8067 = vmul.f32 1.0, %v8066
    %v8068 = vrcp.pop %v7891
    %v8069 = vmul.f32 1.0, %v8068
    %v8070 = vrcp.pop %v7892
    %v8071 = vmul.f32 1.0, %v8070
    %v8072 = vrcp.pop %v7893
    %v8073 = vmul.f32 1.0, %v8072
    %v8074 = vrcp.pop %v7894
    %v8075 = vmul.f32 1.0, %v8074
    %v8076 = vrcp.pop %v7895
    %v8077 = vmul.f32 1.0, %v8076
    %v8078 = vrcp.pop %v7896
    %v8079 = vmul.f32 1.0, %v8078
    %v8080 = vrcp.pop %v7897
    %v8081 = vmul.f32 1.0, %v8080
    %v8082 = vrcp.pop %v7898
    %v8083 = vmul.f32 1.0, %v8082
    %v8084 = vrcp.pop %v7899
    %v8085 = vmul.f32 1.0, %v8084
    %v8086 = vrcp.pop %v7900
    %v8087 = vmul.f32 1.0, %v8086
    %v8088 = vrcp.pop %v7901
    %v8089 = vmul.f32 1.0, %v8088
    %v8090 = vrcp.pop %v7902
    %v8091 = vmul.f32 1.0, %v8090
    %v8092 = vrcp.pop %v7903
    %v8093 = vmul.f32 1.0, %v8092
    %v8094 = vrcp.pop %v7904
    %v8095 = vmul.f32 1.0, %v8094
    %v8096 = vrcp.pop %v7905
    %v8097 = vmul.f32 1.0, %v8096
    %v8098 = vrcp.pop %v7906
    %v8099 = vmul.f32 1.0, %v8098
    %v8100 = vrcp.pop %v7907
    %v8101 = vmul.f32 1.0, %v8100
    %v8102 = vrcp.pop %v7908
    %v8103 = vmul.f32 1.0, %v8102
    %v8104 = vrcp.pop %v7909
    %v8105 = vmul.f32 1.0, %v8104
    %v8106 = vrcp.pop %v7910
    %v8107 = vmul.f32 1.0, %v8106
    %v8108 = vrcp.pop %v7911
    %v8109 = vmul.f32 1.0, %v8108
    %v8110 = vrcp.pop %v7912
    %v8111 = vmul.f32 1.0, %v8110
    %v8112 = vrcp.pop %v7913
    %v8113 = vmul.f32 1.0, %v8112
    %v8114 = vrcp.pop %v7914
    %v8115 = vmul.f32 1.0, %v8114
    %v8116 = vrcp.pop %v7915
    %v8117 = vmul.f32 1.0, %v8116
    %v8118 = vrcp.pop %v7916
    %v8119 = vmul.f32 1.0, %v8118
    %v8120 = vrcp.pop %v7917
    %v8121 = vmul.f32 1.0, %v8120
    %v8122 = vrcp.pop %v7918
    %v8123 = vmul.f32 1.0, %v8122
    %v8124 = vrcp.pop %v7919
    %v8125 = vmul.f32 1.0, %v8124
    %v8126 = vrcp.pop %v7920
    %v8127 = vmul.f32 1.0, %v8126
    %v8128 = vrcp.pop %v7921
    %v8129 = vmul.f32 1.0, %v8128
    %v8130 = vrcp.pop %v7922
    %v8131 = vmul.f32 1.0, %v8130
    %v8132 = vrcp.pop %v7923
    %v8133 = vmul.f32 1.0, %v8132
    %v8134 = vrcp.pop %v7924
    %v8135 = vmul.f32 1.0, %v8134
    %v8136 = vrcp.pop %v7925
    %v8137 = vmul.f32 1.0, %v8136
    %v8138 = vrcp.pop %v7926
    %v8139 = vmul.f32 1.0, %v8138
    %v8140 = vrcp.pop %v7927
    %v8141 = vmul.f32 1.0, %v8140
    %v8142 = vrcp.pop %v7928
    %v8143 = vmul.f32 1.0, %v8142
    %v8144 = vrcp.pop %v7929
    %v8145 = vmul.f32 1.0, %v8144
    %v8146 = vrcp.pop %v7930
    %v8147 = vmul.f32 1.0, %v8146
    %v8148 = vrcp.pop %v7931
    %v8149 = vmul.f32 1.0, %v8148
    %v8150 = vrcp.pop %v7932
    %v8151 = vmul.f32 1.0, %v8150
    %v8152 = vrcp.pop %v7933
    %v8153 = vmul.f32 1.0, %v8152
    %v8154 = vrcp.pop %v7934
    %v8155 = vmul.f32 1.0, %v8154
    %v8156 = vrcp.pop %v7935
    %v8157 = vmul.f32 1.0, %v8156
    %v8158 = vrcp.pop %v7936
    %v8159 = vmul.f32 1.0, %v8158
    %v8160 = vrcp.pop %v7937
    %v8161 = vmul.f32 1.0, %v8160
    %v8162 = vrcp.pop %v7938
    %v8163 = vmul.f32 1.0, %v8162
    %v8164 = vrcp.pop %v7939
    %v8165 = vmul.f32 1.0, %v8164
    %v8166 = vrcp.pop %v7940
    %v8167 = vmul.f32 1.0, %v8166
    %v8168 = vrcp.pop %v7941
    %v8169 = vmul.f32 1.0, %v8168
    %v8170 = vrcp.pop %v7942
    %v8171 = vmul.f32 1.0, %v8170
    %v8172 = vrcp.pop %v7943
    %v8173 = vmul.f32 1.0, %v8172
    %v8174 = vrcp.pop %v7944
    %v8175 = vmul.f32 1.0, %v8174
    %v8176 = vrcp.pop %v7945
    %v8177 = vmul.f32 1.0, %v8176
    %v8178 = vrcp.pop %v7946
    %v8179 = vmul.f32 1.0, %v8178
    %v8180 = vrcp.pop %v7947
    %v8181 = vmul.f32 1.0, %v8180
    %v8182 = vrcp.pop %v7948
    %v8183 = vmul.f32 1.0, %v8182
    %v8184 = vrcp.pop %v7949
    %v8185 = vmul.f32 1.0, %v8184
    %v8186 = vrcp.pop %v7950
    %v8187 = vmul.f32 1.0, %v8186
    %v8188 = vrcp.pop %v7951
    %v8189 = vmul.f32 1.0, %v8188
    %v8190 = vrcp.pop %v7952
    %v8191 = vmul.f32 1.0, %v8190
    %v8192 = vrcp.pop %v7953
    %v8193 = vmul.f32 1.0, %v8192
    %v8194 = vrcp.pop %v7954
    %v8195 = vmul.f32 1.0, %v8194
    %v8196 = vrcp.pop %v7955
    %v8197 = vmul.f32 1.0, %v8196
    %v8198 = vrcp.pop %v7956
    %v8199 = vmul.f32 1.0, %v8198
    %v8200 = vrcp.pop %v7957
    %v8201 = vmul.f32 1.0, %v8200
    %v8202 = vrcp.pop %v7958
    %v8203 = vmul.f32 1.0, %v8202
    %v8204 = vrcp.pop %v7959
    %v8205 = vmul.f32 1.0, %v8204
    %v8206 = vrcp.pop %v7960
    %v8207 = vmul.f32 1.0, %v8206
    %v8208 = vrcp.pop %v7961
    %v8209 = vmul.f32 1.0, %v8208
    %v8210 = vrcp.pop %v7962
    %v8211 = vmul.f32 1.0, %v8210
    %v8212 = vrcp.pop %v7963
    %v8213 = vmul.f32 1.0, %v8212
    %v8214 = vrcp.pop %v7964
    %v8215 = vmul.f32 1.0, %v8214
    %v8216 = vrcp.pop %v7965
    %v8217 = vmul.f32 1.0, %v8216
    %v8218 = vrcp.pop %v7966
    %v8219 = vmul.f32 1.0, %v8218
    %v8220 = vrcp.pop %v7967
    %v8221 = vmul.f32 1.0, %v8220
    %v8222 = vrcp.pop %v7968
    %v8223 = vmul.f32 1.0, %v8222
    %v8224 = vrcp.pop %v7969
    %v8225 = vmul.f32 1.0, %v8224
    %v8226 = vmul.f32 %v7330, %v7971
    %v8227 = vmul.f32 %v7331, %v7973
    %v8228 = vmul.f32 %v7332, %v7975
    %v8229 = vmul.f32 %v7333, %v7977
    %v8230 = vmul.f32 %v7334, %v7979
    %v8231 = vmul.f32 %v7335, %v7981
    %v8232 = vmul.f32 %v7336, %v7983
    %v8233 = vmul.f32 %v7337, %v7985
    %v8234 = vmul.f32 %v7338, %v7987
    %v8235 = vmul.f32 %v7339, %v7989
    %v8236 = vmul.f32 %v7340, %v7991
    %v8237 = vmul.f32 %v7341, %v7993
    %v8238 = vmul.f32 %v7342, %v7995
    %v8239 = vmul.f32 %v7343, %v7997
    %v8240 = vmul.f32 %v7344, %v7999
    %v8241 = vmul.f32 %v7345, %v8001
    %v8242 = vmul.f32 %v7346, %v8003
    %v8243 = vmul.f32 %v7347, %v8005
    %v8244 = vmul.f32 %v7348, %v8007
    %v8245 = vmul.f32 %v7349, %v8009
    %v8246 = vmul.f32 %v7350, %v8011
    %v8247 = vmul.f32 %v7351, %v8013
    %v8248 = vmul.f32 %v7352, %v8015
    %v8249 = vmul.f32 %v7353, %v8017
    %v8250 = vmul.f32 %v7354, %v8019
    %v8251 = vmul.f32 %v7355, %v8021
    %v8252 = vmul.f32 %v7356, %v8023
    %v8253 = vmul.f32 %v7357, %v8025
    %v8254 = vmul.f32 %v7358, %v8027
    %v8255 = vmul.f32 %v7359, %v8029
    %v8256 = vmul.f32 %v7360, %v8031
    %v8257 = vmul.f32 %v7361, %v8033
    %v8258 = vmul.f32 %v7362, %v8035
    %v8259 = vmul.f32 %v7363, %v8037
    %v8260 = vmul.f32 %v7364, %v8039
    %v8261 = vmul.f32 %v7365, %v8041
    %v8262 = vmul.f32 %v7366, %v8043
    %v8263 = vmul.f32 %v7367, %v8045
    %v8264 = vmul.f32 %v7368, %v8047
    %v8265 = vmul.f32 %v7369, %v8049
    %v8266 = vmul.f32 %v7370, %v8051
    %v8267 = vmul.f32 %v7371, %v8053
    %v8268 = vmul.f32 %v7372, %v8055
    %v8269 = vmul.f32 %v7373, %v8057
    %v8270 = vmul.f32 %v7374, %v8059
    %v8271 = vmul.f32 %v7375, %v8061
    %v8272 = vmul.f32 %v7376, %v8063
    %v8273 = vmul.f32 %v7377, %v8065
    %v8274 = vmul.f32 %v7378, %v8067
    %v8275 = vmul.f32 %v7379, %v8069
    %v8276 = vmul.f32 %v7380, %v8071
    %v8277 = vmul.f32 %v7381, %v8073
    %v8278 = vmul.f32 %v7382, %v8075
    %v8279 = vmul.f32 %v7383, %v8077
    %v8280 = vmul.f32 %v7384, %v8079
    %v8281 = vmul.f32 %v7385, %v8081
    %v8282 = vmul.f32 %v7386, %v8083
    %v8283 = vmul.f32 %v7387, %v8085
    %v8284 = vmul.f32 %v7388, %v8087
    %v8285 = vmul.f32 %v7389, %v8089
    %v8286 = vmul.f32 %v7390, %v8091
    %v8287 = vmul.f32 %v7391, %v8093
    %v8288 = vmul.f32 %v7392, %v8095
    %v8289 = vmul.f32 %v7393, %v8097
    %v8290 = vmul.f32 %v7394, %v8099
    %v8291 = vmul.f32 %v7395, %v8101
    %v8292 = vmul.f32 %v7396, %v8103
    %v8293 = vmul.f32 %v7397, %v8105
    %v8294 = vmul.f32 %v7398, %v8107
    %v8295 = vmul.f32 %v7399, %v8109
    %v8296 = vmul.f32 %v7400, %v8111
    %v8297 = vmul.f32 %v7401, %v8113
    %v8298 = vmul.f32 %v7402, %v8115
    %v8299 = vmul.f32 %v7403, %v8117
    %v8300 = vmul.f32 %v7404, %v8119
    %v8301 = vmul.f32 %v7405, %v8121
    %v8302 = vmul.f32 %v7406, %v8123
    %v8303 = vmul.f32 %v7407, %v8125
    %v8304 = vmul.f32 %v7408, %v8127
    %v8305 = vmul.f32 %v7409, %v8129
    %v8306 = vmul.f32 %v7410, %v8131
    %v8307 = vmul.f32 %v7411, %v8133
    %v8308 = vmul.f32 %v7412, %v8135
    %v8309 = vmul.f32 %v7413, %v8137
    %v8310 = vmul.f32 %v7414, %v8139
    %v8311 = vmul.f32 %v7415, %v8141
    %v8312 = vmul.f32 %v7416, %v8143
    %v8313 = vmul.f32 %v7417, %v8145
    %v8314 = vmul.f32 %v7418, %v8147
    %v8315 = vmul.f32 %v7419, %v8149
    %v8316 = vmul.f32 %v7420, %v8151
    %v8317 = vmul.f32 %v7421, %v8153
    %v8318 = vmul.f32 %v7422, %v8155
    %v8319 = vmul.f32 %v7423, %v8157
    %v8320 = vmul.f32 %v7424, %v8159
    %v8321 = vmul.f32 %v7425, %v8161
    %v8322 = vmul.f32 %v7426, %v8163
    %v8323 = vmul.f32 %v7427, %v8165
    %v8324 = vmul.f32 %v7428, %v8167
    %v8325 = vmul.f32 %v7429, %v8169
    %v8326 = vmul.f32 %v7430, %v8171
    %v8327 = vmul.f32 %v7431, %v8173
    %v8328 = vmul.f32 %v7432, %v8175
    %v8329 = vmul.f32 %v7433, %v8177
    %v8330 = vmul.f32 %v7434, %v8179
    %v8331 = vmul.f32 %v7435, %v8181
    %v8332 = vmul.f32 %v7436, %v8183
    %v8333 = vmul.f32 %v7437, %v8185
    %v8334 = vmul.f32 %v7438, %v8187
    %v8335 = vmul.f32 %v7439, %v8189
    %v8336 = vmul.f32 %v7440, %v8191
    %v8337 = vmul.f32 %v7441, %v8193
    %v8338 = vmul.f32 %v7442, %v8195
    %v8339 = vmul.f32 %v7443, %v8197
    %v8340 = vmul.f32 %v7444, %v8199
    %v8341 = vmul.f32 %v7445, %v8201
    %v8342 = vmul.f32 %v7446, %v8203
    %v8343 = vmul.f32 %v7447, %v8205
    %v8344 = vmul.f32 %v7448, %v8207
    %v8345 = vmul.f32 %v7449, %v8209
    %v8346 = vmul.f32 %v7450, %v8211
    %v8347 = vmul.f32 %v7451, %v8213
    %v8348 = vmul.f32 %v7452, %v8215
    %v8349 = vmul.f32 %v7453, %v8217
    %v8350 = vmul.f32 %v7454, %v8219
    %v8351 = vmul.f32 %v7455, %v8221
    %v8352 = vmul.f32 %v7456, %v8223
    %v8353 = vmul.f32 %v7457, %v8225
    %v8354 = vld [vmem:[#allocation11] sm:$0xff]
    %v8355 = vld [vmem:[#allocation11 + $0x8] sm:$0xff]
    %v8356 = vld [vmem:[%s6] sm:$0xff]
    %8358 = vset.pattern.permute.xlu0 0
    %8359 = vperm.xlu0 %8358, %v8356
    %v8360 = vpop.permute.xlu0 %8359
    %8362 = vmatprep.subr.mxu0 %v8257
    %8363 = vmatpush1.xpose.msra.mxu0 %v8256
    %8364 = vmatprep.subr.mxu0 %v8255
    %8365 = vmatpush1.xpose.msra.mxu0 %v8254
    %8366 = vmatprep.subr.mxu0 %v8253
    %8367 = vmatpush1.xpose.msra.mxu0 %v8252
    %8368 = vmatprep.subr.mxu0 %v8251
    %8369 = vmatpush1.xpose.msra.mxu0 %v8250
    %8370 = vmatprep.subr.mxu0 %v8249
    %8371 = vmatpush1.xpose.msra.mxu0 %v8248
    %8372 = vmatprep.subr.mxu0 %v8247
    %8373 = vmatpush1.xpose.msra.mxu0 %v8246
    %8374 = vmatprep.subr.mxu0 %v8245
    %8375 = vmatpush1.xpose.msra.mxu0 %v8244
    %8376 = vmatprep.subr.mxu0 %v8243
    %8377 = vmatpush1.xpose.msra.mxu0 %v8242
    %8378 = vmatprep.subr.mxu0 %v8241
    %8379 = vmatpush1.xpose.msra.mxu0 %v8240
    %8380 = vmatprep.subr.mxu0 %v8239
    %8381 = vmatpush1.xpose.msra.mxu0 %v8238
    %8382 = vmatprep.subr.mxu0 %v8237
    %8383 = vmatpush1.xpose.msra.mxu0 %v8236
    %8384 = vmatprep.subr.mxu0 %v8235
    %8385 = vmatpush1.xpose.msra.mxu0 %v8234
    %8386 = vmatprep.subr.mxu0 %v8233
    %8387 = vmatpush1.xpose.msra.mxu0 %v8232
    %8388 = vmatprep.subr.mxu0 %v8231
    %8389 = vmatpush1.xpose.msra.mxu0 %v8230
    %8390 = vmatprep.subr.mxu0 %v8229
    %8391 = vmatpush1.xpose.msra.mxu0 %v8228
    %8392 = vmatprep.subr.mxu0 %v8227
    %8393 = vmatpush1.xpose.msra.mxu0 %v8226
    %8394 = vmatprep.subr.mxu0 %v8289
    %8395 = vmatpush2.xpose.msra.mxu0 %v8288
    %8396 = vmatprep.subr.mxu0 %v8287
    %8397 = vmatpush2.xpose.msra.mxu0 %v8286
    %8398 = vmatprep.subr.mxu0 %v8285
    %8399 = vmatpush2.xpose.msra.mxu0 %v8284
    %8400 = vmatprep.subr.mxu0 %v8283
    %8401 = vmatpush2.xpose.msra.mxu0 %v8282
    %8402 = vmatprep.subr.mxu0 %v8281
    %8403 = vmatpush2.xpose.msra.mxu0 %v8280
    %8404 = vmatprep.subr.mxu0 %v8279
    %8405 = vmatpush2.xpose.msra.mxu0 %v8278
    %8406 = vmatprep.subr.mxu0 %v8277
    %8407 = vmatpush2.xpose.msra.mxu0 %v8276
    %8408 = vmatprep.subr.mxu0 %v8275
    %8409 = vmatpush2.xpose.msra.mxu0 %v8274
    %8410 = vmatprep.subr.mxu0 %v8273
    %8411 = vmatpush2.xpose.msra.mxu0 %v8272
    %8412 = vmatprep.subr.mxu0 %v8271
    %8413 = vmatpush2.xpose.msra.mxu0 %v8270
    %8414 = vmatprep.subr.mxu0 %v8269
    %8415 = vmatpush2.xpose.msra.mxu0 %v8268
    %8416 = vmatprep.subr.mxu0 %v8267
    %8417 = vmatpush2.xpose.msra.mxu0 %v8266
    %8418 = vmatprep.subr.mxu0 %v8265
    %8419 = vmatpush2.xpose.msra.mxu0 %v8264
    %8420 = vmatprep.subr.mxu0 %v8263
    %8421 = vmatpush2.xpose.msra.mxu0 %v8262
    %8422 = vmatprep.subr.mxu0 %v8261
    %8423 = vmatpush2.xpose.msra.mxu0 %v8260
    %8424 = vmatprep.subr.mxu0 %v8259
    %8425 = vmatpush2.xpose.msra.mxu0 %v8258
    %8426 = vmatprep.mubr.f32.mxu0 %v8355
    %8427 = vmatmul.mubr.f32.gmra.mxu0 %v8354
    %v8428 = vpop.f32.mrf.mxu0
    %v8429 = vadd.f32 %v8360, %v8428
    %v8430 = vpop.f32.mrf.mxu0
    %v8431 = vadd.f32 %v8360, %v8430
    %8432 = vdwg.mxu0
    %8433 = vmatprep.subr.mxu0 %v8321
    %8434 = vmatpush1.xpose.msra.mxu0 %v8320
    %8435 = vmatprep.subr.mxu0 %v8319
    %8436 = vmatpush1.xpose.msra.mxu0 %v8318
    %8437 = vmatprep.subr.mxu0 %v8317
    %8438 = vmatpush1.xpose.msra.mxu0 %v8316
    %8439 = vmatprep.subr.mxu0 %v8315
    %8440 = vmatpush1.xpose.msra.mxu0 %v8314
    %8441 = vmatprep.subr.mxu0 %v8313
    %8442 = vmatpush1.xpose.msra.mxu0 %v8312
    %8443 = vmatprep.subr.mxu0 %v8311
    %8444 = vmatpush1.xpose.msra.mxu0 %v8310
    %8445 = vmatprep.subr.mxu0 %v8309
    %8446 = vmatpush1.xpose.msra.mxu0 %v8308
    %8447 = vmatprep.subr.mxu0 %v8307
    %8448 = vmatpush1.xpose.msra.mxu0 %v8306
    %8449 = vmatprep.subr.mxu0 %v8305
    %8450 = vmatpush1.xpose.msra.mxu0 %v8304
    %8451 = vmatprep.subr.mxu0 %v8303
    %8452 = vmatpush1.xpose.msra.mxu0 %v8302
    %8453 = vmatprep.subr.mxu0 %v8301
    %8454 = vmatpush1.xpose.msra.mxu0 %v8300
    %8455 = vmatprep.subr.mxu0 %v8299
    %8456 = vmatpush1.xpose.msra.mxu0 %v8298
    %8457 = vmatprep.subr.mxu0 %v8297
    %8458 = vmatpush1.xpose.msra.mxu0 %v8296
    %8459 = vmatprep.subr.mxu0 %v8295
    %8460 = vmatpush1.xpose.msra.mxu0 %v8294
    %8461 = vmatprep.subr.mxu0 %v8293
    %8462 = vmatpush1.xpose.msra.mxu0 %v8292
    %8463 = vmatprep.subr.mxu0 %v8291
    %8464 = vmatpush1.xpose.msra.mxu0 %v8290
    %8465 = vmatprep.subr.mxu0 %v8353
    %8466 = vmatpush2.xpose.msra.mxu0 %v8352
    %8467 = vmatprep.subr.mxu0 %v8351
    %8468 = vmatpush2.xpose.msra.mxu0 %v8350
    %8469 = vmatprep.subr.mxu0 %v8349
    %8470 = vmatpush2.xpose.msra.mxu0 %v8348
    %8471 = vmatprep.subr.mxu0 %v8347
    %8472 = vmatpush2.xpose.msra.mxu0 %v8346
    %8473 = vmatprep.subr.mxu0 %v8345
    %8474 = vmatpush2.xpose.msra.mxu0 %v8344
    %8475 = vmatprep.subr.mxu0 %v8343
    %8476 = vmatpush2.xpose.msra.mxu0 %v8342
    %8477 = vmatprep.subr.mxu0 %v8341
    %8478 = vmatpush2.xpose.msra.mxu0 %v8340
    %8479 = vmatprep.subr.mxu0 %v8339
    %8480 = vmatpush2.xpose.msra.mxu0 %v8338
    %8481 = vmatprep.subr.mxu0 %v8337
    %8482 = vmatpush2.xpose.msra.mxu0 %v8336
    %8483 = vmatprep.subr.mxu0 %v8335
    %8484 = vmatpush2.xpose.msra.mxu0 %v8334
    %8485 = vmatprep.subr.mxu0 %v8333
    %8486 = vmatpush2.xpose.msra.mxu0 %v8332
    %8487 = vmatprep.subr.mxu0 %v8331
    %8488 = vmatpush2.xpose.msra.mxu0 %v8330
    %8489 = vmatprep.subr.mxu0 %v8329
    %8490 = vmatpush2.xpose.msra.mxu0 %v8328
    %8491 = vmatprep.subr.mxu0 %v8327
    %8492 = vmatpush2.xpose.msra.mxu0 %v8326
    %8493 = vmatprep.subr.mxu0 %v8325
    %8494 = vmatpush2.xpose.msra.mxu0 %v8324
    %8495 = vmatprep.subr.mxu0 %v8323
    %8496 = vmatpush2.xpose.msra.mxu0 %v8322
    %8497 = vmatprep.mubr.f32.mxu0 %v8355
    %8498 = vmatmul.mubr.f32.gmra.mxu0 %v8354
    %v8499 = vpop.f32.mrf.mxu0
    %v8500 = vadd.f32 %v8360, %v8499
    %v8501 = vpop.f32.mrf.mxu0
    %v8502 = vadd.f32 %v8360, %v8501
    %8503 = vdwg.mxu0
    %8504 = vst [vmem:[#allocation14] sm:$0xff] %v8429
    %8505 = vst [vmem:[#allocation14 + $0x8] sm:$0xff] %v8431
    %8506 = vst [vmem:[#allocation14 + $0x10] sm:$0xff] %v8500
    %8507 = vst [vmem:[#allocation14 + $0x18] sm:$0xff] %v8502
    // Predicated region
    $region54: #{tpu_custom_call.1} parent=1 // pred_check
      _
    $region55: #{tpu_custom_call.1} parent=1 // pred_check_branch
      %8509 = sbr.rel (0) target = $region57
    $region56: #{tpu_custom_call.1} parent=1 // pred_region
      %s8511 = ssub.s32 32768, 32768
      %8512 = vsyncadd [#allocation4], %s8511
      %s8513 = sshll.u32 [#allocation13], 4
      %s8514 = int_to_ptr.vmem [resolvable:$true] %s8513
      %8519 = dma.vmem_to_hbm [thread:$0]  %s8514, 32768, %s7, [#allocation4], 512, 512, 32
    $region57: #{tpu_custom_call.1} parent=1 // pred_fallthru
      _
    // Predicated region
    $region58: #{tpu_custom_call.1} parent=1 // pred_check
      _
    $region59: #{tpu_custom_call.1} parent=1 // pred_check_branch
      %8521 = sbr.rel (0) target = $region61
    $region60: #{tpu_custom_call.1} parent=1 // pred_region
      %s8523 = ssub.s32 512, 512
      %8524 = vsyncadd [#allocation15], %s8523
      %s8526 = sshll.u32 [#allocation14], 4
      %s8527 = int_to_ptr.vmem [resolvable:$true] %s8526
      %8529 = dma.vmem_to_hbm [thread:$0]  %s8527, 512, %s8, [#allocation15]
    $region61: #{tpu_custom_call.1} parent=1 // pred_fallthru
      _
    // Predicated region
    $region62: #{tpu_custom_call.1} parent=1 // pred_check
      _
    $region63: #{tpu_custom_call.1} parent=1 // pred_check_branch
      %8531 = sbr.rel (0) target = $region65
    $region64: #{tpu_custom_call.1} parent=1 // pred_region
      %8532 = dma.done [#allocation4], 32768
    $region65: #{tpu_custom_call.1} parent=1 // pred_fallthru
      _
    // Predicated region
    $region66: #{tpu_custom_call.1} parent=1 // pred_check
      _
    $region67: #{tpu_custom_call.1} parent=1 // pred_check_branch
      %8534 = sbr.rel (0) target = $region69
    $region68: #{tpu_custom_call.1} parent=1 // pred_region
      %8535 = dma.done [#allocation15], 512
    $region69: #{tpu_custom_call.1} parent=1 // pred_fallthru
      _
    %8536 = vsyncpa [#allocation3], 1
    %8537 = vsyncpa [#allocation6], 1
    %8538 = vsyncpa [#allocation9], 1
    %8539 = vsyncpa [#allocation12], 1
    %8540 = vsyncpa [#allocation4], 1
    %8541 = vsyncpa [#allocation15], 1

</llo_original>
